<compile_context>
chip_gen: v7x
topology: tpu7x:2x2x1
jax: 0.10.0
libtpu: 0.0.40
codegen_flags: <defaults>
</compile_context>

<pallas_src>
import functools

import numpy as np
import jax
import jax.numpy as jnp
from jax.experimental import pallas as pl
from jax.experimental.pallas import tpu as pltpu

BN_EPS = 1e-5
CPAD = 8          # zero-pad the 3 xyz input channels to 8 (zero W1 rows keep math exact)
L3_CHUNK = 512    # conv3 output-channel chunk size (caps the live (TN, .) f32 intermediate)


# ----------------------------------------------------------------------------
# spec / sizing helpers
# ----------------------------------------------------------------------------
def _const_spec(shape):
    """BlockSpec for a grid-invariant operand (whole array, constant index map).
    Request single buffering where supported: the block never changes, so the default
    double buffer is pure VMEM waste."""
    nd = len(shape)
    idx = lambda *_: (0,) * nd
    try:
        return pl.BlockSpec(shape, idx, pipeline_mode=pl.Buffered(1))
    except (TypeError, ValueError):
        # older jax without pipeline_mode / Buffered: fall back to default buffering
        return pl.BlockSpec(shape, idx)


def _choose_tile_n(n_per_shard):
    """Largest point tile: exact divisor preferred, else allow <=12.5% edge padding."""
    cands = (2048, 1024, 512, 256, 128)
    for t in cands:
        if n_per_shard >= t and n_per_shard % t == 0:
            return t
    for t in cands:
        if n_per_shard >= t and ((-n_per_shard) % t) * 8 <= n_per_shard:
            return t
    return 128        # tiny N: pad up to a single 128-row tile


def _vmem_limit_bytes(TN, cin, c_feat, ch):
    w_bytes = (cin * 64 + 64 * 128 + 128 * c_feat) * 2 + (64 + 128) * 4
    est = (2 * TN * cin * 2            # x tile (double-buffered)
           + 4 * w_bytes               # weights/biases (+ buffering headroom)
           + TN * (64 + 128) * 6       # layer-1/2 activations (f32 + bf16 copies)
           + 2 * TN * ch * 4           # live conv3 chunk
           + 2 * 8 * c_feat * 4        # resident partial-max output block
           + (4 << 20))                # fudge
    # v7x has only 64 MiB physical VMEM per TensorCore -> stay well below it.
    return int(min(max(est, 16 << 20), 48 << 20))


# ----------------------------------------------------------------------------
# Kernel 1: pointwise 3-layer MLP + running max over points
# ----------------------------------------------------------------------------
def _point_mlp_max_kernel(n_chunks, ch,
                          x_ref, w1_ref, b1_ref, w2_ref, b2_ref, w3_ref, o_ref):
    """grid = (B, S, n_tiles). Per step: 3-layer pointwise MLP on a (TN, CPAD) tile.
    conv3's bias and the (optional) trailing ReLU are deferred to the head kernel --
    both commute with the max over points. The running max lives directly in the
    (8, c_feat) output block (resident across the N axis); the per-step reduction is a
    pure-VPU fold of each (TN, ch) chunk into 8 sublane rows (no per-step XLU reduce,
    no full (TN, c_feat) f32 intermediate)."""
    n = pl.program_id(2)

    x = x_ref[...]                                                     # (TN, CPAD) bf16
    h = jnp.dot(x, w1_ref[...], preferred_element_type=jnp.float32) + b1_ref[...]
    h = jnp.maximum(h, 0.0).astype(jnp.bfloat16)                       # (TN, 64)
    h = jnp.dot(h, w2_ref[...], preferred_element_type=jnp.float32) + b2_ref[...]
    h = jnp.maximum(h, 0.0).astype(jnp.bfloat16)                       # (TN, 128)

    # conv3 in output-channel chunks; fold rows into an (8, ch) partial max per chunk.
    pms = []
    for c in range(n_chunks):
        sl = slice(c * ch, (c + 1) * ch)
        h3 = jnp.dot(h, w3_ref[:, sl], preferred_element_type=jnp.float32)   # (TN, ch)
        pms.append(jnp.max(h3.reshape(-1, 8, ch), axis=0))                   # (8, ch)

    @pl.when(n == 0)
    def _():      # first tile of this (batch, shard): write directly (no -inf init pass)
        for c in range(n_chunks):
            o_ref[:, c * ch:(c + 1) * ch] = pms[c]

    @pl.when(n != 0)
    def _():
        for c in range(n_chunks):
            sl = slice(c * ch, (c + 1) * ch)
            o_ref[:, sl] = jnp.maximum(o_ref[:, sl], pms[c])


def point_mlp_max(x_pad, w1, b1, conv2, w3):
    """x_pad: (B, N, CPAD) bf16 channels-last points.
    w1: (G, CPAD, 64) bf16 with G in {1, B} (per-batch when the STN transform is folded in).
    Returns (B, S*8, c_feat) f32 raw partial maxes of the point MLP, WITHOUT conv3's
    bias / trailing ReLU (deferred to the FC head)."""
    B, N, Cin = x_pad.shape
    G, _, C1 = w1.shape
    w2, b2 = conv2
    c_feat = w3.shape[1]

    # single-sample inference: shard the point axis so both v7x TensorCores stay busy
    n_shards = 2 if (B == 1 and N >= 512) else 1
    TN = _choose_tile_n(max(1, N // n_shards))
    N_pad = pl.cdiv(N, TN * n_shards) * (TN * n_shards)
    if N_pad != N:
        # replicate the last real point: duplicates never change a max over points
        x_pad = jnp.pad(x_pad, ((0, 0), (0, N_pad - N), (0, 0)), mode='edge')
    n_tiles = N_pad // (TN * n_shards)

    ch = c_feat
    for cand in (L3_CHUNK, 256):
        if c_feat > cand and c_feat % cand == 0:
            ch = cand
            break
    n_chunks = c_feat // ch

    w1_idx = (lambda b, s, n: (0, 0, 0)) if G == 1 else (lambda b, s, n: (b, 0, 0))

    out = pl.pallas_call(
        functools.partial(_point_mlp_max_kernel, n_chunks, ch),
        out_shape=jax.ShapeDtypeStruct((B, n_shards, 8, c_feat), jnp.float32),
        grid=(B, n_shards, n_tiles),
        in_specs=[
            pl.BlockSpec((None, TN, Cin), lambda b, s, n: (b, s * n_tiles + n, 0)),
            pl.BlockSpec((None, Cin, C1), w1_idx),
            _const_spec(b1.shape), _const_spec(w2.shape),
            _const_spec(b2.shape), _const_spec(w3.shape),
        ],
        out_specs=pl.BlockSpec((None, None, 8, c_feat), lambda b, s, n: (b, s, 0, 0)),
        compiler_params=pltpu.CompilerParams(
            dimension_semantics=("parallel", "parallel", "arbitrary"),
            vmem_limit_bytes=_vmem_limit_bytes(TN, Cin, c_feat, ch)),
    )(x_pad, w1, b1, w2, b2, w3)
    return out.reshape(B, n_shards * 8, c_feat)


# ----------------------------------------------------------------------------
# Kernel 2: batched FC head (collapse partial maxes -> fc1/fc2/fc3 [-> log_softmax])
# ----------------------------------------------------------------------------
def _fc_head_kernel(relu_in, apply_log_softmax,
                    g_ref, b3_ref, fw1, fb1, fw2, fb2, fw3, fb3, o_ref):
    """g_ref: (TB, R, c_feat) raw per-(batch,shard) partial maxes. Collapse to the global
    max feature, apply the deferred conv3 bias (+ optional ReLU), then run the whole
    batch through fc1/fc2/fc3 so head weights stream through the MXU once per call."""
    g = jnp.max(g_ref[...], axis=1) + b3_ref[...]                      # (TB, c_feat) f32
    if relu_in:
        g = jnp.maximum(g, 0.0)
    g = g.astype(jnp.bfloat16)
    z = jnp.dot(g, fw1[...], preferred_element_type=jnp.float32) + fb1[...]
    z = jnp.maximum(z, 0.0).astype(jnp.bfloat16)
    z = jnp.dot(z, fw2[...], preferred_element_type=jnp.float32) + fb2[...]
    z = jnp.maximum(z, 0.0).astype(jnp.bfloat16)                       # Dropout(p=0.3): identity (eval)
    z = jnp.dot(z, fw3[...], preferred_element_type=jnp.float32) + fb3[...]
    if apply_log_softmax:
        m = jnp.max(z, axis=1, keepdims=True)
        z = z - (m + jnp.log(jnp.sum(jnp.exp(z - m), axis=1, keepdims=True)))
    o_ref[...] = z


def fc_head(g, b3, fc_layers, *, relu_in, apply_log_softmax):
    """g: (B, R, c_feat) f32 raw partial maxes -> (B, c_out) f32."""
    B, R, c_feat = g.shape
    c_out = fc_layers[-1][0].shape[1]
    TB = B
    for t in (128, 64, 32, 16, 8):
        if B % t == 0:
            TB = t
            break
    args = [g, b3]
    in_specs = [pl.BlockSpec((TB, R, c_feat), lambda i: (i, 0, 0)),
                _const_spec(b3.shape)]
    for w, bias in fc_layers:
        args += [w, bias]
        in_specs += [_const_spec(w.shape), _const_spec(bias.shape)]
    return pl.pallas_call(
        functools.partial(_fc_head_kernel, relu_in, apply_log_softmax),
        out_shape=jax.ShapeDtypeStruct((B, c_out), jnp.float32),
        grid=(B // TB,),
        in_specs=in_specs,
        out_specs=pl.BlockSpec((TB, c_out), lambda i: (i, 0)),
        compiler_params=pltpu.CompilerParams(dimension_semantics=("parallel",)),
    )(*args)


# ----------------------------------------------------------------------------
# Deterministic parameter init (shapes per PyTorch __init__)
# ----------------------------------------------------------------------------
def init_linear(key, cout, cin):
    kw, kb = jax.random.split(key)
    s = 1.0 / np.sqrt(cin)
    w = jax.random.uniform(kw, (cout, cin), jnp.float32, -s, s)
    b = jax.random.uniform(kb, (cout,), jnp.float32, -s, s)
    return w, b


def init_bn(key, c):
    k1, k2, k3, k4 = jax.random.split(key, 4)
    gamma = jax.random.uniform(k1, (c,), jnp.float32, 0.5, 1.5)
    beta = jax.random.uniform(k2, (c,), jnp.float32, -0.1, 0.1)
    mean = jax.random.uniform(k3, (c,), jnp.float32, -0.1, 0.1)
    var = jax.random.uniform(k4, (c,), jnp.float32, 0.5, 1.5)
    return gamma, beta, mean, var


def init_params(key, k_classes=2):
    it = iter(jax.random.split(key, 32))
    return {
        'stn': {
            'conv1': init_linear(next(it), 64, 3),
            'conv2': init_linear(next(it), 128, 64),
            'conv3': init_linear(next(it), 1024, 128),
            'fc1': init_linear(next(it), 512, 1024),
            'fc2': init_linear(next(it), 256, 512),
            'fc3': init_linear(next(it), 9, 256),
            'bn1': init_bn(next(it), 64),
            'bn2': init_bn(next(it), 128),
            'bn3': init_bn(next(it), 1024),
            'bn4': init_bn(next(it), 512),
            'bn5': init_bn(next(it), 256),
        },
        'feat': {
            'conv1': init_linear(next(it), 64, 3),
            'conv2': init_linear(next(it), 128, 64),
            'conv3': init_linear(next(it), 1024, 128),
            'bn1': init_bn(next(it), 64),
            'bn2': init_bn(next(it), 128),
            'bn3': init_bn(next(it), 1024),
        },
        'cls': {
            'fc1': init_linear(next(it), 512, 1024),
            'fc2': init_linear(next(it), 256, 512),
            'fc3': init_linear(next(it), k_classes, 256),
            'bn1': init_bn(next(it), 512),
            'bn2': init_bn(next(it), 256),
        },
    }


# ----------------------------------------------------------------------------
# One-time weight preprocessing (BN folding, transpose, pad, bf16 cast)
# ----------------------------------------------------------------------------
def fold_layer(lin, bn=None):
    """Fold eval-mode BatchNorm into a 1x1-conv / linear layer.
    Returns W (C_in, C_out) f32 and bias (1, C_out) f32."""
    w, b = lin                                       # w: (Cout, Cin)
    W = w.T.astype(jnp.float32)
    Bv = b.astype(jnp.float32)
    if bn is not None:
        g, be, m, v = bn
        scale = g / jnp.sqrt(v + BN_EPS)
        W = W * scale[None, :]
        Bv = (b - m) * scale + be
    return W, Bv[None, :].astype(jnp.float32)


def prepare_params(raw):
    """Run once per model (NOT per forward call)."""
    s, f, c = raw['stn'], raw['feat'], raw['cls']

    def conv1_shared(lin, bn):
        W, b1 = fold_layer(lin, bn)                                    # (3, 64) f32
        W = jnp.pad(W, ((0, CPAD - W.shape[0]), (0, 0)))               # zero rows for padded channels
        return W.astype(jnp.bfloat16)[None], b1                        # (1, CPAD, 64) bf16

    def bf(layer):
        W, b = layer
        return W.astype(jnp.bfloat16), b

    return {
        'stn_conv1': conv1_shared(s['conv1'], s['bn1']),
        'stn_conv2': bf(fold_layer(s['conv2'], s['bn2'])),
        'stn_conv3': bf(fold_layer(s['conv3'], s['bn3'])),
        'stn_fc': [bf(fold_layer(s['fc1'], s['bn4'])),
                   bf(fold_layer(s['fc2'], s['bn5'])),
                   bf(fold_layer(s['fc3']))],
        # feat conv1 kept f32 & unpadded so the per-batch STN transform is folded in
        # exactly (f32) before a single bf16 cast inside the forward pass
        'feat_conv1_f32': fold_layer(f['conv1'], f['bn1']),
        'feat_conv2': bf(fold_layer(f['conv2'], f['bn2'])),
        'feat_conv3': bf(fold_layer(f['conv3'], f['bn3'])),
        'cls_fc': [bf(fold_layer(c['fc1'], c['bn1'])),
                   bf(fold_layer(c['fc2'], c['bn2'])),   # Dropout(p=0.3) = identity (eval)
                   bf(fold_layer(c['fc3']))],
    }


# ----------------------------------------------------------------------------
# PointNetCls forward
# ----------------------------------------------------------------------------
# TODO(synk): training-mode Dropout(p=0.3) is not implemented (eval-mode identity).
@jax.jit
def pointnet_cls_forward(x, prep):
    B, C, N = x.shape
    x_pts = jnp.transpose(x, (0, 2, 1))                                   # (B, N, 3)
    x_pad = jnp.pad(x_pts, ((0, 0), (0, 0), (0, CPAD - C))).astype(jnp.bfloat16)

    # ---- STN3d: point MLP + max  ->  batched FC head  ->  trans ----
    s_w1, s_b1 = prep['stn_conv1']
    s_w3, s_b3 = prep['stn_conv3']
    g_stn = point_mlp_max(x_pad, s_w1, s_b1, prep['stn_conv2'], s_w3)
    t9 = fc_head(g_stn, s_b3, prep['stn_fc'], relu_in=True, apply_log_softmax=False)
    trans = t9.reshape(B, 3, 3) + jnp.eye(3, dtype=jnp.float32)           # (B, 3, 3) f32

    # ---- PointNetfeat: fold the 3x3 transform into conv1 (f32, once per batch) ----
    f_w1, f_b1 = prep['feat_conv1_f32']                                   # (3, 64) f32
    w1_eff = jnp.einsum('bij,jk->bik', trans, f_w1, precision='highest')  # (B, 3, 64) f32
    w1_eff = jnp.pad(w1_eff, ((0, 0), (0, CPAD - 3), (0, 0))).astype(jnp.bfloat16)
    f_w3, f_b3 = prep['feat_conv3']
    g_feat = point_mlp_max(x_pad, w1_eff, f_b1, prep['feat_conv2'], f_w3)

    # ---- classifier head + log_softmax ----
    logp = fc_head(g_feat, f_b3, prep['cls_fc'], relu_in=False, apply_log_softmax=True)
    return logp, trans, None


# ----------------------------------------------------------------------------
# Pure-JAX f32 reference (mirrors PyTorch eval-mode semantics) for verification
# ----------------------------------------------------------------------------
def ref_pointnet_cls(x, raw):
    relu = lambda z: jnp.maximum(z, 0.0)

    def bn(h, p):
        g, be, m, v = p
        sh = (1, -1, 1) if h.ndim == 3 else (1, -1)
        return (h - m.reshape(sh)) / jnp.sqrt(v.reshape(sh) + BN_EPS) * g.reshape(sh) + be.reshape(sh)

    def conv(h, p):  # 1x1 Conv1d, NCW
        w, b = p
        return jnp.einsum('oc,bcn->bon', w, h, precision='highest') + b[None, :, None]

    def lin(h, p):
        w, b = p
        return jnp.dot(h, w.T, precision='highest') + b

    s = raw['stn']
    h = relu(bn(conv(x, s['conv1']), s['bn1']))
    h = relu(bn(conv(h, s['conv2']), s['bn2']))
    h = relu(bn(conv(h, s['conv3']), s['bn3']))
    h = jnp.max(h, axis=-1)
    h = relu(bn(lin(h, s['fc1']), s['bn4']))
    h = relu(bn(lin(h, s['fc2']), s['bn5']))
    h = lin(h, s['fc3'])
    trans = h.reshape(-1, 3, 3) + jnp.eye(3, dtype=jnp.float32)

    f = raw['feat']
    y = jnp.matmul(jnp.transpose(x, (0, 2, 1)), trans)
    y = jnp.transpose(y, (0, 2, 1))
    h = relu(bn(conv(y, f['conv1']), f['bn1']))
    h = relu(bn(conv(h, f['conv2']), f['bn2']))
    h = bn(conv(h, f['conv3']), f['bn3'])
    h = jnp.max(h, axis=-1)

    c = raw['cls']
    z = relu(bn(lin(h, c['fc1']), c['bn1']))
    z = relu(bn(lin(z, c['fc2']), c['bn2']))   # dropout = identity (eval)
    z = lin(z, c['fc3'])
    m = jnp.max(z, axis=1, keepdims=True)
    logp = z - (m + jnp.log(jnp.sum(jnp.exp(z - m), axis=1, keepdims=True)))
    return logp, trans, None


if __name__ == "__main__":
    key = jax.random.PRNGKey(0)
    kx, kp = jax.random.split(key)
    B, N, K_CLASSES = 2, 128, 2
    x = jax.random.normal(kx, (B, 3, N), jnp.float32)   # PyTorch NCW: (batch, 3, n_points)
    raw = init_params(kp, k_classes=K_CLASSES)
    prep = prepare_params(raw)                          # one-time weight folding (outside fwd)

    logp, trans, trans_feat = pointnet_cls_forward(x, prep)
    jax.block_until_ready(logp)
    jax.block_until_ready(trans)

    ref_logp, ref_trans, _ = ref_pointnet_cls(x, raw)
    # bf16 MXU matmuls (f32 accumulation) vs f32 reference -> loose tolerance
    np.testing.assert_allclose(np.asarray(trans), np.asarray(ref_trans), rtol=5e-2, atol=5e-2)
    np.testing.assert_allclose(np.asarray(logp), np.asarray(ref_logp), rtol=5e-2, atol=5e-2)
    assert logp.shape == (B, K_CLASSES) and trans.shape == (B, 3, 3) and trans_feat is None

    print("KERNEL_OK")
</pallas_src>

<mosaic_0001>
module attributes {stable_mosaic.version = 11 : i64} {
  func.func @_point_mlp_max_kernel(%arg0: i32, %arg1: i32, %arg2: i32, %arg3: memref<1x128x8xbf16, #tpu.memory_space<vmem>>, %arg4: memref<1x8x64xbf16, #tpu.memory_space<vmem>>, %arg5: memref<1x64xf32, #tpu.memory_space<vmem>>, %arg6: memref<64x128xbf16, #tpu.memory_space<vmem>>, %arg7: memref<1x128xf32, #tpu.memory_space<vmem>>, %arg8: memref<128x1024xbf16, #tpu.memory_space<vmem>>, %arg9: memref<1x1x8x1024xf32, #tpu.memory_space<vmem>>) attributes {dimension_semantics = [#tpu.dimension_semantics<parallel>, #tpu.dimension_semantics<parallel>, #tpu.dimension_semantics<arbitrary>], iteration_bounds = array<i64: 2, 1, 1>, scalar_prefetch = 0 : i64, scratch_operands = 0 : i64, tpu.core_type = #tpu.core_type<tc>, window_params = [{transform_indices = @transform_0, window_bounds = array<i64: 1, 128, 8>}, {pipeline_mode = #tpu.pipeline_mode<synchronous>, transform_indices = @transform_1, window_bounds = array<i64: 1, 8, 64>}, {pipeline_mode = #tpu.pipeline_mode<synchronous>, transform_indices = @transform_2, window_bounds = array<i64: 1, 64>}, {pipeline_mode = #tpu.pipeline_mode<synchronous>, transform_indices = @transform_3, window_bounds = array<i64: 64, 128>}, {pipeline_mode = #tpu.pipeline_mode<synchronous>, transform_indices = @transform_4, window_bounds = array<i64: 1, 128>}, {pipeline_mode = #tpu.pipeline_mode<synchronous>, transform_indices = @transform_5, window_bounds = array<i64: 128, 1024>}, {transform_indices = @transform_6, window_bounds = array<i64: 1, 1, 8, 1024>}]} {
    %c0 = arith.constant 0 : index
    %c0_0 = arith.constant 0 : index
    %c0_1 = arith.constant 0 : index
    %0 = vector.load %arg3[%c0, %c0_0, %c0_1] : memref<1x128x8xbf16, #tpu.memory_space<vmem>>, vector<1x128x8xbf16>
    %1 = vector.shape_cast %0 : vector<1x128x8xbf16> to vector<128x8xbf16>
    %c0_2 = arith.constant 0 : index
    %c0_3 = arith.constant 0 : index
    %c0_4 = arith.constant 0 : index
    %2 = vector.load %arg4[%c0_2, %c0_3, %c0_4] : memref<1x8x64xbf16, #tpu.memory_space<vmem>>, vector<1x8x64xbf16>
    %3 = vector.shape_cast %2 : vector<1x8x64xbf16> to vector<8x64xbf16>
    %cst = arith.constant dense<0.000000e+00> : vector<128x64xf32>
    %4 = tpu.matmul %1, %3, %cst {dimension_numbers = #tpu.dot_dimension_numbers<[1], [0], [0], [1], [0, 0, 1, 1], [], []>} : vector<128x8xbf16>, vector<8x64xbf16>, vector<128x64xf32> -> vector<128x64xf32>
    %c0_5 = arith.constant 0 : index
    %c0_6 = arith.constant 0 : index
    %5 = vector.load %arg5[%c0_5, %c0_6] : memref<1x64xf32, #tpu.memory_space<vmem>>, vector<1x64xf32>
    %6 = vector.broadcast %5 : vector<1x64xf32> to vector<128x64xf32>
    %7 = arith.addf %4, %6 : vector<128x64xf32>
    %cst_7 = arith.constant 0.000000e+00 : f32
    %8 = vector.broadcast %cst_7 : f32 to vector<128x64xf32>
    %9 = arith.maximumf %7, %8 : vector<128x64xf32>
    %10 = arith.truncf %9 : vector<128x64xf32> to vector<128x64xbf16>
    %c0_8 = arith.constant 0 : index
    %c0_9 = arith.constant 0 : index
    %11 = vector.load %arg6[%c0_8, %c0_9] : memref<64x128xbf16, #tpu.memory_space<vmem>>, vector<64x128xbf16>
    %cst_10 = arith.constant dense<0.000000e+00> : vector<128x128xf32>
    %12 = tpu.matmul %10, %11, %cst_10 {dimension_numbers = #tpu.dot_dimension_numbers<[1], [0], [0], [1], [0, 0, 1, 1], [], []>} : vector<128x64xbf16>, vector<64x128xbf16>, vector<128x128xf32> -> vector<128x128xf32>
    %c0_11 = arith.constant 0 : index
    %c0_12 = arith.constant 0 : index
    %13 = vector.load %arg7[%c0_11, %c0_12] : memref<1x128xf32, #tpu.memory_space<vmem>>, vector<1x128xf32>
    %14 = vector.broadcast %13 : vector<1x128xf32> to vector<128x128xf32>
    %15 = arith.addf %12, %14 : vector<128x128xf32>
    %cst_13 = arith.constant 0.000000e+00 : f32
    %16 = vector.broadcast %cst_13 : f32 to vector<128x128xf32>
    %17 = arith.maximumf %15, %16 : vector<128x128xf32>
    %18 = arith.truncf %17 : vector<128x128xf32> to vector<128x128xbf16>
    %c0_14 = arith.constant 0 : index
    %c0_15 = arith.constant 0 : index
    %19 = vector.load %arg8[%c0_14, %c0_15] : memref<128x1024xbf16, #tpu.memory_space<vmem>>, vector<128x512xbf16>
    %cst_16 = arith.constant dense<0.000000e+00> : vector<128x512xf32>
    %20 = tpu.matmul %18, %19, %cst_16 {dimension_numbers = #tpu.dot_dimension_numbers<[1], [0], [0], [1], [0, 0, 1, 1], [], []>} : vector<128x128xbf16>, vector<128x512xbf16>, vector<128x512xf32> -> vector<128x512xf32>
    %21 = vector.shape_cast %20 : vector<128x512xf32> to vector<16x8x512xf32>
    %cst_17 = arith.constant dense<0xFF800000> : vector<8x512xf32>
    %22 = vector.multi_reduction <maximumf>, %21, %cst_17 [0] : vector<16x8x512xf32> to vector<8x512xf32>
    %c0_18 = arith.constant 0 : index
    %c512 = arith.constant 512 : index
    %23 = vector.load %arg8[%c0_18, %c512] : memref<128x1024xbf16, #tpu.memory_space<vmem>>, vector<128x512xbf16>
    %cst_19 = arith.constant dense<0.000000e+00> : vector<128x512xf32>
    %24 = tpu.matmul %18, %23, %cst_19 {dimension_numbers = #tpu.dot_dimension_numbers<[1], [0], [0], [1], [0, 0, 1, 1], [], []>} : vector<128x128xbf16>, vector<128x512xbf16>, vector<128x512xf32> -> vector<128x512xf32>
    %25 = vector.shape_cast %24 : vector<128x512xf32> to vector<16x8x512xf32>
    %cst_20 = arith.constant dense<0xFF800000> : vector<8x512xf32>
    %26 = vector.multi_reduction <maximumf>, %25, %cst_20 [0] : vector<16x8x512xf32> to vector<8x512xf32>
    %c0_i32 = arith.constant 0 : i32
    %27 = arith.cmpi eq, %arg2, %c0_i32 : i32
    %28 = arith.extui %27 : i1 to i32
    %c0_i32_21 = arith.constant 0 : i32
    %29 = arith.cmpi ne, %28, %c0_i32_21 : i32
    scf.if %29 {
      %c0_24 = arith.constant 0 : index
      %c0_25 = arith.constant 0 : index
      %c0_26 = arith.constant 0 : index
      %c0_27 = arith.constant 0 : index
      %33 = vector.load %arg9[%c0_24, %c0_25, %c0_26, %c0_27] : memref<1x1x8x1024xf32, #tpu.memory_space<vmem>>, vector<1x1x8x512xf32>
      %34 = vector.shape_cast %33 : vector<1x1x8x512xf32> to vector<8x512xf32>
      %35 = vector.shape_cast %22 : vector<8x512xf32> to vector<1x1x8x512xf32>
      tpu.vector_store %arg9[%c0_24, %c0_25, %c0_26, %c0_27], %35 {strides = array<i32>} : memref<1x1x8x1024xf32, #tpu.memory_space<vmem>>, vector<1x1x8x512xf32>,
      %c0_28 = arith.constant 0 : index
      %c0_29 = arith.constant 0 : index
      %c0_30 = arith.constant 0 : index
      %c512_31 = arith.constant 512 : index
      %36 = vector.load %arg9[%c0_28, %c0_29, %c0_30, %c512_31] : memref<1x1x8x1024xf32, #tpu.memory_space<vmem>>, vector<1x1x8x512xf32>
      %37 = vector.shape_cast %36 : vector<1x1x8x512xf32> to vector<8x512xf32>
      %38 = vector.shape_cast %26 : vector<8x512xf32> to vector<1x1x8x512xf32>
      tpu.vector_store %arg9[%c0_28, %c0_29, %c0_30, %c512_31], %38 {strides = array<i32>} : memref<1x1x8x1024xf32, #tpu.memory_space<vmem>>, vector<1x1x8x512xf32>,
    } else {
    }
    %c0_i32_22 = arith.constant 0 : i32
    %30 = arith.cmpi ne, %arg2, %c0_i32_22 : i32
    %31 = arith.extui %30 : i1 to i32
    %c0_i32_23 = arith.constant 0 : i32
    %32 = arith.cmpi ne, %31, %c0_i32_23 : i32
    scf.if %32 {
      %c0_24 = arith.constant 0 : index
      %c0_25 = arith.constant 0 : index
      %c0_26 = arith.constant 0 : index
      %c0_27 = arith.constant 0 : index
      %33 = vector.load %arg9[%c0_24, %c0_25, %c0_26, %c0_27] : memref<1x1x8x1024xf32, #tpu.memory_space<vmem>>, vector<1x1x8x512xf32>
      %34 = vector.shape_cast %33 : vector<1x1x8x512xf32> to vector<8x512xf32>
      %35 = arith.maximumf %34, %22 : vector<8x512xf32>
      %c0_28 = arith.constant 0 : index
      %c0_29 = arith.constant 0 : index
      %c0_30 = arith.constant 0 : index
      %c0_31 = arith.constant 0 : index
      %36 = vector.load %arg9[%c0_28, %c0_29, %c0_30, %c0_31] : memref<1x1x8x1024xf32, #tpu.memory_space<vmem>>, vector<1x1x8x512xf32>
      %37 = vector.shape_cast %36 : vector<1x1x8x512xf32> to vector<8x512xf32>
      %38 = vector.shape_cast %35 : vector<8x512xf32> to vector<1x1x8x512xf32>
      tpu.vector_store %arg9[%c0_28, %c0_29, %c0_30, %c0_31], %38 {strides = array<i32>} : memref<1x1x8x1024xf32, #tpu.memory_space<vmem>>, vector<1x1x8x512xf32>,
      %c0_32 = arith.constant 0 : index
      %c0_33 = arith.constant 0 : index
      %c0_34 = arith.constant 0 : index
      %c512_35 = arith.constant 512 : index
      %39 = vector.load %arg9[%c0_32, %c0_33, %c0_34, %c512_35] : memref<1x1x8x1024xf32, #tpu.memory_space<vmem>>, vector<1x1x8x512xf32>
      %40 = vector.shape_cast %39 : vector<1x1x8x512xf32> to vector<8x512xf32>
      %41 = arith.maximumf %40, %26 : vector<8x512xf32>
      %c0_36 = arith.constant 0 : index
      %c0_37 = arith.constant 0 : index
      %c0_38 = arith.constant 0 : index
      %c512_39 = arith.constant 512 : index
      %42 = vector.load %arg9[%c0_36, %c0_37, %c0_38, %c512_39] : memref<1x1x8x1024xf32, #tpu.memory_space<vmem>>, vector<1x1x8x512xf32>
      %43 = vector.shape_cast %42 : vector<1x1x8x512xf32> to vector<8x512xf32>
      %44 = vector.shape_cast %41 : vector<8x512xf32> to vector<1x1x8x512xf32>
      tpu.vector_store %arg9[%c0_36, %c0_37, %c0_38, %c512_39], %44 {strides = array<i32>} : memref<1x1x8x1024xf32, #tpu.memory_space<vmem>>, vector<1x1x8x512xf32>,
    } else {
    }
    return
  }
  func.func @transform_0(%arg0: i32, %arg1: i32, %arg2: i32) -> (i32, i32, i32) {
    %c1_i32 = arith.constant 1 : i32
    %0 = arith.muli %arg1, %c1_i32 : i32
    %1 = arith.addi %0, %arg2 : i32
    %c0_i32 = arith.constant 0 : i32
    %c0_i32_0 = arith.constant 0 : i32
    return %arg0, %1, %c0_i32 : i32, i32, i32
  }
  func.func @transform_1(%arg0: i32, %arg1: i32, %arg2: i32) -> (i32, i32, i32) {
    %c0_i32 = arith.constant 0 : i32
    %c0_i32_0 = arith.constant 0 : i32
    %c0_i32_1 = arith.constant 0 : i32
    %c0_i32_2 = arith.constant 0 : i32
    return %c0_i32, %c0_i32_0, %c0_i32_1 : i32, i32, i32
  }
  func.func @transform_2(%arg0: i32, %arg1: i32, %arg2: i32) -> (i32, i32) {
    %c0_i32 = arith.constant 0 : i32
    %c0_i32_0 = arith.constant 0 : i32
    %c0_i32_1 = arith.constant 0 : i32
    return %c0_i32, %c0_i32_0 : i32, i32
  }
  func.func @transform_3(%arg0: i32, %arg1: i32, %arg2: i32) -> (i32, i32) {
    %c0_i32 = arith.constant 0 : i32
    %c0_i32_0 = arith.constant 0 : i32
    %c0_i32_1 = arith.constant 0 : i32
    return %c0_i32, %c0_i32_0 : i32, i32
  }
  func.func @transform_4(%arg0: i32, %arg1: i32, %arg2: i32) -> (i32, i32) {
    %c0_i32 = arith.constant 0 : i32
    %c0_i32_0 = arith.constant 0 : i32
    %c0_i32_1 = arith.constant 0 : i32
    return %c0_i32, %c0_i32_0 : i32, i32
  }
  func.func @transform_5(%arg0: i32, %arg1: i32, %arg2: i32) -> (i32, i32) {
    %c0_i32 = arith.constant 0 : i32
    %c0_i32_0 = arith.constant 0 : i32
    %c0_i32_1 = arith.constant 0 : i32
    return %c0_i32, %c0_i32_0 : i32, i32
  }
  func.func @transform_6(%arg0: i32, %arg1: i32, %arg2: i32) -> (i32, i32, i32, i32) {
    %c0_i32 = arith.constant 0 : i32
    %c0_i32_0 = arith.constant 0 : i32
    %c0_i32_1 = arith.constant 0 : i32
    return %arg0, %arg1, %c0_i32, %c0_i32_0 : i32, i32, i32, i32
  }
}

module attributes {stable_mosaic.version = 11 : i64} {
  func.func @_fc_head_kernel(%arg0: i32, %arg1: memref<2x8x1024xf32, #tpu.memory_space<vmem>>, %arg2: memref<1x1024xf32, #tpu.memory_space<vmem>>, %arg3: memref<1024x512xbf16, #tpu.memory_space<vmem>>, %arg4: memref<1x512xf32, #tpu.memory_space<vmem>>, %arg5: memref<512x256xbf16, #tpu.memory_space<vmem>>, %arg6: memref<1x256xf32, #tpu.memory_space<vmem>>, %arg7: memref<256x9xbf16, #tpu.memory_space<vmem>>, %arg8: memref<1x9xf32, #tpu.memory_space<vmem>>, %arg9: memref<2x9xf32, #tpu.memory_space<vmem>>) attributes {dimension_semantics = [#tpu.dimension_semantics<parallel>], iteration_bounds = array<i64: 1>, scalar_prefetch = 0 : i64, scratch_operands = 0 : i64, tpu.core_type = #tpu.core_type<tc>, window_params = [{transform_indices = @transform_0, window_bounds = array<i64: 2, 8, 1024>}, {pipeline_mode = #tpu.pipeline_mode<synchronous>, transform_indices = @transform_1, window_bounds = array<i64: 1, 1024>}, {pipeline_mode = #tpu.pipeline_mode<synchronous>, transform_indices = @transform_2, window_bounds = array<i64: 1024, 512>}, {pipeline_mode = #tpu.pipeline_mode<synchronous>, transform_indices = @transform_3, window_bounds = array<i64: 1, 512>}, {pipeline_mode = #tpu.pipeline_mode<synchronous>, transform_indices = @transform_4, window_bounds = array<i64: 512, 256>}, {pipeline_mode = #tpu.pipeline_mode<synchronous>, transform_indices = @transform_5, window_bounds = array<i64: 1, 256>}, {pipeline_mode = #tpu.pipeline_mode<synchronous>, transform_indices = @transform_6, window_bounds = array<i64: 256, 9>}, {pipeline_mode = #tpu.pipeline_mode<synchronous>, transform_indices = @transform_7, window_bounds = array<i64: 1, 9>}, {transform_indices = @transform_8, window_bounds = array<i64: 2, 9>}]} {
    %c0 = arith.constant 0 : index
    %c0_0 = arith.constant 0 : index
    %c0_1 = arith.constant 0 : index
    %0 = vector.load %arg1[%c0, %c0_0, %c0_1] : memref<2x8x1024xf32, #tpu.memory_space<vmem>>, vector<2x8x1024xf32>
    %cst = arith.constant dense<0xFF800000> : vector<2x1024xf32>
    %1 = vector.multi_reduction <maximumf>, %0, %cst [1] : vector<2x8x1024xf32> to vector<2x1024xf32>
    %c0_2 = arith.constant 0 : index
    %c0_3 = arith.constant 0 : index
    %2 = vector.load %arg2[%c0_2, %c0_3] : memref<1x1024xf32, #tpu.memory_space<vmem>>, vector<1x1024xf32>
    %3 = vector.broadcast %2 : vector<1x1024xf32> to vector<2x1024xf32>
    %4 = arith.addf %1, %3 : vector<2x1024xf32>
    %cst_4 = arith.constant 0.000000e+00 : f32
    %5 = vector.broadcast %cst_4 : f32 to vector<2x1024xf32>
    %6 = arith.maximumf %4, %5 : vector<2x1024xf32>
    %7 = arith.truncf %6 : vector<2x1024xf32> to vector<2x1024xbf16>
    %c0_5 = arith.constant 0 : index
    %c0_6 = arith.constant 0 : index
    %8 = vector.load %arg3[%c0_5, %c0_6] : memref<1024x512xbf16, #tpu.memory_space<vmem>>, vector<1024x512xbf16>
    %cst_7 = arith.constant dense<0.000000e+00> : vector<2x512xf32>
    %9 = tpu.matmul %7, %8, %cst_7 {dimension_numbers = #tpu.dot_dimension_numbers<[1], [0], [0], [1], [0, 0, 1, 1], [], []>} : vector<2x1024xbf16>, vector<1024x512xbf16>, vector<2x512xf32> -> vector<2x512xf32>
    %c0_8 = arith.constant 0 : index
    %c0_9 = arith.constant 0 : index
    %10 = vector.load %arg4[%c0_8, %c0_9] : memref<1x512xf32, #tpu.memory_space<vmem>>, vector<1x512xf32>
    %11 = vector.broadcast %10 : vector<1x512xf32> to vector<2x512xf32>
    %12 = arith.addf %9, %11 : vector<2x512xf32>
    %cst_10 = arith.constant 0.000000e+00 : f32
    %13 = vector.broadcast %cst_10 : f32 to vector<2x512xf32>
    %14 = arith.maximumf %12, %13 : vector<2x512xf32>
    %15 = arith.truncf %14 : vector<2x512xf32> to vector<2x512xbf16>
    %c0_11 = arith.constant 0 : index
    %c0_12 = arith.constant 0 : index
    %16 = vector.load %arg5[%c0_11, %c0_12] : memref<512x256xbf16, #tpu.memory_space<vmem>>, vector<512x256xbf16>
    %cst_13 = arith.constant dense<0.000000e+00> : vector<2x256xf32>
    %17 = tpu.matmul %15, %16, %cst_13 {dimension_numbers = #tpu.dot_dimension_numbers<[1], [0], [0], [1], [0, 0, 1, 1], [], []>} : vector<2x512xbf16>, vector<512x256xbf16>, vector<2x256xf32> -> vector<2x256xf32>
    %c0_14 = arith.constant 0 : index
    %c0_15 = arith.constant 0 : index
    %18 = vector.load %arg6[%c0_14, %c0_15] : memref<1x256xf32, #tpu.memory_space<vmem>>, vector<1x256xf32>
    %19 = vector.broadcast %18 : vector<1x256xf32> to vector<2x256xf32>
    %20 = arith.addf %17, %19 : vector<2x256xf32>
    %cst_16 = arith.constant 0.000000e+00 : f32
    %21 = vector.broadcast %cst_16 : f32 to vector<2x256xf32>
    %22 = arith.maximumf %20, %21 : vector<2x256xf32>
    %23 = arith.truncf %22 : vector<2x256xf32> to vector<2x256xbf16>
    %c0_17 = arith.constant 0 : index
    %c0_18 = arith.constant 0 : index
    %24 = vector.load %arg7[%c0_17, %c0_18] : memref<256x9xbf16, #tpu.memory_space<vmem>>, vector<256x9xbf16>
    %cst_19 = arith.constant dense<0.000000e+00> : vector<2x9xf32>
    %25 = tpu.matmul %23, %24, %cst_19 {dimension_numbers = #tpu.dot_dimension_numbers<[1], [0], [0], [1], [0, 0, 1, 1], [], []>} : vector<2x256xbf16>, vector<256x9xbf16>, vector<2x9xf32> -> vector<2x9xf32>
    %c0_20 = arith.constant 0 : index
    %c0_21 = arith.constant 0 : index
    %26 = vector.load %arg8[%c0_20, %c0_21] : memref<1x9xf32, #tpu.memory_space<vmem>>, vector<1x9xf32>
    %27 = vector.broadcast %26 : vector<1x9xf32> to vector<2x9xf32>
    %28 = arith.addf %25, %27 : vector<2x9xf32>
    %c0_22 = arith.constant 0 : index
    %c0_23 = arith.constant 0 : index
    %29 = vector.load %arg9[%c0_22, %c0_23] : memref<2x9xf32, #tpu.memory_space<vmem>>, vector<2x9xf32>
    tpu.vector_store %arg9[%c0_22, %c0_23], %28 {strides = array<i32>} : memref<2x9xf32, #tpu.memory_space<vmem>>, vector<2x9xf32>,
    return
  }
  func.func @transform_0(%arg0: i32) -> (i32, i32, i32) {
    %c0_i32 = arith.constant 0 : i32
    %c0_i32_0 = arith.constant 0 : i32
    %c0_i32_1 = arith.constant 0 : i32
    return %arg0, %c0_i32, %c0_i32_0 : i32, i32, i32
  }
  func.func @transform_1(%arg0: i32) -> (i32, i32) {
    %c0_i32 = arith.constant 0 : i32
    %c0_i32_0 = arith.constant 0 : i32
    %c0_i32_1 = arith.constant 0 : i32
    return %c0_i32, %c0_i32_0 : i32, i32
  }
  func.func @transform_2(%arg0: i32) -> (i32, i32) {
    %c0_i32 = arith.constant 0 : i32
    %c0_i32_0 = arith.constant 0 : i32
    %c0_i32_1 = arith.constant 0 : i32
    return %c0_i32, %c0_i32_0 : i32, i32
  }
  func.func @transform_3(%arg0: i32) -> (i32, i32) {
    %c0_i32 = arith.constant 0 : i32
    %c0_i32_0 = arith.constant 0 : i32
    %c0_i32_1 = arith.constant 0 : i32
    return %c0_i32, %c0_i32_0 : i32, i32
  }
  func.func @transform_4(%arg0: i32) -> (i32, i32) {
    %c0_i32 = arith.constant 0 : i32
    %c0_i32_0 = arith.constant 0 : i32
    %c0_i32_1 = arith.constant 0 : i32
    return %c0_i32, %c0_i32_0 : i32, i32
  }
  func.func @transform_5(%arg0: i32) -> (i32, i32) {
    %c0_i32 = arith.constant 0 : i32
    %c0_i32_0 = arith.constant 0 : i32
    %c0_i32_1 = arith.constant 0 : i32
    return %c0_i32, %c0_i32_0 : i32, i32
  }
  func.func @transform_6(%arg0: i32) -> (i32, i32) {
    %c0_i32 = arith.constant 0 : i32
    %c0_i32_0 = arith.constant 0 : i32
    %c0_i32_1 = arith.constant 0 : i32
    return %c0_i32, %c0_i32_0 : i32, i32
  }
  func.func @transform_7(%arg0: i32) -> (i32, i32) {
    %c0_i32 = arith.constant 0 : i32
    %c0_i32_0 = arith.constant 0 : i32
    %c0_i32_1 = arith.constant 0 : i32
    return %c0_i32, %c0_i32_0 : i32, i32
  }
  func.func @transform_8(%arg0: i32) -> (i32, i32) {
    %c0_i32 = arith.constant 0 : i32
    %c0_i32_0 = arith.constant 0 : i32
    return %arg0, %c0_i32 : i32, i32
  }
}

module attributes {stable_mosaic.version = 11 : i64} {
  func.func @_point_mlp_max_kernel(%arg0: i32, %arg1: i32, %arg2: i32, %arg3: memref<1x128x8xbf16, #tpu.memory_space<vmem>>, %arg4: memref<1x8x64xbf16, #tpu.memory_space<vmem>>, %arg5: memref<1x64xf32, #tpu.memory_space<vmem>>, %arg6: memref<64x128xbf16, #tpu.memory_space<vmem>>, %arg7: memref<1x128xf32, #tpu.memory_space<vmem>>, %arg8: memref<128x1024xbf16, #tpu.memory_space<vmem>>, %arg9: memref<1x1x8x1024xf32, #tpu.memory_space<vmem>>) attributes {dimension_semantics = [#tpu.dimension_semantics<parallel>, #tpu.dimension_semantics<parallel>, #tpu.dimension_semantics<arbitrary>], iteration_bounds = array<i64: 2, 1, 1>, scalar_prefetch = 0 : i64, scratch_operands = 0 : i64, tpu.core_type = #tpu.core_type<tc>, window_params = [{transform_indices = @transform_0, window_bounds = array<i64: 1, 128, 8>}, {transform_indices = @transform_1, window_bounds = array<i64: 1, 8, 64>}, {pipeline_mode = #tpu.pipeline_mode<synchronous>, transform_indices = @transform_2, window_bounds = array<i64: 1, 64>}, {pipeline_mode = #tpu.pipeline_mode<synchronous>, transform_indices = @transform_3, window_bounds = array<i64: 64, 128>}, {pipeline_mode = #tpu.pipeline_mode<synchronous>, transform_indices = @transform_4, window_bounds = array<i64: 1, 128>}, {pipeline_mode = #tpu.pipeline_mode<synchronous>, transform_indices = @transform_5, window_bounds = array<i64: 128, 1024>}, {transform_indices = @transform_6, window_bounds = array<i64: 1, 1, 8, 1024>}]} {
    %c0 = arith.constant 0 : index
    %c0_0 = arith.constant 0 : index
    %c0_1 = arith.constant 0 : index
    %0 = vector.load %arg3[%c0, %c0_0, %c0_1] : memref<1x128x8xbf16, #tpu.memory_space<vmem>>, vector<1x128x8xbf16>
    %1 = vector.shape_cast %0 : vector<1x128x8xbf16> to vector<128x8xbf16>
    %c0_2 = arith.constant 0 : index
    %c0_3 = arith.constant 0 : index
    %c0_4 = arith.constant 0 : index
    %2 = vector.load %arg4[%c0_2, %c0_3, %c0_4] : memref<1x8x64xbf16, #tpu.memory_space<vmem>>, vector<1x8x64xbf16>
    %3 = vector.shape_cast %2 : vector<1x8x64xbf16> to vector<8x64xbf16>
    %cst = arith.constant dense<0.000000e+00> : vector<128x64xf32>
    %4 = tpu.matmul %1, %3, %cst {dimension_numbers = #tpu.dot_dimension_numbers<[1], [0], [0], [1], [0, 0, 1, 1], [], []>} : vector<128x8xbf16>, vector<8x64xbf16>, vector<128x64xf32> -> vector<128x64xf32>
    %c0_5 = arith.constant 0 : index
    %c0_6 = arith.constant 0 : index
    %5 = vector.load %arg5[%c0_5, %c0_6] : memref<1x64xf32, #tpu.memory_space<vmem>>, vector<1x64xf32>
    %6 = vector.broadcast %5 : vector<1x64xf32> to vector<128x64xf32>
    %7 = arith.addf %4, %6 : vector<128x64xf32>
    %cst_7 = arith.constant 0.000000e+00 : f32
    %8 = vector.broadcast %cst_7 : f32 to vector<128x64xf32>
    %9 = arith.maximumf %7, %8 : vector<128x64xf32>
    %10 = arith.truncf %9 : vector<128x64xf32> to vector<128x64xbf16>
    %c0_8 = arith.constant 0 : index
    %c0_9 = arith.constant 0 : index
    %11 = vector.load %arg6[%c0_8, %c0_9] : memref<64x128xbf16, #tpu.memory_space<vmem>>, vector<64x128xbf16>
    %cst_10 = arith.constant dense<0.000000e+00> : vector<128x128xf32>
    %12 = tpu.matmul %10, %11, %cst_10 {dimension_numbers = #tpu.dot_dimension_numbers<[1], [0], [0], [1], [0, 0, 1, 1], [], []>} : vector<128x64xbf16>, vector<64x128xbf16>, vector<128x128xf32> -> vector<128x128xf32>
    %c0_11 = arith.constant 0 : index
    %c0_12 = arith.constant 0 : index
    %13 = vector.load %arg7[%c0_11, %c0_12] : memref<1x128xf32, #tpu.memory_space<vmem>>, vector<1x128xf32>
    %14 = vector.broadcast %13 : vector<1x128xf32> to vector<128x128xf32>
    %15 = arith.addf %12, %14 : vector<128x128xf32>
    %cst_13 = arith.constant 0.000000e+00 : f32
    %16 = vector.broadcast %cst_13 : f32 to vector<128x128xf32>
    %17 = arith.maximumf %15, %16 : vector<128x128xf32>
    %18 = arith.truncf %17 : vector<128x128xf32> to vector<128x128xbf16>
    %c0_14 = arith.constant 0 : index
    %c0_15 = arith.constant 0 : index
    %19 = vector.load %arg8[%c0_14, %c0_15] : memref<128x1024xbf16, #tpu.memory_space<vmem>>, vector<128x512xbf16>
    %cst_16 = arith.constant dense<0.000000e+00> : vector<128x512xf32>
    %20 = tpu.matmul %18, %19, %cst_16 {dimension_numbers = #tpu.dot_dimension_numbers<[1], [0], [0], [1], [0, 0, 1, 1], [], []>} : vector<128x128xbf16>, vector<128x512xbf16>, vector<128x512xf32> -> vector<128x512xf32>
    %21 = vector.shape_cast %20 : vector<128x512xf32> to vector<16x8x512xf32>
    %cst_17 = arith.constant dense<0xFF800000> : vector<8x512xf32>
    %22 = vector.multi_reduction <maximumf>, %21, %cst_17 [0] : vector<16x8x512xf32> to vector<8x512xf32>
    %c0_18 = arith.constant 0 : index
    %c512 = arith.constant 512 : index
    %23 = vector.load %arg8[%c0_18, %c512] : memref<128x1024xbf16, #tpu.memory_space<vmem>>, vector<128x512xbf16>
    %cst_19 = arith.constant dense<0.000000e+00> : vector<128x512xf32>
    %24 = tpu.matmul %18, %23, %cst_19 {dimension_numbers = #tpu.dot_dimension_numbers<[1], [0], [0], [1], [0, 0, 1, 1], [], []>} : vector<128x128xbf16>, vector<128x512xbf16>, vector<128x512xf32> -> vector<128x512xf32>
    %25 = vector.shape_cast %24 : vector<128x512xf32> to vector<16x8x512xf32>
    %cst_20 = arith.constant dense<0xFF800000> : vector<8x512xf32>
    %26 = vector.multi_reduction <maximumf>, %25, %cst_20 [0] : vector<16x8x512xf32> to vector<8x512xf32>
    %c0_i32 = arith.constant 0 : i32
    %27 = arith.cmpi eq, %arg2, %c0_i32 : i32
    %28 = arith.extui %27 : i1 to i32
    %c0_i32_21 = arith.constant 0 : i32
    %29 = arith.cmpi ne, %28, %c0_i32_21 : i32
    scf.if %29 {
      %c0_24 = arith.constant 0 : index
      %c0_25 = arith.constant 0 : index
      %c0_26 = arith.constant 0 : index
      %c0_27 = arith.constant 0 : index
      %33 = vector.load %arg9[%c0_24, %c0_25, %c0_26, %c0_27] : memref<1x1x8x1024xf32, #tpu.memory_space<vmem>>, vector<1x1x8x512xf32>
      %34 = vector.shape_cast %33 : vector<1x1x8x512xf32> to vector<8x512xf32>
      %35 = vector.shape_cast %22 : vector<8x512xf32> to vector<1x1x8x512xf32>
      tpu.vector_store %arg9[%c0_24, %c0_25, %c0_26, %c0_27], %35 {strides = array<i32>} : memref<1x1x8x1024xf32, #tpu.memory_space<vmem>>, vector<1x1x8x512xf32>,
      %c0_28 = arith.constant 0 : index
      %c0_29 = arith.constant 0 : index
      %c0_30 = arith.constant 0 : index
      %c512_31 = arith.constant 512 : index
      %36 = vector.load %arg9[%c0_28, %c0_29, %c0_30, %c512_31] : memref<1x1x8x1024xf32, #tpu.memory_space<vmem>>, vector<1x1x8x512xf32>
      %37 = vector.shape_cast %36 : vector<1x1x8x512xf32> to vector<8x512xf32>
      %38 = vector.shape_cast %26 : vector<8x512xf32> to vector<1x1x8x512xf32>
      tpu.vector_store %arg9[%c0_28, %c0_29, %c0_30, %c512_31], %38 {strides = array<i32>} : memref<1x1x8x1024xf32, #tpu.memory_space<vmem>>, vector<1x1x8x512xf32>,
    } else {
    }
    %c0_i32_22 = arith.constant 0 : i32
    %30 = arith.cmpi ne, %arg2, %c0_i32_22 : i32
    %31 = arith.extui %30 : i1 to i32
    %c0_i32_23 = arith.constant 0 : i32
    %32 = arith.cmpi ne, %31, %c0_i32_23 : i32
    scf.if %32 {
      %c0_24 = arith.constant 0 : index
      %c0_25 = arith.constant 0 : index
      %c0_26 = arith.constant 0 : index
      %c0_27 = arith.constant 0 : index
      %33 = vector.load %arg9[%c0_24, %c0_25, %c0_26, %c0_27] : memref<1x1x8x1024xf32, #tpu.memory_space<vmem>>, vector<1x1x8x512xf32>
      %34 = vector.shape_cast %33 : vector<1x1x8x512xf32> to vector<8x512xf32>
      %35 = arith.maximumf %34, %22 : vector<8x512xf32>
      %c0_28 = arith.constant 0 : index
      %c0_29 = arith.constant 0 : index
      %c0_30 = arith.constant 0 : index
      %c0_31 = arith.constant 0 : index
      %36 = vector.load %arg9[%c0_28, %c0_29, %c0_30, %c0_31] : memref<1x1x8x1024xf32, #tpu.memory_space<vmem>>, vector<1x1x8x512xf32>
      %37 = vector.shape_cast %36 : vector<1x1x8x512xf32> to vector<8x512xf32>
      %38 = vector.shape_cast %35 : vector<8x512xf32> to vector<1x1x8x512xf32>
      tpu.vector_store %arg9[%c0_28, %c0_29, %c0_30, %c0_31], %38 {strides = array<i32>} : memref<1x1x8x1024xf32, #tpu.memory_space<vmem>>, vector<1x1x8x512xf32>,
      %c0_32 = arith.constant 0 : index
      %c0_33 = arith.constant 0 : index
      %c0_34 = arith.constant 0 : index
      %c512_35 = arith.constant 512 : index
      %39 = vector.load %arg9[%c0_32, %c0_33, %c0_34, %c512_35] : memref<1x1x8x1024xf32, #tpu.memory_space<vmem>>, vector<1x1x8x512xf32>
      %40 = vector.shape_cast %39 : vector<1x1x8x512xf32> to vector<8x512xf32>
      %41 = arith.maximumf %40, %26 : vector<8x512xf32>
      %c0_36 = arith.constant 0 : index
      %c0_37 = arith.constant 0 : index
      %c0_38 = arith.constant 0 : index
      %c512_39 = arith.constant 512 : index
      %42 = vector.load %arg9[%c0_36, %c0_37, %c0_38, %c512_39] : memref<1x1x8x1024xf32, #tpu.memory_space<vmem>>, vector<1x1x8x512xf32>
      %43 = vector.shape_cast %42 : vector<1x1x8x512xf32> to vector<8x512xf32>
      %44 = vector.shape_cast %41 : vector<8x512xf32> to vector<1x1x8x512xf32>
      tpu.vector_store %arg9[%c0_36, %c0_37, %c0_38, %c512_39], %44 {strides = array<i32>} : memref<1x1x8x1024xf32, #tpu.memory_space<vmem>>, vector<1x1x8x512xf32>,
    } else {
    }
    return
  }
  func.func @transform_0(%arg0: i32, %arg1: i32, %arg2: i32) -> (i32, i32, i32) {
    %c1_i32 = arith.constant 1 : i32
    %0 = arith.muli %arg1, %c1_i32 : i32
    %1 = arith.addi %0, %arg2 : i32
    %c0_i32 = arith.constant 0 : i32
    %c0_i32_0 = arith.constant 0 : i32
    return %arg0, %1, %c0_i32 : i32, i32, i32
  }
  func.func @transform_1(%arg0: i32, %arg1: i32, %arg2: i32) -> (i32, i32, i32) {
    %c0_i32 = arith.constant 0 : i32
    %c0_i32_0 = arith.constant 0 : i32
    %c0_i32_1 = arith.constant 0 : i32
    return %arg0, %c0_i32, %c0_i32_0 : i32, i32, i32
  }
  func.func @transform_2(%arg0: i32, %arg1: i32, %arg2: i32) -> (i32, i32) {
    %c0_i32 = arith.constant 0 : i32
    %c0_i32_0 = arith.constant 0 : i32
    %c0_i32_1 = arith.constant 0 : i32
    return %c0_i32, %c0_i32_0 : i32, i32
  }
  func.func @transform_3(%arg0: i32, %arg1: i32, %arg2: i32) -> (i32, i32) {
    %c0_i32 = arith.constant 0 : i32
    %c0_i32_0 = arith.constant 0 : i32
    %c0_i32_1 = arith.constant 0 : i32
    return %c0_i32, %c0_i32_0 : i32, i32
  }
  func.func @transform_4(%arg0: i32, %arg1: i32, %arg2: i32) -> (i32, i32) {
    %c0_i32 = arith.constant 0 : i32
    %c0_i32_0 = arith.constant 0 : i32
    %c0_i32_1 = arith.constant 0 : i32
    return %c0_i32, %c0_i32_0 : i32, i32
  }
  func.func @transform_5(%arg0: i32, %arg1: i32, %arg2: i32) -> (i32, i32) {
    %c0_i32 = arith.constant 0 : i32
    %c0_i32_0 = arith.constant 0 : i32
    %c0_i32_1 = arith.constant 0 : i32
    return %c0_i32, %c0_i32_0 : i32, i32
  }
  func.func @transform_6(%arg0: i32, %arg1: i32, %arg2: i32) -> (i32, i32, i32, i32) {
    %c0_i32 = arith.constant 0 : i32
    %c0_i32_0 = arith.constant 0 : i32
    %c0_i32_1 = arith.constant 0 : i32
    return %arg0, %arg1, %c0_i32, %c0_i32_0 : i32, i32, i32, i32
  }
}

module attributes {stable_mosaic.version = 11 : i64} {
  func.func @_fc_head_kernel(%arg0: i32, %arg1: memref<2x8x1024xf32, #tpu.memory_space<vmem>>, %arg2: memref<1x1024xf32, #tpu.memory_space<vmem>>, %arg3: memref<1024x512xbf16, #tpu.memory_space<vmem>>, %arg4: memref<1x512xf32, #tpu.memory_space<vmem>>, %arg5: memref<512x256xbf16, #tpu.memory_space<vmem>>, %arg6: memref<1x256xf32, #tpu.memory_space<vmem>>, %arg7: memref<256x2xbf16, #tpu.memory_space<vmem>>, %arg8: memref<1x2xf32, #tpu.memory_space<vmem>>, %arg9: memref<2x2xf32, #tpu.memory_space<vmem>>) attributes {dimension_semantics = [#tpu.dimension_semantics<parallel>], iteration_bounds = array<i64: 1>, scalar_prefetch = 0 : i64, scratch_operands = 0 : i64, tpu.core_type = #tpu.core_type<tc>, window_params = [{transform_indices = @transform_0, window_bounds = array<i64: 2, 8, 1024>}, {pipeline_mode = #tpu.pipeline_mode<synchronous>, transform_indices = @transform_1, window_bounds = array<i64: 1, 1024>}, {pipeline_mode = #tpu.pipeline_mode<synchronous>, transform_indices = @transform_2, window_bounds = array<i64: 1024, 512>}, {pipeline_mode = #tpu.pipeline_mode<synchronous>, transform_indices = @transform_3, window_bounds = array<i64: 1, 512>}, {pipeline_mode = #tpu.pipeline_mode<synchronous>, transform_indices = @transform_4, window_bounds = array<i64: 512, 256>}, {pipeline_mode = #tpu.pipeline_mode<synchronous>, transform_indices = @transform_5, window_bounds = array<i64: 1, 256>}, {pipeline_mode = #tpu.pipeline_mode<synchronous>, transform_indices = @transform_6, window_bounds = array<i64: 256, 2>}, {pipeline_mode = #tpu.pipeline_mode<synchronous>, transform_indices = @transform_7, window_bounds = array<i64: 1, 2>}, {transform_indices = @transform_8, window_bounds = array<i64: 2, 2>}]} {
    %c0 = arith.constant 0 : index
    %c0_0 = arith.constant 0 : index
    %c0_1 = arith.constant 0 : index
    %0 = vector.load %arg1[%c0, %c0_0, %c0_1] : memref<2x8x1024xf32, #tpu.memory_space<vmem>>, vector<2x8x1024xf32>
    %cst = arith.constant dense<0xFF800000> : vector<2x1024xf32>
    %1 = vector.multi_reduction <maximumf>, %0, %cst [1] : vector<2x8x1024xf32> to vector<2x1024xf32>
    %c0_2 = arith.constant 0 : index
    %c0_3 = arith.constant 0 : index
    %2 = vector.load %arg2[%c0_2, %c0_3] : memref<1x1024xf32, #tpu.memory_space<vmem>>, vector<1x1024xf32>
    %3 = vector.broadcast %2 : vector<1x1024xf32> to vector<2x1024xf32>
    %4 = arith.addf %1, %3 : vector<2x1024xf32>
    %5 = arith.truncf %4 : vector<2x1024xf32> to vector<2x1024xbf16>
    %c0_4 = arith.constant 0 : index
    %c0_5 = arith.constant 0 : index
    %6 = vector.load %arg3[%c0_4, %c0_5] : memref<1024x512xbf16, #tpu.memory_space<vmem>>, vector<1024x512xbf16>
    %cst_6 = arith.constant dense<0.000000e+00> : vector<2x512xf32>
    %7 = tpu.matmul %5, %6, %cst_6 {dimension_numbers = #tpu.dot_dimension_numbers<[1], [0], [0], [1], [0, 0, 1, 1], [], []>} : vector<2x1024xbf16>, vector<1024x512xbf16>, vector<2x512xf32> -> vector<2x512xf32>
    %c0_7 = arith.constant 0 : index
    %c0_8 = arith.constant 0 : index
    %8 = vector.load %arg4[%c0_7, %c0_8] : memref<1x512xf32, #tpu.memory_space<vmem>>, vector<1x512xf32>
    %9 = vector.broadcast %8 : vector<1x512xf32> to vector<2x512xf32>
    %10 = arith.addf %7, %9 : vector<2x512xf32>
    %cst_9 = arith.constant 0.000000e+00 : f32
    %11 = vector.broadcast %cst_9 : f32 to vector<2x512xf32>
    %12 = arith.maximumf %10, %11 : vector<2x512xf32>
    %13 = arith.truncf %12 : vector<2x512xf32> to vector<2x512xbf16>
    %c0_10 = arith.constant 0 : index
    %c0_11 = arith.constant 0 : index
    %14 = vector.load %arg5[%c0_10, %c0_11] : memref<512x256xbf16, #tpu.memory_space<vmem>>, vector<512x256xbf16>
    %cst_12 = arith.constant dense<0.000000e+00> : vector<2x256xf32>
    %15 = tpu.matmul %13, %14, %cst_12 {dimension_numbers = #tpu.dot_dimension_numbers<[1], [0], [0], [1], [0, 0, 1, 1], [], []>} : vector<2x512xbf16>, vector<512x256xbf16>, vector<2x256xf32> -> vector<2x256xf32>
    %c0_13 = arith.constant 0 : index
    %c0_14 = arith.constant 0 : index
    %16 = vector.load %arg6[%c0_13, %c0_14] : memref<1x256xf32, #tpu.memory_space<vmem>>, vector<1x256xf32>
    %17 = vector.broadcast %16 : vector<1x256xf32> to vector<2x256xf32>
    %18 = arith.addf %15, %17 : vector<2x256xf32>
    %cst_15 = arith.constant 0.000000e+00 : f32
    %19 = vector.broadcast %cst_15 : f32 to vector<2x256xf32>
    %20 = arith.maximumf %18, %19 : vector<2x256xf32>
    %21 = arith.truncf %20 : vector<2x256xf32> to vector<2x256xbf16>
    %c0_16 = arith.constant 0 : index
    %c0_17 = arith.constant 0 : index
    %22 = vector.load %arg7[%c0_16, %c0_17] : memref<256x2xbf16, #tpu.memory_space<vmem>>, vector<256x2xbf16>
    %cst_18 = arith.constant dense<0.000000e+00> : vector<2x2xf32>
    %23 = tpu.matmul %21, %22, %cst_18 {dimension_numbers = #tpu.dot_dimension_numbers<[1], [0], [0], [1], [0, 0, 1, 1], [], []>} : vector<2x256xbf16>, vector<256x2xbf16>, vector<2x2xf32> -> vector<2x2xf32>
    %c0_19 = arith.constant 0 : index
    %c0_20 = arith.constant 0 : index
    %24 = vector.load %arg8[%c0_19, %c0_20] : memref<1x2xf32, #tpu.memory_space<vmem>>, vector<1x2xf32>
    %25 = vector.broadcast %24 : vector<1x2xf32> to vector<2x2xf32>
    %26 = arith.addf %23, %25 : vector<2x2xf32>
    %cst_21 = arith.constant dense<0xFF800000> : vector<2xf32>
    %27 = vector.multi_reduction <maximumf>, %26, %cst_21 [1] : vector<2x2xf32> to vector<2xf32>
    %28 = vector.shape_cast %27 : vector<2xf32> to vector<2x1xf32>
    %29 = vector.broadcast %28 : vector<2x1xf32> to vector<2x2xf32>
    %30 = arith.subf %26, %29 : vector<2x2xf32>
    %31 = math.exp %30 : vector<2x2xf32>
    %cst_22 = arith.constant dense<0.000000e+00> : vector<2xf32>
    %32 = vector.multi_reduction <add>, %31, %cst_22 [1] : vector<2x2xf32> to vector<2xf32>
    %33 = vector.shape_cast %32 : vector<2xf32> to vector<2x1xf32>
    %34 = math.log %33 : vector<2x1xf32>
    %35 = arith.addf %28, %34 : vector<2x1xf32>
    %36 = vector.broadcast %35 : vector<2x1xf32> to vector<2x2xf32>
    %37 = arith.subf %26, %36 : vector<2x2xf32>
    %c0_23 = arith.constant 0 : index
    %c0_24 = arith.constant 0 : index
    %38 = vector.load %arg9[%c0_23, %c0_24] : memref<2x2xf32, #tpu.memory_space<vmem>>, vector<2x2xf32>
    tpu.vector_store %arg9[%c0_23, %c0_24], %37 {strides = array<i32>} : memref<2x2xf32, #tpu.memory_space<vmem>>, vector<2x2xf32>,
    return
  }
  func.func @transform_0(%arg0: i32) -> (i32, i32, i32) {
    %c0_i32 = arith.constant 0 : i32
    %c0_i32_0 = arith.constant 0 : i32
    %c0_i32_1 = arith.constant 0 : i32
    return %arg0, %c0_i32, %c0_i32_0 : i32, i32, i32
  }
  func.func @transform_1(%arg0: i32) -> (i32, i32) {
    %c0_i32 = arith.constant 0 : i32
    %c0_i32_0 = arith.constant 0 : i32
    %c0_i32_1 = arith.constant 0 : i32
    return %c0_i32, %c0_i32_0 : i32, i32
  }
  func.func @transform_2(%arg0: i32) -> (i32, i32) {
    %c0_i32 = arith.constant 0 : i32
    %c0_i32_0 = arith.constant 0 : i32
    %c0_i32_1 = arith.constant 0 : i32
    return %c0_i32, %c0_i32_0 : i32, i32
  }
  func.func @transform_3(%arg0: i32) -> (i32, i32) {
    %c0_i32 = arith.constant 0 : i32
    %c0_i32_0 = arith.constant 0 : i32
    %c0_i32_1 = arith.constant 0 : i32
    return %c0_i32, %c0_i32_0 : i32, i32
  }
  func.func @transform_4(%arg0: i32) -> (i32, i32) {
    %c0_i32 = arith.constant 0 : i32
    %c0_i32_0 = arith.constant 0 : i32
    %c0_i32_1 = arith.constant 0 : i32
    return %c0_i32, %c0_i32_0 : i32, i32
  }
  func.func @transform_5(%arg0: i32) -> (i32, i32) {
    %c0_i32 = arith.constant 0 : i32
    %c0_i32_0 = arith.constant 0 : i32
    %c0_i32_1 = arith.constant 0 : i32
    return %c0_i32, %c0_i32_0 : i32, i32
  }
  func.func @transform_6(%arg0: i32) -> (i32, i32) {
    %c0_i32 = arith.constant 0 : i32
    %c0_i32_0 = arith.constant 0 : i32
    %c0_i32_1 = arith.constant 0 : i32
    return %c0_i32, %c0_i32_0 : i32, i32
  }
  func.func @transform_7(%arg0: i32) -> (i32, i32) {
    %c0_i32 = arith.constant 0 : i32
    %c0_i32_0 = arith.constant 0 : i32
    %c0_i32_1 = arith.constant 0 : i32
    return %c0_i32, %c0_i32_0 : i32, i32
  }
  func.func @transform_8(%arg0: i32) -> (i32, i32) {
    %c0_i32 = arith.constant 0 : i32
    %c0_i32_0 = arith.constant 0 : i32
    return %arg0, %c0_i32 : i32, i32
  }
}

</mosaic_0001>

<llo_original>
// kernel: pointnet_cls_forward.4
$region0: #{pointnet_cls_forward.4}
  #allocation0 [shape = 'u32[]', space=smem, size = 0x4, offset = 0x4, fixed_abs, tag = 'smem constant byte address 0x4 - core index']
  #allocation1 [shape = 'u32[144,128]{1,0:T(1,128)}', space=vmem, size = 0x12000, scoped, tag = 'internal scratch']
  %s0 = inlined_call_operand.vmem [shape: bf16[2,128,8], index: 0, kind: input, shape index: {}]
  %s1 = inlined_call_operand.vmem [shape: bf16[1,8,64], index: 1, kind: input, shape index: {}]
  %s2 = inlined_call_operand.vmem [shape: f32[1,64], index: 2, kind: input, shape index: {}]
  %s3 = inlined_call_operand.vmem [shape: bf16[64,128], index: 3, kind: input, shape index: {}]
  %s4 = inlined_call_operand.vmem [shape: f32[1,128], index: 4, kind: input, shape index: {}]
  %s5 = inlined_call_operand.hbm [shape: bf16[128,1024], index: 5, kind: input, shape index: {}]
  %s6 = inlined_call_operand.vmem [shape: f32[2,1,8,1024], index: 6, kind: output, shape index: {}]
  %s7 = sld [smem:[#allocation0]]
  $region69: #{pointnet_cls_forward.4} parent=0
    _
  %s9 = ssub.s32 1, %s7
  %s10 = scalar_select 0, %s9, %s7
  $region1: #{pointnet_cls_forward.4} parent=0
    #allocation2 [shape = 'u8[262144]{0}', space=vmem, size = 0x40000, scoped, tag = 'input window, operand 5, single buffered']
    #allocation3 [shape = 's32[2]{0}', space=sflag, size = 0x8, scoped, tag = 'scoped memory for pointnet_cls_forward.4']
    %11 = vsyncpa [#allocation3], 0
    loop: start=0, step=1, limit=4
    $region2: #{pointnet_cls_forward.4} parent=1 // loop_pre_header
      _
    $region3: #{pointnet_cls_forward.4} parent=1 // loop_header
      %s13 = sphi 0, %s17
      %p14 = scmp.ge.s32.totalorder %s13, 4
      %s20 = sphi 0, %s39
      %s21 = sphi 0, %s35
      %s22 = sphi 0, %s31
      %s23 = sphi 0, %s20
      %s24 = sphi 0, %s21
      %s25 = sphi 0, %s22
      %s26 = sphi 0, %s23
      %s27 = sphi 0, %s24
      %s28 = sphi 0, %s25
      %s46 = sphi 0, %s48
      %s49 = sphi 0, %s46
      %s50 = sphi 0, %s49
      %s66 = sphi 0, %s50
      %s70 = sphi 0, %s70
      %s72 = sphi 0, %s70
      %s73 = sphi 0, %s72
      %s87 = sphi 0, %s73
      %s91 = sphi 0, %s91
      %s93 = sphi 0, %s91
      %s94 = sphi 0, %s93
      %s108 = sphi 0, %s94
      %s112 = sphi 0, %s112
      %s114 = sphi 0, %s112
      %s115 = sphi 0, %s114
      %s129 = sphi 0, %s115
      %s133 = sphi 0, %s133
      %s135 = sphi 0, %s133
      %s136 = sphi 0, %s135
      %s150 = sphi 0, %s136
      %s154 = sphi 0, %s154
      %s156 = sphi 0, %s154
      %s157 = sphi 0, %s156
      %s171 = sphi 0, %s157
      %s179 = sphi 0, %s181
      %s182 = sphi 0, %s179
      %s183 = sphi 0, %s182
      %s199 = sphi 0, %s183
    $region4: #{pointnet_cls_forward.4} parent=1 // loop_header_branch
      %16 = sbr.rel (%p14) target = $region8
    $region5: #{pointnet_cls_forward.4} parent=1 // loop_body
      %s18 = ssub.s32 %s13, 1
      %s19 = ssub.s32 %s13, 2
      %s29 = sadd.s32 1, %s22
      %p30 = scmp.ge.s32.totalorder %s29, 1
      %s31 = scalar_select %p30, 0, %s29
      %s32 = sadd.s32 1, %s21
      %s33 = scalar_select %p30, %s32, %s21
      %p34 = scmp.ge.s32.totalorder %s33, 1
      %s35 = scalar_select %p34, 0, %s33
      %s36 = sadd.s32 1, %s20
      %s37 = scalar_select %p34, %s36, %s20
      %p38 = scmp.ge.s32.totalorder %s37, 2
      %s39 = scalar_select %p38, 0, %s37
      %s40 = sadd.s32 %s21, %s22
      %s41 = sadd.s32 %s35, %s31
      %s42 = ssub.s32 %s20, %s39
      %s43 = ssub.s32 %s40, %s41
      %s44 = sor.u32 %s42, %s43
      %p45 = scmp.eq.s32.totalorder %s44, 0
      %s47 = sadd.s32 %s46, 1
      %s48 = scalar_select %p45, %s46, %s47
      %p51 = pneg %p45
      %p52 = scmp.eq.s32.totalorder %s13, 1
      %p53 = por %p51, %p52
      %p54 = scmp.ne.s32.totalorder %s46, %s49
      %p55 = scmp.eq.s32.totalorder %s13, 0
      %p56 = por %p54, %p55
      %p57 = scmp.ne.s32.totalorder %s46, %s49
      %p58 = scmp.eq.s32.totalorder %s18, 1
      %p59 = por %p57, %p58
      %p60 = scmp.ne.s32.totalorder %s49, %s50
      %p61 = scmp.eq.s32.totalorder %s18, 0
      %p62 = por %p60, %p61
      %p63 = scmp.ne.s32.totalorder %s49, %s50
      %p64 = scmp.eq.s32.totalorder %s19, 1
      %p65 = por %p63, %p64
      %p67 = scmp.ne.s32.totalorder %s50, %s66
      %p68 = scmp.eq.s32.totalorder %s19, 0
      %p69 = por %p67, %p68
      %s71 = sadd.s32 %s70, 1
      %p74 = scmp.eq.s32.totalorder %s13, 1
      %p75 = scmp.ne.s32.totalorder %s70, %s72
      %p76 = scmp.eq.s32.totalorder %s13, 0
      %p77 = por %p75, %p76
      %p78 = scmp.ne.s32.totalorder %s70, %s72
      %p79 = scmp.eq.s32.totalorder %s18, 1
      %p80 = por %p78, %p79
      %p81 = scmp.ne.s32.totalorder %s72, %s73
      %p82 = scmp.eq.s32.totalorder %s18, 0
      %p83 = por %p81, %p82
      %p84 = scmp.ne.s32.totalorder %s72, %s73
      %p85 = scmp.eq.s32.totalorder %s19, 1
      %p86 = por %p84, %p85
      %p88 = scmp.ne.s32.totalorder %s73, %s87
      %p89 = scmp.eq.s32.totalorder %s19, 0
      %p90 = por %p88, %p89
      %s92 = sadd.s32 %s91, 1
      %p95 = scmp.eq.s32.totalorder %s13, 1
      %p96 = scmp.ne.s32.totalorder %s91, %s93
      %p97 = scmp.eq.s32.totalorder %s13, 0
      %p98 = por %p96, %p97
      %p99 = scmp.ne.s32.totalorder %s91, %s93
      %p100 = scmp.eq.s32.totalorder %s18, 1
      %p101 = por %p99, %p100
      %p102 = scmp.ne.s32.totalorder %s93, %s94
      %p103 = scmp.eq.s32.totalorder %s18, 0
      %p104 = por %p102, %p103
      %p105 = scmp.ne.s32.totalorder %s93, %s94
      %p106 = scmp.eq.s32.totalorder %s19, 1
      %p107 = por %p105, %p106
      %p109 = scmp.ne.s32.totalorder %s94, %s108
      %p110 = scmp.eq.s32.totalorder %s19, 0
      %p111 = por %p109, %p110
      %s113 = sadd.s32 %s112, 1
      %p116 = scmp.eq.s32.totalorder %s13, 1
      %p117 = scmp.ne.s32.totalorder %s112, %s114
      %p118 = scmp.eq.s32.totalorder %s13, 0
      %p119 = por %p117, %p118
      %p120 = scmp.ne.s32.totalorder %s112, %s114
      %p121 = scmp.eq.s32.totalorder %s18, 1
      %p122 = por %p120, %p121
      %p123 = scmp.ne.s32.totalorder %s114, %s115
      %p124 = scmp.eq.s32.totalorder %s18, 0
      %p125 = por %p123, %p124
      %p126 = scmp.ne.s32.totalorder %s114, %s115
      %p127 = scmp.eq.s32.totalorder %s19, 1
      %p128 = por %p126, %p127
      %p130 = scmp.ne.s32.totalorder %s115, %s129
      %p131 = scmp.eq.s32.totalorder %s19, 0
      %p132 = por %p130, %p131
      %s134 = sadd.s32 %s133, 1
      %p137 = scmp.eq.s32.totalorder %s13, 1
      %p138 = scmp.ne.s32.totalorder %s133, %s135
      %p139 = scmp.eq.s32.totalorder %s13, 0
      %p140 = por %p138, %p139
      %p141 = scmp.ne.s32.totalorder %s133, %s135
      %p142 = scmp.eq.s32.totalorder %s18, 1
      %p143 = por %p141, %p142
      %p144 = scmp.ne.s32.totalorder %s135, %s136
      %p145 = scmp.eq.s32.totalorder %s18, 0
      %p146 = por %p144, %p145
      %p147 = scmp.ne.s32.totalorder %s135, %s136
      %p148 = scmp.eq.s32.totalorder %s19, 1
      %p149 = por %p147, %p148
      %p151 = scmp.ne.s32.totalorder %s136, %s150
      %p152 = scmp.eq.s32.totalorder %s19, 0
      %p153 = por %p151, %p152
      %s155 = sadd.s32 %s154, 1
      %p158 = scmp.eq.s32.totalorder %s13, 1
      %p159 = scmp.ne.s32.totalorder %s154, %s156
      %p160 = scmp.eq.s32.totalorder %s13, 0
      %p161 = por %p159, %p160
      %p162 = scmp.ne.s32.totalorder %s154, %s156
      %p163 = scmp.eq.s32.totalorder %s18, 1
      %p164 = por %p162, %p163
      %p165 = scmp.ne.s32.totalorder %s156, %s157
      %p166 = scmp.eq.s32.totalorder %s18, 0
      %p167 = por %p165, %p166
      %p168 = scmp.ne.s32.totalorder %s156, %s157
      %p169 = scmp.eq.s32.totalorder %s19, 1
      %p170 = por %p168, %p169
      %p172 = scmp.ne.s32.totalorder %s157, %s171
      %p173 = scmp.eq.s32.totalorder %s19, 0
      %p174 = por %p172, %p173
      %s175 = ssub.s32 %s20, %s39
      %s176 = ssub.s32 %s21, %s35
      %s177 = sor.u32 %s175, %s176
      %p178 = scmp.eq.s32.totalorder %s177, 0
      %s180 = sadd.s32 %s179, 1
      %s181 = scalar_select %p178, %s179, %s180
      %p184 = pneg %p178
      %p185 = scmp.eq.s32.totalorder %s13, 1
      %p186 = por %p184, %p185
      %p187 = scmp.ne.s32.totalorder %s179, %s182
      %p188 = scmp.eq.s32.totalorder %s13, 0
      %p189 = por %p187, %p188
      %p190 = scmp.ne.s32.totalorder %s179, %s182
      %p191 = scmp.eq.s32.totalorder %s18, 1
      %p192 = por %p190, %p191
      %p193 = scmp.ne.s32.totalorder %s182, %s183
      %p194 = scmp.eq.s32.totalorder %s18, 0
      %p195 = por %p193, %p194
      %p196 = scmp.ne.s32.totalorder %s182, %s183
      %p197 = scmp.eq.s32.totalorder %s19, 1
      %p198 = por %p196, %p197
      %p200 = scmp.ne.s32.totalorder %s183, %s199
      %p201 = scmp.eq.s32.totalorder %s19, 0
      %p202 = por %p200, %p201
      %p203 = scmp.le.s32.totalorder 1, %s13
      %p204 = scmp.lt.s32.totalorder %s13, 3
      %p205 = pnand %p203, %p204
      %p206 = pneg %p205
      // Predicated region
      $region9: #{pointnet_cls_forward.4} parent=5 // pred_check
        _
      $region10: #{pointnet_cls_forward.4} parent=5 // pred_check_branch
        %208 = sbr.rel (%p205) target = $region12
      $region11: #{pointnet_cls_forward.4} parent=5 // pred_region
        %s209 = ssub.s32 %s13, 1
        // Predicated region
        $region13: #{pointnet_cls_forward.4} parent=11 // pred_check
          %p210 = pneg %p83
        $region14: #{pointnet_cls_forward.4} parent=11 // pred_check_branch
          %212 = sbr.rel (%p210) target = $region16
        $region15: #{pointnet_cls_forward.4} parent=11 // pred_region
          _
        $region16: #{pointnet_cls_forward.4} parent=11 // pred_fallthru
          _
        // Predicated region
        $region17: #{pointnet_cls_forward.4} parent=11 // pred_check
          %p213 = pneg %p104
        $region18: #{pointnet_cls_forward.4} parent=11 // pred_check_branch
          %215 = sbr.rel (%p213) target = $region20
        $region19: #{pointnet_cls_forward.4} parent=11 // pred_region
          _
        $region20: #{pointnet_cls_forward.4} parent=11 // pred_fallthru
          _
        // Predicated region
        $region21: #{pointnet_cls_forward.4} parent=11 // pred_check
          %p216 = pneg %p125
        $region22: #{pointnet_cls_forward.4} parent=11 // pred_check_branch
          %218 = sbr.rel (%p216) target = $region24
        $region23: #{pointnet_cls_forward.4} parent=11 // pred_region
          _
        $region24: #{pointnet_cls_forward.4} parent=11 // pred_fallthru
          _
        // Predicated region
        $region25: #{pointnet_cls_forward.4} parent=11 // pred_check
          %p219 = pneg %p146
        $region26: #{pointnet_cls_forward.4} parent=11 // pred_check_branch
          %221 = sbr.rel (%p219) target = $region28
        $region27: #{pointnet_cls_forward.4} parent=11 // pred_region
          _
        $region28: #{pointnet_cls_forward.4} parent=11 // pred_fallthru
          _
        // Predicated region
        $region29: #{pointnet_cls_forward.4} parent=11 // pred_check
          %p222 = pneg %p167
        $region30: #{pointnet_cls_forward.4} parent=11 // pred_check_branch
          %224 = sbr.rel (%p222) target = $region32
        $region31: #{pointnet_cls_forward.4} parent=11 // pred_region
          %s226 = ssub.s32 8192, 8192
          %227 = vsyncadd [#allocation3], %s226
          %s228 = sshll.u32 [#allocation2], 4
          %s229 = int_to_ptr.vmem [resolvable:$true] %s228
          %234 = dma.hbm_to_vmem [thread:$0]  %s5, 8192, %s229, [#allocation3], 512, 512, 32
        $region32: #{pointnet_cls_forward.4} parent=11 // pred_fallthru
          _
      $region12: #{pointnet_cls_forward.4} parent=5 // pred_fallthru
        _
      %p235 = scmp.lt.s32.totalorder %s13, 2
      // Predicated region
      $region33: #{pointnet_cls_forward.4} parent=5 // pred_check
        %p236 = pneg %p235
      $region34: #{pointnet_cls_forward.4} parent=5 // pred_check_branch
        %238 = sbr.rel (%p236) target = $region36
      $region35: #{pointnet_cls_forward.4} parent=5 // pred_region
        // Predicated region
        $region37: #{pointnet_cls_forward.4} parent=35 // pred_check
          %p239 = pneg %p56
        $region38: #{pointnet_cls_forward.4} parent=35 // pred_check_branch
          %241 = sbr.rel (%p239) target = $region40
        $region39: #{pointnet_cls_forward.4} parent=35 // pred_region
          %s242 = sadd.s32 %s21, %s22
          %s243 = smul.u32 16, %s242
          %p244 = scmp.lt.s32.totalorder %s20, 1
          %s245 = scalar_select %p244, %s20, 1
          %p246 = scmp.lt.s32.totalorder %s243, 15
          %s247 = scalar_select %p246, %s243, 15
          %s248 = smul.addr %s245, 16
          %s249 = sadd.s32 %s247, %s248
          %s250 = smul.addr %s249, 4
          %s251 = scalar_lea.vmem %s0, %s250
          %s252 = sadd.s32 %s21, %s22
          %s253 = smul.u32 16, %s252
        $region40: #{pointnet_cls_forward.4} parent=35 // pred_fallthru
          _
      $region36: #{pointnet_cls_forward.4} parent=5 // pred_fallthru
        _
      %p254 = scmp.le.s32.totalorder 1, %s13
      %p255 = scmp.lt.s32.totalorder %s13, 3
      %p256 = pnand %p254, %p255
      %p257 = pneg %p256
      // Predicated region
      $region41: #{pointnet_cls_forward.4} parent=5 // pred_check
        _
      $region42: #{pointnet_cls_forward.4} parent=5 // pred_check_branch
        %259 = sbr.rel (%p256) target = $region44
      $region43: #{pointnet_cls_forward.4} parent=5 // pred_region
        %s260 = ssub.s32 %s13, 1
        // Predicated region
        $region45: #{pointnet_cls_forward.4} parent=43 // pred_check
          %p261 = pneg %p167
        $region46: #{pointnet_cls_forward.4} parent=43 // pred_check_branch
          %263 = sbr.rel (%p261) target = $region48
        $region47: #{pointnet_cls_forward.4} parent=43 // pred_region
          %264 = dma.done [#allocation3], 8192
        $region48: #{pointnet_cls_forward.4} parent=43 // pred_fallthru
          _
        %s265 = sadd.s32 %s24, %s25
        %s266 = smul.u32 16, %s265
        %p267 = scmp.lt.s32.totalorder %s23, 1
        %s268 = scalar_select %p267, %s23, 1
        %p269 = scmp.lt.s32.totalorder %s266, 15
        %s270 = scalar_select %p269, %s266, 15
        %s271 = smul.addr %s268, 16
        %s272 = sadd.s32 %s270, %s271
        %s273 = smul.addr %s272, 4
        %s274 = scalar_lea.vmem %s0, %s273
        %p275 = pneg %p62
        %p276 = pneg %p59
        %p277 = pneg %p83
        %p278 = pneg %p80
        %p279 = pneg %p104
        %p280 = pneg %p101
        %p281 = pneg %p125
        %p282 = pneg %p122
        %p283 = pneg %p146
        %p284 = pneg %p143
        %p285 = pneg %p167
        %p286 = pneg %p164
        %p287 = pneg %p195
        %p288 = pneg %p192
        %p289 = scmp.lt.s32.totalorder %s23, 1
        %s290 = scalar_select %p289, %s23, 1
        %p291 = scmp.lt.s32.totalorder %s24, 0
        %s292 = scalar_select %p291, %s24, 0
        %s293 = smul.addr %s292, 8
        %s294 = smul.addr %s290, 8
        %s295 = sadd.s32 %s293, %s294
        %s296 = smul.addr %s295, 8
        %s297 = scalar_lea.vmem %s6, %s296
        %s298 = sadd.s32 %s24, %s25
        %s299 = smul.u32 16, %s298
        %p300 = scmp.lt.s32.totalorder %s23, 1
        %s301 = scalar_select %p300, %s23, 1
        %p302 = scmp.lt.s32.totalorder %s299, 15
        %s303 = scalar_select %p302, %s299, 15
        %s304 = smul.addr %s301, 16
        %s305 = sadd.s32 %s303, %s304
        %s306 = smul.addr %s305, 4
        %s307 = scalar_lea.vmem %s0, %s306
        %s308 = sadd.s32 %s24, %s25
        %s309 = smul.u32 16, %s308
        %p310 = scmp.lt.s32.totalorder %s23, 1
        %s311 = scalar_select %p310, %s23, 1
        %p312 = scmp.lt.s32.totalorder %s24, 0
        %s313 = scalar_select %p312, %s24, 0
        %s314 = smul.addr %s313, 8
        %s315 = smul.addr %s311, 8
        %s316 = sadd.s32 %s314, %s315
        %s317 = smul.addr %s316, 8
        %s318 = scalar_lea.vmem %s6, %s317
        %v320 = vld [vmem:[%s307] sm:$0xf]
        %v321 = vld [vmem:[%s307 + $0x4] sm:$0xf]
        %v322 = vld [vmem:[%s307 + $0x8] sm:$0xf]
        %v323 = vld [vmem:[%s307 + $0xc] sm:$0xf]
        %v324 = vld [vmem:[%s307 + $0x10] sm:$0xf]
        %v325 = vld [vmem:[%s307 + $0x14] sm:$0xf]
        %v326 = vld [vmem:[%s307 + $0x18] sm:$0xf]
        %v327 = vld [vmem:[%s307 + $0x1c] sm:$0xf]
        %v328 = vld [vmem:[%s307 + $0x20] sm:$0xf]
        %v329 = vld [vmem:[%s307 + $0x24] sm:$0xf]
        %v330 = vld [vmem:[%s307 + $0x28] sm:$0xf]
        %v331 = vld [vmem:[%s307 + $0x2c] sm:$0xf]
        %v332 = vld [vmem:[%s307 + $0x30] sm:$0xf]
        %v333 = vld [vmem:[%s307 + $0x34] sm:$0xf]
        %v334 = vld [vmem:[%s307 + $0x38] sm:$0xf]
        %v335 = vld [vmem:[%s307 + $0x3c] sm:$0xf]
        %v336 = vld [vmem:[%s1] sm:$0xf]
        %v337 = vld [vmem:[%s2] sm:$0x1]
        %v339 = vlaneseq
        %v340 = vshrl.u32 %v339, 7
        %v341 = vsub.s32 0, %v340
        %v342 = vrot.slane %v337, %v341
        %v360 = vunpack.c.l.b16 %v320
        %v361 = vunpack.c.l.b16 %v321
        %v362 = vunpack.c.l.b16 %v322
        %v363 = vunpack.c.l.b16 %v323
        %v364 = vunpack.c.l.b16 %v324
        %v365 = vunpack.c.l.b16 %v325
        %v366 = vunpack.c.l.b16 %v326
        %v367 = vunpack.c.l.b16 %v327
        %v368 = vunpack.c.l.b16 %v328
        %v369 = vunpack.c.l.b16 %v329
        %v370 = vunpack.c.l.b16 %v330
        %v371 = vunpack.c.l.b16 %v331
        %v372 = vunpack.c.l.b16 %v332
        %v373 = vunpack.c.l.b16 %v333
        %v374 = vunpack.c.l.b16 %v334
        %v375 = vunpack.c.l.b16 %v335
        %v376 = vpack.c.b16 %v361, %v360
        %v377 = vpack.c.b16 %v363, %v362
        %v378 = vpack.c.b16 %v365, %v364
        %v379 = vpack.c.b16 %v367, %v366
        %v380 = vpack.c.b16 %v369, %v368
        %v381 = vpack.c.b16 %v371, %v370
        %v382 = vpack.c.b16 %v373, %v372
        %v383 = vpack.c.b16 %v375, %v374
        %vm384 = vcmask 64512
        %v386 = vsel %vm384, %v376, 0
        %v389 = vsel %vm384, %v377, 0
        %v392 = vsel %vm384, %v378, 0
        %v395 = vsel %vm384, %v379, 0
        %v398 = vsel %vm384, %v380, 0
        %v401 = vsel %vm384, %v381, 0
        %v404 = vsel %vm384, %v382, 0
        %v407 = vsel %vm384, %v383, 0
        %vm409 = vcmask 1043456
        %v411 = vsel %vm409, %v336, 0
        %413 = vmatprep.subr.bf16.mxu0 0
        %414 = vmatpush1.bf16.msra.mxu0 %v411
        %415 = vmatprep.subr.bf16.mxu0 0
        %416 = vmatpush1.bf16.msra.mxu0 0
        %417 = vmatprep.subr.bf16.mxu0 0
        %418 = vmatpush1.bf16.msra.mxu0 0
        %419 = vmatprep.subr.bf16.mxu0 0
        %420 = vmatpush1.bf16.msra.mxu0 0
        %421 = vmatprep.subr.bf16.mxu0 0
        %422 = vmatpush1.bf16.msra.mxu0 0
        %423 = vmatprep.subr.bf16.mxu0 0
        %424 = vmatpush1.bf16.msra.mxu0 0
        %425 = vmatprep.subr.bf16.mxu0 0
        %426 = vmatpush1.bf16.msra.mxu0 0
        %427 = vmatprep.subr.bf16.mxu0 0
        %428 = vmatpush1.bf16.msra.mxu0 0
        %429 = vmatprep.subr.bf16.mxu0 0
        %430 = vmatpush1.bf16.msra.mxu0 0
        %431 = vmatprep.subr.bf16.mxu0 0
        %432 = vmatpush1.bf16.msra.mxu0 0
        %433 = vmatprep.subr.bf16.mxu0 0
        %434 = vmatpush1.bf16.msra.mxu0 0
        %435 = vmatprep.subr.bf16.mxu0 0
        %436 = vmatpush1.bf16.msra.mxu0 0
        %437 = vmatprep.subr.bf16.mxu0 0
        %438 = vmatpush1.bf16.msra.mxu0 0
        %439 = vmatprep.subr.bf16.mxu0 0
        %440 = vmatpush1.bf16.msra.mxu0 0
        %441 = vmatprep.subr.bf16.mxu0 0
        %442 = vmatpush1.bf16.msra.mxu0 0
        %443 = vmatprep.subr.bf16.mxu0 0
        %444 = vmatpush1.bf16.msra.mxu0 0
        %445 = vmatprep.mubr.bf16.mxu0 0
        %446 = vmatmul.mubr.bf16.gmra.mrb[0].mxu0 %v386
        %v447 = vpop.f32.mrb[0].mxu0
        %v448 = vadd.f32 %v342, %v447
        %v449 = vpop.f32.mrb[0].mxu0
        %v450 = vpop.f32.mrb[0].mxu0
        %v451 = vadd.f32 %v342, %v450
        %v452 = vpop.f32.mrb[0].mxu0
        %453 = vmatprep.mubr.bf16.mxu0 0
        %454 = vmatmul.mubr.bf16.gmra.mrb[0].mxu0 %v389
        %v455 = vpop.f32.mrb[0].mxu0
        %v456 = vadd.f32 %v342, %v455
        %v457 = vpop.f32.mrb[0].mxu0
        %v458 = vpop.f32.mrb[0].mxu0
        %v459 = vadd.f32 %v342, %v458
        %v460 = vpop.f32.mrb[0].mxu0
        %461 = vmatprep.mubr.bf16.mxu0 0
        %462 = vmatmul.mubr.bf16.gmra.mrb[0].mxu0 %v392
        %v463 = vpop.f32.mrb[0].mxu0
        %v464 = vadd.f32 %v342, %v463
        %v465 = vpop.f32.mrb[0].mxu0
        %v466 = vpop.f32.mrb[0].mxu0
        %v467 = vadd.f32 %v342, %v466
        %v468 = vpop.f32.mrb[0].mxu0
        %469 = vmatprep.mubr.bf16.mxu0 0
        %470 = vmatmul.mubr.bf16.gmra.mrb[0].mxu0 %v395
        %v471 = vpop.f32.mrb[0].mxu0
        %v472 = vadd.f32 %v342, %v471
        %v473 = vpop.f32.mrb[0].mxu0
        %v474 = vpop.f32.mrb[0].mxu0
        %v475 = vadd.f32 %v342, %v474
        %v476 = vpop.f32.mrb[0].mxu0
        %477 = vmatprep.mubr.bf16.mxu0 0
        %478 = vmatmul.mubr.bf16.gmra.mrb[0].mxu0 %v398
        %v479 = vpop.f32.mrb[0].mxu0
        %v480 = vadd.f32 %v342, %v479
        %v481 = vpop.f32.mrb[0].mxu0
        %v482 = vpop.f32.mrb[0].mxu0
        %v483 = vadd.f32 %v342, %v482
        %v484 = vpop.f32.mrb[0].mxu0
        %485 = vmatprep.mubr.bf16.mxu0 0
        %486 = vmatmul.mubr.bf16.gmra.mrb[0].mxu0 %v401
        %v487 = vpop.f32.mrb[0].mxu0
        %v488 = vadd.f32 %v342, %v487
        %v489 = vpop.f32.mrb[0].mxu0
        %v490 = vpop.f32.mrb[0].mxu0
        %v491 = vadd.f32 %v342, %v490
        %v492 = vpop.f32.mrb[0].mxu0
        %493 = vmatprep.mubr.bf16.mxu0 0
        %494 = vmatmul.mubr.bf16.gmra.mrb[0].mxu0 %v404
        %v495 = vpop.f32.mrb[0].mxu0
        %v496 = vadd.f32 %v342, %v495
        %v497 = vpop.f32.mrb[0].mxu0
        %v498 = vpop.f32.mrb[0].mxu0
        %v499 = vadd.f32 %v342, %v498
        %v500 = vpop.f32.mrb[0].mxu0
        %501 = vmatprep.mubr.bf16.mxu0 0
        %502 = vmatmul.mubr.bf16.gmra.mrb[0].mxu0 %v407
        %v503 = vpop.f32.mrb[0].mxu0
        %v504 = vadd.f32 %v342, %v503
        %v505 = vpop.f32.mrb[0].mxu0
        %v506 = vpop.f32.mrb[0].mxu0
        %v507 = vadd.f32 %v342, %v506
        %v508 = vpop.f32.mrb[0].mxu0
        %509 = vdwg.mxu0
        %v510 = vmax.f32 %v448, 0.0
        %v511 = vmax.f32 %v451, 0.0
        %v512 = vmax.f32 %v456, 0.0
        %v513 = vmax.f32 %v459, 0.0
        %v514 = vmax.f32 %v464, 0.0
        %v515 = vmax.f32 %v467, 0.0
        %v516 = vmax.f32 %v472, 0.0
        %v517 = vmax.f32 %v475, 0.0
        %v518 = vmax.f32 %v480, 0.0
        %v519 = vmax.f32 %v483, 0.0
        %v520 = vmax.f32 %v488, 0.0
        %v521 = vmax.f32 %v491, 0.0
        %v522 = vmax.f32 %v496, 0.0
        %v523 = vmax.f32 %v499, 0.0
        %v524 = vmax.f32 %v504, 0.0
        %v525 = vmax.f32 %v507, 0.0
        %v526 = vpack.c.bf16 %v511, %v510
        %v527 = vpack.c.bf16 %v513, %v512
        %v528 = vpack.c.bf16 %v515, %v514
        %v529 = vpack.c.bf16 %v517, %v516
        %v530 = vpack.c.bf16 %v519, %v518
        %v531 = vpack.c.bf16 %v521, %v520
        %v532 = vpack.c.bf16 %v523, %v522
        %v533 = vpack.c.bf16 %v525, %v524
        %v534 = vld [vmem:[%s3] sm:$0xf]
        %v535 = vld [vmem:[%s3 + $0x4] sm:$0xf]
        %v536 = vld [vmem:[%s3 + $0x8] sm:$0xf]
        %v537 = vld [vmem:[%s3 + $0xc] sm:$0xf]
        %v538 = vld [vmem:[%s3 + $0x10] sm:$0xf]
        %v539 = vld [vmem:[%s3 + $0x14] sm:$0xf]
        %v540 = vld [vmem:[%s3 + $0x18] sm:$0xf]
        %v541 = vld [vmem:[%s3 + $0x1c] sm:$0xf]
        %v542 = vld [vmem:[%s4] sm:$0x1]
        %v544 = vlaneseq
        %v545 = vshrl.u32 %v544, 7
        %v546 = vsub.s32 0, %v545
        %v547 = vrot.slane %v542, %v546
        %v557 = vunpack.c.l.b16 %v534
        %v558 = vunpack.c.l.b16 %v535
        %v559 = vunpack.c.l.b16 %v536
        %v560 = vunpack.c.l.b16 %v537
        %v561 = vunpack.c.l.b16 %v538
        %v562 = vunpack.c.l.b16 %v539
        %v563 = vunpack.c.l.b16 %v540
        %v564 = vunpack.c.l.b16 %v541
        %v565 = vpack.c.b16 %v558, %v557
        %v566 = vpack.c.b16 %v560, %v559
        %v567 = vpack.c.b16 %v562, %v561
        %v568 = vpack.c.b16 %v564, %v563
        %vm573 = vcmask 523264
        %v575 = vsel %vm573, %v526, 0
        %v578 = vsel %vm573, %v527, 0
        %v581 = vsel %vm573, %v528, 0
        %v584 = vsel %vm573, %v529, 0
        %v587 = vsel %vm573, %v530, 0
        %v590 = vsel %vm573, %v531, 0
        %v593 = vsel %vm573, %v532, 0
        %v596 = vsel %vm573, %v533, 0
        %598 = vmatprep.subr.bf16.mxu0 0
        %599 = vmatpush1.bf16.msra.mxu0 %v565
        %600 = vmatprep.subr.bf16.mxu0 0
        %601 = vmatpush1.bf16.msra.mxu0 %v566
        %602 = vmatprep.subr.bf16.mxu0 0
        %603 = vmatpush1.bf16.msra.mxu0 %v567
        %604 = vmatprep.subr.bf16.mxu0 0
        %605 = vmatpush1.bf16.msra.mxu0 %v568
        %606 = vmatprep.subr.bf16.mxu0 0
        %607 = vmatpush1.bf16.msra.mxu0 0
        %608 = vmatprep.subr.bf16.mxu0 0
        %609 = vmatpush1.bf16.msra.mxu0 0
        %610 = vmatprep.subr.bf16.mxu0 0
        %611 = vmatpush1.bf16.msra.mxu0 0
        %612 = vmatprep.subr.bf16.mxu0 0
        %613 = vmatpush1.bf16.msra.mxu0 0
        %614 = vmatprep.subr.bf16.mxu0 0
        %615 = vmatpush1.bf16.msra.mxu0 0
        %616 = vmatprep.subr.bf16.mxu0 0
        %617 = vmatpush1.bf16.msra.mxu0 0
        %618 = vmatprep.subr.bf16.mxu0 0
        %619 = vmatpush1.bf16.msra.mxu0 0
        %620 = vmatprep.subr.bf16.mxu0 0
        %621 = vmatpush1.bf16.msra.mxu0 0
        %622 = vmatprep.subr.bf16.mxu0 0
        %623 = vmatpush1.bf16.msra.mxu0 0
        %624 = vmatprep.subr.bf16.mxu0 0
        %625 = vmatpush1.bf16.msra.mxu0 0
        %626 = vmatprep.subr.bf16.mxu0 0
        %627 = vmatpush1.bf16.msra.mxu0 0
        %628 = vmatprep.subr.bf16.mxu0 0
        %629 = vmatpush1.bf16.msra.mxu0 0
        %630 = vmatprep.mubr.bf16.mxu0 0
        %631 = vmatmul.mubr.bf16.gmra.mrb[0].mxu0 %v575
        %v632 = vpop.f32.mrb[0].mxu0
        %v633 = vadd.f32 %v547, %v632
        %v634 = vpop.f32.mrb[0].mxu0
        %v635 = vpop.f32.mrb[0].mxu0
        %v636 = vadd.f32 %v547, %v635
        %v637 = vpop.f32.mrb[0].mxu0
        %638 = vmatprep.mubr.bf16.mxu0 0
        %639 = vmatmul.mubr.bf16.gmra.mrb[0].mxu0 %v578
        %v640 = vpop.f32.mrb[0].mxu0
        %v641 = vadd.f32 %v547, %v640
        %v642 = vpop.f32.mrb[0].mxu0
        %v643 = vpop.f32.mrb[0].mxu0
        %v644 = vadd.f32 %v547, %v643
        %v645 = vpop.f32.mrb[0].mxu0
        %646 = vmatprep.mubr.bf16.mxu0 0
        %647 = vmatmul.mubr.bf16.gmra.mrb[0].mxu0 %v581
        %v648 = vpop.f32.mrb[0].mxu0
        %v649 = vadd.f32 %v547, %v648
        %v650 = vpop.f32.mrb[0].mxu0
        %v651 = vpop.f32.mrb[0].mxu0
        %v652 = vadd.f32 %v547, %v651
        %v653 = vpop.f32.mrb[0].mxu0
        %654 = vmatprep.mubr.bf16.mxu0 0
        %655 = vmatmul.mubr.bf16.gmra.mrb[0].mxu0 %v584
        %v656 = vpop.f32.mrb[0].mxu0
        %v657 = vadd.f32 %v547, %v656
        %v658 = vpop.f32.mrb[0].mxu0
        %v659 = vpop.f32.mrb[0].mxu0
        %v660 = vadd.f32 %v547, %v659
        %v661 = vpop.f32.mrb[0].mxu0
        %662 = vmatprep.mubr.bf16.mxu0 0
        %663 = vmatmul.mubr.bf16.gmra.mrb[0].mxu0 %v587
        %v664 = vpop.f32.mrb[0].mxu0
        %v665 = vadd.f32 %v547, %v664
        %v666 = vpop.f32.mrb[0].mxu0
        %v667 = vpop.f32.mrb[0].mxu0
        %v668 = vadd.f32 %v547, %v667
        %v669 = vpop.f32.mrb[0].mxu0
        %670 = vmatprep.mubr.bf16.mxu0 0
        %671 = vmatmul.mubr.bf16.gmra.mrb[0].mxu0 %v590
        %v672 = vpop.f32.mrb[0].mxu0
        %v673 = vadd.f32 %v547, %v672
        %v674 = vpop.f32.mrb[0].mxu0
        %v675 = vpop.f32.mrb[0].mxu0
        %v676 = vadd.f32 %v547, %v675
        %v677 = vpop.f32.mrb[0].mxu0
        %678 = vmatprep.mubr.bf16.mxu0 0
        %679 = vmatmul.mubr.bf16.gmra.mrb[0].mxu0 %v593
        %v680 = vpop.f32.mrb[0].mxu0
        %v681 = vadd.f32 %v547, %v680
        %v682 = vpop.f32.mrb[0].mxu0
        %v683 = vpop.f32.mrb[0].mxu0
        %v684 = vadd.f32 %v547, %v683
        %v685 = vpop.f32.mrb[0].mxu0
        %686 = vmatprep.mubr.bf16.mxu0 0
        %687 = vmatmul.mubr.bf16.gmra.mrb[0].mxu0 %v596
        %v688 = vpop.f32.mrb[0].mxu0
        %v689 = vadd.f32 %v547, %v688
        %v690 = vpop.f32.mrb[0].mxu0
        %v691 = vpop.f32.mrb[0].mxu0
        %v692 = vadd.f32 %v547, %v691
        %v693 = vpop.f32.mrb[0].mxu0
        %694 = vdwg.mxu0
        %v695 = vmax.f32 %v633, 0.0
        %v696 = vmax.f32 %v636, 0.0
        %v697 = vmax.f32 %v641, 0.0
        %v698 = vmax.f32 %v644, 0.0
        %v699 = vmax.f32 %v649, 0.0
        %v700 = vmax.f32 %v652, 0.0
        %v701 = vmax.f32 %v657, 0.0
        %v702 = vmax.f32 %v660, 0.0
        %v703 = vmax.f32 %v665, 0.0
        %v704 = vmax.f32 %v668, 0.0
        %v705 = vmax.f32 %v673, 0.0
        %v706 = vmax.f32 %v676, 0.0
        %v707 = vmax.f32 %v681, 0.0
        %v708 = vmax.f32 %v684, 0.0
        %v709 = vmax.f32 %v689, 0.0
        %v710 = vmax.f32 %v692, 0.0
        %v711 = vpack.c.bf16 %v696, %v695
        %v712 = vpack.c.bf16 %v698, %v697
        %v713 = vpack.c.bf16 %v700, %v699
        %v714 = vpack.c.bf16 %v702, %v701
        %v715 = vpack.c.bf16 %v704, %v703
        %v716 = vpack.c.bf16 %v706, %v705
        %v717 = vpack.c.bf16 %v708, %v707
        %v718 = vpack.c.bf16 %v710, %v709
        %v719 = vld [vmem:[#allocation2] sm:$0xff]
        %v720 = vld [vmem:[#allocation2 + $0x8] sm:$0xff]
        %v721 = vld [vmem:[#allocation2 + $0x20] sm:$0xff]
        %v722 = vld [vmem:[#allocation2 + $0x28] sm:$0xff]
        %v723 = vld [vmem:[#allocation2 + $0x40] sm:$0xff]
        %v724 = vld [vmem:[#allocation2 + $0x48] sm:$0xff]
        %v725 = vld [vmem:[#allocation2 + $0x60] sm:$0xff]
        %v726 = vld [vmem:[#allocation2 + $0x68] sm:$0xff]
        %v727 = vld [vmem:[#allocation2 + $0x80] sm:$0xff]
        %v728 = vld [vmem:[#allocation2 + $0x88] sm:$0xff]
        %v729 = vld [vmem:[#allocation2 + $0xa0] sm:$0xff]
        %v730 = vld [vmem:[#allocation2 + $0xa8] sm:$0xff]
        %v731 = vld [vmem:[#allocation2 + $0xc0] sm:$0xff]
        %v732 = vld [vmem:[#allocation2 + $0xc8] sm:$0xff]
        %v733 = vld [vmem:[#allocation2 + $0xe0] sm:$0xff]
        %v734 = vld [vmem:[#allocation2 + $0xe8] sm:$0xff]
        %v735 = vld [vmem:[#allocation2 + $0x100] sm:$0xff]
        %v736 = vld [vmem:[#allocation2 + $0x108] sm:$0xff]
        %v737 = vld [vmem:[#allocation2 + $0x120] sm:$0xff]
        %v738 = vld [vmem:[#allocation2 + $0x128] sm:$0xff]
        %v739 = vld [vmem:[#allocation2 + $0x140] sm:$0xff]
        %v740 = vld [vmem:[#allocation2 + $0x148] sm:$0xff]
        %v741 = vld [vmem:[#allocation2 + $0x160] sm:$0xff]
        %v742 = vld [vmem:[#allocation2 + $0x168] sm:$0xff]
        %v743 = vld [vmem:[#allocation2 + $0x180] sm:$0xff]
        %v744 = vld [vmem:[#allocation2 + $0x188] sm:$0xff]
        %v745 = vld [vmem:[#allocation2 + $0x1a0] sm:$0xff]
        %v746 = vld [vmem:[#allocation2 + $0x1a8] sm:$0xff]
        %v747 = vld [vmem:[#allocation2 + $0x1c0] sm:$0xff]
        %v748 = vld [vmem:[#allocation2 + $0x1c8] sm:$0xff]
        %v749 = vld [vmem:[#allocation2 + $0x1e0] sm:$0xff]
        %v750 = vld [vmem:[#allocation2 + $0x1e8] sm:$0xff]
        %v783 = vunpack.c.l.b16 %v719
        %v784 = vunpack.c.h.b16 %v719
        %v785 = vunpack.c.l.b16 %v720
        %v786 = vunpack.c.h.b16 %v720
        %v787 = vunpack.c.l.b16 %v721
        %v788 = vunpack.c.h.b16 %v721
        %v789 = vunpack.c.l.b16 %v722
        %v790 = vunpack.c.h.b16 %v722
        %v791 = vunpack.c.l.b16 %v723
        %v792 = vunpack.c.h.b16 %v723
        %v793 = vunpack.c.l.b16 %v724
        %v794 = vunpack.c.h.b16 %v724
        %v795 = vunpack.c.l.b16 %v725
        %v796 = vunpack.c.h.b16 %v725
        %v797 = vunpack.c.l.b16 %v726
        %v798 = vunpack.c.h.b16 %v726
        %v799 = vunpack.c.l.b16 %v727
        %v800 = vunpack.c.h.b16 %v727
        %v801 = vunpack.c.l.b16 %v728
        %v802 = vunpack.c.h.b16 %v728
        %v803 = vunpack.c.l.b16 %v729
        %v804 = vunpack.c.h.b16 %v729
        %v805 = vunpack.c.l.b16 %v730
        %v806 = vunpack.c.h.b16 %v730
        %v807 = vunpack.c.l.b16 %v731
        %v808 = vunpack.c.h.b16 %v731
        %v809 = vunpack.c.l.b16 %v732
        %v810 = vunpack.c.h.b16 %v732
        %v811 = vunpack.c.l.b16 %v733
        %v812 = vunpack.c.h.b16 %v733
        %v813 = vunpack.c.l.b16 %v734
        %v814 = vunpack.c.h.b16 %v734
        %v815 = vunpack.c.l.b16 %v735
        %v816 = vunpack.c.h.b16 %v735
        %v817 = vunpack.c.l.b16 %v736
        %v818 = vunpack.c.h.b16 %v736
        %v819 = vunpack.c.l.b16 %v737
        %v820 = vunpack.c.h.b16 %v737
        %v821 = vunpack.c.l.b16 %v738
        %v822 = vunpack.c.h.b16 %v738
        %v823 = vunpack.c.l.b16 %v739
        %v824 = vunpack.c.h.b16 %v739
        %v825 = vunpack.c.l.b16 %v740
        %v826 = vunpack.c.h.b16 %v740
        %v827 = vunpack.c.l.b16 %v741
        %v828 = vunpack.c.h.b16 %v741
        %v829 = vunpack.c.l.b16 %v742
        %v830 = vunpack.c.h.b16 %v742
        %v831 = vunpack.c.l.b16 %v743
        %v832 = vunpack.c.h.b16 %v743
        %v833 = vunpack.c.l.b16 %v744
        %v834 = vunpack.c.h.b16 %v744
        %v835 = vunpack.c.l.b16 %v745
        %v836 = vunpack.c.h.b16 %v745
        %v837 = vunpack.c.l.b16 %v746
        %v838 = vunpack.c.h.b16 %v746
        %v839 = vunpack.c.l.b16 %v747
        %v840 = vunpack.c.h.b16 %v747
        %v841 = vunpack.c.l.b16 %v748
        %v842 = vunpack.c.h.b16 %v748
        %v843 = vunpack.c.l.b16 %v749
        %v844 = vunpack.c.h.b16 %v749
        %v845 = vunpack.c.l.b16 %v750
        %v846 = vunpack.c.h.b16 %v750
        %v847 = vpack.c.b16 %v787, %v783
        %v848 = vpack.c.b16 %v788, %v784
        %v849 = vpack.c.b16 %v789, %v785
        %v850 = vpack.c.b16 %v790, %v786
        %v851 = vpack.c.b16 %v795, %v791
        %v852 = vpack.c.b16 %v796, %v792
        %v853 = vpack.c.b16 %v797, %v793
        %v854 = vpack.c.b16 %v798, %v794
        %v855 = vpack.c.b16 %v803, %v799
        %v856 = vpack.c.b16 %v804, %v800
        %v857 = vpack.c.b16 %v805, %v801
        %v858 = vpack.c.b16 %v806, %v802
        %v859 = vpack.c.b16 %v811, %v807
        %v860 = vpack.c.b16 %v812, %v808
        %v861 = vpack.c.b16 %v813, %v809
        %v862 = vpack.c.b16 %v814, %v810
        %v863 = vpack.c.b16 %v819, %v815
        %v864 = vpack.c.b16 %v820, %v816
        %v865 = vpack.c.b16 %v821, %v817
        %v866 = vpack.c.b16 %v822, %v818
        %v867 = vpack.c.b16 %v827, %v823
        %v868 = vpack.c.b16 %v828, %v824
        %v869 = vpack.c.b16 %v829, %v825
        %v870 = vpack.c.b16 %v830, %v826
        %v871 = vpack.c.b16 %v835, %v831
        %v872 = vpack.c.b16 %v836, %v832
        %v873 = vpack.c.b16 %v837, %v833
        %v874 = vpack.c.b16 %v838, %v834
        %v875 = vpack.c.b16 %v843, %v839
        %v876 = vpack.c.b16 %v844, %v840
        %v877 = vpack.c.b16 %v845, %v841
        %v878 = vpack.c.b16 %v846, %v842
        %911 = vmatprep.subr.bf16.mxu0 %v848
        %912 = vmatpush1.bf16.msra.mxu0 %v847
        %913 = vmatprep.subr.bf16.mxu0 %v852
        %914 = vmatpush1.bf16.msra.mxu0 %v851
        %915 = vmatprep.subr.bf16.mxu0 %v856
        %916 = vmatpush1.bf16.msra.mxu0 %v855
        %917 = vmatprep.subr.bf16.mxu0 %v860
        %918 = vmatpush1.bf16.msra.mxu0 %v859
        %919 = vmatprep.subr.bf16.mxu0 %v864
        %920 = vmatpush1.bf16.msra.mxu0 %v863
        %921 = vmatprep.subr.bf16.mxu0 %v868
        %922 = vmatpush1.bf16.msra.mxu0 %v867
        %923 = vmatprep.subr.bf16.mxu0 %v872
        %924 = vmatpush1.bf16.msra.mxu0 %v871
        %925 = vmatprep.subr.bf16.mxu0 %v876
        %926 = vmatpush1.bf16.msra.mxu0 %v875
        %927 = vmatprep.subr.bf16.mxu0 0
        %928 = vmatpush1.bf16.msra.mxu0 0
        %929 = vmatprep.subr.bf16.mxu0 0
        %930 = vmatpush1.bf16.msra.mxu0 0
        %931 = vmatprep.subr.bf16.mxu0 0
        %932 = vmatpush1.bf16.msra.mxu0 0
        %933 = vmatprep.subr.bf16.mxu0 0
        %934 = vmatpush1.bf16.msra.mxu0 0
        %935 = vmatprep.subr.bf16.mxu0 0
        %936 = vmatpush1.bf16.msra.mxu0 0
        %937 = vmatprep.subr.bf16.mxu0 0
        %938 = vmatpush1.bf16.msra.mxu0 0
        %939 = vmatprep.subr.bf16.mxu0 0
        %940 = vmatpush1.bf16.msra.mxu0 0
        %941 = vmatprep.subr.bf16.mxu0 0
        %942 = vmatpush1.bf16.msra.mxu0 0
        %943 = vmatprep.mubr.bf16.mxu0 0
        %944 = vmatmul.mubr.bf16.gmra.mrb[0].mxu0 %v711
        %v945 = vpop.f32.mrb[0].mxu0
        %v946 = vadd.f32 0.0, %v945
        %v947 = vpop.f32.mrb[0].mxu0
        %v948 = vadd.f32 0.0, %v947
        %v949 = vpop.f32.mrb[0].mxu0
        %v950 = vadd.f32 0.0, %v949
        %v951 = vpop.f32.mrb[0].mxu0
        %v952 = vadd.f32 0.0, %v951
        %953 = vmatprep.mubr.bf16.mxu0 0
        %954 = vmatmul.mubr.bf16.gmra.mrb[0].mxu0 %v712
        %v955 = vpop.f32.mrb[0].mxu0
        %v956 = vadd.f32 0.0, %v955
        %v957 = vpop.f32.mrb[0].mxu0
        %v958 = vadd.f32 0.0, %v957
        %v959 = vpop.f32.mrb[0].mxu0
        %v960 = vadd.f32 0.0, %v959
        %v961 = vpop.f32.mrb[0].mxu0
        %v962 = vadd.f32 0.0, %v961
        %963 = vmatprep.mubr.bf16.mxu0 0
        %964 = vmatmul.mubr.bf16.gmra.mrb[0].mxu0 %v713
        %v965 = vpop.f32.mrb[0].mxu0
        %v966 = vadd.f32 0.0, %v965
        %v967 = vpop.f32.mrb[0].mxu0
        %v968 = vadd.f32 0.0, %v967
        %v969 = vpop.f32.mrb[0].mxu0
        %v970 = vadd.f32 0.0, %v969
        %v971 = vpop.f32.mrb[0].mxu0
        %v972 = vadd.f32 0.0, %v971
        %973 = vmatprep.mubr.bf16.mxu0 0
        %974 = vmatmul.mubr.bf16.gmra.mrb[0].mxu0 %v714
        %v975 = vpop.f32.mrb[0].mxu0
        %v976 = vadd.f32 0.0, %v975
        %v977 = vpop.f32.mrb[0].mxu0
        %v978 = vadd.f32 0.0, %v977
        %v979 = vpop.f32.mrb[0].mxu0
        %v980 = vadd.f32 0.0, %v979
        %v981 = vpop.f32.mrb[0].mxu0
        %v982 = vadd.f32 0.0, %v981
        %983 = vmatprep.mubr.bf16.mxu0 0
        %984 = vmatmul.mubr.bf16.gmra.mrb[0].mxu0 %v715
        %v985 = vpop.f32.mrb[0].mxu0
        %v986 = vadd.f32 0.0, %v985
        %v987 = vpop.f32.mrb[0].mxu0
        %v988 = vadd.f32 0.0, %v987
        %v989 = vpop.f32.mrb[0].mxu0
        %v990 = vadd.f32 0.0, %v989
        %v991 = vpop.f32.mrb[0].mxu0
        %v992 = vadd.f32 0.0, %v991
        %993 = vmatprep.mubr.bf16.mxu0 0
        %994 = vmatmul.mubr.bf16.gmra.mrb[0].mxu0 %v716
        %v995 = vpop.f32.mrb[0].mxu0
        %v996 = vadd.f32 0.0, %v995
        %v997 = vpop.f32.mrb[0].mxu0
        %v998 = vadd.f32 0.0, %v997
        %v999 = vpop.f32.mrb[0].mxu0
        %v1000 = vadd.f32 0.0, %v999
        %v1001 = vpop.f32.mrb[0].mxu0
        %v1002 = vadd.f32 0.0, %v1001
        %1003 = vmatprep.mubr.bf16.mxu0 0
        %1004 = vmatmul.mubr.bf16.gmra.mrb[0].mxu0 %v717
        %v1005 = vpop.f32.mrb[0].mxu0
        %v1006 = vadd.f32 0.0, %v1005
        %v1007 = vpop.f32.mrb[0].mxu0
        %v1008 = vadd.f32 0.0, %v1007
        %v1009 = vpop.f32.mrb[0].mxu0
        %v1010 = vadd.f32 0.0, %v1009
        %v1011 = vpop.f32.mrb[0].mxu0
        %v1012 = vadd.f32 0.0, %v1011
        %1013 = vmatprep.mubr.bf16.mxu0 0
        %1014 = vmatmul.mubr.bf16.gmra.mrb[0].mxu0 %v718
        %v1015 = vpop.f32.mrb[0].mxu0
        %v1016 = vadd.f32 0.0, %v1015
        %v1017 = vpop.f32.mrb[0].mxu0
        %v1018 = vadd.f32 0.0, %v1017
        %v1019 = vpop.f32.mrb[0].mxu0
        %v1020 = vadd.f32 0.0, %v1019
        %v1021 = vpop.f32.mrb[0].mxu0
        %v1022 = vadd.f32 0.0, %v1021
        %1023 = vdwg.mxu0
        %1024 = vmatprep.subr.bf16.mxu0 %v850
        %1025 = vmatpush1.bf16.msra.mxu0 %v849
        %1026 = vmatprep.subr.bf16.mxu0 %v854
        %1027 = vmatpush1.bf16.msra.mxu0 %v853
        %1028 = vmatprep.subr.bf16.mxu0 %v858
        %1029 = vmatpush1.bf16.msra.mxu0 %v857
        %1030 = vmatprep.subr.bf16.mxu0 %v862
        %1031 = vmatpush1.bf16.msra.mxu0 %v861
        %1032 = vmatprep.subr.bf16.mxu0 %v866
        %1033 = vmatpush1.bf16.msra.mxu0 %v865
        %1034 = vmatprep.subr.bf16.mxu0 %v870
        %1035 = vmatpush1.bf16.msra.mxu0 %v869
        %1036 = vmatprep.subr.bf16.mxu0 %v874
        %1037 = vmatpush1.bf16.msra.mxu0 %v873
        %1038 = vmatprep.subr.bf16.mxu0 %v878
        %1039 = vmatpush1.bf16.msra.mxu0 %v877
        %1040 = vmatprep.subr.bf16.mxu0 0
        %1041 = vmatpush1.bf16.msra.mxu0 0
        %1042 = vmatprep.subr.bf16.mxu0 0
        %1043 = vmatpush1.bf16.msra.mxu0 0
        %1044 = vmatprep.subr.bf16.mxu0 0
        %1045 = vmatpush1.bf16.msra.mxu0 0
        %1046 = vmatprep.subr.bf16.mxu0 0
        %1047 = vmatpush1.bf16.msra.mxu0 0
        %1048 = vmatprep.subr.bf16.mxu0 0
        %1049 = vmatpush1.bf16.msra.mxu0 0
        %1050 = vmatprep.subr.bf16.mxu0 0
        %1051 = vmatpush1.bf16.msra.mxu0 0
        %1052 = vmatprep.subr.bf16.mxu0 0
        %1053 = vmatpush1.bf16.msra.mxu0 0
        %1054 = vmatprep.subr.bf16.mxu0 0
        %1055 = vmatpush1.bf16.msra.mxu0 0
        %1056 = vmatprep.mubr.bf16.mxu0 0
        %1057 = vmatmul.mubr.bf16.gmra.mrb[0].mxu0 %v711
        %v1058 = vpop.f32.mrb[0].mxu0
        %v1059 = vadd.f32 0.0, %v1058
        %v1060 = vpop.f32.mrb[0].mxu0
        %v1061 = vadd.f32 0.0, %v1060
        %v1062 = vpop.f32.mrb[0].mxu0
        %v1063 = vadd.f32 0.0, %v1062
        %v1064 = vpop.f32.mrb[0].mxu0
        %v1065 = vadd.f32 0.0, %v1064
        %1066 = vmatprep.mubr.bf16.mxu0 0
        %1067 = vmatmul.mubr.bf16.gmra.mrb[0].mxu0 %v712
        %v1068 = vpop.f32.mrb[0].mxu0
        %v1069 = vadd.f32 0.0, %v1068
        %v1070 = vpop.f32.mrb[0].mxu0
        %v1071 = vadd.f32 0.0, %v1070
        %v1072 = vpop.f32.mrb[0].mxu0
        %v1073 = vadd.f32 0.0, %v1072
        %v1074 = vpop.f32.mrb[0].mxu0
        %v1075 = vadd.f32 0.0, %v1074
        %1076 = vmatprep.mubr.bf16.mxu0 0
        %1077 = vmatmul.mubr.bf16.gmra.mrb[0].mxu0 %v713
        %v1078 = vpop.f32.mrb[0].mxu0
        %v1079 = vadd.f32 0.0, %v1078
        %v1080 = vpop.f32.mrb[0].mxu0
        %v1081 = vadd.f32 0.0, %v1080
        %v1082 = vpop.f32.mrb[0].mxu0
        %v1083 = vadd.f32 0.0, %v1082
        %v1084 = vpop.f32.mrb[0].mxu0
        %v1085 = vadd.f32 0.0, %v1084
        %1086 = vmatprep.mubr.bf16.mxu0 0
        %1087 = vmatmul.mubr.bf16.gmra.mrb[0].mxu0 %v714
        %v1088 = vpop.f32.mrb[0].mxu0
        %v1089 = vadd.f32 0.0, %v1088
        %v1090 = vpop.f32.mrb[0].mxu0
        %v1091 = vadd.f32 0.0, %v1090
        %v1092 = vpop.f32.mrb[0].mxu0
        %v1093 = vadd.f32 0.0, %v1092
        %v1094 = vpop.f32.mrb[0].mxu0
        %v1095 = vadd.f32 0.0, %v1094
        %1096 = vmatprep.mubr.bf16.mxu0 0
        %1097 = vmatmul.mubr.bf16.gmra.mrb[0].mxu0 %v715
        %v1098 = vpop.f32.mrb[0].mxu0
        %v1099 = vadd.f32 0.0, %v1098
        %v1100 = vpop.f32.mrb[0].mxu0
        %v1101 = vadd.f32 0.0, %v1100
        %v1102 = vpop.f32.mrb[0].mxu0
        %v1103 = vadd.f32 0.0, %v1102
        %v1104 = vpop.f32.mrb[0].mxu0
        %v1105 = vadd.f32 0.0, %v1104
        %1106 = vmatprep.mubr.bf16.mxu0 0
        %1107 = vmatmul.mubr.bf16.gmra.mrb[0].mxu0 %v716
        %v1108 = vpop.f32.mrb[0].mxu0
        %v1109 = vadd.f32 0.0, %v1108
        %v1110 = vpop.f32.mrb[0].mxu0
        %v1111 = vadd.f32 0.0, %v1110
        %v1112 = vpop.f32.mrb[0].mxu0
        %v1113 = vadd.f32 0.0, %v1112
        %v1114 = vpop.f32.mrb[0].mxu0
        %v1115 = vadd.f32 0.0, %v1114
        %1116 = vmatprep.mubr.bf16.mxu0 0
        %1117 = vmatmul.mubr.bf16.gmra.mrb[0].mxu0 %v717
        %v1118 = vpop.f32.mrb[0].mxu0
        %v1119 = vadd.f32 0.0, %v1118
        %v1120 = vpop.f32.mrb[0].mxu0
        %v1121 = vadd.f32 0.0, %v1120
        %v1122 = vpop.f32.mrb[0].mxu0
        %v1123 = vadd.f32 0.0, %v1122
        %v1124 = vpop.f32.mrb[0].mxu0
        %v1125 = vadd.f32 0.0, %v1124
        %1126 = vmatprep.mubr.bf16.mxu0 0
        %1127 = vmatmul.mubr.bf16.gmra.mrb[0].mxu0 %v718
        %v1128 = vpop.f32.mrb[0].mxu0
        %v1129 = vadd.f32 0.0, %v1128
        %v1130 = vpop.f32.mrb[0].mxu0
        %v1131 = vadd.f32 0.0, %v1130
        %v1132 = vpop.f32.mrb[0].mxu0
        %v1133 = vadd.f32 0.0, %v1132
        %v1134 = vpop.f32.mrb[0].mxu0
        %v1135 = vadd.f32 0.0, %v1134
        %1136 = vdwg.mxu0
        %v1137 = vmax.f32 %v946, %v950
        %v1138 = vmax.f32 %v1137, %v956
        %v1139 = vmax.f32 %v1138, %v960
        %v1140 = vmax.f32 %v1139, %v966
        %v1141 = vmax.f32 %v1140, %v970
        %v1142 = vmax.f32 %v1141, %v976
        %v1143 = vmax.f32 %v1142, %v980
        %v1144 = vmax.f32 %v1143, %v986
        %v1145 = vmax.f32 %v1144, %v990
        %v1146 = vmax.f32 %v1145, %v996
        %v1147 = vmax.f32 %v1146, %v1000
        %v1148 = vmax.f32 %v1147, %v1006
        %v1149 = vmax.f32 %v1148, %v1010
        %v1150 = vmax.f32 %v1149, %v1016
        %v1151 = vmax.f32 %v1150, %v1020
        %v1152 = vmax.f32 %v948, %v952
        %v1153 = vmax.f32 %v1152, %v958
        %v1154 = vmax.f32 %v1153, %v962
        %v1155 = vmax.f32 %v1154, %v968
        %v1156 = vmax.f32 %v1155, %v972
        %v1157 = vmax.f32 %v1156, %v978
        %v1158 = vmax.f32 %v1157, %v982
        %v1159 = vmax.f32 %v1158, %v988
        %v1160 = vmax.f32 %v1159, %v992
        %v1161 = vmax.f32 %v1160, %v998
        %v1162 = vmax.f32 %v1161, %v1002
        %v1163 = vmax.f32 %v1162, %v1008
        %v1164 = vmax.f32 %v1163, %v1012
        %v1165 = vmax.f32 %v1164, %v1018
        %v1166 = vmax.f32 %v1165, %v1022
        %v1167 = vmax.f32 %v1059, %v1063
        %v1168 = vmax.f32 %v1167, %v1069
        %v1169 = vmax.f32 %v1168, %v1073
        %v1170 = vmax.f32 %v1169, %v1079
        %v1171 = vmax.f32 %v1170, %v1083
        %v1172 = vmax.f32 %v1171, %v1089
        %v1173 = vmax.f32 %v1172, %v1093
        %v1174 = vmax.f32 %v1173, %v1099
        %v1175 = vmax.f32 %v1174, %v1103
        %v1176 = vmax.f32 %v1175, %v1109
        %v1177 = vmax.f32 %v1176, %v1113
        %v1178 = vmax.f32 %v1177, %v1119
        %v1179 = vmax.f32 %v1178, %v1123
        %v1180 = vmax.f32 %v1179, %v1129
        %v1181 = vmax.f32 %v1180, %v1133
        %v1182 = vmax.f32 %v1061, %v1065
        %v1183 = vmax.f32 %v1182, %v1071
        %v1184 = vmax.f32 %v1183, %v1075
        %v1185 = vmax.f32 %v1184, %v1081
        %v1186 = vmax.f32 %v1185, %v1085
        %v1187 = vmax.f32 %v1186, %v1091
        %v1188 = vmax.f32 %v1187, %v1095
        %v1189 = vmax.f32 %v1188, %v1101
        %v1190 = vmax.f32 %v1189, %v1105
        %v1191 = vmax.f32 %v1190, %v1111
        %v1192 = vmax.f32 %v1191, %v1115
        %v1193 = vmax.f32 %v1192, %v1121
        %v1194 = vmax.f32 %v1193, %v1125
        %v1195 = vmax.f32 %v1194, %v1131
        %v1196 = vmax.f32 %v1195, %v1135
        %v1197 = vld [vmem:[#allocation2 + $0x10] sm:$0xff]
        %v1198 = vld [vmem:[#allocation2 + $0x18] sm:$0xff]
        %v1199 = vld [vmem:[#allocation2 + $0x30] sm:$0xff]
        %v1200 = vld [vmem:[#allocation2 + $0x38] sm:$0xff]
        %v1201 = vld [vmem:[#allocation2 + $0x50] sm:$0xff]
        %v1202 = vld [vmem:[#allocation2 + $0x58] sm:$0xff]
        %v1203 = vld [vmem:[#allocation2 + $0x70] sm:$0xff]
        %v1204 = vld [vmem:[#allocation2 + $0x78] sm:$0xff]
        %v1205 = vld [vmem:[#allocation2 + $0x90] sm:$0xff]
        %v1206 = vld [vmem:[#allocation2 + $0x98] sm:$0xff]
        %v1207 = vld [vmem:[#allocation2 + $0xb0] sm:$0xff]
        %v1208 = vld [vmem:[#allocation2 + $0xb8] sm:$0xff]
        %v1209 = vld [vmem:[#allocation2 + $0xd0] sm:$0xff]
        %v1210 = vld [vmem:[#allocation2 + $0xd8] sm:$0xff]
        %v1211 = vld [vmem:[#allocation2 + $0xf0] sm:$0xff]
        %v1212 = vld [vmem:[#allocation2 + $0xf8] sm:$0xff]
        %v1213 = vld [vmem:[#allocation2 + $0x110] sm:$0xff]
        %v1214 = vld [vmem:[#allocation2 + $0x118] sm:$0xff]
        %v1215 = vld [vmem:[#allocation2 + $0x130] sm:$0xff]
        %v1216 = vld [vmem:[#allocation2 + $0x138] sm:$0xff]
        %v1217 = vld [vmem:[#allocation2 + $0x150] sm:$0xff]
        %v1218 = vld [vmem:[#allocation2 + $0x158] sm:$0xff]
        %v1219 = vld [vmem:[#allocation2 + $0x170] sm:$0xff]
        %v1220 = vld [vmem:[#allocation2 + $0x178] sm:$0xff]
        %v1221 = vld [vmem:[#allocation2 + $0x190] sm:$0xff]
        %v1222 = vld [vmem:[#allocation2 + $0x198] sm:$0xff]
        %v1223 = vld [vmem:[#allocation2 + $0x1b0] sm:$0xff]
        %v1224 = vld [vmem:[#allocation2 + $0x1b8] sm:$0xff]
        %v1225 = vld [vmem:[#allocation2 + $0x1d0] sm:$0xff]
        %v1226 = vld [vmem:[#allocation2 + $0x1d8] sm:$0xff]
        %v1227 = vld [vmem:[#allocation2 + $0x1f0] sm:$0xff]
        %v1228 = vld [vmem:[#allocation2 + $0x1f8] sm:$0xff]
        %v1261 = vunpack.c.l.b16 %v1197
        %v1262 = vunpack.c.h.b16 %v1197
        %v1263 = vunpack.c.l.b16 %v1198
        %v1264 = vunpack.c.h.b16 %v1198
        %v1265 = vunpack.c.l.b16 %v1199
        %v1266 = vunpack.c.h.b16 %v1199
        %v1267 = vunpack.c.l.b16 %v1200
        %v1268 = vunpack.c.h.b16 %v1200
        %v1269 = vunpack.c.l.b16 %v1201
        %v1270 = vunpack.c.h.b16 %v1201
        %v1271 = vunpack.c.l.b16 %v1202
        %v1272 = vunpack.c.h.b16 %v1202
        %v1273 = vunpack.c.l.b16 %v1203
        %v1274 = vunpack.c.h.b16 %v1203
        %v1275 = vunpack.c.l.b16 %v1204
        %v1276 = vunpack.c.h.b16 %v1204
        %v1277 = vunpack.c.l.b16 %v1205
        %v1278 = vunpack.c.h.b16 %v1205
        %v1279 = vunpack.c.l.b16 %v1206
        %v1280 = vunpack.c.h.b16 %v1206
        %v1281 = vunpack.c.l.b16 %v1207
        %v1282 = vunpack.c.h.b16 %v1207
        %v1283 = vunpack.c.l.b16 %v1208
        %v1284 = vunpack.c.h.b16 %v1208
        %v1285 = vunpack.c.l.b16 %v1209
        %v1286 = vunpack.c.h.b16 %v1209
        %v1287 = vunpack.c.l.b16 %v1210
        %v1288 = vunpack.c.h.b16 %v1210
        %v1289 = vunpack.c.l.b16 %v1211
        %v1290 = vunpack.c.h.b16 %v1211
        %v1291 = vunpack.c.l.b16 %v1212
        %v1292 = vunpack.c.h.b16 %v1212
        %v1293 = vunpack.c.l.b16 %v1213
        %v1294 = vunpack.c.h.b16 %v1213
        %v1295 = vunpack.c.l.b16 %v1214
        %v1296 = vunpack.c.h.b16 %v1214
        %v1297 = vunpack.c.l.b16 %v1215
        %v1298 = vunpack.c.h.b16 %v1215
        %v1299 = vunpack.c.l.b16 %v1216
        %v1300 = vunpack.c.h.b16 %v1216
        %v1301 = vunpack.c.l.b16 %v1217
        %v1302 = vunpack.c.h.b16 %v1217
        %v1303 = vunpack.c.l.b16 %v1218
        %v1304 = vunpack.c.h.b16 %v1218
        %v1305 = vunpack.c.l.b16 %v1219
        %v1306 = vunpack.c.h.b16 %v1219
        %v1307 = vunpack.c.l.b16 %v1220
        %v1308 = vunpack.c.h.b16 %v1220
        %v1309 = vunpack.c.l.b16 %v1221
        %v1310 = vunpack.c.h.b16 %v1221
        %v1311 = vunpack.c.l.b16 %v1222
        %v1312 = vunpack.c.h.b16 %v1222
        %v1313 = vunpack.c.l.b16 %v1223
        %v1314 = vunpack.c.h.b16 %v1223
        %v1315 = vunpack.c.l.b16 %v1224
        %v1316 = vunpack.c.h.b16 %v1224
        %v1317 = vunpack.c.l.b16 %v1225
        %v1318 = vunpack.c.h.b16 %v1225
        %v1319 = vunpack.c.l.b16 %v1226
        %v1320 = vunpack.c.h.b16 %v1226
        %v1321 = vunpack.c.l.b16 %v1227
        %v1322 = vunpack.c.h.b16 %v1227
        %v1323 = vunpack.c.l.b16 %v1228
        %v1324 = vunpack.c.h.b16 %v1228
        %v1325 = vpack.c.b16 %v1265, %v1261
        %v1326 = vpack.c.b16 %v1266, %v1262
        %v1327 = vpack.c.b16 %v1267, %v1263
        %v1328 = vpack.c.b16 %v1268, %v1264
        %v1329 = vpack.c.b16 %v1273, %v1269
        %v1330 = vpack.c.b16 %v1274, %v1270
        %v1331 = vpack.c.b16 %v1275, %v1271
        %v1332 = vpack.c.b16 %v1276, %v1272
        %v1333 = vpack.c.b16 %v1281, %v1277
        %v1334 = vpack.c.b16 %v1282, %v1278
        %v1335 = vpack.c.b16 %v1283, %v1279
        %v1336 = vpack.c.b16 %v1284, %v1280
        %v1337 = vpack.c.b16 %v1289, %v1285
        %v1338 = vpack.c.b16 %v1290, %v1286
        %v1339 = vpack.c.b16 %v1291, %v1287
        %v1340 = vpack.c.b16 %v1292, %v1288
        %v1341 = vpack.c.b16 %v1297, %v1293
        %v1342 = vpack.c.b16 %v1298, %v1294
        %v1343 = vpack.c.b16 %v1299, %v1295
        %v1344 = vpack.c.b16 %v1300, %v1296
        %v1345 = vpack.c.b16 %v1305, %v1301
        %v1346 = vpack.c.b16 %v1306, %v1302
        %v1347 = vpack.c.b16 %v1307, %v1303
        %v1348 = vpack.c.b16 %v1308, %v1304
        %v1349 = vpack.c.b16 %v1313, %v1309
        %v1350 = vpack.c.b16 %v1314, %v1310
        %v1351 = vpack.c.b16 %v1315, %v1311
        %v1352 = vpack.c.b16 %v1316, %v1312
        %v1353 = vpack.c.b16 %v1321, %v1317
        %v1354 = vpack.c.b16 %v1322, %v1318
        %v1355 = vpack.c.b16 %v1323, %v1319
        %v1356 = vpack.c.b16 %v1324, %v1320
        %1389 = vmatprep.subr.bf16.mxu0 %v1326
        %1390 = vmatpush1.bf16.msra.mxu0 %v1325
        %1391 = vmatprep.subr.bf16.mxu0 %v1330
        %1392 = vmatpush1.bf16.msra.mxu0 %v1329
        %1393 = vmatprep.subr.bf16.mxu0 %v1334
        %1394 = vmatpush1.bf16.msra.mxu0 %v1333
        %1395 = vmatprep.subr.bf16.mxu0 %v1338
        %1396 = vmatpush1.bf16.msra.mxu0 %v1337
        %1397 = vmatprep.subr.bf16.mxu0 %v1342
        %1398 = vmatpush1.bf16.msra.mxu0 %v1341
        %1399 = vmatprep.subr.bf16.mxu0 %v1346
        %1400 = vmatpush1.bf16.msra.mxu0 %v1345
        %1401 = vmatprep.subr.bf16.mxu0 %v1350
        %1402 = vmatpush1.bf16.msra.mxu0 %v1349
        %1403 = vmatprep.subr.bf16.mxu0 %v1354
        %1404 = vmatpush1.bf16.msra.mxu0 %v1353
        %1405 = vmatprep.subr.bf16.mxu0 0
        %1406 = vmatpush1.bf16.msra.mxu0 0
        %1407 = vmatprep.subr.bf16.mxu0 0
        %1408 = vmatpush1.bf16.msra.mxu0 0
        %1409 = vmatprep.subr.bf16.mxu0 0
        %1410 = vmatpush1.bf16.msra.mxu0 0
        %1411 = vmatprep.subr.bf16.mxu0 0
        %1412 = vmatpush1.bf16.msra.mxu0 0
        %1413 = vmatprep.subr.bf16.mxu0 0
        %1414 = vmatpush1.bf16.msra.mxu0 0
        %1415 = vmatprep.subr.bf16.mxu0 0
        %1416 = vmatpush1.bf16.msra.mxu0 0
        %1417 = vmatprep.subr.bf16.mxu0 0
        %1418 = vmatpush1.bf16.msra.mxu0 0
        %1419 = vmatprep.subr.bf16.mxu0 0
        %1420 = vmatpush1.bf16.msra.mxu0 0
        %1421 = vmatprep.mubr.bf16.mxu0 0
        %1422 = vmatmul.mubr.bf16.gmra.mrb[0].mxu0 %v711
        %v1423 = vpop.f32.mrb[0].mxu0
        %v1424 = vadd.f32 0.0, %v1423
        %v1425 = vpop.f32.mrb[0].mxu0
        %v1426 = vadd.f32 0.0, %v1425
        %v1427 = vpop.f32.mrb[0].mxu0
        %v1428 = vadd.f32 0.0, %v1427
        %v1429 = vpop.f32.mrb[0].mxu0
        %v1430 = vadd.f32 0.0, %v1429
        %1431 = vmatprep.mubr.bf16.mxu0 0
        %1432 = vmatmul.mubr.bf16.gmra.mrb[0].mxu0 %v712
        %v1433 = vpop.f32.mrb[0].mxu0
        %v1434 = vadd.f32 0.0, %v1433
        %v1435 = vpop.f32.mrb[0].mxu0
        %v1436 = vadd.f32 0.0, %v1435
        %v1437 = vpop.f32.mrb[0].mxu0
        %v1438 = vadd.f32 0.0, %v1437
        %v1439 = vpop.f32.mrb[0].mxu0
        %v1440 = vadd.f32 0.0, %v1439
        %1441 = vmatprep.mubr.bf16.mxu0 0
        %1442 = vmatmul.mubr.bf16.gmra.mrb[0].mxu0 %v713
        %v1443 = vpop.f32.mrb[0].mxu0
        %v1444 = vadd.f32 0.0, %v1443
        %v1445 = vpop.f32.mrb[0].mxu0
        %v1446 = vadd.f32 0.0, %v1445
        %v1447 = vpop.f32.mrb[0].mxu0
        %v1448 = vadd.f32 0.0, %v1447
        %v1449 = vpop.f32.mrb[0].mxu0
        %v1450 = vadd.f32 0.0, %v1449
        %1451 = vmatprep.mubr.bf16.mxu0 0
        %1452 = vmatmul.mubr.bf16.gmra.mrb[0].mxu0 %v714
        %v1453 = vpop.f32.mrb[0].mxu0
        %v1454 = vadd.f32 0.0, %v1453
        %v1455 = vpop.f32.mrb[0].mxu0
        %v1456 = vadd.f32 0.0, %v1455
        %v1457 = vpop.f32.mrb[0].mxu0
        %v1458 = vadd.f32 0.0, %v1457
        %v1459 = vpop.f32.mrb[0].mxu0
        %v1460 = vadd.f32 0.0, %v1459
        %1461 = vmatprep.mubr.bf16.mxu0 0
        %1462 = vmatmul.mubr.bf16.gmra.mrb[0].mxu0 %v715
        %v1463 = vpop.f32.mrb[0].mxu0
        %v1464 = vadd.f32 0.0, %v1463
        %v1465 = vpop.f32.mrb[0].mxu0
        %v1466 = vadd.f32 0.0, %v1465
        %v1467 = vpop.f32.mrb[0].mxu0
        %v1468 = vadd.f32 0.0, %v1467
        %v1469 = vpop.f32.mrb[0].mxu0
        %v1470 = vadd.f32 0.0, %v1469
        %1471 = vmatprep.mubr.bf16.mxu0 0
        %1472 = vmatmul.mubr.bf16.gmra.mrb[0].mxu0 %v716
        %v1473 = vpop.f32.mrb[0].mxu0
        %v1474 = vadd.f32 0.0, %v1473
        %v1475 = vpop.f32.mrb[0].mxu0
        %v1476 = vadd.f32 0.0, %v1475
        %v1477 = vpop.f32.mrb[0].mxu0
        %v1478 = vadd.f32 0.0, %v1477
        %v1479 = vpop.f32.mrb[0].mxu0
        %v1480 = vadd.f32 0.0, %v1479
        %1481 = vmatprep.mubr.bf16.mxu0 0
        %1482 = vmatmul.mubr.bf16.gmra.mrb[0].mxu0 %v717
        %v1483 = vpop.f32.mrb[0].mxu0
        %v1484 = vadd.f32 0.0, %v1483
        %v1485 = vpop.f32.mrb[0].mxu0
        %v1486 = vadd.f32 0.0, %v1485
        %v1487 = vpop.f32.mrb[0].mxu0
        %v1488 = vadd.f32 0.0, %v1487
        %v1489 = vpop.f32.mrb[0].mxu0
        %v1490 = vadd.f32 0.0, %v1489
        %1491 = vmatprep.mubr.bf16.mxu0 0
        %1492 = vmatmul.mubr.bf16.gmra.mrb[0].mxu0 %v718
        %v1493 = vpop.f32.mrb[0].mxu0
        %v1494 = vadd.f32 0.0, %v1493
        %v1495 = vpop.f32.mrb[0].mxu0
        %v1496 = vadd.f32 0.0, %v1495
        %v1497 = vpop.f32.mrb[0].mxu0
        %v1498 = vadd.f32 0.0, %v1497
        %v1499 = vpop.f32.mrb[0].mxu0
        %v1500 = vadd.f32 0.0, %v1499
        %1501 = vdwg.mxu0
        %1502 = vmatprep.subr.bf16.mxu0 %v1328
        %1503 = vmatpush1.bf16.msra.mxu0 %v1327
        %1504 = vmatprep.subr.bf16.mxu0 %v1332
        %1505 = vmatpush1.bf16.msra.mxu0 %v1331
        %1506 = vmatprep.subr.bf16.mxu0 %v1336
        %1507 = vmatpush1.bf16.msra.mxu0 %v1335
        %1508 = vmatprep.subr.bf16.mxu0 %v1340
        %1509 = vmatpush1.bf16.msra.mxu0 %v1339
        %1510 = vmatprep.subr.bf16.mxu0 %v1344
        %1511 = vmatpush1.bf16.msra.mxu0 %v1343
        %1512 = vmatprep.subr.bf16.mxu0 %v1348
        %1513 = vmatpush1.bf16.msra.mxu0 %v1347
        %1514 = vmatprep.subr.bf16.mxu0 %v1352
        %1515 = vmatpush1.bf16.msra.mxu0 %v1351
        %1516 = vmatprep.subr.bf16.mxu0 %v1356
        %1517 = vmatpush1.bf16.msra.mxu0 %v1355
        %1518 = vmatprep.subr.bf16.mxu0 0
        %1519 = vmatpush1.bf16.msra.mxu0 0
        %1520 = vmatprep.subr.bf16.mxu0 0
        %1521 = vmatpush1.bf16.msra.mxu0 0
        %1522 = vmatprep.subr.bf16.mxu0 0
        %1523 = vmatpush1.bf16.msra.mxu0 0
        %1524 = vmatprep.subr.bf16.mxu0 0
        %1525 = vmatpush1.bf16.msra.mxu0 0
        %1526 = vmatprep.subr.bf16.mxu0 0
        %1527 = vmatpush1.bf16.msra.mxu0 0
        %1528 = vmatprep.subr.bf16.mxu0 0
        %1529 = vmatpush1.bf16.msra.mxu0 0
        %1530 = vmatprep.subr.bf16.mxu0 0
        %1531 = vmatpush1.bf16.msra.mxu0 0
        %1532 = vmatprep.subr.bf16.mxu0 0
        %1533 = vmatpush1.bf16.msra.mxu0 0
        %1534 = vmatprep.mubr.bf16.mxu0 0
        %1535 = vmatmul.mubr.bf16.gmra.mrb[0].mxu0 %v711
        %v1536 = vpop.f32.mrb[0].mxu0
        %v1537 = vadd.f32 0.0, %v1536
        %v1538 = vpop.f32.mrb[0].mxu0
        %v1539 = vadd.f32 0.0, %v1538
        %v1540 = vpop.f32.mrb[0].mxu0
        %v1541 = vadd.f32 0.0, %v1540
        %v1542 = vpop.f32.mrb[0].mxu0
        %v1543 = vadd.f32 0.0, %v1542
        %1544 = vmatprep.mubr.bf16.mxu0 0
        %1545 = vmatmul.mubr.bf16.gmra.mrb[0].mxu0 %v712
        %v1546 = vpop.f32.mrb[0].mxu0
        %v1547 = vadd.f32 0.0, %v1546
        %v1548 = vpop.f32.mrb[0].mxu0
        %v1549 = vadd.f32 0.0, %v1548
        %v1550 = vpop.f32.mrb[0].mxu0
        %v1551 = vadd.f32 0.0, %v1550
        %v1552 = vpop.f32.mrb[0].mxu0
        %v1553 = vadd.f32 0.0, %v1552
        %1554 = vmatprep.mubr.bf16.mxu0 0
        %1555 = vmatmul.mubr.bf16.gmra.mrb[0].mxu0 %v713
        %v1556 = vpop.f32.mrb[0].mxu0
        %v1557 = vadd.f32 0.0, %v1556
        %v1558 = vpop.f32.mrb[0].mxu0
        %v1559 = vadd.f32 0.0, %v1558
        %v1560 = vpop.f32.mrb[0].mxu0
        %v1561 = vadd.f32 0.0, %v1560
        %v1562 = vpop.f32.mrb[0].mxu0
        %v1563 = vadd.f32 0.0, %v1562
        %1564 = vmatprep.mubr.bf16.mxu0 0
        %1565 = vmatmul.mubr.bf16.gmra.mrb[0].mxu0 %v714
        %v1566 = vpop.f32.mrb[0].mxu0
        %v1567 = vadd.f32 0.0, %v1566
        %v1568 = vpop.f32.mrb[0].mxu0
        %v1569 = vadd.f32 0.0, %v1568
        %v1570 = vpop.f32.mrb[0].mxu0
        %v1571 = vadd.f32 0.0, %v1570
        %v1572 = vpop.f32.mrb[0].mxu0
        %v1573 = vadd.f32 0.0, %v1572
        %1574 = vmatprep.mubr.bf16.mxu0 0
        %1575 = vmatmul.mubr.bf16.gmra.mrb[0].mxu0 %v715
        %v1576 = vpop.f32.mrb[0].mxu0
        %v1577 = vadd.f32 0.0, %v1576
        %v1578 = vpop.f32.mrb[0].mxu0
        %v1579 = vadd.f32 0.0, %v1578
        %v1580 = vpop.f32.mrb[0].mxu0
        %v1581 = vadd.f32 0.0, %v1580
        %v1582 = vpop.f32.mrb[0].mxu0
        %v1583 = vadd.f32 0.0, %v1582
        %1584 = vmatprep.mubr.bf16.mxu0 0
        %1585 = vmatmul.mubr.bf16.gmra.mrb[0].mxu0 %v716
        %v1586 = vpop.f32.mrb[0].mxu0
        %v1587 = vadd.f32 0.0, %v1586
        %v1588 = vpop.f32.mrb[0].mxu0
        %v1589 = vadd.f32 0.0, %v1588
        %v1590 = vpop.f32.mrb[0].mxu0
        %v1591 = vadd.f32 0.0, %v1590
        %v1592 = vpop.f32.mrb[0].mxu0
        %v1593 = vadd.f32 0.0, %v1592
        %1594 = vmatprep.mubr.bf16.mxu0 0
        %1595 = vmatmul.mubr.bf16.gmra.mrb[0].mxu0 %v717
        %v1596 = vpop.f32.mrb[0].mxu0
        %v1597 = vadd.f32 0.0, %v1596
        %v1598 = vpop.f32.mrb[0].mxu0
        %v1599 = vadd.f32 0.0, %v1598
        %v1600 = vpop.f32.mrb[0].mxu0
        %v1601 = vadd.f32 0.0, %v1600
        %v1602 = vpop.f32.mrb[0].mxu0
        %v1603 = vadd.f32 0.0, %v1602
        %1604 = vmatprep.mubr.bf16.mxu0 0
        %1605 = vmatmul.mubr.bf16.gmra.mrb[0].mxu0 %v718
        %v1606 = vpop.f32.mrb[0].mxu0
        %v1607 = vadd.f32 0.0, %v1606
        %v1608 = vpop.f32.mrb[0].mxu0
        %v1609 = vadd.f32 0.0, %v1608
        %v1610 = vpop.f32.mrb[0].mxu0
        %v1611 = vadd.f32 0.0, %v1610
        %v1612 = vpop.f32.mrb[0].mxu0
        %v1613 = vadd.f32 0.0, %v1612
        %1614 = vdwg.mxu0
        %v1615 = vmax.f32 %v1424, %v1428
        %v1616 = vmax.f32 %v1615, %v1434
        %v1617 = vmax.f32 %v1616, %v1438
        %v1618 = vmax.f32 %v1617, %v1444
        %v1619 = vmax.f32 %v1618, %v1448
        %v1620 = vmax.f32 %v1619, %v1454
        %v1621 = vmax.f32 %v1620, %v1458
        %v1622 = vmax.f32 %v1621, %v1464
        %v1623 = vmax.f32 %v1622, %v1468
        %v1624 = vmax.f32 %v1623, %v1474
        %v1625 = vmax.f32 %v1624, %v1478
        %v1626 = vmax.f32 %v1625, %v1484
        %v1627 = vmax.f32 %v1626, %v1488
        %v1628 = vmax.f32 %v1627, %v1494
        %v1629 = vmax.f32 %v1628, %v1498
        %v1630 = vmax.f32 %v1426, %v1430
        %v1631 = vmax.f32 %v1630, %v1436
        %v1632 = vmax.f32 %v1631, %v1440
        %v1633 = vmax.f32 %v1632, %v1446
        %v1634 = vmax.f32 %v1633, %v1450
        %v1635 = vmax.f32 %v1634, %v1456
        %v1636 = vmax.f32 %v1635, %v1460
        %v1637 = vmax.f32 %v1636, %v1466
        %v1638 = vmax.f32 %v1637, %v1470
        %v1639 = vmax.f32 %v1638, %v1476
        %v1640 = vmax.f32 %v1639, %v1480
        %v1641 = vmax.f32 %v1640, %v1486
        %v1642 = vmax.f32 %v1641, %v1490
        %v1643 = vmax.f32 %v1642, %v1496
        %v1644 = vmax.f32 %v1643, %v1500
        %v1645 = vmax.f32 %v1537, %v1541
        %v1646 = vmax.f32 %v1645, %v1547
        %v1647 = vmax.f32 %v1646, %v1551
        %v1648 = vmax.f32 %v1647, %v1557
        %v1649 = vmax.f32 %v1648, %v1561
        %v1650 = vmax.f32 %v1649, %v1567
        %v1651 = vmax.f32 %v1650, %v1571
        %v1652 = vmax.f32 %v1651, %v1577
        %v1653 = vmax.f32 %v1652, %v1581
        %v1654 = vmax.f32 %v1653, %v1587
        %v1655 = vmax.f32 %v1654, %v1591
        %v1656 = vmax.f32 %v1655, %v1597
        %v1657 = vmax.f32 %v1656, %v1601
        %v1658 = vmax.f32 %v1657, %v1607
        %v1659 = vmax.f32 %v1658, %v1611
        %v1660 = vmax.f32 %v1539, %v1543
        %v1661 = vmax.f32 %v1660, %v1549
        %v1662 = vmax.f32 %v1661, %v1553
        %v1663 = vmax.f32 %v1662, %v1559
        %v1664 = vmax.f32 %v1663, %v1563
        %v1665 = vmax.f32 %v1664, %v1569
        %v1666 = vmax.f32 %v1665, %v1573
        %v1667 = vmax.f32 %v1666, %v1579
        %v1668 = vmax.f32 %v1667, %v1583
        %v1669 = vmax.f32 %v1668, %v1589
        %v1670 = vmax.f32 %v1669, %v1593
        %v1671 = vmax.f32 %v1670, %v1599
        %v1672 = vmax.f32 %v1671, %v1603
        %v1673 = vmax.f32 %v1672, %v1609
        %v1674 = vmax.f32 %v1673, %v1613
        %p1675 = scmp.eq.s32.totalorder %s25, 0
        // Predicated region
        $region49: #{pointnet_cls_forward.4} parent=43 // pred_check
          %p1676 = pneg %p1675
        $region50: #{pointnet_cls_forward.4} parent=43 // pred_check_branch
          %1678 = sbr.rel (%p1676) target = $region52
        $region51: #{pointnet_cls_forward.4} parent=43 // pred_region
          %1679 = vst [vmem:[%s318] sm:$0xff] %v1151
          %1680 = vst [vmem:[%s318 + $0x8] sm:$0xff] %v1166
          %1681 = vst [vmem:[%s318 + $0x10] sm:$0xff] %v1181
          %1682 = vst [vmem:[%s318 + $0x18] sm:$0xff] %v1196
          %1683 = vst [vmem:[%s318 + $0x20] sm:$0xff] %v1629
          %1684 = vst [vmem:[%s318 + $0x28] sm:$0xff] %v1644
          %1685 = vst [vmem:[%s318 + $0x30] sm:$0xff] %v1659
          %1686 = vst [vmem:[%s318 + $0x38] sm:$0xff] %v1674
        $region52: #{pointnet_cls_forward.4} parent=43 // pred_fallthru
          _
        %p1687 = scmp.ne.s32.totalorder %s25, 0
        // Predicated region
        $region53: #{pointnet_cls_forward.4} parent=43 // pred_check
          %p1688 = pneg %p1687
        $region54: #{pointnet_cls_forward.4} parent=43 // pred_check_branch
          %1690 = sbr.rel (%p1688) target = $region56
        $region55: #{pointnet_cls_forward.4} parent=43 // pred_region
          %v1691 = vld [vmem:[%s318] sm:$0xff]
          %v1692 = vld [vmem:[%s318 + $0x8] sm:$0xff]
          %v1693 = vld [vmem:[%s318 + $0x10] sm:$0xff]
          %v1694 = vld [vmem:[%s318 + $0x18] sm:$0xff]
          %v1695 = vmax.f32 %v1691, %v1151
          %v1696 = vmax.f32 %v1692, %v1166
          %v1697 = vmax.f32 %v1693, %v1181
          %v1698 = vmax.f32 %v1694, %v1196
          %1699 = vst [vmem:[%s318] sm:$0xff] %v1695
          %1700 = vst [vmem:[%s318 + $0x8] sm:$0xff] %v1696
          %1701 = vst [vmem:[%s318 + $0x10] sm:$0xff] %v1697
          %1702 = vst [vmem:[%s318 + $0x18] sm:$0xff] %v1698
          %v1703 = vld [vmem:[%s318 + $0x20] sm:$0xff]
          %v1704 = vld [vmem:[%s318 + $0x28] sm:$0xff]
          %v1705 = vld [vmem:[%s318 + $0x30] sm:$0xff]
          %v1706 = vld [vmem:[%s318 + $0x38] sm:$0xff]
          %v1707 = vmax.f32 %v1703, %v1629
          %v1708 = vmax.f32 %v1704, %v1644
          %v1709 = vmax.f32 %v1705, %v1659
          %v1710 = vmax.f32 %v1706, %v1674
          %1711 = vst [vmem:[%s318 + $0x20] sm:$0xff] %v1707
          %1712 = vst [vmem:[%s318 + $0x28] sm:$0xff] %v1708
          %1713 = vst [vmem:[%s318 + $0x30] sm:$0xff] %v1709
          %1714 = vst [vmem:[%s318 + $0x38] sm:$0xff] %v1710
        $region56: #{pointnet_cls_forward.4} parent=43 // pred_fallthru
          _
        %p1715 = scmp.lt.s32.totalorder %s23, 1
        %s1716 = scalar_select %p1715, %s23, 1
        %p1717 = scmp.lt.s32.totalorder %s24, 0
        %s1718 = scalar_select %p1717, %s24, 0
        %s1719 = smul.addr %s1718, 8
        %s1720 = smul.addr %s1716, 8
        %s1721 = sadd.s32 %s1719, %s1720
        %s1722 = smul.addr %s1721, 8
        %s1723 = scalar_lea.vmem %s6, %s1722
        // Predicated region
        $region57: #{pointnet_cls_forward.4} parent=43 // pred_check
          %p1724 = pneg %p192
        $region58: #{pointnet_cls_forward.4} parent=43 // pred_check_branch
          %1726 = sbr.rel (%p1724) target = $region60
        $region59: #{pointnet_cls_forward.4} parent=43 // pred_region
          _
        $region60: #{pointnet_cls_forward.4} parent=43 // pred_fallthru
          _
      $region44: #{pointnet_cls_forward.4} parent=5 // pred_fallthru
        _
      %p1727 = scmp.le.s32.totalorder 2, %s13
      // Predicated region
      $region61: #{pointnet_cls_forward.4} parent=5 // pred_check
        %p1728 = pneg %p1727
      $region62: #{pointnet_cls_forward.4} parent=5 // pred_check_branch
        %1730 = sbr.rel (%p1728) target = $region64
      $region63: #{pointnet_cls_forward.4} parent=5 // pred_region
        %s1731 = ssub.s32 %s13, 2
        // Predicated region
        $region65: #{pointnet_cls_forward.4} parent=63 // pred_check
          %p1732 = pneg %p198
        $region66: #{pointnet_cls_forward.4} parent=63 // pred_check_branch
          %1734 = sbr.rel (%p1732) target = $region68
        $region67: #{pointnet_cls_forward.4} parent=63 // pred_region
          %p1735 = scmp.lt.s32.totalorder %s26, 1
          %s1736 = scalar_select %p1735, %s26, 1
          %p1737 = scmp.lt.s32.totalorder %s27, 0
          %s1738 = scalar_select %p1737, %s27, 0
          %s1739 = smul.addr %s1738, 8
          %s1740 = smul.addr %s1736, 8
          %s1741 = sadd.s32 %s1739, %s1740
          %s1742 = smul.addr %s1741, 8
          %s1743 = scalar_lea.vmem %s6, %s1742
        $region68: #{pointnet_cls_forward.4} parent=63 // pred_fallthru
          _
      $region64: #{pointnet_cls_forward.4} parent=5 // pred_fallthru
        _
    $region6: #{pointnet_cls_forward.4} parent=1 // loop_footer
      %s17 = sadd.s32 1, %s13
    $region7: #{pointnet_cls_forward.4} parent=1 // loop_footer_branch
      %12 = sbr.rel target = $region3
    $region8: #{pointnet_cls_forward.4} parent=1 // loop_exit
      _
    %1744 = vsyncpa [#allocation3], 1
    %s1745 = scalar_lea.sflag [#allocation3], 1
    %1746 = vsyncpa %s1745, 1

// kernel: pointnet_cls_forward.6
$region0: #{pointnet_cls_forward.6}
  #allocation0 [shape = 'u32[]', space=smem, size = 0x4, offset = 0x4, fixed_abs, tag = 'smem constant byte address 0x4 - core index']
  #allocation1 [shape = 'u32[144,128]{1,0:T(1,128)}', space=vmem, size = 0x12000, scoped, tag = 'internal scratch']
  %s0 = inlined_call_operand.vmem [shape: bf16[2,128,8], index: 0, kind: input, shape index: {}]
  %s1 = inlined_call_operand.vmem [shape: bf16[2,8,64], index: 1, kind: input, shape index: {}]
  %s2 = inlined_call_operand.vmem [shape: f32[1,64], index: 2, kind: input, shape index: {}]
  %s3 = inlined_call_operand.vmem [shape: bf16[64,128], index: 3, kind: input, shape index: {}]
  %s4 = inlined_call_operand.vmem [shape: f32[1,128], index: 4, kind: input, shape index: {}]
  %s5 = inlined_call_operand.vmem [shape: bf16[128,1024], index: 5, kind: input, shape index: {}]
  %s6 = inlined_call_operand.vmem [shape: f32[2,1,8,1024], index: 6, kind: output, shape index: {}]
  %s7 = sld [smem:[#allocation0]]
  $region65: #{pointnet_cls_forward.6} parent=0
    _
  %s9 = ssub.s32 1, %s7
  %s10 = scalar_select 0, %s9, %s7
  loop: start=0, step=1, limit=4
  $region2: #{pointnet_cls_forward.6} parent=0 // loop_pre_header
    _
  $region3: #{pointnet_cls_forward.6} parent=0 // loop_header
    %s12 = sphi 0, %s16
    %p13 = scmp.ge.s32.totalorder %s12, 4
    %s19 = sphi 0, %s38
    %s20 = sphi 0, %s34
    %s21 = sphi 0, %s30
    %s22 = sphi 0, %s19
    %s23 = sphi 0, %s20
    %s24 = sphi 0, %s21
    %s25 = sphi 0, %s22
    %s26 = sphi 0, %s23
    %s27 = sphi 0, %s24
    %s45 = sphi 0, %s47
    %s48 = sphi 0, %s45
    %s49 = sphi 0, %s48
    %s65 = sphi 0, %s49
    %s71 = sphi 0, %s73
    %s74 = sphi 0, %s71
    %s75 = sphi 0, %s74
    %s91 = sphi 0, %s75
    %s95 = sphi 0, %s95
    %s97 = sphi 0, %s95
    %s98 = sphi 0, %s97
    %s112 = sphi 0, %s98
    %s116 = sphi 0, %s116
    %s118 = sphi 0, %s116
    %s119 = sphi 0, %s118
    %s133 = sphi 0, %s119
    %s137 = sphi 0, %s137
    %s139 = sphi 0, %s137
    %s140 = sphi 0, %s139
    %s154 = sphi 0, %s140
    %s158 = sphi 0, %s158
    %s160 = sphi 0, %s158
    %s161 = sphi 0, %s160
    %s175 = sphi 0, %s161
    %s183 = sphi 0, %s185
    %s186 = sphi 0, %s183
    %s187 = sphi 0, %s186
    %s203 = sphi 0, %s187
  $region4: #{pointnet_cls_forward.6} parent=0 // loop_header_branch
    %15 = sbr.rel (%p13) target = $region8
  $region5: #{pointnet_cls_forward.6} parent=0 // loop_body
    %s17 = ssub.s32 %s12, 1
    %s18 = ssub.s32 %s12, 2
    %s28 = sadd.s32 1, %s21
    %p29 = scmp.ge.s32.totalorder %s28, 1
    %s30 = scalar_select %p29, 0, %s28
    %s31 = sadd.s32 1, %s20
    %s32 = scalar_select %p29, %s31, %s20
    %p33 = scmp.ge.s32.totalorder %s32, 1
    %s34 = scalar_select %p33, 0, %s32
    %s35 = sadd.s32 1, %s19
    %s36 = scalar_select %p33, %s35, %s19
    %p37 = scmp.ge.s32.totalorder %s36, 2
    %s38 = scalar_select %p37, 0, %s36
    %s39 = sadd.s32 %s20, %s21
    %s40 = sadd.s32 %s34, %s30
    %s41 = ssub.s32 %s19, %s38
    %s42 = ssub.s32 %s39, %s40
    %s43 = sor.u32 %s41, %s42
    %p44 = scmp.eq.s32.totalorder %s43, 0
    %s46 = sadd.s32 %s45, 1
    %s47 = scalar_select %p44, %s45, %s46
    %p50 = pneg %p44
    %p51 = scmp.eq.s32.totalorder %s12, 1
    %p52 = por %p50, %p51
    %p53 = scmp.ne.s32.totalorder %s45, %s48
    %p54 = scmp.eq.s32.totalorder %s12, 0
    %p55 = por %p53, %p54
    %p56 = scmp.ne.s32.totalorder %s45, %s48
    %p57 = scmp.eq.s32.totalorder %s17, 1
    %p58 = por %p56, %p57
    %p59 = scmp.ne.s32.totalorder %s48, %s49
    %p60 = scmp.eq.s32.totalorder %s17, 0
    %p61 = por %p59, %p60
    %p62 = scmp.ne.s32.totalorder %s48, %s49
    %p63 = scmp.eq.s32.totalorder %s18, 1
    %p64 = por %p62, %p63
    %p66 = scmp.ne.s32.totalorder %s49, %s65
    %p67 = scmp.eq.s32.totalorder %s18, 0
    %p68 = por %p66, %p67
    %s69 = ssub.s32 %s19, %s38
    %p70 = scmp.eq.s32.totalorder %s69, 0
    %s72 = sadd.s32 %s71, 1
    %s73 = scalar_select %p70, %s71, %s72
    %p76 = pneg %p70
    %p77 = scmp.eq.s32.totalorder %s12, 1
    %p78 = por %p76, %p77
    %p79 = scmp.ne.s32.totalorder %s71, %s74
    %p80 = scmp.eq.s32.totalorder %s12, 0
    %p81 = por %p79, %p80
    %p82 = scmp.ne.s32.totalorder %s71, %s74
    %p83 = scmp.eq.s32.totalorder %s17, 1
    %p84 = por %p82, %p83
    %p85 = scmp.ne.s32.totalorder %s74, %s75
    %p86 = scmp.eq.s32.totalorder %s17, 0
    %p87 = por %p85, %p86
    %p88 = scmp.ne.s32.totalorder %s74, %s75
    %p89 = scmp.eq.s32.totalorder %s18, 1
    %p90 = por %p88, %p89
    %p92 = scmp.ne.s32.totalorder %s75, %s91
    %p93 = scmp.eq.s32.totalorder %s18, 0
    %p94 = por %p92, %p93
    %s96 = sadd.s32 %s95, 1
    %p99 = scmp.eq.s32.totalorder %s12, 1
    %p100 = scmp.ne.s32.totalorder %s95, %s97
    %p101 = scmp.eq.s32.totalorder %s12, 0
    %p102 = por %p100, %p101
    %p103 = scmp.ne.s32.totalorder %s95, %s97
    %p104 = scmp.eq.s32.totalorder %s17, 1
    %p105 = por %p103, %p104
    %p106 = scmp.ne.s32.totalorder %s97, %s98
    %p107 = scmp.eq.s32.totalorder %s17, 0
    %p108 = por %p106, %p107
    %p109 = scmp.ne.s32.totalorder %s97, %s98
    %p110 = scmp.eq.s32.totalorder %s18, 1
    %p111 = por %p109, %p110
    %p113 = scmp.ne.s32.totalorder %s98, %s112
    %p114 = scmp.eq.s32.totalorder %s18, 0
    %p115 = por %p113, %p114
    %s117 = sadd.s32 %s116, 1
    %p120 = scmp.eq.s32.totalorder %s12, 1
    %p121 = scmp.ne.s32.totalorder %s116, %s118
    %p122 = scmp.eq.s32.totalorder %s12, 0
    %p123 = por %p121, %p122
    %p124 = scmp.ne.s32.totalorder %s116, %s118
    %p125 = scmp.eq.s32.totalorder %s17, 1
    %p126 = por %p124, %p125
    %p127 = scmp.ne.s32.totalorder %s118, %s119
    %p128 = scmp.eq.s32.totalorder %s17, 0
    %p129 = por %p127, %p128
    %p130 = scmp.ne.s32.totalorder %s118, %s119
    %p131 = scmp.eq.s32.totalorder %s18, 1
    %p132 = por %p130, %p131
    %p134 = scmp.ne.s32.totalorder %s119, %s133
    %p135 = scmp.eq.s32.totalorder %s18, 0
    %p136 = por %p134, %p135
    %s138 = sadd.s32 %s137, 1
    %p141 = scmp.eq.s32.totalorder %s12, 1
    %p142 = scmp.ne.s32.totalorder %s137, %s139
    %p143 = scmp.eq.s32.totalorder %s12, 0
    %p144 = por %p142, %p143
    %p145 = scmp.ne.s32.totalorder %s137, %s139
    %p146 = scmp.eq.s32.totalorder %s17, 1
    %p147 = por %p145, %p146
    %p148 = scmp.ne.s32.totalorder %s139, %s140
    %p149 = scmp.eq.s32.totalorder %s17, 0
    %p150 = por %p148, %p149
    %p151 = scmp.ne.s32.totalorder %s139, %s140
    %p152 = scmp.eq.s32.totalorder %s18, 1
    %p153 = por %p151, %p152
    %p155 = scmp.ne.s32.totalorder %s140, %s154
    %p156 = scmp.eq.s32.totalorder %s18, 0
    %p157 = por %p155, %p156
    %s159 = sadd.s32 %s158, 1
    %p162 = scmp.eq.s32.totalorder %s12, 1
    %p163 = scmp.ne.s32.totalorder %s158, %s160
    %p164 = scmp.eq.s32.totalorder %s12, 0
    %p165 = por %p163, %p164
    %p166 = scmp.ne.s32.totalorder %s158, %s160
    %p167 = scmp.eq.s32.totalorder %s17, 1
    %p168 = por %p166, %p167
    %p169 = scmp.ne.s32.totalorder %s160, %s161
    %p170 = scmp.eq.s32.totalorder %s17, 0
    %p171 = por %p169, %p170
    %p172 = scmp.ne.s32.totalorder %s160, %s161
    %p173 = scmp.eq.s32.totalorder %s18, 1
    %p174 = por %p172, %p173
    %p176 = scmp.ne.s32.totalorder %s161, %s175
    %p177 = scmp.eq.s32.totalorder %s18, 0
    %p178 = por %p176, %p177
    %s179 = ssub.s32 %s19, %s38
    %s180 = ssub.s32 %s20, %s34
    %s181 = sor.u32 %s179, %s180
    %p182 = scmp.eq.s32.totalorder %s181, 0
    %s184 = sadd.s32 %s183, 1
    %s185 = scalar_select %p182, %s183, %s184
    %p188 = pneg %p182
    %p189 = scmp.eq.s32.totalorder %s12, 1
    %p190 = por %p188, %p189
    %p191 = scmp.ne.s32.totalorder %s183, %s186
    %p192 = scmp.eq.s32.totalorder %s12, 0
    %p193 = por %p191, %p192
    %p194 = scmp.ne.s32.totalorder %s183, %s186
    %p195 = scmp.eq.s32.totalorder %s17, 1
    %p196 = por %p194, %p195
    %p197 = scmp.ne.s32.totalorder %s186, %s187
    %p198 = scmp.eq.s32.totalorder %s17, 0
    %p199 = por %p197, %p198
    %p200 = scmp.ne.s32.totalorder %s186, %s187
    %p201 = scmp.eq.s32.totalorder %s18, 1
    %p202 = por %p200, %p201
    %p204 = scmp.ne.s32.totalorder %s187, %s203
    %p205 = scmp.eq.s32.totalorder %s18, 0
    %p206 = por %p204, %p205
    %p207 = scmp.le.s32.totalorder 1, %s12
    %p208 = scmp.lt.s32.totalorder %s12, 3
    %p209 = pnand %p207, %p208
    %p210 = pneg %p209
    // Predicated region
    $region9: #{pointnet_cls_forward.6} parent=5 // pred_check
      _
    $region10: #{pointnet_cls_forward.6} parent=5 // pred_check_branch
      %212 = sbr.rel (%p209) target = $region12
    $region11: #{pointnet_cls_forward.6} parent=5 // pred_region
      %s213 = ssub.s32 %s12, 1
      // Predicated region
      $region13: #{pointnet_cls_forward.6} parent=11 // pred_check
        %p214 = pneg %p108
      $region14: #{pointnet_cls_forward.6} parent=11 // pred_check_branch
        %216 = sbr.rel (%p214) target = $region16
      $region15: #{pointnet_cls_forward.6} parent=11 // pred_region
        _
      $region16: #{pointnet_cls_forward.6} parent=11 // pred_fallthru
        _
      // Predicated region
      $region17: #{pointnet_cls_forward.6} parent=11 // pred_check
        %p217 = pneg %p129
      $region18: #{pointnet_cls_forward.6} parent=11 // pred_check_branch
        %219 = sbr.rel (%p217) target = $region20
      $region19: #{pointnet_cls_forward.6} parent=11 // pred_region
        _
      $region20: #{pointnet_cls_forward.6} parent=11 // pred_fallthru
        _
      // Predicated region
      $region21: #{pointnet_cls_forward.6} parent=11 // pred_check
        %p220 = pneg %p150
      $region22: #{pointnet_cls_forward.6} parent=11 // pred_check_branch
        %222 = sbr.rel (%p220) target = $region24
      $region23: #{pointnet_cls_forward.6} parent=11 // pred_region
        _
      $region24: #{pointnet_cls_forward.6} parent=11 // pred_fallthru
        _
      // Predicated region
      $region25: #{pointnet_cls_forward.6} parent=11 // pred_check
        %p223 = pneg %p171
      $region26: #{pointnet_cls_forward.6} parent=11 // pred_check_branch
        %225 = sbr.rel (%p223) target = $region28
      $region27: #{pointnet_cls_forward.6} parent=11 // pred_region
        _
      $region28: #{pointnet_cls_forward.6} parent=11 // pred_fallthru
        _
    $region12: #{pointnet_cls_forward.6} parent=5 // pred_fallthru
      _
    %p226 = scmp.lt.s32.totalorder %s12, 2
    // Predicated region
    $region29: #{pointnet_cls_forward.6} parent=5 // pred_check
      %p227 = pneg %p226
    $region30: #{pointnet_cls_forward.6} parent=5 // pred_check_branch
      %229 = sbr.rel (%p227) target = $region32
    $region31: #{pointnet_cls_forward.6} parent=5 // pred_region
      // Predicated region
      $region33: #{pointnet_cls_forward.6} parent=31 // pred_check
        %p230 = pneg %p55
      $region34: #{pointnet_cls_forward.6} parent=31 // pred_check_branch
        %232 = sbr.rel (%p230) target = $region36
      $region35: #{pointnet_cls_forward.6} parent=31 // pred_region
        %s233 = sadd.s32 %s20, %s21
        %s234 = smul.u32 16, %s233
        %p235 = scmp.lt.s32.totalorder %s19, 1
        %s236 = scalar_select %p235, %s19, 1
        %p237 = scmp.lt.s32.totalorder %s234, 15
        %s238 = scalar_select %p237, %s234, 15
        %s239 = smul.addr %s236, 16
        %s240 = sadd.s32 %s238, %s239
        %s241 = smul.addr %s240, 4
        %s242 = scalar_lea.vmem %s0, %s241
        %s243 = sadd.s32 %s20, %s21
        %s244 = smul.u32 16, %s243
      $region36: #{pointnet_cls_forward.6} parent=31 // pred_fallthru
        _
      // Predicated region
      $region37: #{pointnet_cls_forward.6} parent=31 // pred_check
        %p245 = pneg %p81
      $region38: #{pointnet_cls_forward.6} parent=31 // pred_check_branch
        %247 = sbr.rel (%p245) target = $region40
      $region39: #{pointnet_cls_forward.6} parent=31 // pred_region
        %p248 = scmp.lt.s32.totalorder %s19, 1
        %s249 = scalar_select %p248, %s19, 1
        %s250 = smul.addr %s249, 4
        %s251 = scalar_lea.vmem %s1, %s250
      $region40: #{pointnet_cls_forward.6} parent=31 // pred_fallthru
        _
    $region32: #{pointnet_cls_forward.6} parent=5 // pred_fallthru
      _
    %p252 = scmp.le.s32.totalorder 1, %s12
    %p253 = scmp.lt.s32.totalorder %s12, 3
    %p254 = pnand %p252, %p253
    %p255 = pneg %p254
    // Predicated region
    $region41: #{pointnet_cls_forward.6} parent=5 // pred_check
      _
    $region42: #{pointnet_cls_forward.6} parent=5 // pred_check_branch
      %257 = sbr.rel (%p254) target = $region44
    $region43: #{pointnet_cls_forward.6} parent=5 // pred_region
      %s258 = ssub.s32 %s12, 1
      %s259 = sadd.s32 %s23, %s24
      %s260 = smul.u32 16, %s259
      %p261 = scmp.lt.s32.totalorder %s22, 1
      %s262 = scalar_select %p261, %s22, 1
      %p263 = scmp.lt.s32.totalorder %s260, 15
      %s264 = scalar_select %p263, %s260, 15
      %s265 = smul.addr %s262, 16
      %s266 = sadd.s32 %s264, %s265
      %s267 = smul.addr %s266, 4
      %s268 = scalar_lea.vmem %s0, %s267
      %p269 = pneg %p61
      %p270 = pneg %p58
      %p271 = scmp.lt.s32.totalorder %s22, 1
      %s272 = scalar_select %p271, %s22, 1
      %s273 = smul.addr %s272, 4
      %s274 = scalar_lea.vmem %s1, %s273
      %p275 = pneg %p87
      %p276 = pneg %p84
      %p277 = pneg %p108
      %p278 = pneg %p105
      %p279 = pneg %p129
      %p280 = pneg %p126
      %p281 = pneg %p150
      %p282 = pneg %p147
      %p283 = pneg %p171
      %p284 = pneg %p168
      %p285 = pneg %p199
      %p286 = pneg %p196
      %p287 = scmp.lt.s32.totalorder %s22, 1
      %s288 = scalar_select %p287, %s22, 1
      %p289 = scmp.lt.s32.totalorder %s23, 0
      %s290 = scalar_select %p289, %s23, 0
      %s291 = smul.addr %s290, 8
      %s292 = smul.addr %s288, 8
      %s293 = sadd.s32 %s291, %s292
      %s294 = smul.addr %s293, 8
      %s295 = scalar_lea.vmem %s6, %s294
      %s296 = sadd.s32 %s23, %s24
      %s297 = smul.u32 16, %s296
      %p298 = scmp.lt.s32.totalorder %s22, 1
      %s299 = scalar_select %p298, %s22, 1
      %p300 = scmp.lt.s32.totalorder %s297, 15
      %s301 = scalar_select %p300, %s297, 15
      %s302 = smul.addr %s299, 16
      %s303 = sadd.s32 %s301, %s302
      %s304 = smul.addr %s303, 4
      %s305 = scalar_lea.vmem %s0, %s304
      %s306 = sadd.s32 %s23, %s24
      %s307 = smul.u32 16, %s306
      %p308 = scmp.lt.s32.totalorder %s22, 1
      %s309 = scalar_select %p308, %s22, 1
      %s310 = smul.addr %s309, 4
      %s311 = scalar_lea.vmem %s1, %s310
      %p312 = scmp.lt.s32.totalorder %s22, 1
      %s313 = scalar_select %p312, %s22, 1
      %p314 = scmp.lt.s32.totalorder %s23, 0
      %s315 = scalar_select %p314, %s23, 0
      %s316 = smul.addr %s315, 8
      %s317 = smul.addr %s313, 8
      %s318 = sadd.s32 %s316, %s317
      %s319 = smul.addr %s318, 8
      %s320 = scalar_lea.vmem %s6, %s319
      %v322 = vld [vmem:[%s305] sm:$0xf]
      %v323 = vld [vmem:[%s305 + $0x4] sm:$0xf]
      %v324 = vld [vmem:[%s305 + $0x8] sm:$0xf]
      %v325 = vld [vmem:[%s305 + $0xc] sm:$0xf]
      %v326 = vld [vmem:[%s305 + $0x10] sm:$0xf]
      %v327 = vld [vmem:[%s305 + $0x14] sm:$0xf]
      %v328 = vld [vmem:[%s305 + $0x18] sm:$0xf]
      %v329 = vld [vmem:[%s305 + $0x1c] sm:$0xf]
      %v330 = vld [vmem:[%s305 + $0x20] sm:$0xf]
      %v331 = vld [vmem:[%s305 + $0x24] sm:$0xf]
      %v332 = vld [vmem:[%s305 + $0x28] sm:$0xf]
      %v333 = vld [vmem:[%s305 + $0x2c] sm:$0xf]
      %v334 = vld [vmem:[%s305 + $0x30] sm:$0xf]
      %v335 = vld [vmem:[%s305 + $0x34] sm:$0xf]
      %v336 = vld [vmem:[%s305 + $0x38] sm:$0xf]
      %v337 = vld [vmem:[%s305 + $0x3c] sm:$0xf]
      %v338 = vld [vmem:[%s311] sm:$0xf]
      %v339 = vld [vmem:[%s2] sm:$0x1]
      %v341 = vlaneseq
      %v342 = vshrl.u32 %v341, 7
      %v343 = vsub.s32 0, %v342
      %v344 = vrot.slane %v339, %v343
      %v362 = vunpack.c.l.b16 %v322
      %v363 = vunpack.c.l.b16 %v323
      %v364 = vunpack.c.l.b16 %v324
      %v365 = vunpack.c.l.b16 %v325
      %v366 = vunpack.c.l.b16 %v326
      %v367 = vunpack.c.l.b16 %v327
      %v368 = vunpack.c.l.b16 %v328
      %v369 = vunpack.c.l.b16 %v329
      %v370 = vunpack.c.l.b16 %v330
      %v371 = vunpack.c.l.b16 %v331
      %v372 = vunpack.c.l.b16 %v332
      %v373 = vunpack.c.l.b16 %v333
      %v374 = vunpack.c.l.b16 %v334
      %v375 = vunpack.c.l.b16 %v335
      %v376 = vunpack.c.l.b16 %v336
      %v377 = vunpack.c.l.b16 %v337
      %v378 = vpack.c.b16 %v363, %v362
      %v379 = vpack.c.b16 %v365, %v364
      %v380 = vpack.c.b16 %v367, %v366
      %v381 = vpack.c.b16 %v369, %v368
      %v382 = vpack.c.b16 %v371, %v370
      %v383 = vpack.c.b16 %v373, %v372
      %v384 = vpack.c.b16 %v375, %v374
      %v385 = vpack.c.b16 %v377, %v376
      %vm386 = vcmask 64512
      %v388 = vsel %vm386, %v378, 0
      %v391 = vsel %vm386, %v379, 0
      %v394 = vsel %vm386, %v380, 0
      %v397 = vsel %vm386, %v381, 0
      %v400 = vsel %vm386, %v382, 0
      %v403 = vsel %vm386, %v383, 0
      %v406 = vsel %vm386, %v384, 0
      %v409 = vsel %vm386, %v385, 0
      %vm411 = vcmask 1043456
      %v413 = vsel %vm411, %v338, 0
      %415 = vmatprep.subr.bf16.mxu0 0
      %416 = vmatpush1.bf16.msra.mxu0 %v413
      %417 = vmatprep.subr.bf16.mxu0 0
      %418 = vmatpush1.bf16.msra.mxu0 0
      %419 = vmatprep.subr.bf16.mxu0 0
      %420 = vmatpush1.bf16.msra.mxu0 0
      %421 = vmatprep.subr.bf16.mxu0 0
      %422 = vmatpush1.bf16.msra.mxu0 0
      %423 = vmatprep.subr.bf16.mxu0 0
      %424 = vmatpush1.bf16.msra.mxu0 0
      %425 = vmatprep.subr.bf16.mxu0 0
      %426 = vmatpush1.bf16.msra.mxu0 0
      %427 = vmatprep.subr.bf16.mxu0 0
      %428 = vmatpush1.bf16.msra.mxu0 0
      %429 = vmatprep.subr.bf16.mxu0 0
      %430 = vmatpush1.bf16.msra.mxu0 0
      %431 = vmatprep.subr.bf16.mxu0 0
      %432 = vmatpush1.bf16.msra.mxu0 0
      %433 = vmatprep.subr.bf16.mxu0 0
      %434 = vmatpush1.bf16.msra.mxu0 0
      %435 = vmatprep.subr.bf16.mxu0 0
      %436 = vmatpush1.bf16.msra.mxu0 0
      %437 = vmatprep.subr.bf16.mxu0 0
      %438 = vmatpush1.bf16.msra.mxu0 0
      %439 = vmatprep.subr.bf16.mxu0 0
      %440 = vmatpush1.bf16.msra.mxu0 0
      %441 = vmatprep.subr.bf16.mxu0 0
      %442 = vmatpush1.bf16.msra.mxu0 0
      %443 = vmatprep.subr.bf16.mxu0 0
      %444 = vmatpush1.bf16.msra.mxu0 0
      %445 = vmatprep.subr.bf16.mxu0 0
      %446 = vmatpush1.bf16.msra.mxu0 0
      %447 = vmatprep.mubr.bf16.mxu0 0
      %448 = vmatmul.mubr.bf16.gmra.mrb[0].mxu0 %v388
      %v449 = vpop.f32.mrb[0].mxu0
      %v450 = vadd.f32 %v344, %v449
      %v451 = vpop.f32.mrb[0].mxu0
      %v452 = vpop.f32.mrb[0].mxu0
      %v453 = vadd.f32 %v344, %v452
      %v454 = vpop.f32.mrb[0].mxu0
      %455 = vmatprep.mubr.bf16.mxu0 0
      %456 = vmatmul.mubr.bf16.gmra.mrb[0].mxu0 %v391
      %v457 = vpop.f32.mrb[0].mxu0
      %v458 = vadd.f32 %v344, %v457
      %v459 = vpop.f32.mrb[0].mxu0
      %v460 = vpop.f32.mrb[0].mxu0
      %v461 = vadd.f32 %v344, %v460
      %v462 = vpop.f32.mrb[0].mxu0
      %463 = vmatprep.mubr.bf16.mxu0 0
      %464 = vmatmul.mubr.bf16.gmra.mrb[0].mxu0 %v394
      %v465 = vpop.f32.mrb[0].mxu0
      %v466 = vadd.f32 %v344, %v465
      %v467 = vpop.f32.mrb[0].mxu0
      %v468 = vpop.f32.mrb[0].mxu0
      %v469 = vadd.f32 %v344, %v468
      %v470 = vpop.f32.mrb[0].mxu0
      %471 = vmatprep.mubr.bf16.mxu0 0
      %472 = vmatmul.mubr.bf16.gmra.mrb[0].mxu0 %v397
      %v473 = vpop.f32.mrb[0].mxu0
      %v474 = vadd.f32 %v344, %v473
      %v475 = vpop.f32.mrb[0].mxu0
      %v476 = vpop.f32.mrb[0].mxu0
      %v477 = vadd.f32 %v344, %v476
      %v478 = vpop.f32.mrb[0].mxu0
      %479 = vmatprep.mubr.bf16.mxu0 0
      %480 = vmatmul.mubr.bf16.gmra.mrb[0].mxu0 %v400
      %v481 = vpop.f32.mrb[0].mxu0
      %v482 = vadd.f32 %v344, %v481
      %v483 = vpop.f32.mrb[0].mxu0
      %v484 = vpop.f32.mrb[0].mxu0
      %v485 = vadd.f32 %v344, %v484
      %v486 = vpop.f32.mrb[0].mxu0
      %487 = vmatprep.mubr.bf16.mxu0 0
      %488 = vmatmul.mubr.bf16.gmra.mrb[0].mxu0 %v403
      %v489 = vpop.f32.mrb[0].mxu0
      %v490 = vadd.f32 %v344, %v489
      %v491 = vpop.f32.mrb[0].mxu0
      %v492 = vpop.f32.mrb[0].mxu0
      %v493 = vadd.f32 %v344, %v492
      %v494 = vpop.f32.mrb[0].mxu0
      %495 = vmatprep.mubr.bf16.mxu0 0
      %496 = vmatmul.mubr.bf16.gmra.mrb[0].mxu0 %v406
      %v497 = vpop.f32.mrb[0].mxu0
      %v498 = vadd.f32 %v344, %v497
      %v499 = vpop.f32.mrb[0].mxu0
      %v500 = vpop.f32.mrb[0].mxu0
      %v501 = vadd.f32 %v344, %v500
      %v502 = vpop.f32.mrb[0].mxu0
      %503 = vmatprep.mubr.bf16.mxu0 0
      %504 = vmatmul.mubr.bf16.gmra.mrb[0].mxu0 %v409
      %v505 = vpop.f32.mrb[0].mxu0
      %v506 = vadd.f32 %v344, %v505
      %v507 = vpop.f32.mrb[0].mxu0
      %v508 = vpop.f32.mrb[0].mxu0
      %v509 = vadd.f32 %v344, %v508
      %v510 = vpop.f32.mrb[0].mxu0
      %511 = vdwg.mxu0
      %v512 = vmax.f32 %v450, 0.0
      %v513 = vmax.f32 %v453, 0.0
      %v514 = vmax.f32 %v458, 0.0
      %v515 = vmax.f32 %v461, 0.0
      %v516 = vmax.f32 %v466, 0.0
      %v517 = vmax.f32 %v469, 0.0
      %v518 = vmax.f32 %v474, 0.0
      %v519 = vmax.f32 %v477, 0.0
      %v520 = vmax.f32 %v482, 0.0
      %v521 = vmax.f32 %v485, 0.0
      %v522 = vmax.f32 %v490, 0.0
      %v523 = vmax.f32 %v493, 0.0
      %v524 = vmax.f32 %v498, 0.0
      %v525 = vmax.f32 %v501, 0.0
      %v526 = vmax.f32 %v506, 0.0
      %v527 = vmax.f32 %v509, 0.0
      %v528 = vpack.c.bf16 %v513, %v512
      %v529 = vpack.c.bf16 %v515, %v514
      %v530 = vpack.c.bf16 %v517, %v516
      %v531 = vpack.c.bf16 %v519, %v518
      %v532 = vpack.c.bf16 %v521, %v520
      %v533 = vpack.c.bf16 %v523, %v522
      %v534 = vpack.c.bf16 %v525, %v524
      %v535 = vpack.c.bf16 %v527, %v526
      %v536 = vld [vmem:[%s3] sm:$0xf]
      %v537 = vld [vmem:[%s3 + $0x4] sm:$0xf]
      %v538 = vld [vmem:[%s3 + $0x8] sm:$0xf]
      %v539 = vld [vmem:[%s3 + $0xc] sm:$0xf]
      %v540 = vld [vmem:[%s3 + $0x10] sm:$0xf]
      %v541 = vld [vmem:[%s3 + $0x14] sm:$0xf]
      %v542 = vld [vmem:[%s3 + $0x18] sm:$0xf]
      %v543 = vld [vmem:[%s3 + $0x1c] sm:$0xf]
      %v544 = vld [vmem:[%s4] sm:$0x1]
      %v546 = vlaneseq
      %v547 = vshrl.u32 %v546, 7
      %v548 = vsub.s32 0, %v547
      %v549 = vrot.slane %v544, %v548
      %v559 = vunpack.c.l.b16 %v536
      %v560 = vunpack.c.l.b16 %v537
      %v561 = vunpack.c.l.b16 %v538
      %v562 = vunpack.c.l.b16 %v539
      %v563 = vunpack.c.l.b16 %v540
      %v564 = vunpack.c.l.b16 %v541
      %v565 = vunpack.c.l.b16 %v542
      %v566 = vunpack.c.l.b16 %v543
      %v567 = vpack.c.b16 %v560, %v559
      %v568 = vpack.c.b16 %v562, %v561
      %v569 = vpack.c.b16 %v564, %v563
      %v570 = vpack.c.b16 %v566, %v565
      %vm575 = vcmask 523264
      %v577 = vsel %vm575, %v528, 0
      %v580 = vsel %vm575, %v529, 0
      %v583 = vsel %vm575, %v530, 0
      %v586 = vsel %vm575, %v531, 0
      %v589 = vsel %vm575, %v532, 0
      %v592 = vsel %vm575, %v533, 0
      %v595 = vsel %vm575, %v534, 0
      %v598 = vsel %vm575, %v535, 0
      %600 = vmatprep.subr.bf16.mxu0 0
      %601 = vmatpush1.bf16.msra.mxu0 %v567
      %602 = vmatprep.subr.bf16.mxu0 0
      %603 = vmatpush1.bf16.msra.mxu0 %v568
      %604 = vmatprep.subr.bf16.mxu0 0
      %605 = vmatpush1.bf16.msra.mxu0 %v569
      %606 = vmatprep.subr.bf16.mxu0 0
      %607 = vmatpush1.bf16.msra.mxu0 %v570
      %608 = vmatprep.subr.bf16.mxu0 0
      %609 = vmatpush1.bf16.msra.mxu0 0
      %610 = vmatprep.subr.bf16.mxu0 0
      %611 = vmatpush1.bf16.msra.mxu0 0
      %612 = vmatprep.subr.bf16.mxu0 0
      %613 = vmatpush1.bf16.msra.mxu0 0
      %614 = vmatprep.subr.bf16.mxu0 0
      %615 = vmatpush1.bf16.msra.mxu0 0
      %616 = vmatprep.subr.bf16.mxu0 0
      %617 = vmatpush1.bf16.msra.mxu0 0
      %618 = vmatprep.subr.bf16.mxu0 0
      %619 = vmatpush1.bf16.msra.mxu0 0
      %620 = vmatprep.subr.bf16.mxu0 0
      %621 = vmatpush1.bf16.msra.mxu0 0
      %622 = vmatprep.subr.bf16.mxu0 0
      %623 = vmatpush1.bf16.msra.mxu0 0
      %624 = vmatprep.subr.bf16.mxu0 0
      %625 = vmatpush1.bf16.msra.mxu0 0
      %626 = vmatprep.subr.bf16.mxu0 0
      %627 = vmatpush1.bf16.msra.mxu0 0
      %628 = vmatprep.subr.bf16.mxu0 0
      %629 = vmatpush1.bf16.msra.mxu0 0
      %630 = vmatprep.subr.bf16.mxu0 0
      %631 = vmatpush1.bf16.msra.mxu0 0
      %632 = vmatprep.mubr.bf16.mxu0 0
      %633 = vmatmul.mubr.bf16.gmra.mrb[0].mxu0 %v577
      %v634 = vpop.f32.mrb[0].mxu0
      %v635 = vadd.f32 %v549, %v634
      %v636 = vpop.f32.mrb[0].mxu0
      %v637 = vpop.f32.mrb[0].mxu0
      %v638 = vadd.f32 %v549, %v637
      %v639 = vpop.f32.mrb[0].mxu0
      %640 = vmatprep.mubr.bf16.mxu0 0
      %641 = vmatmul.mubr.bf16.gmra.mrb[0].mxu0 %v580
      %v642 = vpop.f32.mrb[0].mxu0
      %v643 = vadd.f32 %v549, %v642
      %v644 = vpop.f32.mrb[0].mxu0
      %v645 = vpop.f32.mrb[0].mxu0
      %v646 = vadd.f32 %v549, %v645
      %v647 = vpop.f32.mrb[0].mxu0
      %648 = vmatprep.mubr.bf16.mxu0 0
      %649 = vmatmul.mubr.bf16.gmra.mrb[0].mxu0 %v583
      %v650 = vpop.f32.mrb[0].mxu0
      %v651 = vadd.f32 %v549, %v650
      %v652 = vpop.f32.mrb[0].mxu0
      %v653 = vpop.f32.mrb[0].mxu0
      %v654 = vadd.f32 %v549, %v653
      %v655 = vpop.f32.mrb[0].mxu0
      %656 = vmatprep.mubr.bf16.mxu0 0
      %657 = vmatmul.mubr.bf16.gmra.mrb[0].mxu0 %v586
      %v658 = vpop.f32.mrb[0].mxu0
      %v659 = vadd.f32 %v549, %v658
      %v660 = vpop.f32.mrb[0].mxu0
      %v661 = vpop.f32.mrb[0].mxu0
      %v662 = vadd.f32 %v549, %v661
      %v663 = vpop.f32.mrb[0].mxu0
      %664 = vmatprep.mubr.bf16.mxu0 0
      %665 = vmatmul.mubr.bf16.gmra.mrb[0].mxu0 %v589
      %v666 = vpop.f32.mrb[0].mxu0
      %v667 = vadd.f32 %v549, %v666
      %v668 = vpop.f32.mrb[0].mxu0
      %v669 = vpop.f32.mrb[0].mxu0
      %v670 = vadd.f32 %v549, %v669
      %v671 = vpop.f32.mrb[0].mxu0
      %672 = vmatprep.mubr.bf16.mxu0 0
      %673 = vmatmul.mubr.bf16.gmra.mrb[0].mxu0 %v592
      %v674 = vpop.f32.mrb[0].mxu0
      %v675 = vadd.f32 %v549, %v674
      %v676 = vpop.f32.mrb[0].mxu0
      %v677 = vpop.f32.mrb[0].mxu0
      %v678 = vadd.f32 %v549, %v677
      %v679 = vpop.f32.mrb[0].mxu0
      %680 = vmatprep.mubr.bf16.mxu0 0
      %681 = vmatmul.mubr.bf16.gmra.mrb[0].mxu0 %v595
      %v682 = vpop.f32.mrb[0].mxu0
      %v683 = vadd.f32 %v549, %v682
      %v684 = vpop.f32.mrb[0].mxu0
      %v685 = vpop.f32.mrb[0].mxu0
      %v686 = vadd.f32 %v549, %v685
      %v687 = vpop.f32.mrb[0].mxu0
      %688 = vmatprep.mubr.bf16.mxu0 0
      %689 = vmatmul.mubr.bf16.gmra.mrb[0].mxu0 %v598
      %v690 = vpop.f32.mrb[0].mxu0
      %v691 = vadd.f32 %v549, %v690
      %v692 = vpop.f32.mrb[0].mxu0
      %v693 = vpop.f32.mrb[0].mxu0
      %v694 = vadd.f32 %v549, %v693
      %v695 = vpop.f32.mrb[0].mxu0
      %696 = vdwg.mxu0
      %v697 = vmax.f32 %v635, 0.0
      %v698 = vmax.f32 %v638, 0.0
      %v699 = vmax.f32 %v643, 0.0
      %v700 = vmax.f32 %v646, 0.0
      %v701 = vmax.f32 %v651, 0.0
      %v702 = vmax.f32 %v654, 0.0
      %v703 = vmax.f32 %v659, 0.0
      %v704 = vmax.f32 %v662, 0.0
      %v705 = vmax.f32 %v667, 0.0
      %v706 = vmax.f32 %v670, 0.0
      %v707 = vmax.f32 %v675, 0.0
      %v708 = vmax.f32 %v678, 0.0
      %v709 = vmax.f32 %v683, 0.0
      %v710 = vmax.f32 %v686, 0.0
      %v711 = vmax.f32 %v691, 0.0
      %v712 = vmax.f32 %v694, 0.0
      %v713 = vpack.c.bf16 %v698, %v697
      %v714 = vpack.c.bf16 %v700, %v699
      %v715 = vpack.c.bf16 %v702, %v701
      %v716 = vpack.c.bf16 %v704, %v703
      %v717 = vpack.c.bf16 %v706, %v705
      %v718 = vpack.c.bf16 %v708, %v707
      %v719 = vpack.c.bf16 %v710, %v709
      %v720 = vpack.c.bf16 %v712, %v711
      %v721 = vld [vmem:[%s5] sm:$0xff]
      %v722 = vld [vmem:[%s5 + $0x8] sm:$0xff]
      %v723 = vld [vmem:[%s5 + $0x20] sm:$0xff]
      %v724 = vld [vmem:[%s5 + $0x28] sm:$0xff]
      %v725 = vld [vmem:[%s5 + $0x40] sm:$0xff]
      %v726 = vld [vmem:[%s5 + $0x48] sm:$0xff]
      %v727 = vld [vmem:[%s5 + $0x60] sm:$0xff]
      %v728 = vld [vmem:[%s5 + $0x68] sm:$0xff]
      %v729 = vld [vmem:[%s5 + $0x80] sm:$0xff]
      %v730 = vld [vmem:[%s5 + $0x88] sm:$0xff]
      %v731 = vld [vmem:[%s5 + $0xa0] sm:$0xff]
      %v732 = vld [vmem:[%s5 + $0xa8] sm:$0xff]
      %v733 = vld [vmem:[%s5 + $0xc0] sm:$0xff]
      %v734 = vld [vmem:[%s5 + $0xc8] sm:$0xff]
      %v735 = vld [vmem:[%s5 + $0xe0] sm:$0xff]
      %v736 = vld [vmem:[%s5 + $0xe8] sm:$0xff]
      %v737 = vld [vmem:[%s5 + $0x100] sm:$0xff]
      %v738 = vld [vmem:[%s5 + $0x108] sm:$0xff]
      %v739 = vld [vmem:[%s5 + $0x120] sm:$0xff]
      %v740 = vld [vmem:[%s5 + $0x128] sm:$0xff]
      %v741 = vld [vmem:[%s5 + $0x140] sm:$0xff]
      %v742 = vld [vmem:[%s5 + $0x148] sm:$0xff]
      %v743 = vld [vmem:[%s5 + $0x160] sm:$0xff]
      %v744 = vld [vmem:[%s5 + $0x168] sm:$0xff]
      %v745 = vld [vmem:[%s5 + $0x180] sm:$0xff]
      %v746 = vld [vmem:[%s5 + $0x188] sm:$0xff]
      %v747 = vld [vmem:[%s5 + $0x1a0] sm:$0xff]
      %v748 = vld [vmem:[%s5 + $0x1a8] sm:$0xff]
      %v749 = vld [vmem:[%s5 + $0x1c0] sm:$0xff]
      %v750 = vld [vmem:[%s5 + $0x1c8] sm:$0xff]
      %v751 = vld [vmem:[%s5 + $0x1e0] sm:$0xff]
      %v752 = vld [vmem:[%s5 + $0x1e8] sm:$0xff]
      %v785 = vunpack.c.l.b16 %v721
      %v786 = vunpack.c.h.b16 %v721
      %v787 = vunpack.c.l.b16 %v722
      %v788 = vunpack.c.h.b16 %v722
      %v789 = vunpack.c.l.b16 %v723
      %v790 = vunpack.c.h.b16 %v723
      %v791 = vunpack.c.l.b16 %v724
      %v792 = vunpack.c.h.b16 %v724
      %v793 = vunpack.c.l.b16 %v725
      %v794 = vunpack.c.h.b16 %v725
      %v795 = vunpack.c.l.b16 %v726
      %v796 = vunpack.c.h.b16 %v726
      %v797 = vunpack.c.l.b16 %v727
      %v798 = vunpack.c.h.b16 %v727
      %v799 = vunpack.c.l.b16 %v728
      %v800 = vunpack.c.h.b16 %v728
      %v801 = vunpack.c.l.b16 %v729
      %v802 = vunpack.c.h.b16 %v729
      %v803 = vunpack.c.l.b16 %v730
      %v804 = vunpack.c.h.b16 %v730
      %v805 = vunpack.c.l.b16 %v731
      %v806 = vunpack.c.h.b16 %v731
      %v807 = vunpack.c.l.b16 %v732
      %v808 = vunpack.c.h.b16 %v732
      %v809 = vunpack.c.l.b16 %v733
      %v810 = vunpack.c.h.b16 %v733
      %v811 = vunpack.c.l.b16 %v734
      %v812 = vunpack.c.h.b16 %v734
      %v813 = vunpack.c.l.b16 %v735
      %v814 = vunpack.c.h.b16 %v735
      %v815 = vunpack.c.l.b16 %v736
      %v816 = vunpack.c.h.b16 %v736
      %v817 = vunpack.c.l.b16 %v737
      %v818 = vunpack.c.h.b16 %v737
      %v819 = vunpack.c.l.b16 %v738
      %v820 = vunpack.c.h.b16 %v738
      %v821 = vunpack.c.l.b16 %v739
      %v822 = vunpack.c.h.b16 %v739
      %v823 = vunpack.c.l.b16 %v740
      %v824 = vunpack.c.h.b16 %v740
      %v825 = vunpack.c.l.b16 %v741
      %v826 = vunpack.c.h.b16 %v741
      %v827 = vunpack.c.l.b16 %v742
      %v828 = vunpack.c.h.b16 %v742
      %v829 = vunpack.c.l.b16 %v743
      %v830 = vunpack.c.h.b16 %v743
      %v831 = vunpack.c.l.b16 %v744
      %v832 = vunpack.c.h.b16 %v744
      %v833 = vunpack.c.l.b16 %v745
      %v834 = vunpack.c.h.b16 %v745
      %v835 = vunpack.c.l.b16 %v746
      %v836 = vunpack.c.h.b16 %v746
      %v837 = vunpack.c.l.b16 %v747
      %v838 = vunpack.c.h.b16 %v747
      %v839 = vunpack.c.l.b16 %v748
      %v840 = vunpack.c.h.b16 %v748
      %v841 = vunpack.c.l.b16 %v749
      %v842 = vunpack.c.h.b16 %v749
      %v843 = vunpack.c.l.b16 %v750
      %v844 = vunpack.c.h.b16 %v750
      %v845 = vunpack.c.l.b16 %v751
      %v846 = vunpack.c.h.b16 %v751
      %v847 = vunpack.c.l.b16 %v752
      %v848 = vunpack.c.h.b16 %v752
      %v849 = vpack.c.b16 %v789, %v785
      %v850 = vpack.c.b16 %v790, %v786
      %v851 = vpack.c.b16 %v791, %v787
      %v852 = vpack.c.b16 %v792, %v788
      %v853 = vpack.c.b16 %v797, %v793
      %v854 = vpack.c.b16 %v798, %v794
      %v855 = vpack.c.b16 %v799, %v795
      %v856 = vpack.c.b16 %v800, %v796
      %v857 = vpack.c.b16 %v805, %v801
      %v858 = vpack.c.b16 %v806, %v802
      %v859 = vpack.c.b16 %v807, %v803
      %v860 = vpack.c.b16 %v808, %v804
      %v861 = vpack.c.b16 %v813, %v809
      %v862 = vpack.c.b16 %v814, %v810
      %v863 = vpack.c.b16 %v815, %v811
      %v864 = vpack.c.b16 %v816, %v812
      %v865 = vpack.c.b16 %v821, %v817
      %v866 = vpack.c.b16 %v822, %v818
      %v867 = vpack.c.b16 %v823, %v819
      %v868 = vpack.c.b16 %v824, %v820
      %v869 = vpack.c.b16 %v829, %v825
      %v870 = vpack.c.b16 %v830, %v826
      %v871 = vpack.c.b16 %v831, %v827
      %v872 = vpack.c.b16 %v832, %v828
      %v873 = vpack.c.b16 %v837, %v833
      %v874 = vpack.c.b16 %v838, %v834
      %v875 = vpack.c.b16 %v839, %v835
      %v876 = vpack.c.b16 %v840, %v836
      %v877 = vpack.c.b16 %v845, %v841
      %v878 = vpack.c.b16 %v846, %v842
      %v879 = vpack.c.b16 %v847, %v843
      %v880 = vpack.c.b16 %v848, %v844
      %913 = vmatprep.subr.bf16.mxu0 %v850
      %914 = vmatpush1.bf16.msra.mxu0 %v849
      %915 = vmatprep.subr.bf16.mxu0 %v854
      %916 = vmatpush1.bf16.msra.mxu0 %v853
      %917 = vmatprep.subr.bf16.mxu0 %v858
      %918 = vmatpush1.bf16.msra.mxu0 %v857
      %919 = vmatprep.subr.bf16.mxu0 %v862
      %920 = vmatpush1.bf16.msra.mxu0 %v861
      %921 = vmatprep.subr.bf16.mxu0 %v866
      %922 = vmatpush1.bf16.msra.mxu0 %v865
      %923 = vmatprep.subr.bf16.mxu0 %v870
      %924 = vmatpush1.bf16.msra.mxu0 %v869
      %925 = vmatprep.subr.bf16.mxu0 %v874
      %926 = vmatpush1.bf16.msra.mxu0 %v873
      %927 = vmatprep.subr.bf16.mxu0 %v878
      %928 = vmatpush1.bf16.msra.mxu0 %v877
      %929 = vmatprep.subr.bf16.mxu0 0
      %930 = vmatpush1.bf16.msra.mxu0 0
      %931 = vmatprep.subr.bf16.mxu0 0
      %932 = vmatpush1.bf16.msra.mxu0 0
      %933 = vmatprep.subr.bf16.mxu0 0
      %934 = vmatpush1.bf16.msra.mxu0 0
      %935 = vmatprep.subr.bf16.mxu0 0
      %936 = vmatpush1.bf16.msra.mxu0 0
      %937 = vmatprep.subr.bf16.mxu0 0
      %938 = vmatpush1.bf16.msra.mxu0 0
      %939 = vmatprep.subr.bf16.mxu0 0
      %940 = vmatpush1.bf16.msra.mxu0 0
      %941 = vmatprep.subr.bf16.mxu0 0
      %942 = vmatpush1.bf16.msra.mxu0 0
      %943 = vmatprep.subr.bf16.mxu0 0
      %944 = vmatpush1.bf16.msra.mxu0 0
      %945 = vmatprep.mubr.bf16.mxu0 0
      %946 = vmatmul.mubr.bf16.gmra.mrb[0].mxu0 %v713
      %v947 = vpop.f32.mrb[0].mxu0
      %v948 = vadd.f32 0.0, %v947
      %v949 = vpop.f32.mrb[0].mxu0
      %v950 = vadd.f32 0.0, %v949
      %v951 = vpop.f32.mrb[0].mxu0
      %v952 = vadd.f32 0.0, %v951
      %v953 = vpop.f32.mrb[0].mxu0
      %v954 = vadd.f32 0.0, %v953
      %955 = vmatprep.mubr.bf16.mxu0 0
      %956 = vmatmul.mubr.bf16.gmra.mrb[0].mxu0 %v714
      %v957 = vpop.f32.mrb[0].mxu0
      %v958 = vadd.f32 0.0, %v957
      %v959 = vpop.f32.mrb[0].mxu0
      %v960 = vadd.f32 0.0, %v959
      %v961 = vpop.f32.mrb[0].mxu0
      %v962 = vadd.f32 0.0, %v961
      %v963 = vpop.f32.mrb[0].mxu0
      %v964 = vadd.f32 0.0, %v963
      %965 = vmatprep.mubr.bf16.mxu0 0
      %966 = vmatmul.mubr.bf16.gmra.mrb[0].mxu0 %v715
      %v967 = vpop.f32.mrb[0].mxu0
      %v968 = vadd.f32 0.0, %v967
      %v969 = vpop.f32.mrb[0].mxu0
      %v970 = vadd.f32 0.0, %v969
      %v971 = vpop.f32.mrb[0].mxu0
      %v972 = vadd.f32 0.0, %v971
      %v973 = vpop.f32.mrb[0].mxu0
      %v974 = vadd.f32 0.0, %v973
      %975 = vmatprep.mubr.bf16.mxu0 0
      %976 = vmatmul.mubr.bf16.gmra.mrb[0].mxu0 %v716
      %v977 = vpop.f32.mrb[0].mxu0
      %v978 = vadd.f32 0.0, %v977
      %v979 = vpop.f32.mrb[0].mxu0
      %v980 = vadd.f32 0.0, %v979
      %v981 = vpop.f32.mrb[0].mxu0
      %v982 = vadd.f32 0.0, %v981
      %v983 = vpop.f32.mrb[0].mxu0
      %v984 = vadd.f32 0.0, %v983
      %985 = vmatprep.mubr.bf16.mxu0 0
      %986 = vmatmul.mubr.bf16.gmra.mrb[0].mxu0 %v717
      %v987 = vpop.f32.mrb[0].mxu0
      %v988 = vadd.f32 0.0, %v987
      %v989 = vpop.f32.mrb[0].mxu0
      %v990 = vadd.f32 0.0, %v989
      %v991 = vpop.f32.mrb[0].mxu0
      %v992 = vadd.f32 0.0, %v991
      %v993 = vpop.f32.mrb[0].mxu0
      %v994 = vadd.f32 0.0, %v993
      %995 = vmatprep.mubr.bf16.mxu0 0
      %996 = vmatmul.mubr.bf16.gmra.mrb[0].mxu0 %v718
      %v997 = vpop.f32.mrb[0].mxu0
      %v998 = vadd.f32 0.0, %v997
      %v999 = vpop.f32.mrb[0].mxu0
      %v1000 = vadd.f32 0.0, %v999
      %v1001 = vpop.f32.mrb[0].mxu0
      %v1002 = vadd.f32 0.0, %v1001
      %v1003 = vpop.f32.mrb[0].mxu0
      %v1004 = vadd.f32 0.0, %v1003
      %1005 = vmatprep.mubr.bf16.mxu0 0
      %1006 = vmatmul.mubr.bf16.gmra.mrb[0].mxu0 %v719
      %v1007 = vpop.f32.mrb[0].mxu0
      %v1008 = vadd.f32 0.0, %v1007
      %v1009 = vpop.f32.mrb[0].mxu0
      %v1010 = vadd.f32 0.0, %v1009
      %v1011 = vpop.f32.mrb[0].mxu0
      %v1012 = vadd.f32 0.0, %v1011
      %v1013 = vpop.f32.mrb[0].mxu0
      %v1014 = vadd.f32 0.0, %v1013
      %1015 = vmatprep.mubr.bf16.mxu0 0
      %1016 = vmatmul.mubr.bf16.gmra.mrb[0].mxu0 %v720
      %v1017 = vpop.f32.mrb[0].mxu0
      %v1018 = vadd.f32 0.0, %v1017
      %v1019 = vpop.f32.mrb[0].mxu0
      %v1020 = vadd.f32 0.0, %v1019
      %v1021 = vpop.f32.mrb[0].mxu0
      %v1022 = vadd.f32 0.0, %v1021
      %v1023 = vpop.f32.mrb[0].mxu0
      %v1024 = vadd.f32 0.0, %v1023
      %1025 = vdwg.mxu0
      %1026 = vmatprep.subr.bf16.mxu0 %v852
      %1027 = vmatpush1.bf16.msra.mxu0 %v851
      %1028 = vmatprep.subr.bf16.mxu0 %v856
      %1029 = vmatpush1.bf16.msra.mxu0 %v855
      %1030 = vmatprep.subr.bf16.mxu0 %v860
      %1031 = vmatpush1.bf16.msra.mxu0 %v859
      %1032 = vmatprep.subr.bf16.mxu0 %v864
      %1033 = vmatpush1.bf16.msra.mxu0 %v863
      %1034 = vmatprep.subr.bf16.mxu0 %v868
      %1035 = vmatpush1.bf16.msra.mxu0 %v867
      %1036 = vmatprep.subr.bf16.mxu0 %v872
      %1037 = vmatpush1.bf16.msra.mxu0 %v871
      %1038 = vmatprep.subr.bf16.mxu0 %v876
      %1039 = vmatpush1.bf16.msra.mxu0 %v875
      %1040 = vmatprep.subr.bf16.mxu0 %v880
      %1041 = vmatpush1.bf16.msra.mxu0 %v879
      %1042 = vmatprep.subr.bf16.mxu0 0
      %1043 = vmatpush1.bf16.msra.mxu0 0
      %1044 = vmatprep.subr.bf16.mxu0 0
      %1045 = vmatpush1.bf16.msra.mxu0 0
      %1046 = vmatprep.subr.bf16.mxu0 0
      %1047 = vmatpush1.bf16.msra.mxu0 0
      %1048 = vmatprep.subr.bf16.mxu0 0
      %1049 = vmatpush1.bf16.msra.mxu0 0
      %1050 = vmatprep.subr.bf16.mxu0 0
      %1051 = vmatpush1.bf16.msra.mxu0 0
      %1052 = vmatprep.subr.bf16.mxu0 0
      %1053 = vmatpush1.bf16.msra.mxu0 0
      %1054 = vmatprep.subr.bf16.mxu0 0
      %1055 = vmatpush1.bf16.msra.mxu0 0
      %1056 = vmatprep.subr.bf16.mxu0 0
      %1057 = vmatpush1.bf16.msra.mxu0 0
      %1058 = vmatprep.mubr.bf16.mxu0 0
      %1059 = vmatmul.mubr.bf16.gmra.mrb[0].mxu0 %v713
      %v1060 = vpop.f32.mrb[0].mxu0
      %v1061 = vadd.f32 0.0, %v1060
      %v1062 = vpop.f32.mrb[0].mxu0
      %v1063 = vadd.f32 0.0, %v1062
      %v1064 = vpop.f32.mrb[0].mxu0
      %v1065 = vadd.f32 0.0, %v1064
      %v1066 = vpop.f32.mrb[0].mxu0
      %v1067 = vadd.f32 0.0, %v1066
      %1068 = vmatprep.mubr.bf16.mxu0 0
      %1069 = vmatmul.mubr.bf16.gmra.mrb[0].mxu0 %v714
      %v1070 = vpop.f32.mrb[0].mxu0
      %v1071 = vadd.f32 0.0, %v1070
      %v1072 = vpop.f32.mrb[0].mxu0
      %v1073 = vadd.f32 0.0, %v1072
      %v1074 = vpop.f32.mrb[0].mxu0
      %v1075 = vadd.f32 0.0, %v1074
      %v1076 = vpop.f32.mrb[0].mxu0
      %v1077 = vadd.f32 0.0, %v1076
      %1078 = vmatprep.mubr.bf16.mxu0 0
      %1079 = vmatmul.mubr.bf16.gmra.mrb[0].mxu0 %v715
      %v1080 = vpop.f32.mrb[0].mxu0
      %v1081 = vadd.f32 0.0, %v1080
      %v1082 = vpop.f32.mrb[0].mxu0
      %v1083 = vadd.f32 0.0, %v1082
      %v1084 = vpop.f32.mrb[0].mxu0
      %v1085 = vadd.f32 0.0, %v1084
      %v1086 = vpop.f32.mrb[0].mxu0
      %v1087 = vadd.f32 0.0, %v1086
      %1088 = vmatprep.mubr.bf16.mxu0 0
      %1089 = vmatmul.mubr.bf16.gmra.mrb[0].mxu0 %v716
      %v1090 = vpop.f32.mrb[0].mxu0
      %v1091 = vadd.f32 0.0, %v1090
      %v1092 = vpop.f32.mrb[0].mxu0
      %v1093 = vadd.f32 0.0, %v1092
      %v1094 = vpop.f32.mrb[0].mxu0
      %v1095 = vadd.f32 0.0, %v1094
      %v1096 = vpop.f32.mrb[0].mxu0
      %v1097 = vadd.f32 0.0, %v1096
      %1098 = vmatprep.mubr.bf16.mxu0 0
      %1099 = vmatmul.mubr.bf16.gmra.mrb[0].mxu0 %v717
      %v1100 = vpop.f32.mrb[0].mxu0
      %v1101 = vadd.f32 0.0, %v1100
      %v1102 = vpop.f32.mrb[0].mxu0
      %v1103 = vadd.f32 0.0, %v1102
      %v1104 = vpop.f32.mrb[0].mxu0
      %v1105 = vadd.f32 0.0, %v1104
      %v1106 = vpop.f32.mrb[0].mxu0
      %v1107 = vadd.f32 0.0, %v1106
      %1108 = vmatprep.mubr.bf16.mxu0 0
      %1109 = vmatmul.mubr.bf16.gmra.mrb[0].mxu0 %v718
      %v1110 = vpop.f32.mrb[0].mxu0
      %v1111 = vadd.f32 0.0, %v1110
      %v1112 = vpop.f32.mrb[0].mxu0
      %v1113 = vadd.f32 0.0, %v1112
      %v1114 = vpop.f32.mrb[0].mxu0
      %v1115 = vadd.f32 0.0, %v1114
      %v1116 = vpop.f32.mrb[0].mxu0
      %v1117 = vadd.f32 0.0, %v1116
      %1118 = vmatprep.mubr.bf16.mxu0 0
      %1119 = vmatmul.mubr.bf16.gmra.mrb[0].mxu0 %v719
      %v1120 = vpop.f32.mrb[0].mxu0
      %v1121 = vadd.f32 0.0, %v1120
      %v1122 = vpop.f32.mrb[0].mxu0
      %v1123 = vadd.f32 0.0, %v1122
      %v1124 = vpop.f32.mrb[0].mxu0
      %v1125 = vadd.f32 0.0, %v1124
      %v1126 = vpop.f32.mrb[0].mxu0
      %v1127 = vadd.f32 0.0, %v1126
      %1128 = vmatprep.mubr.bf16.mxu0 0
      %1129 = vmatmul.mubr.bf16.gmra.mrb[0].mxu0 %v720
      %v1130 = vpop.f32.mrb[0].mxu0
      %v1131 = vadd.f32 0.0, %v1130
      %v1132 = vpop.f32.mrb[0].mxu0
      %v1133 = vadd.f32 0.0, %v1132
      %v1134 = vpop.f32.mrb[0].mxu0
      %v1135 = vadd.f32 0.0, %v1134
      %v1136 = vpop.f32.mrb[0].mxu0
      %v1137 = vadd.f32 0.0, %v1136
      %1138 = vdwg.mxu0
      %v1139 = vmax.f32 %v948, %v952
      %v1140 = vmax.f32 %v1139, %v958
      %v1141 = vmax.f32 %v1140, %v962
      %v1142 = vmax.f32 %v1141, %v968
      %v1143 = vmax.f32 %v1142, %v972
      %v1144 = vmax.f32 %v1143, %v978
      %v1145 = vmax.f32 %v1144, %v982
      %v1146 = vmax.f32 %v1145, %v988
      %v1147 = vmax.f32 %v1146, %v992
      %v1148 = vmax.f32 %v1147, %v998
      %v1149 = vmax.f32 %v1148, %v1002
      %v1150 = vmax.f32 %v1149, %v1008
      %v1151 = vmax.f32 %v1150, %v1012
      %v1152 = vmax.f32 %v1151, %v1018
      %v1153 = vmax.f32 %v1152, %v1022
      %v1154 = vmax.f32 %v950, %v954
      %v1155 = vmax.f32 %v1154, %v960
      %v1156 = vmax.f32 %v1155, %v964
      %v1157 = vmax.f32 %v1156, %v970
      %v1158 = vmax.f32 %v1157, %v974
      %v1159 = vmax.f32 %v1158, %v980
      %v1160 = vmax.f32 %v1159, %v984
      %v1161 = vmax.f32 %v1160, %v990
      %v1162 = vmax.f32 %v1161, %v994
      %v1163 = vmax.f32 %v1162, %v1000
      %v1164 = vmax.f32 %v1163, %v1004
      %v1165 = vmax.f32 %v1164, %v1010
      %v1166 = vmax.f32 %v1165, %v1014
      %v1167 = vmax.f32 %v1166, %v1020
      %v1168 = vmax.f32 %v1167, %v1024
      %v1169 = vmax.f32 %v1061, %v1065
      %v1170 = vmax.f32 %v1169, %v1071
      %v1171 = vmax.f32 %v1170, %v1075
      %v1172 = vmax.f32 %v1171, %v1081
      %v1173 = vmax.f32 %v1172, %v1085
      %v1174 = vmax.f32 %v1173, %v1091
      %v1175 = vmax.f32 %v1174, %v1095
      %v1176 = vmax.f32 %v1175, %v1101
      %v1177 = vmax.f32 %v1176, %v1105
      %v1178 = vmax.f32 %v1177, %v1111
      %v1179 = vmax.f32 %v1178, %v1115
      %v1180 = vmax.f32 %v1179, %v1121
      %v1181 = vmax.f32 %v1180, %v1125
      %v1182 = vmax.f32 %v1181, %v1131
      %v1183 = vmax.f32 %v1182, %v1135
      %v1184 = vmax.f32 %v1063, %v1067
      %v1185 = vmax.f32 %v1184, %v1073
      %v1186 = vmax.f32 %v1185, %v1077
      %v1187 = vmax.f32 %v1186, %v1083
      %v1188 = vmax.f32 %v1187, %v1087
      %v1189 = vmax.f32 %v1188, %v1093
      %v1190 = vmax.f32 %v1189, %v1097
      %v1191 = vmax.f32 %v1190, %v1103
      %v1192 = vmax.f32 %v1191, %v1107
      %v1193 = vmax.f32 %v1192, %v1113
      %v1194 = vmax.f32 %v1193, %v1117
      %v1195 = vmax.f32 %v1194, %v1123
      %v1196 = vmax.f32 %v1195, %v1127
      %v1197 = vmax.f32 %v1196, %v1133
      %v1198 = vmax.f32 %v1197, %v1137
      %v1199 = vld [vmem:[%s5 + $0x10] sm:$0xff]
      %v1200 = vld [vmem:[%s5 + $0x18] sm:$0xff]
      %v1201 = vld [vmem:[%s5 + $0x30] sm:$0xff]
      %v1202 = vld [vmem:[%s5 + $0x38] sm:$0xff]
      %v1203 = vld [vmem:[%s5 + $0x50] sm:$0xff]
      %v1204 = vld [vmem:[%s5 + $0x58] sm:$0xff]
      %v1205 = vld [vmem:[%s5 + $0x70] sm:$0xff]
      %v1206 = vld [vmem:[%s5 + $0x78] sm:$0xff]
      %v1207 = vld [vmem:[%s5 + $0x90] sm:$0xff]
      %v1208 = vld [vmem:[%s5 + $0x98] sm:$0xff]
      %v1209 = vld [vmem:[%s5 + $0xb0] sm:$0xff]
      %v1210 = vld [vmem:[%s5 + $0xb8] sm:$0xff]
      %v1211 = vld [vmem:[%s5 + $0xd0] sm:$0xff]
      %v1212 = vld [vmem:[%s5 + $0xd8] sm:$0xff]
      %v1213 = vld [vmem:[%s5 + $0xf0] sm:$0xff]
      %v1214 = vld [vmem:[%s5 + $0xf8] sm:$0xff]
      %v1215 = vld [vmem:[%s5 + $0x110] sm:$0xff]
      %v1216 = vld [vmem:[%s5 + $0x118] sm:$0xff]
      %v1217 = vld [vmem:[%s5 + $0x130] sm:$0xff]
      %v1218 = vld [vmem:[%s5 + $0x138] sm:$0xff]
      %v1219 = vld [vmem:[%s5 + $0x150] sm:$0xff]
      %v1220 = vld [vmem:[%s5 + $0x158] sm:$0xff]
      %v1221 = vld [vmem:[%s5 + $0x170] sm:$0xff]
      %v1222 = vld [vmem:[%s5 + $0x178] sm:$0xff]
      %v1223 = vld [vmem:[%s5 + $0x190] sm:$0xff]
      %v1224 = vld [vmem:[%s5 + $0x198] sm:$0xff]
      %v1225 = vld [vmem:[%s5 + $0x1b0] sm:$0xff]
      %v1226 = vld [vmem:[%s5 + $0x1b8] sm:$0xff]
      %v1227 = vld [vmem:[%s5 + $0x1d0] sm:$0xff]
      %v1228 = vld [vmem:[%s5 + $0x1d8] sm:$0xff]
      %v1229 = vld [vmem:[%s5 + $0x1f0] sm:$0xff]
      %v1230 = vld [vmem:[%s5 + $0x1f8] sm:$0xff]
      %v1263 = vunpack.c.l.b16 %v1199
      %v1264 = vunpack.c.h.b16 %v1199
      %v1265 = vunpack.c.l.b16 %v1200
      %v1266 = vunpack.c.h.b16 %v1200
      %v1267 = vunpack.c.l.b16 %v1201
      %v1268 = vunpack.c.h.b16 %v1201
      %v1269 = vunpack.c.l.b16 %v1202
      %v1270 = vunpack.c.h.b16 %v1202
      %v1271 = vunpack.c.l.b16 %v1203
      %v1272 = vunpack.c.h.b16 %v1203
      %v1273 = vunpack.c.l.b16 %v1204
      %v1274 = vunpack.c.h.b16 %v1204
      %v1275 = vunpack.c.l.b16 %v1205
      %v1276 = vunpack.c.h.b16 %v1205
      %v1277 = vunpack.c.l.b16 %v1206
      %v1278 = vunpack.c.h.b16 %v1206
      %v1279 = vunpack.c.l.b16 %v1207
      %v1280 = vunpack.c.h.b16 %v1207
      %v1281 = vunpack.c.l.b16 %v1208
      %v1282 = vunpack.c.h.b16 %v1208
      %v1283 = vunpack.c.l.b16 %v1209
      %v1284 = vunpack.c.h.b16 %v1209
      %v1285 = vunpack.c.l.b16 %v1210
      %v1286 = vunpack.c.h.b16 %v1210
      %v1287 = vunpack.c.l.b16 %v1211
      %v1288 = vunpack.c.h.b16 %v1211
      %v1289 = vunpack.c.l.b16 %v1212
      %v1290 = vunpack.c.h.b16 %v1212
      %v1291 = vunpack.c.l.b16 %v1213
      %v1292 = vunpack.c.h.b16 %v1213
      %v1293 = vunpack.c.l.b16 %v1214
      %v1294 = vunpack.c.h.b16 %v1214
      %v1295 = vunpack.c.l.b16 %v1215
      %v1296 = vunpack.c.h.b16 %v1215
      %v1297 = vunpack.c.l.b16 %v1216
      %v1298 = vunpack.c.h.b16 %v1216
      %v1299 = vunpack.c.l.b16 %v1217
      %v1300 = vunpack.c.h.b16 %v1217
      %v1301 = vunpack.c.l.b16 %v1218
      %v1302 = vunpack.c.h.b16 %v1218
      %v1303 = vunpack.c.l.b16 %v1219
      %v1304 = vunpack.c.h.b16 %v1219
      %v1305 = vunpack.c.l.b16 %v1220
      %v1306 = vunpack.c.h.b16 %v1220
      %v1307 = vunpack.c.l.b16 %v1221
      %v1308 = vunpack.c.h.b16 %v1221
      %v1309 = vunpack.c.l.b16 %v1222
      %v1310 = vunpack.c.h.b16 %v1222
      %v1311 = vunpack.c.l.b16 %v1223
      %v1312 = vunpack.c.h.b16 %v1223
      %v1313 = vunpack.c.l.b16 %v1224
      %v1314 = vunpack.c.h.b16 %v1224
      %v1315 = vunpack.c.l.b16 %v1225
      %v1316 = vunpack.c.h.b16 %v1225
      %v1317 = vunpack.c.l.b16 %v1226
      %v1318 = vunpack.c.h.b16 %v1226
      %v1319 = vunpack.c.l.b16 %v1227
      %v1320 = vunpack.c.h.b16 %v1227
      %v1321 = vunpack.c.l.b16 %v1228
      %v1322 = vunpack.c.h.b16 %v1228
      %v1323 = vunpack.c.l.b16 %v1229
      %v1324 = vunpack.c.h.b16 %v1229
      %v1325 = vunpack.c.l.b16 %v1230
      %v1326 = vunpack.c.h.b16 %v1230
      %v1327 = vpack.c.b16 %v1267, %v1263
      %v1328 = vpack.c.b16 %v1268, %v1264
      %v1329 = vpack.c.b16 %v1269, %v1265
      %v1330 = vpack.c.b16 %v1270, %v1266
      %v1331 = vpack.c.b16 %v1275, %v1271
      %v1332 = vpack.c.b16 %v1276, %v1272
      %v1333 = vpack.c.b16 %v1277, %v1273
      %v1334 = vpack.c.b16 %v1278, %v1274
      %v1335 = vpack.c.b16 %v1283, %v1279
      %v1336 = vpack.c.b16 %v1284, %v1280
      %v1337 = vpack.c.b16 %v1285, %v1281
      %v1338 = vpack.c.b16 %v1286, %v1282
      %v1339 = vpack.c.b16 %v1291, %v1287
      %v1340 = vpack.c.b16 %v1292, %v1288
      %v1341 = vpack.c.b16 %v1293, %v1289
      %v1342 = vpack.c.b16 %v1294, %v1290
      %v1343 = vpack.c.b16 %v1299, %v1295
      %v1344 = vpack.c.b16 %v1300, %v1296
      %v1345 = vpack.c.b16 %v1301, %v1297
      %v1346 = vpack.c.b16 %v1302, %v1298
      %v1347 = vpack.c.b16 %v1307, %v1303
      %v1348 = vpack.c.b16 %v1308, %v1304
      %v1349 = vpack.c.b16 %v1309, %v1305
      %v1350 = vpack.c.b16 %v1310, %v1306
      %v1351 = vpack.c.b16 %v1315, %v1311
      %v1352 = vpack.c.b16 %v1316, %v1312
      %v1353 = vpack.c.b16 %v1317, %v1313
      %v1354 = vpack.c.b16 %v1318, %v1314
      %v1355 = vpack.c.b16 %v1323, %v1319
      %v1356 = vpack.c.b16 %v1324, %v1320
      %v1357 = vpack.c.b16 %v1325, %v1321
      %v1358 = vpack.c.b16 %v1326, %v1322
      %1391 = vmatprep.subr.bf16.mxu0 %v1328
      %1392 = vmatpush1.bf16.msra.mxu0 %v1327
      %1393 = vmatprep.subr.bf16.mxu0 %v1332
      %1394 = vmatpush1.bf16.msra.mxu0 %v1331
      %1395 = vmatprep.subr.bf16.mxu0 %v1336
      %1396 = vmatpush1.bf16.msra.mxu0 %v1335
      %1397 = vmatprep.subr.bf16.mxu0 %v1340
      %1398 = vmatpush1.bf16.msra.mxu0 %v1339
      %1399 = vmatprep.subr.bf16.mxu0 %v1344
      %1400 = vmatpush1.bf16.msra.mxu0 %v1343
      %1401 = vmatprep.subr.bf16.mxu0 %v1348
      %1402 = vmatpush1.bf16.msra.mxu0 %v1347
      %1403 = vmatprep.subr.bf16.mxu0 %v1352
      %1404 = vmatpush1.bf16.msra.mxu0 %v1351
      %1405 = vmatprep.subr.bf16.mxu0 %v1356
      %1406 = vmatpush1.bf16.msra.mxu0 %v1355
      %1407 = vmatprep.subr.bf16.mxu0 0
      %1408 = vmatpush1.bf16.msra.mxu0 0
      %1409 = vmatprep.subr.bf16.mxu0 0
      %1410 = vmatpush1.bf16.msra.mxu0 0
      %1411 = vmatprep.subr.bf16.mxu0 0
      %1412 = vmatpush1.bf16.msra.mxu0 0
      %1413 = vmatprep.subr.bf16.mxu0 0
      %1414 = vmatpush1.bf16.msra.mxu0 0
      %1415 = vmatprep.subr.bf16.mxu0 0
      %1416 = vmatpush1.bf16.msra.mxu0 0
      %1417 = vmatprep.subr.bf16.mxu0 0
      %1418 = vmatpush1.bf16.msra.mxu0 0
      %1419 = vmatprep.subr.bf16.mxu0 0
      %1420 = vmatpush1.bf16.msra.mxu0 0
      %1421 = vmatprep.subr.bf16.mxu0 0
      %1422 = vmatpush1.bf16.msra.mxu0 0
      %1423 = vmatprep.mubr.bf16.mxu0 0
      %1424 = vmatmul.mubr.bf16.gmra.mrb[0].mxu0 %v713
      %v1425 = vpop.f32.mrb[0].mxu0
      %v1426 = vadd.f32 0.0, %v1425
      %v1427 = vpop.f32.mrb[0].mxu0
      %v1428 = vadd.f32 0.0, %v1427
      %v1429 = vpop.f32.mrb[0].mxu0
      %v1430 = vadd.f32 0.0, %v1429
      %v1431 = vpop.f32.mrb[0].mxu0
      %v1432 = vadd.f32 0.0, %v1431
      %1433 = vmatprep.mubr.bf16.mxu0 0
      %1434 = vmatmul.mubr.bf16.gmra.mrb[0].mxu0 %v714
      %v1435 = vpop.f32.mrb[0].mxu0
      %v1436 = vadd.f32 0.0, %v1435
      %v1437 = vpop.f32.mrb[0].mxu0
      %v1438 = vadd.f32 0.0, %v1437
      %v1439 = vpop.f32.mrb[0].mxu0
      %v1440 = vadd.f32 0.0, %v1439
      %v1441 = vpop.f32.mrb[0].mxu0
      %v1442 = vadd.f32 0.0, %v1441
      %1443 = vmatprep.mubr.bf16.mxu0 0
      %1444 = vmatmul.mubr.bf16.gmra.mrb[0].mxu0 %v715
      %v1445 = vpop.f32.mrb[0].mxu0
      %v1446 = vadd.f32 0.0, %v1445
      %v1447 = vpop.f32.mrb[0].mxu0
      %v1448 = vadd.f32 0.0, %v1447
      %v1449 = vpop.f32.mrb[0].mxu0
      %v1450 = vadd.f32 0.0, %v1449
      %v1451 = vpop.f32.mrb[0].mxu0
      %v1452 = vadd.f32 0.0, %v1451
      %1453 = vmatprep.mubr.bf16.mxu0 0
      %1454 = vmatmul.mubr.bf16.gmra.mrb[0].mxu0 %v716
      %v1455 = vpop.f32.mrb[0].mxu0
      %v1456 = vadd.f32 0.0, %v1455
      %v1457 = vpop.f32.mrb[0].mxu0
      %v1458 = vadd.f32 0.0, %v1457
      %v1459 = vpop.f32.mrb[0].mxu0
      %v1460 = vadd.f32 0.0, %v1459
      %v1461 = vpop.f32.mrb[0].mxu0
      %v1462 = vadd.f32 0.0, %v1461
      %1463 = vmatprep.mubr.bf16.mxu0 0
      %1464 = vmatmul.mubr.bf16.gmra.mrb[0].mxu0 %v717
      %v1465 = vpop.f32.mrb[0].mxu0
      %v1466 = vadd.f32 0.0, %v1465
      %v1467 = vpop.f32.mrb[0].mxu0
      %v1468 = vadd.f32 0.0, %v1467
      %v1469 = vpop.f32.mrb[0].mxu0
      %v1470 = vadd.f32 0.0, %v1469
      %v1471 = vpop.f32.mrb[0].mxu0
      %v1472 = vadd.f32 0.0, %v1471
      %1473 = vmatprep.mubr.bf16.mxu0 0
      %1474 = vmatmul.mubr.bf16.gmra.mrb[0].mxu0 %v718
      %v1475 = vpop.f32.mrb[0].mxu0
      %v1476 = vadd.f32 0.0, %v1475
      %v1477 = vpop.f32.mrb[0].mxu0
      %v1478 = vadd.f32 0.0, %v1477
      %v1479 = vpop.f32.mrb[0].mxu0
      %v1480 = vadd.f32 0.0, %v1479
      %v1481 = vpop.f32.mrb[0].mxu0
      %v1482 = vadd.f32 0.0, %v1481
      %1483 = vmatprep.mubr.bf16.mxu0 0
      %1484 = vmatmul.mubr.bf16.gmra.mrb[0].mxu0 %v719
      %v1485 = vpop.f32.mrb[0].mxu0
      %v1486 = vadd.f32 0.0, %v1485
      %v1487 = vpop.f32.mrb[0].mxu0
      %v1488 = vadd.f32 0.0, %v1487
      %v1489 = vpop.f32.mrb[0].mxu0
      %v1490 = vadd.f32 0.0, %v1489
      %v1491 = vpop.f32.mrb[0].mxu0
      %v1492 = vadd.f32 0.0, %v1491
      %1493 = vmatprep.mubr.bf16.mxu0 0
      %1494 = vmatmul.mubr.bf16.gmra.mrb[0].mxu0 %v720
      %v1495 = vpop.f32.mrb[0].mxu0
      %v1496 = vadd.f32 0.0, %v1495
      %v1497 = vpop.f32.mrb[0].mxu0
      %v1498 = vadd.f32 0.0, %v1497
      %v1499 = vpop.f32.mrb[0].mxu0
      %v1500 = vadd.f32 0.0, %v1499
      %v1501 = vpop.f32.mrb[0].mxu0
      %v1502 = vadd.f32 0.0, %v1501
      %1503 = vdwg.mxu0
      %1504 = vmatprep.subr.bf16.mxu0 %v1330
      %1505 = vmatpush1.bf16.msra.mxu0 %v1329
      %1506 = vmatprep.subr.bf16.mxu0 %v1334
      %1507 = vmatpush1.bf16.msra.mxu0 %v1333
      %1508 = vmatprep.subr.bf16.mxu0 %v1338
      %1509 = vmatpush1.bf16.msra.mxu0 %v1337
      %1510 = vmatprep.subr.bf16.mxu0 %v1342
      %1511 = vmatpush1.bf16.msra.mxu0 %v1341
      %1512 = vmatprep.subr.bf16.mxu0 %v1346
      %1513 = vmatpush1.bf16.msra.mxu0 %v1345
      %1514 = vmatprep.subr.bf16.mxu0 %v1350
      %1515 = vmatpush1.bf16.msra.mxu0 %v1349
      %1516 = vmatprep.subr.bf16.mxu0 %v1354
      %1517 = vmatpush1.bf16.msra.mxu0 %v1353
      %1518 = vmatprep.subr.bf16.mxu0 %v1358
      %1519 = vmatpush1.bf16.msra.mxu0 %v1357
      %1520 = vmatprep.subr.bf16.mxu0 0
      %1521 = vmatpush1.bf16.msra.mxu0 0
      %1522 = vmatprep.subr.bf16.mxu0 0
      %1523 = vmatpush1.bf16.msra.mxu0 0
      %1524 = vmatprep.subr.bf16.mxu0 0
      %1525 = vmatpush1.bf16.msra.mxu0 0
      %1526 = vmatprep.subr.bf16.mxu0 0
      %1527 = vmatpush1.bf16.msra.mxu0 0
      %1528 = vmatprep.subr.bf16.mxu0 0
      %1529 = vmatpush1.bf16.msra.mxu0 0
      %1530 = vmatprep.subr.bf16.mxu0 0
      %1531 = vmatpush1.bf16.msra.mxu0 0
      %1532 = vmatprep.subr.bf16.mxu0 0
      %1533 = vmatpush1.bf16.msra.mxu0 0
      %1534 = vmatprep.subr.bf16.mxu0 0
      %1535 = vmatpush1.bf16.msra.mxu0 0
      %1536 = vmatprep.mubr.bf16.mxu0 0
      %1537 = vmatmul.mubr.bf16.gmra.mrb[0].mxu0 %v713
      %v1538 = vpop.f32.mrb[0].mxu0
      %v1539 = vadd.f32 0.0, %v1538
      %v1540 = vpop.f32.mrb[0].mxu0
      %v1541 = vadd.f32 0.0, %v1540
      %v1542 = vpop.f32.mrb[0].mxu0
      %v1543 = vadd.f32 0.0, %v1542
      %v1544 = vpop.f32.mrb[0].mxu0
      %v1545 = vadd.f32 0.0, %v1544
      %1546 = vmatprep.mubr.bf16.mxu0 0
      %1547 = vmatmul.mubr.bf16.gmra.mrb[0].mxu0 %v714
      %v1548 = vpop.f32.mrb[0].mxu0
      %v1549 = vadd.f32 0.0, %v1548
      %v1550 = vpop.f32.mrb[0].mxu0
      %v1551 = vadd.f32 0.0, %v1550
      %v1552 = vpop.f32.mrb[0].mxu0
      %v1553 = vadd.f32 0.0, %v1552
      %v1554 = vpop.f32.mrb[0].mxu0
      %v1555 = vadd.f32 0.0, %v1554
      %1556 = vmatprep.mubr.bf16.mxu0 0
      %1557 = vmatmul.mubr.bf16.gmra.mrb[0].mxu0 %v715
      %v1558 = vpop.f32.mrb[0].mxu0
      %v1559 = vadd.f32 0.0, %v1558
      %v1560 = vpop.f32.mrb[0].mxu0
      %v1561 = vadd.f32 0.0, %v1560
      %v1562 = vpop.f32.mrb[0].mxu0
      %v1563 = vadd.f32 0.0, %v1562
      %v1564 = vpop.f32.mrb[0].mxu0
      %v1565 = vadd.f32 0.0, %v1564
      %1566 = vmatprep.mubr.bf16.mxu0 0
      %1567 = vmatmul.mubr.bf16.gmra.mrb[0].mxu0 %v716
      %v1568 = vpop.f32.mrb[0].mxu0
      %v1569 = vadd.f32 0.0, %v1568
      %v1570 = vpop.f32.mrb[0].mxu0
      %v1571 = vadd.f32 0.0, %v1570
      %v1572 = vpop.f32.mrb[0].mxu0
      %v1573 = vadd.f32 0.0, %v1572
      %v1574 = vpop.f32.mrb[0].mxu0
      %v1575 = vadd.f32 0.0, %v1574
      %1576 = vmatprep.mubr.bf16.mxu0 0
      %1577 = vmatmul.mubr.bf16.gmra.mrb[0].mxu0 %v717
      %v1578 = vpop.f32.mrb[0].mxu0
      %v1579 = vadd.f32 0.0, %v1578
      %v1580 = vpop.f32.mrb[0].mxu0
      %v1581 = vadd.f32 0.0, %v1580
      %v1582 = vpop.f32.mrb[0].mxu0
      %v1583 = vadd.f32 0.0, %v1582
      %v1584 = vpop.f32.mrb[0].mxu0
      %v1585 = vadd.f32 0.0, %v1584
      %1586 = vmatprep.mubr.bf16.mxu0 0
      %1587 = vmatmul.mubr.bf16.gmra.mrb[0].mxu0 %v718
      %v1588 = vpop.f32.mrb[0].mxu0
      %v1589 = vadd.f32 0.0, %v1588
      %v1590 = vpop.f32.mrb[0].mxu0
      %v1591 = vadd.f32 0.0, %v1590
      %v1592 = vpop.f32.mrb[0].mxu0
      %v1593 = vadd.f32 0.0, %v1592
      %v1594 = vpop.f32.mrb[0].mxu0
      %v1595 = vadd.f32 0.0, %v1594
      %1596 = vmatprep.mubr.bf16.mxu0 0
      %1597 = vmatmul.mubr.bf16.gmra.mrb[0].mxu0 %v719
      %v1598 = vpop.f32.mrb[0].mxu0
      %v1599 = vadd.f32 0.0, %v1598
      %v1600 = vpop.f32.mrb[0].mxu0
      %v1601 = vadd.f32 0.0, %v1600
      %v1602 = vpop.f32.mrb[0].mxu0
      %v1603 = vadd.f32 0.0, %v1602
      %v1604 = vpop.f32.mrb[0].mxu0
      %v1605 = vadd.f32 0.0, %v1604
      %1606 = vmatprep.mubr.bf16.mxu0 0
      %1607 = vmatmul.mubr.bf16.gmra.mrb[0].mxu0 %v720
      %v1608 = vpop.f32.mrb[0].mxu0
      %v1609 = vadd.f32 0.0, %v1608
      %v1610 = vpop.f32.mrb[0].mxu0
      %v1611 = vadd.f32 0.0, %v1610
      %v1612 = vpop.f32.mrb[0].mxu0
      %v1613 = vadd.f32 0.0, %v1612
      %v1614 = vpop.f32.mrb[0].mxu0
      %v1615 = vadd.f32 0.0, %v1614
      %1616 = vdwg.mxu0
      %v1617 = vmax.f32 %v1426, %v1430
      %v1618 = vmax.f32 %v1617, %v1436
      %v1619 = vmax.f32 %v1618, %v1440
      %v1620 = vmax.f32 %v1619, %v1446
      %v1621 = vmax.f32 %v1620, %v1450
      %v1622 = vmax.f32 %v1621, %v1456
      %v1623 = vmax.f32 %v1622, %v1460
      %v1624 = vmax.f32 %v1623, %v1466
      %v1625 = vmax.f32 %v1624, %v1470
      %v1626 = vmax.f32 %v1625, %v1476
      %v1627 = vmax.f32 %v1626, %v1480
      %v1628 = vmax.f32 %v1627, %v1486
      %v1629 = vmax.f32 %v1628, %v1490
      %v1630 = vmax.f32 %v1629, %v1496
      %v1631 = vmax.f32 %v1630, %v1500
      %v1632 = vmax.f32 %v1428, %v1432
      %v1633 = vmax.f32 %v1632, %v1438
      %v1634 = vmax.f32 %v1633, %v1442
      %v1635 = vmax.f32 %v1634, %v1448
      %v1636 = vmax.f32 %v1635, %v1452
      %v1637 = vmax.f32 %v1636, %v1458
      %v1638 = vmax.f32 %v1637, %v1462
      %v1639 = vmax.f32 %v1638, %v1468
      %v1640 = vmax.f32 %v1639, %v1472
      %v1641 = vmax.f32 %v1640, %v1478
      %v1642 = vmax.f32 %v1641, %v1482
      %v1643 = vmax.f32 %v1642, %v1488
      %v1644 = vmax.f32 %v1643, %v1492
      %v1645 = vmax.f32 %v1644, %v1498
      %v1646 = vmax.f32 %v1645, %v1502
      %v1647 = vmax.f32 %v1539, %v1543
      %v1648 = vmax.f32 %v1647, %v1549
      %v1649 = vmax.f32 %v1648, %v1553
      %v1650 = vmax.f32 %v1649, %v1559
      %v1651 = vmax.f32 %v1650, %v1563
      %v1652 = vmax.f32 %v1651, %v1569
      %v1653 = vmax.f32 %v1652, %v1573
      %v1654 = vmax.f32 %v1653, %v1579
      %v1655 = vmax.f32 %v1654, %v1583
      %v1656 = vmax.f32 %v1655, %v1589
      %v1657 = vmax.f32 %v1656, %v1593
      %v1658 = vmax.f32 %v1657, %v1599
      %v1659 = vmax.f32 %v1658, %v1603
      %v1660 = vmax.f32 %v1659, %v1609
      %v1661 = vmax.f32 %v1660, %v1613
      %v1662 = vmax.f32 %v1541, %v1545
      %v1663 = vmax.f32 %v1662, %v1551
      %v1664 = vmax.f32 %v1663, %v1555
      %v1665 = vmax.f32 %v1664, %v1561
      %v1666 = vmax.f32 %v1665, %v1565
      %v1667 = vmax.f32 %v1666, %v1571
      %v1668 = vmax.f32 %v1667, %v1575
      %v1669 = vmax.f32 %v1668, %v1581
      %v1670 = vmax.f32 %v1669, %v1585
      %v1671 = vmax.f32 %v1670, %v1591
      %v1672 = vmax.f32 %v1671, %v1595
      %v1673 = vmax.f32 %v1672, %v1601
      %v1674 = vmax.f32 %v1673, %v1605
      %v1675 = vmax.f32 %v1674, %v1611
      %v1676 = vmax.f32 %v1675, %v1615
      %p1677 = scmp.eq.s32.totalorder %s24, 0
      // Predicated region
      $region45: #{pointnet_cls_forward.6} parent=43 // pred_check
        %p1678 = pneg %p1677
      $region46: #{pointnet_cls_forward.6} parent=43 // pred_check_branch
        %1680 = sbr.rel (%p1678) target = $region48
      $region47: #{pointnet_cls_forward.6} parent=43 // pred_region
        %1681 = vst [vmem:[%s320] sm:$0xff] %v1153
        %1682 = vst [vmem:[%s320 + $0x8] sm:$0xff] %v1168
        %1683 = vst [vmem:[%s320 + $0x10] sm:$0xff] %v1183
        %1684 = vst [vmem:[%s320 + $0x18] sm:$0xff] %v1198
        %1685 = vst [vmem:[%s320 + $0x20] sm:$0xff] %v1631
        %1686 = vst [vmem:[%s320 + $0x28] sm:$0xff] %v1646
        %1687 = vst [vmem:[%s320 + $0x30] sm:$0xff] %v1661
        %1688 = vst [vmem:[%s320 + $0x38] sm:$0xff] %v1676
      $region48: #{pointnet_cls_forward.6} parent=43 // pred_fallthru
        _
      %p1689 = scmp.ne.s32.totalorder %s24, 0
      // Predicated region
      $region49: #{pointnet_cls_forward.6} parent=43 // pred_check
        %p1690 = pneg %p1689
      $region50: #{pointnet_cls_forward.6} parent=43 // pred_check_branch
        %1692 = sbr.rel (%p1690) target = $region52
      $region51: #{pointnet_cls_forward.6} parent=43 // pred_region
        %v1693 = vld [vmem:[%s320] sm:$0xff]
        %v1694 = vld [vmem:[%s320 + $0x8] sm:$0xff]
        %v1695 = vld [vmem:[%s320 + $0x10] sm:$0xff]
        %v1696 = vld [vmem:[%s320 + $0x18] sm:$0xff]
        %v1697 = vmax.f32 %v1693, %v1153
        %v1698 = vmax.f32 %v1694, %v1168
        %v1699 = vmax.f32 %v1695, %v1183
        %v1700 = vmax.f32 %v1696, %v1198
        %1701 = vst [vmem:[%s320] sm:$0xff] %v1697
        %1702 = vst [vmem:[%s320 + $0x8] sm:$0xff] %v1698
        %1703 = vst [vmem:[%s320 + $0x10] sm:$0xff] %v1699
        %1704 = vst [vmem:[%s320 + $0x18] sm:$0xff] %v1700
        %v1705 = vld [vmem:[%s320 + $0x20] sm:$0xff]
        %v1706 = vld [vmem:[%s320 + $0x28] sm:$0xff]
        %v1707 = vld [vmem:[%s320 + $0x30] sm:$0xff]
        %v1708 = vld [vmem:[%s320 + $0x38] sm:$0xff]
        %v1709 = vmax.f32 %v1705, %v1631
        %v1710 = vmax.f32 %v1706, %v1646
        %v1711 = vmax.f32 %v1707, %v1661
        %v1712 = vmax.f32 %v1708, %v1676
        %1713 = vst [vmem:[%s320 + $0x20] sm:$0xff] %v1709
        %1714 = vst [vmem:[%s320 + $0x28] sm:$0xff] %v1710
        %1715 = vst [vmem:[%s320 + $0x30] sm:$0xff] %v1711
        %1716 = vst [vmem:[%s320 + $0x38] sm:$0xff] %v1712
      $region52: #{pointnet_cls_forward.6} parent=43 // pred_fallthru
        _
      %p1717 = scmp.lt.s32.totalorder %s22, 1
      %s1718 = scalar_select %p1717, %s22, 1
      %p1719 = scmp.lt.s32.totalorder %s23, 0
      %s1720 = scalar_select %p1719, %s23, 0
      %s1721 = smul.addr %s1720, 8
      %s1722 = smul.addr %s1718, 8
      %s1723 = sadd.s32 %s1721, %s1722
      %s1724 = smul.addr %s1723, 8
      %s1725 = scalar_lea.vmem %s6, %s1724
      // Predicated region
      $region53: #{pointnet_cls_forward.6} parent=43 // pred_check
        %p1726 = pneg %p196
      $region54: #{pointnet_cls_forward.6} parent=43 // pred_check_branch
        %1728 = sbr.rel (%p1726) target = $region56
      $region55: #{pointnet_cls_forward.6} parent=43 // pred_region
        _
      $region56: #{pointnet_cls_forward.6} parent=43 // pred_fallthru
        _
    $region44: #{pointnet_cls_forward.6} parent=5 // pred_fallthru
      _
    %p1729 = scmp.le.s32.totalorder 2, %s12
    // Predicated region
    $region57: #{pointnet_cls_forward.6} parent=5 // pred_check
      %p1730 = pneg %p1729
    $region58: #{pointnet_cls_forward.6} parent=5 // pred_check_branch
      %1732 = sbr.rel (%p1730) target = $region60
    $region59: #{pointnet_cls_forward.6} parent=5 // pred_region
      %s1733 = ssub.s32 %s12, 2
      // Predicated region
      $region61: #{pointnet_cls_forward.6} parent=59 // pred_check
        %p1734 = pneg %p202
      $region62: #{pointnet_cls_forward.6} parent=59 // pred_check_branch
        %1736 = sbr.rel (%p1734) target = $region64
      $region63: #{pointnet_cls_forward.6} parent=59 // pred_region
        %p1737 = scmp.lt.s32.totalorder %s25, 1
        %s1738 = scalar_select %p1737, %s25, 1
        %p1739 = scmp.lt.s32.totalorder %s26, 0
        %s1740 = scalar_select %p1739, %s26, 0
        %s1741 = smul.addr %s1740, 8
        %s1742 = smul.addr %s1738, 8
        %s1743 = sadd.s32 %s1741, %s1742
        %s1744 = smul.addr %s1743, 8
        %s1745 = scalar_lea.vmem %s6, %s1744
      $region64: #{pointnet_cls_forward.6} parent=59 // pred_fallthru
        _
    $region60: #{pointnet_cls_forward.6} parent=5 // pred_fallthru
      _
  $region6: #{pointnet_cls_forward.6} parent=0 // loop_footer
    %s16 = sadd.s32 1, %s12
  $region7: #{pointnet_cls_forward.6} parent=0 // loop_footer_branch
    %11 = sbr.rel target = $region3
  $region8: #{pointnet_cls_forward.6} parent=0 // loop_exit
    _

// kernel: pointnet_cls_forward.5
$region0: #{pointnet_cls_forward.5}
  #allocation0 [shape = 'u32[]', space=smem, size = 0x4, offset = 0x4, fixed_abs, tag = 'smem constant byte address 0x4 - core index']
  #allocation1 [shape = 'u32[144,128]{1,0:T(1,128)}', space=vmem, size = 0x12000, scoped, tag = 'internal scratch']
  %s0 = inlined_call_operand.vmem [shape: f32[2,8,1024], index: 0, kind: input, shape index: {}]
  %s1 = inlined_call_operand.vmem [shape: f32[1,1024], index: 1, kind: input, shape index: {}]
  %s2 = inlined_call_operand.hbm [shape: bf16[1024,512], index: 2, kind: input, shape index: {}]
  %s3 = inlined_call_operand.vmem [shape: f32[1,512], index: 3, kind: input, shape index: {}]
  %s4 = inlined_call_operand.vmem [shape: bf16[512,256], index: 4, kind: input, shape index: {}]
  %s5 = inlined_call_operand.vmem [shape: f32[1,256], index: 5, kind: input, shape index: {}]
  %s6 = inlined_call_operand.vmem [shape: bf16[256,9], index: 6, kind: input, shape index: {}]
  %s7 = inlined_call_operand.vmem [shape: f32[1,9], index: 7, kind: input, shape index: {}]
  %s8 = inlined_call_operand.vmem [shape: f32[2,9], index: 8, kind: output, shape index: {}]
  %s9 = sld [smem:[#allocation0]]
  $region46: #{pointnet_cls_forward.5} parent=0
    _
  %s11 = ssub.s32 1, %s9
  %s12 = scalar_select 0, %s11, %s9
  $region1: #{pointnet_cls_forward.5} parent=0
    #allocation2 [shape = 'u8[1048576]{0}', space=vmem, size = 0x100000, scoped, tag = 'input window, operand 2, single buffered']
    #allocation3 [shape = 's32[1]{0}', space=sflag, size = 0x4, scoped, tag = 'scoped memory for pointnet_cls_forward.5']
    %13 = vsyncpa [#allocation3], 0
    // Predicated region
    $region2: #{pointnet_cls_forward.5} parent=1 // pred_check
      _
    $region3: #{pointnet_cls_forward.5} parent=1 // pred_check_branch
      %15 = sbr.rel (0) target = $region5
    $region4: #{pointnet_cls_forward.5} parent=1 // pred_region
      _
    $region5: #{pointnet_cls_forward.5} parent=1 // pred_fallthru
      _
    // Predicated region
    $region6: #{pointnet_cls_forward.5} parent=1 // pred_check
      _
    $region7: #{pointnet_cls_forward.5} parent=1 // pred_check_branch
      %17 = sbr.rel (0) target = $region9
    $region8: #{pointnet_cls_forward.5} parent=1 // pred_region
      _
    $region9: #{pointnet_cls_forward.5} parent=1 // pred_fallthru
      _
    // Predicated region
    $region10: #{pointnet_cls_forward.5} parent=1 // pred_check
      _
    $region11: #{pointnet_cls_forward.5} parent=1 // pred_check_branch
      %19 = sbr.rel (0) target = $region13
    $region12: #{pointnet_cls_forward.5} parent=1 // pred_region
      %s21 = ssub.s32 32768, 32768
      %22 = vsyncadd [#allocation3], %s21
      %s23 = sshll.u32 [#allocation2], 4
      %s24 = int_to_ptr.vmem [resolvable:$true] %s23
      %29 = dma.hbm_to_vmem [thread:$0]  %s2, 32768, %s24, [#allocation3], 256, 256, 16
    $region13: #{pointnet_cls_forward.5} parent=1 // pred_fallthru
      _
    // Predicated region
    $region14: #{pointnet_cls_forward.5} parent=1 // pred_check
      _
    $region15: #{pointnet_cls_forward.5} parent=1 // pred_check_branch
      %31 = sbr.rel (0) target = $region17
    $region16: #{pointnet_cls_forward.5} parent=1 // pred_region
      _
    $region17: #{pointnet_cls_forward.5} parent=1 // pred_fallthru
      _
    // Predicated region
    $region18: #{pointnet_cls_forward.5} parent=1 // pred_check
      _
    $region19: #{pointnet_cls_forward.5} parent=1 // pred_check_branch
      %33 = sbr.rel (0) target = $region21
    $region20: #{pointnet_cls_forward.5} parent=1 // pred_region
      _
    $region21: #{pointnet_cls_forward.5} parent=1 // pred_fallthru
      _
    // Predicated region
    $region22: #{pointnet_cls_forward.5} parent=1 // pred_check
      _
    $region23: #{pointnet_cls_forward.5} parent=1 // pred_check_branch
      %35 = sbr.rel (0) target = $region25
    $region24: #{pointnet_cls_forward.5} parent=1 // pred_region
      _
    $region25: #{pointnet_cls_forward.5} parent=1 // pred_fallthru
      _
    // Predicated region
    $region26: #{pointnet_cls_forward.5} parent=1 // pred_check
      _
    $region27: #{pointnet_cls_forward.5} parent=1 // pred_check_branch
      %37 = sbr.rel (0) target = $region29
    $region28: #{pointnet_cls_forward.5} parent=1 // pred_region
      _
    $region29: #{pointnet_cls_forward.5} parent=1 // pred_fallthru
      _
    // Predicated region
    $region30: #{pointnet_cls_forward.5} parent=1 // pred_check
      _
    $region31: #{pointnet_cls_forward.5} parent=1 // pred_check_branch
      %39 = sbr.rel (0) target = $region33
    $region32: #{pointnet_cls_forward.5} parent=1 // pred_region
      _
    $region33: #{pointnet_cls_forward.5} parent=1 // pred_fallthru
      _
    // Predicated region
    $region34: #{pointnet_cls_forward.5} parent=1 // pred_check
      _
    $region35: #{pointnet_cls_forward.5} parent=1 // pred_check_branch
      %41 = sbr.rel (0) target = $region37
    $region36: #{pointnet_cls_forward.5} parent=1 // pred_region
      %42 = dma.done [#allocation3], 32768
    $region37: #{pointnet_cls_forward.5} parent=1 // pred_fallthru
      _
    %v44 = vld [vmem:[%s0] sm:$0xff]
    %v45 = vld [vmem:[%s0 + $0x8] sm:$0xff]
    %v46 = vld [vmem:[%s0 + $0x10] sm:$0xff]
    %v47 = vld [vmem:[%s0 + $0x18] sm:$0xff]
    %v48 = vld [vmem:[%s0 + $0x20] sm:$0xff]
    %v49 = vld [vmem:[%s0 + $0x28] sm:$0xff]
    %v50 = vld [vmem:[%s0 + $0x30] sm:$0xff]
    %v51 = vld [vmem:[%s0 + $0x38] sm:$0xff]
    %v52 = vld [vmem:[%s0 + $0x40] sm:$0xff]
    %v53 = vld [vmem:[%s0 + $0x48] sm:$0xff]
    %v54 = vld [vmem:[%s0 + $0x50] sm:$0xff]
    %v55 = vld [vmem:[%s0 + $0x58] sm:$0xff]
    %v56 = vld [vmem:[%s0 + $0x60] sm:$0xff]
    %v57 = vld [vmem:[%s0 + $0x68] sm:$0xff]
    %v58 = vld [vmem:[%s0 + $0x70] sm:$0xff]
    %v59 = vld [vmem:[%s0 + $0x78] sm:$0xff]
    %v60 = vrot.slane %v44, 4
    %v61 = vmax.f32 %v44, %v60
    %v62 = vrot.slane %v61, 2
    %v63 = vmax.f32 %v61, %v62
    %v64 = vrot.slane %v63, 1
    %v65 = vmax.f32 %v63, %v64
    %v66 = vrot.slane %v45, 4
    %v67 = vmax.f32 %v45, %v66
    %v68 = vrot.slane %v67, 2
    %v69 = vmax.f32 %v67, %v68
    %v70 = vrot.slane %v69, 1
    %v71 = vmax.f32 %v69, %v70
    %v72 = vrot.slane %v46, 4
    %v73 = vmax.f32 %v46, %v72
    %v74 = vrot.slane %v73, 2
    %v75 = vmax.f32 %v73, %v74
    %v76 = vrot.slane %v75, 1
    %v77 = vmax.f32 %v75, %v76
    %v78 = vrot.slane %v47, 4
    %v79 = vmax.f32 %v47, %v78
    %v80 = vrot.slane %v79, 2
    %v81 = vmax.f32 %v79, %v80
    %v82 = vrot.slane %v81, 1
    %v83 = vmax.f32 %v81, %v82
    %v84 = vrot.slane %v48, 4
    %v85 = vmax.f32 %v48, %v84
    %v86 = vrot.slane %v85, 2
    %v87 = vmax.f32 %v85, %v86
    %v88 = vrot.slane %v87, 1
    %v89 = vmax.f32 %v87, %v88
    %v90 = vrot.slane %v49, 4
    %v91 = vmax.f32 %v49, %v90
    %v92 = vrot.slane %v91, 2
    %v93 = vmax.f32 %v91, %v92
    %v94 = vrot.slane %v93, 1
    %v95 = vmax.f32 %v93, %v94
    %v96 = vrot.slane %v50, 4
    %v97 = vmax.f32 %v50, %v96
    %v98 = vrot.slane %v97, 2
    %v99 = vmax.f32 %v97, %v98
    %v100 = vrot.slane %v99, 1
    %v101 = vmax.f32 %v99, %v100
    %v102 = vrot.slane %v51, 4
    %v103 = vmax.f32 %v51, %v102
    %v104 = vrot.slane %v103, 2
    %v105 = vmax.f32 %v103, %v104
    %v106 = vrot.slane %v105, 1
    %v107 = vmax.f32 %v105, %v106
    %v108 = vrot.slane %v52, 4
    %v109 = vmax.f32 %v52, %v108
    %v110 = vrot.slane %v109, 2
    %v111 = vmax.f32 %v109, %v110
    %v112 = vrot.slane %v111, 1
    %v113 = vmax.f32 %v111, %v112
    %v114 = vrot.slane %v53, 4
    %v115 = vmax.f32 %v53, %v114
    %v116 = vrot.slane %v115, 2
    %v117 = vmax.f32 %v115, %v116
    %v118 = vrot.slane %v117, 1
    %v119 = vmax.f32 %v117, %v118
    %v120 = vrot.slane %v54, 4
    %v121 = vmax.f32 %v54, %v120
    %v122 = vrot.slane %v121, 2
    %v123 = vmax.f32 %v121, %v122
    %v124 = vrot.slane %v123, 1
    %v125 = vmax.f32 %v123, %v124
    %v126 = vrot.slane %v55, 4
    %v127 = vmax.f32 %v55, %v126
    %v128 = vrot.slane %v127, 2
    %v129 = vmax.f32 %v127, %v128
    %v130 = vrot.slane %v129, 1
    %v131 = vmax.f32 %v129, %v130
    %v132 = vrot.slane %v56, 4
    %v133 = vmax.f32 %v56, %v132
    %v134 = vrot.slane %v133, 2
    %v135 = vmax.f32 %v133, %v134
    %v136 = vrot.slane %v135, 1
    %v137 = vmax.f32 %v135, %v136
    %v138 = vrot.slane %v57, 4
    %v139 = vmax.f32 %v57, %v138
    %v140 = vrot.slane %v139, 2
    %v141 = vmax.f32 %v139, %v140
    %v142 = vrot.slane %v141, 1
    %v143 = vmax.f32 %v141, %v142
    %v144 = vrot.slane %v58, 4
    %v145 = vmax.f32 %v58, %v144
    %v146 = vrot.slane %v145, 2
    %v147 = vmax.f32 %v145, %v146
    %v148 = vrot.slane %v147, 1
    %v149 = vmax.f32 %v147, %v148
    %v150 = vrot.slane %v59, 4
    %v151 = vmax.f32 %v59, %v150
    %v152 = vrot.slane %v151, 2
    %v153 = vmax.f32 %v151, %v152
    %v154 = vrot.slane %v153, 1
    %v155 = vmax.f32 %v153, %v154
    %v156 = vld [vmem:[%s1] sm:$0xff]
    %v158 = vlaneseq
    %v159 = vshrl.u32 %v158, 7
    %v160 = vsub.s32 0, %v159
    %v161 = vrot.slane %v156, %v160
    %v162 = vlaneseq
    %v163 = vshrl.u32 %v162, 7
    %v164 = vsub.s32 1, %v163
    %v165 = vrot.slane %v156, %v164
    %v166 = vlaneseq
    %v167 = vshrl.u32 %v166, 7
    %v168 = vsub.s32 2, %v167
    %v169 = vrot.slane %v156, %v168
    %v170 = vlaneseq
    %v171 = vshrl.u32 %v170, 7
    %v172 = vsub.s32 3, %v171
    %v173 = vrot.slane %v156, %v172
    %v174 = vlaneseq
    %v175 = vshrl.u32 %v174, 7
    %v176 = vsub.s32 4, %v175
    %v177 = vrot.slane %v156, %v176
    %v178 = vlaneseq
    %v179 = vshrl.u32 %v178, 7
    %v180 = vsub.s32 5, %v179
    %v181 = vrot.slane %v156, %v180
    %v182 = vlaneseq
    %v183 = vshrl.u32 %v182, 7
    %v184 = vsub.s32 6, %v183
    %v185 = vrot.slane %v156, %v184
    %v186 = vlaneseq
    %v187 = vshrl.u32 %v186, 7
    %v188 = vsub.s32 7, %v187
    %v189 = vrot.slane %v156, %v188
    %v198 = vadd.f32 %v65, %v161
    %v199 = vadd.f32 %v71, %v165
    %v200 = vadd.f32 %v77, %v169
    %v201 = vadd.f32 %v83, %v173
    %v202 = vadd.f32 %v89, %v177
    %v203 = vadd.f32 %v95, %v181
    %v204 = vadd.f32 %v101, %v185
    %v205 = vadd.f32 %v107, %v189
    %v206 = vadd.f32 %v113, %v161
    %v207 = vadd.f32 %v119, %v165
    %v208 = vadd.f32 %v125, %v169
    %v209 = vadd.f32 %v131, %v173
    %v210 = vadd.f32 %v137, %v177
    %v211 = vadd.f32 %v143, %v181
    %v212 = vadd.f32 %v149, %v185
    %v213 = vadd.f32 %v155, %v189
    %v214 = vmax.f32 %v198, 0.0
    %v215 = vmax.f32 %v199, 0.0
    %v216 = vmax.f32 %v200, 0.0
    %v217 = vmax.f32 %v201, 0.0
    %v218 = vmax.f32 %v202, 0.0
    %v219 = vmax.f32 %v203, 0.0
    %v220 = vmax.f32 %v204, 0.0
    %v221 = vmax.f32 %v205, 0.0
    %v222 = vmax.f32 %v206, 0.0
    %v223 = vmax.f32 %v207, 0.0
    %v224 = vmax.f32 %v208, 0.0
    %v225 = vmax.f32 %v209, 0.0
    %v226 = vmax.f32 %v210, 0.0
    %v227 = vmax.f32 %v211, 0.0
    %v228 = vmax.f32 %v212, 0.0
    %v229 = vmax.f32 %v213, 0.0
    %v230 = vpack.c.bf16 %v214, %v214
    %v231 = vpack.c.bf16 %v215, %v215
    %v232 = vpack.c.bf16 %v216, %v216
    %v233 = vpack.c.bf16 %v217, %v217
    %v234 = vpack.c.bf16 %v218, %v218
    %v235 = vpack.c.bf16 %v219, %v219
    %v236 = vpack.c.bf16 %v220, %v220
    %v237 = vpack.c.bf16 %v221, %v221
    %v238 = vpack.c.bf16 %v222, %v222
    %v239 = vpack.c.bf16 %v223, %v223
    %v240 = vpack.c.bf16 %v224, %v224
    %v241 = vpack.c.bf16 %v225, %v225
    %v242 = vpack.c.bf16 %v226, %v226
    %v243 = vpack.c.bf16 %v227, %v227
    %v244 = vpack.c.bf16 %v228, %v228
    %v245 = vpack.c.bf16 %v229, %v229
    %v246 = vld [vmem:[#allocation2] sm:$0xff]
    %v247 = vld [vmem:[#allocation2 + $0x8] sm:$0xff]
    %v248 = vld [vmem:[#allocation2 + $0x10] sm:$0xff]
    %v249 = vld [vmem:[#allocation2 + $0x18] sm:$0xff]
    %v250 = vld [vmem:[#allocation2 + $0x20] sm:$0xff]
    %v251 = vld [vmem:[#allocation2 + $0x28] sm:$0xff]
    %v252 = vld [vmem:[#allocation2 + $0x30] sm:$0xff]
    %v253 = vld [vmem:[#allocation2 + $0x38] sm:$0xff]
    %v254 = vld [vmem:[#allocation2 + $0x40] sm:$0xff]
    %v255 = vld [vmem:[#allocation2 + $0x48] sm:$0xff]
    %v256 = vld [vmem:[#allocation2 + $0x50] sm:$0xff]
    %v257 = vld [vmem:[#allocation2 + $0x58] sm:$0xff]
    %v258 = vld [vmem:[#allocation2 + $0x60] sm:$0xff]
    %v259 = vld [vmem:[#allocation2 + $0x68] sm:$0xff]
    %v260 = vld [vmem:[#allocation2 + $0x70] sm:$0xff]
    %v261 = vld [vmem:[#allocation2 + $0x78] sm:$0xff]
    %v262 = vld [vmem:[#allocation2 + $0x80] sm:$0xff]
    %v263 = vld [vmem:[#allocation2 + $0x88] sm:$0xff]
    %v264 = vld [vmem:[#allocation2 + $0x90] sm:$0xff]
    %v265 = vld [vmem:[#allocation2 + $0x98] sm:$0xff]
    %v266 = vld [vmem:[#allocation2 + $0xa0] sm:$0xff]
    %v267 = vld [vmem:[#allocation2 + $0xa8] sm:$0xff]
    %v268 = vld [vmem:[#allocation2 + $0xb0] sm:$0xff]
    %v269 = vld [vmem:[#allocation2 + $0xb8] sm:$0xff]
    %v270 = vld [vmem:[#allocation2 + $0xc0] sm:$0xff]
    %v271 = vld [vmem:[#allocation2 + $0xc8] sm:$0xff]
    %v272 = vld [vmem:[#allocation2 + $0xd0] sm:$0xff]
    %v273 = vld [vmem:[#allocation2 + $0xd8] sm:$0xff]
    %v274 = vld [vmem:[#allocation2 + $0xe0] sm:$0xff]
    %v275 = vld [vmem:[#allocation2 + $0xe8] sm:$0xff]
    %v276 = vld [vmem:[#allocation2 + $0xf0] sm:$0xff]
    %v277 = vld [vmem:[#allocation2 + $0xf8] sm:$0xff]
    %v278 = vld [vmem:[#allocation2 + $0x100] sm:$0xff]
    %v279 = vld [vmem:[#allocation2 + $0x108] sm:$0xff]
    %v280 = vld [vmem:[#allocation2 + $0x110] sm:$0xff]
    %v281 = vld [vmem:[#allocation2 + $0x118] sm:$0xff]
    %v282 = vld [vmem:[#allocation2 + $0x120] sm:$0xff]
    %v283 = vld [vmem:[#allocation2 + $0x128] sm:$0xff]
    %v284 = vld [vmem:[#allocation2 + $0x130] sm:$0xff]
    %v285 = vld [vmem:[#allocation2 + $0x138] sm:$0xff]
    %v286 = vld [vmem:[#allocation2 + $0x140] sm:$0xff]
    %v287 = vld [vmem:[#allocation2 + $0x148] sm:$0xff]
    %v288 = vld [vmem:[#allocation2 + $0x150] sm:$0xff]
    %v289 = vld [vmem:[#allocation2 + $0x158] sm:$0xff]
    %v290 = vld [vmem:[#allocation2 + $0x160] sm:$0xff]
    %v291 = vld [vmem:[#allocation2 + $0x168] sm:$0xff]
    %v292 = vld [vmem:[#allocation2 + $0x170] sm:$0xff]
    %v293 = vld [vmem:[#allocation2 + $0x178] sm:$0xff]
    %v294 = vld [vmem:[#allocation2 + $0x180] sm:$0xff]
    %v295 = vld [vmem:[#allocation2 + $0x188] sm:$0xff]
    %v296 = vld [vmem:[#allocation2 + $0x190] sm:$0xff]
    %v297 = vld [vmem:[#allocation2 + $0x198] sm:$0xff]
    %v298 = vld [vmem:[#allocation2 + $0x1a0] sm:$0xff]
    %v299 = vld [vmem:[#allocation2 + $0x1a8] sm:$0xff]
    %v300 = vld [vmem:[#allocation2 + $0x1b0] sm:$0xff]
    %v301 = vld [vmem:[#allocation2 + $0x1b8] sm:$0xff]
    %v302 = vld [vmem:[#allocation2 + $0x1c0] sm:$0xff]
    %v303 = vld [vmem:[#allocation2 + $0x1c8] sm:$0xff]
    %v304 = vld [vmem:[#allocation2 + $0x1d0] sm:$0xff]
    %v305 = vld [vmem:[#allocation2 + $0x1d8] sm:$0xff]
    %v306 = vld [vmem:[#allocation2 + $0x1e0] sm:$0xff]
    %v307 = vld [vmem:[#allocation2 + $0x1e8] sm:$0xff]
    %v308 = vld [vmem:[#allocation2 + $0x1f0] sm:$0xff]
    %v309 = vld [vmem:[#allocation2 + $0x1f8] sm:$0xff]
    %v310 = vld [vmem:[#allocation2 + $0x200] sm:$0xff]
    %v311 = vld [vmem:[#allocation2 + $0x208] sm:$0xff]
    %v312 = vld [vmem:[#allocation2 + $0x210] sm:$0xff]
    %v313 = vld [vmem:[#allocation2 + $0x218] sm:$0xff]
    %v314 = vld [vmem:[#allocation2 + $0x220] sm:$0xff]
    %v315 = vld [vmem:[#allocation2 + $0x228] sm:$0xff]
    %v316 = vld [vmem:[#allocation2 + $0x230] sm:$0xff]
    %v317 = vld [vmem:[#allocation2 + $0x238] sm:$0xff]
    %v318 = vld [vmem:[#allocation2 + $0x240] sm:$0xff]
    %v319 = vld [vmem:[#allocation2 + $0x248] sm:$0xff]
    %v320 = vld [vmem:[#allocation2 + $0x250] sm:$0xff]
    %v321 = vld [vmem:[#allocation2 + $0x258] sm:$0xff]
    %v322 = vld [vmem:[#allocation2 + $0x260] sm:$0xff]
    %v323 = vld [vmem:[#allocation2 + $0x268] sm:$0xff]
    %v324 = vld [vmem:[#allocation2 + $0x270] sm:$0xff]
    %v325 = vld [vmem:[#allocation2 + $0x278] sm:$0xff]
    %v326 = vld [vmem:[#allocation2 + $0x280] sm:$0xff]
    %v327 = vld [vmem:[#allocation2 + $0x288] sm:$0xff]
    %v328 = vld [vmem:[#allocation2 + $0x290] sm:$0xff]
    %v329 = vld [vmem:[#allocation2 + $0x298] sm:$0xff]
    %v330 = vld [vmem:[#allocation2 + $0x2a0] sm:$0xff]
    %v331 = vld [vmem:[#allocation2 + $0x2a8] sm:$0xff]
    %v332 = vld [vmem:[#allocation2 + $0x2b0] sm:$0xff]
    %v333 = vld [vmem:[#allocation2 + $0x2b8] sm:$0xff]
    %v334 = vld [vmem:[#allocation2 + $0x2c0] sm:$0xff]
    %v335 = vld [vmem:[#allocation2 + $0x2c8] sm:$0xff]
    %v336 = vld [vmem:[#allocation2 + $0x2d0] sm:$0xff]
    %v337 = vld [vmem:[#allocation2 + $0x2d8] sm:$0xff]
    %v338 = vld [vmem:[#allocation2 + $0x2e0] sm:$0xff]
    %v339 = vld [vmem:[#allocation2 + $0x2e8] sm:$0xff]
    %v340 = vld [vmem:[#allocation2 + $0x2f0] sm:$0xff]
    %v341 = vld [vmem:[#allocation2 + $0x2f8] sm:$0xff]
    %v342 = vld [vmem:[#allocation2 + $0x300] sm:$0xff]
    %v343 = vld [vmem:[#allocation2 + $0x308] sm:$0xff]
    %v344 = vld [vmem:[#allocation2 + $0x310] sm:$0xff]
    %v345 = vld [vmem:[#allocation2 + $0x318] sm:$0xff]
    %v346 = vld [vmem:[#allocation2 + $0x320] sm:$0xff]
    %v347 = vld [vmem:[#allocation2 + $0x328] sm:$0xff]
    %v348 = vld [vmem:[#allocation2 + $0x330] sm:$0xff]
    %v349 = vld [vmem:[#allocation2 + $0x338] sm:$0xff]
    %v350 = vld [vmem:[#allocation2 + $0x340] sm:$0xff]
    %v351 = vld [vmem:[#allocation2 + $0x348] sm:$0xff]
    %v352 = vld [vmem:[#allocation2 + $0x350] sm:$0xff]
    %v353 = vld [vmem:[#allocation2 + $0x358] sm:$0xff]
    %v354 = vld [vmem:[#allocation2 + $0x360] sm:$0xff]
    %v355 = vld [vmem:[#allocation2 + $0x368] sm:$0xff]
    %v356 = vld [vmem:[#allocation2 + $0x370] sm:$0xff]
    %v357 = vld [vmem:[#allocation2 + $0x378] sm:$0xff]
    %v358 = vld [vmem:[#allocation2 + $0x380] sm:$0xff]
    %v359 = vld [vmem:[#allocation2 + $0x388] sm:$0xff]
    %v360 = vld [vmem:[#allocation2 + $0x390] sm:$0xff]
    %v361 = vld [vmem:[#allocation2 + $0x398] sm:$0xff]
    %v362 = vld [vmem:[#allocation2 + $0x3a0] sm:$0xff]
    %v363 = vld [vmem:[#allocation2 + $0x3a8] sm:$0xff]
    %v364 = vld [vmem:[#allocation2 + $0x3b0] sm:$0xff]
    %v365 = vld [vmem:[#allocation2 + $0x3b8] sm:$0xff]
    %v366 = vld [vmem:[#allocation2 + $0x3c0] sm:$0xff]
    %v367 = vld [vmem:[#allocation2 + $0x3c8] sm:$0xff]
    %v368 = vld [vmem:[#allocation2 + $0x3d0] sm:$0xff]
    %v369 = vld [vmem:[#allocation2 + $0x3d8] sm:$0xff]
    %v370 = vld [vmem:[#allocation2 + $0x3e0] sm:$0xff]
    %v371 = vld [vmem:[#allocation2 + $0x3e8] sm:$0xff]
    %v372 = vld [vmem:[#allocation2 + $0x3f0] sm:$0xff]
    %v373 = vld [vmem:[#allocation2 + $0x3f8] sm:$0xff]
    %v374 = vld [vmem:[#allocation2 + $0x400] sm:$0xff]
    %v375 = vld [vmem:[#allocation2 + $0x408] sm:$0xff]
    %v376 = vld [vmem:[#allocation2 + $0x410] sm:$0xff]
    %v377 = vld [vmem:[#allocation2 + $0x418] sm:$0xff]
    %v378 = vld [vmem:[#allocation2 + $0x420] sm:$0xff]
    %v379 = vld [vmem:[#allocation2 + $0x428] sm:$0xff]
    %v380 = vld [vmem:[#allocation2 + $0x430] sm:$0xff]
    %v381 = vld [vmem:[#allocation2 + $0x438] sm:$0xff]
    %v382 = vld [vmem:[#allocation2 + $0x440] sm:$0xff]
    %v383 = vld [vmem:[#allocation2 + $0x448] sm:$0xff]
    %v384 = vld [vmem:[#allocation2 + $0x450] sm:$0xff]
    %v385 = vld [vmem:[#allocation2 + $0x458] sm:$0xff]
    %v386 = vld [vmem:[#allocation2 + $0x460] sm:$0xff]
    %v387 = vld [vmem:[#allocation2 + $0x468] sm:$0xff]
    %v388 = vld [vmem:[#allocation2 + $0x470] sm:$0xff]
    %v389 = vld [vmem:[#allocation2 + $0x478] sm:$0xff]
    %v390 = vld [vmem:[#allocation2 + $0x480] sm:$0xff]
    %v391 = vld [vmem:[#allocation2 + $0x488] sm:$0xff]
    %v392 = vld [vmem:[#allocation2 + $0x490] sm:$0xff]
    %v393 = vld [vmem:[#allocation2 + $0x498] sm:$0xff]
    %v394 = vld [vmem:[#allocation2 + $0x4a0] sm:$0xff]
    %v395 = vld [vmem:[#allocation2 + $0x4a8] sm:$0xff]
    %v396 = vld [vmem:[#allocation2 + $0x4b0] sm:$0xff]
    %v397 = vld [vmem:[#allocation2 + $0x4b8] sm:$0xff]
    %v398 = vld [vmem:[#allocation2 + $0x4c0] sm:$0xff]
    %v399 = vld [vmem:[#allocation2 + $0x4c8] sm:$0xff]
    %v400 = vld [vmem:[#allocation2 + $0x4d0] sm:$0xff]
    %v401 = vld [vmem:[#allocation2 + $0x4d8] sm:$0xff]
    %v402 = vld [vmem:[#allocation2 + $0x4e0] sm:$0xff]
    %v403 = vld [vmem:[#allocation2 + $0x4e8] sm:$0xff]
    %v404 = vld [vmem:[#allocation2 + $0x4f0] sm:$0xff]
    %v405 = vld [vmem:[#allocation2 + $0x4f8] sm:$0xff]
    %v406 = vld [vmem:[#allocation2 + $0x500] sm:$0xff]
    %v407 = vld [vmem:[#allocation2 + $0x508] sm:$0xff]
    %v408 = vld [vmem:[#allocation2 + $0x510] sm:$0xff]
    %v409 = vld [vmem:[#allocation2 + $0x518] sm:$0xff]
    %v410 = vld [vmem:[#allocation2 + $0x520] sm:$0xff]
    %v411 = vld [vmem:[#allocation2 + $0x528] sm:$0xff]
    %v412 = vld [vmem:[#allocation2 + $0x530] sm:$0xff]
    %v413 = vld [vmem:[#allocation2 + $0x538] sm:$0xff]
    %v414 = vld [vmem:[#allocation2 + $0x540] sm:$0xff]
    %v415 = vld [vmem:[#allocation2 + $0x548] sm:$0xff]
    %v416 = vld [vmem:[#allocation2 + $0x550] sm:$0xff]
    %v417 = vld [vmem:[#allocation2 + $0x558] sm:$0xff]
    %v418 = vld [vmem:[#allocation2 + $0x560] sm:$0xff]
    %v419 = vld [vmem:[#allocation2 + $0x568] sm:$0xff]
    %v420 = vld [vmem:[#allocation2 + $0x570] sm:$0xff]
    %v421 = vld [vmem:[#allocation2 + $0x578] sm:$0xff]
    %v422 = vld [vmem:[#allocation2 + $0x580] sm:$0xff]
    %v423 = vld [vmem:[#allocation2 + $0x588] sm:$0xff]
    %v424 = vld [vmem:[#allocation2 + $0x590] sm:$0xff]
    %v425 = vld [vmem:[#allocation2 + $0x598] sm:$0xff]
    %v426 = vld [vmem:[#allocation2 + $0x5a0] sm:$0xff]
    %v427 = vld [vmem:[#allocation2 + $0x5a8] sm:$0xff]
    %v428 = vld [vmem:[#allocation2 + $0x5b0] sm:$0xff]
    %v429 = vld [vmem:[#allocation2 + $0x5b8] sm:$0xff]
    %v430 = vld [vmem:[#allocation2 + $0x5c0] sm:$0xff]
    %v431 = vld [vmem:[#allocation2 + $0x5c8] sm:$0xff]
    %v432 = vld [vmem:[#allocation2 + $0x5d0] sm:$0xff]
    %v433 = vld [vmem:[#allocation2 + $0x5d8] sm:$0xff]
    %v434 = vld [vmem:[#allocation2 + $0x5e0] sm:$0xff]
    %v435 = vld [vmem:[#allocation2 + $0x5e8] sm:$0xff]
    %v436 = vld [vmem:[#allocation2 + $0x5f0] sm:$0xff]
    %v437 = vld [vmem:[#allocation2 + $0x5f8] sm:$0xff]
    %v438 = vld [vmem:[#allocation2 + $0x600] sm:$0xff]
    %v439 = vld [vmem:[#allocation2 + $0x608] sm:$0xff]
    %v440 = vld [vmem:[#allocation2 + $0x610] sm:$0xff]
    %v441 = vld [vmem:[#allocation2 + $0x618] sm:$0xff]
    %v442 = vld [vmem:[#allocation2 + $0x620] sm:$0xff]
    %v443 = vld [vmem:[#allocation2 + $0x628] sm:$0xff]
    %v444 = vld [vmem:[#allocation2 + $0x630] sm:$0xff]
    %v445 = vld [vmem:[#allocation2 + $0x638] sm:$0xff]
    %v446 = vld [vmem:[#allocation2 + $0x640] sm:$0xff]
    %v447 = vld [vmem:[#allocation2 + $0x648] sm:$0xff]
    %v448 = vld [vmem:[#allocation2 + $0x650] sm:$0xff]
    %v449 = vld [vmem:[#allocation2 + $0x658] sm:$0xff]
    %v450 = vld [vmem:[#allocation2 + $0x660] sm:$0xff]
    %v451 = vld [vmem:[#allocation2 + $0x668] sm:$0xff]
    %v452 = vld [vmem:[#allocation2 + $0x670] sm:$0xff]
    %v453 = vld [vmem:[#allocation2 + $0x678] sm:$0xff]
    %v454 = vld [vmem:[#allocation2 + $0x680] sm:$0xff]
    %v455 = vld [vmem:[#allocation2 + $0x688] sm:$0xff]
    %v456 = vld [vmem:[#allocation2 + $0x690] sm:$0xff]
    %v457 = vld [vmem:[#allocation2 + $0x698] sm:$0xff]
    %v458 = vld [vmem:[#allocation2 + $0x6a0] sm:$0xff]
    %v459 = vld [vmem:[#allocation2 + $0x6a8] sm:$0xff]
    %v460 = vld [vmem:[#allocation2 + $0x6b0] sm:$0xff]
    %v461 = vld [vmem:[#allocation2 + $0x6b8] sm:$0xff]
    %v462 = vld [vmem:[#allocation2 + $0x6c0] sm:$0xff]
    %v463 = vld [vmem:[#allocation2 + $0x6c8] sm:$0xff]
    %v464 = vld [vmem:[#allocation2 + $0x6d0] sm:$0xff]
    %v465 = vld [vmem:[#allocation2 + $0x6d8] sm:$0xff]
    %v466 = vld [vmem:[#allocation2 + $0x6e0] sm:$0xff]
    %v467 = vld [vmem:[#allocation2 + $0x6e8] sm:$0xff]
    %v468 = vld [vmem:[#allocation2 + $0x6f0] sm:$0xff]
    %v469 = vld [vmem:[#allocation2 + $0x6f8] sm:$0xff]
    %v470 = vld [vmem:[#allocation2 + $0x700] sm:$0xff]
    %v471 = vld [vmem:[#allocation2 + $0x708] sm:$0xff]
    %v472 = vld [vmem:[#allocation2 + $0x710] sm:$0xff]
    %v473 = vld [vmem:[#allocation2 + $0x718] sm:$0xff]
    %v474 = vld [vmem:[#allocation2 + $0x720] sm:$0xff]
    %v475 = vld [vmem:[#allocation2 + $0x728] sm:$0xff]
    %v476 = vld [vmem:[#allocation2 + $0x730] sm:$0xff]
    %v477 = vld [vmem:[#allocation2 + $0x738] sm:$0xff]
    %v478 = vld [vmem:[#allocation2 + $0x740] sm:$0xff]
    %v479 = vld [vmem:[#allocation2 + $0x748] sm:$0xff]
    %v480 = vld [vmem:[#allocation2 + $0x750] sm:$0xff]
    %v481 = vld [vmem:[#allocation2 + $0x758] sm:$0xff]
    %v482 = vld [vmem:[#allocation2 + $0x760] sm:$0xff]
    %v483 = vld [vmem:[#allocation2 + $0x768] sm:$0xff]
    %v484 = vld [vmem:[#allocation2 + $0x770] sm:$0xff]
    %v485 = vld [vmem:[#allocation2 + $0x778] sm:$0xff]
    %v486 = vld [vmem:[#allocation2 + $0x780] sm:$0xff]
    %v487 = vld [vmem:[#allocation2 + $0x788] sm:$0xff]
    %v488 = vld [vmem:[#allocation2 + $0x790] sm:$0xff]
    %v489 = vld [vmem:[#allocation2 + $0x798] sm:$0xff]
    %v490 = vld [vmem:[#allocation2 + $0x7a0] sm:$0xff]
    %v491 = vld [vmem:[#allocation2 + $0x7a8] sm:$0xff]
    %v492 = vld [vmem:[#allocation2 + $0x7b0] sm:$0xff]
    %v493 = vld [vmem:[#allocation2 + $0x7b8] sm:$0xff]
    %v494 = vld [vmem:[#allocation2 + $0x7c0] sm:$0xff]
    %v495 = vld [vmem:[#allocation2 + $0x7c8] sm:$0xff]
    %v496 = vld [vmem:[#allocation2 + $0x7d0] sm:$0xff]
    %v497 = vld [vmem:[#allocation2 + $0x7d8] sm:$0xff]
    %v498 = vld [vmem:[#allocation2 + $0x7e0] sm:$0xff]
    %v499 = vld [vmem:[#allocation2 + $0x7e8] sm:$0xff]
    %v500 = vld [vmem:[#allocation2 + $0x7f0] sm:$0xff]
    %v501 = vld [vmem:[#allocation2 + $0x7f8] sm:$0xff]
    %v502 = vld [vmem:[%s3] sm:$0xf]
    %v504 = vlaneseq
    %v505 = vshrl.u32 %v504, 7
    %v506 = vsub.s32 0, %v505
    %v507 = vrot.slane %v502, %v506
    %v508 = vlaneseq
    %v509 = vshrl.u32 %v508, 7
    %v510 = vsub.s32 1, %v509
    %v511 = vrot.slane %v502, %v510
    %v512 = vlaneseq
    %v513 = vshrl.u32 %v512, 7
    %v514 = vsub.s32 2, %v513
    %v515 = vrot.slane %v502, %v514
    %v516 = vlaneseq
    %v517 = vshrl.u32 %v516, 7
    %v518 = vsub.s32 3, %v517
    %v519 = vrot.slane %v502, %v518
    %v540 = vunpack.c.l.b16 %v230
    %v541 = vunpack.c.l.b16 %v231
    %v542 = vunpack.c.l.b16 %v232
    %v543 = vunpack.c.l.b16 %v233
    %v544 = vunpack.c.l.b16 %v234
    %v545 = vunpack.c.l.b16 %v235
    %v546 = vunpack.c.l.b16 %v236
    %v547 = vunpack.c.l.b16 %v237
    %v548 = vunpack.c.l.b16 %v238
    %v549 = vunpack.c.l.b16 %v239
    %v550 = vunpack.c.l.b16 %v240
    %v551 = vunpack.c.l.b16 %v241
    %v552 = vunpack.c.l.b16 %v242
    %v553 = vunpack.c.l.b16 %v243
    %v554 = vunpack.c.l.b16 %v244
    %v555 = vunpack.c.l.b16 %v245
    %v556 = vrot.slane %v548, 7
    %vm557 = vcmask 1041409
    %v558 = vsel %vm557, %v556, %v540
    %v559 = vrot.slane %v549, 7
    %v560 = vsel %vm557, %v559, %v541
    %v561 = vrot.slane %v550, 7
    %v562 = vsel %vm557, %v561, %v542
    %v563 = vrot.slane %v551, 7
    %v564 = vsel %vm557, %v563, %v543
    %v565 = vrot.slane %v552, 7
    %v566 = vsel %vm557, %v565, %v544
    %v567 = vrot.slane %v553, 7
    %v568 = vsel %vm557, %v567, %v545
    %v569 = vrot.slane %v554, 7
    %v570 = vsel %vm557, %v569, %v546
    %v571 = vrot.slane %v555, 7
    %v572 = vsel %vm557, %v571, %v547
    %v573 = vpack.c.b16 %v558, %v558
    %v574 = vpack.c.b16 %v560, %v560
    %v575 = vpack.c.b16 %v562, %v562
    %v576 = vpack.c.b16 %v564, %v564
    %v577 = vpack.c.b16 %v566, %v566
    %v578 = vpack.c.b16 %v568, %v568
    %v579 = vpack.c.b16 %v570, %v570
    %v580 = vpack.c.b16 %v572, %v572
    %v845 = vunpack.c.l.b16 %v246
    %v846 = vunpack.c.h.b16 %v246
    %v847 = vunpack.c.l.b16 %v247
    %v848 = vunpack.c.h.b16 %v247
    %v849 = vunpack.c.l.b16 %v248
    %v850 = vunpack.c.h.b16 %v248
    %v851 = vunpack.c.l.b16 %v249
    %v852 = vunpack.c.h.b16 %v249
    %v853 = vunpack.c.l.b16 %v250
    %v854 = vunpack.c.h.b16 %v250
    %v855 = vunpack.c.l.b16 %v251
    %v856 = vunpack.c.h.b16 %v251
    %v857 = vunpack.c.l.b16 %v252
    %v858 = vunpack.c.h.b16 %v252
    %v859 = vunpack.c.l.b16 %v253
    %v860 = vunpack.c.h.b16 %v253
    %v861 = vunpack.c.l.b16 %v254
    %v862 = vunpack.c.h.b16 %v254
    %v863 = vunpack.c.l.b16 %v255
    %v864 = vunpack.c.h.b16 %v255
    %v865 = vunpack.c.l.b16 %v256
    %v866 = vunpack.c.h.b16 %v256
    %v867 = vunpack.c.l.b16 %v257
    %v868 = vunpack.c.h.b16 %v257
    %v869 = vunpack.c.l.b16 %v258
    %v870 = vunpack.c.h.b16 %v258
    %v871 = vunpack.c.l.b16 %v259
    %v872 = vunpack.c.h.b16 %v259
    %v873 = vunpack.c.l.b16 %v260
    %v874 = vunpack.c.h.b16 %v260
    %v875 = vunpack.c.l.b16 %v261
    %v876 = vunpack.c.h.b16 %v261
    %v877 = vunpack.c.l.b16 %v262
    %v878 = vunpack.c.h.b16 %v262
    %v879 = vunpack.c.l.b16 %v263
    %v880 = vunpack.c.h.b16 %v263
    %v881 = vunpack.c.l.b16 %v264
    %v882 = vunpack.c.h.b16 %v264
    %v883 = vunpack.c.l.b16 %v265
    %v884 = vunpack.c.h.b16 %v265
    %v885 = vunpack.c.l.b16 %v266
    %v886 = vunpack.c.h.b16 %v266
    %v887 = vunpack.c.l.b16 %v267
    %v888 = vunpack.c.h.b16 %v267
    %v889 = vunpack.c.l.b16 %v268
    %v890 = vunpack.c.h.b16 %v268
    %v891 = vunpack.c.l.b16 %v269
    %v892 = vunpack.c.h.b16 %v269
    %v893 = vunpack.c.l.b16 %v270
    %v894 = vunpack.c.h.b16 %v270
    %v895 = vunpack.c.l.b16 %v271
    %v896 = vunpack.c.h.b16 %v271
    %v897 = vunpack.c.l.b16 %v272
    %v898 = vunpack.c.h.b16 %v272
    %v899 = vunpack.c.l.b16 %v273
    %v900 = vunpack.c.h.b16 %v273
    %v901 = vunpack.c.l.b16 %v274
    %v902 = vunpack.c.h.b16 %v274
    %v903 = vunpack.c.l.b16 %v275
    %v904 = vunpack.c.h.b16 %v275
    %v905 = vunpack.c.l.b16 %v276
    %v906 = vunpack.c.h.b16 %v276
    %v907 = vunpack.c.l.b16 %v277
    %v908 = vunpack.c.h.b16 %v277
    %v909 = vunpack.c.l.b16 %v278
    %v910 = vunpack.c.h.b16 %v278
    %v911 = vunpack.c.l.b16 %v279
    %v912 = vunpack.c.h.b16 %v279
    %v913 = vunpack.c.l.b16 %v280
    %v914 = vunpack.c.h.b16 %v280
    %v915 = vunpack.c.l.b16 %v281
    %v916 = vunpack.c.h.b16 %v281
    %v917 = vunpack.c.l.b16 %v282
    %v918 = vunpack.c.h.b16 %v282
    %v919 = vunpack.c.l.b16 %v283
    %v920 = vunpack.c.h.b16 %v283
    %v921 = vunpack.c.l.b16 %v284
    %v922 = vunpack.c.h.b16 %v284
    %v923 = vunpack.c.l.b16 %v285
    %v924 = vunpack.c.h.b16 %v285
    %v925 = vunpack.c.l.b16 %v286
    %v926 = vunpack.c.h.b16 %v286
    %v927 = vunpack.c.l.b16 %v287
    %v928 = vunpack.c.h.b16 %v287
    %v929 = vunpack.c.l.b16 %v288
    %v930 = vunpack.c.h.b16 %v288
    %v931 = vunpack.c.l.b16 %v289
    %v932 = vunpack.c.h.b16 %v289
    %v933 = vunpack.c.l.b16 %v290
    %v934 = vunpack.c.h.b16 %v290
    %v935 = vunpack.c.l.b16 %v291
    %v936 = vunpack.c.h.b16 %v291
    %v937 = vunpack.c.l.b16 %v292
    %v938 = vunpack.c.h.b16 %v292
    %v939 = vunpack.c.l.b16 %v293
    %v940 = vunpack.c.h.b16 %v293
    %v941 = vunpack.c.l.b16 %v294
    %v942 = vunpack.c.h.b16 %v294
    %v943 = vunpack.c.l.b16 %v295
    %v944 = vunpack.c.h.b16 %v295
    %v945 = vunpack.c.l.b16 %v296
    %v946 = vunpack.c.h.b16 %v296
    %v947 = vunpack.c.l.b16 %v297
    %v948 = vunpack.c.h.b16 %v297
    %v949 = vunpack.c.l.b16 %v298
    %v950 = vunpack.c.h.b16 %v298
    %v951 = vunpack.c.l.b16 %v299
    %v952 = vunpack.c.h.b16 %v299
    %v953 = vunpack.c.l.b16 %v300
    %v954 = vunpack.c.h.b16 %v300
    %v955 = vunpack.c.l.b16 %v301
    %v956 = vunpack.c.h.b16 %v301
    %v957 = vunpack.c.l.b16 %v302
    %v958 = vunpack.c.h.b16 %v302
    %v959 = vunpack.c.l.b16 %v303
    %v960 = vunpack.c.h.b16 %v303
    %v961 = vunpack.c.l.b16 %v304
    %v962 = vunpack.c.h.b16 %v304
    %v963 = vunpack.c.l.b16 %v305
    %v964 = vunpack.c.h.b16 %v305
    %v965 = vunpack.c.l.b16 %v306
    %v966 = vunpack.c.h.b16 %v306
    %v967 = vunpack.c.l.b16 %v307
    %v968 = vunpack.c.h.b16 %v307
    %v969 = vunpack.c.l.b16 %v308
    %v970 = vunpack.c.h.b16 %v308
    %v971 = vunpack.c.l.b16 %v309
    %v972 = vunpack.c.h.b16 %v309
    %v973 = vunpack.c.l.b16 %v310
    %v974 = vunpack.c.h.b16 %v310
    %v975 = vunpack.c.l.b16 %v311
    %v976 = vunpack.c.h.b16 %v311
    %v977 = vunpack.c.l.b16 %v312
    %v978 = vunpack.c.h.b16 %v312
    %v979 = vunpack.c.l.b16 %v313
    %v980 = vunpack.c.h.b16 %v313
    %v981 = vunpack.c.l.b16 %v314
    %v982 = vunpack.c.h.b16 %v314
    %v983 = vunpack.c.l.b16 %v315
    %v984 = vunpack.c.h.b16 %v315
    %v985 = vunpack.c.l.b16 %v316
    %v986 = vunpack.c.h.b16 %v316
    %v987 = vunpack.c.l.b16 %v317
    %v988 = vunpack.c.h.b16 %v317
    %v989 = vunpack.c.l.b16 %v318
    %v990 = vunpack.c.h.b16 %v318
    %v991 = vunpack.c.l.b16 %v319
    %v992 = vunpack.c.h.b16 %v319
    %v993 = vunpack.c.l.b16 %v320
    %v994 = vunpack.c.h.b16 %v320
    %v995 = vunpack.c.l.b16 %v321
    %v996 = vunpack.c.h.b16 %v321
    %v997 = vunpack.c.l.b16 %v322
    %v998 = vunpack.c.h.b16 %v322
    %v999 = vunpack.c.l.b16 %v323
    %v1000 = vunpack.c.h.b16 %v323
    %v1001 = vunpack.c.l.b16 %v324
    %v1002 = vunpack.c.h.b16 %v324
    %v1003 = vunpack.c.l.b16 %v325
    %v1004 = vunpack.c.h.b16 %v325
    %v1005 = vunpack.c.l.b16 %v326
    %v1006 = vunpack.c.h.b16 %v326
    %v1007 = vunpack.c.l.b16 %v327
    %v1008 = vunpack.c.h.b16 %v327
    %v1009 = vunpack.c.l.b16 %v328
    %v1010 = vunpack.c.h.b16 %v328
    %v1011 = vunpack.c.l.b16 %v329
    %v1012 = vunpack.c.h.b16 %v329
    %v1013 = vunpack.c.l.b16 %v330
    %v1014 = vunpack.c.h.b16 %v330
    %v1015 = vunpack.c.l.b16 %v331
    %v1016 = vunpack.c.h.b16 %v331
    %v1017 = vunpack.c.l.b16 %v332
    %v1018 = vunpack.c.h.b16 %v332
    %v1019 = vunpack.c.l.b16 %v333
    %v1020 = vunpack.c.h.b16 %v333
    %v1021 = vunpack.c.l.b16 %v334
    %v1022 = vunpack.c.h.b16 %v334
    %v1023 = vunpack.c.l.b16 %v335
    %v1024 = vunpack.c.h.b16 %v335
    %v1025 = vunpack.c.l.b16 %v336
    %v1026 = vunpack.c.h.b16 %v336
    %v1027 = vunpack.c.l.b16 %v337
    %v1028 = vunpack.c.h.b16 %v337
    %v1029 = vunpack.c.l.b16 %v338
    %v1030 = vunpack.c.h.b16 %v338
    %v1031 = vunpack.c.l.b16 %v339
    %v1032 = vunpack.c.h.b16 %v339
    %v1033 = vunpack.c.l.b16 %v340
    %v1034 = vunpack.c.h.b16 %v340
    %v1035 = vunpack.c.l.b16 %v341
    %v1036 = vunpack.c.h.b16 %v341
    %v1037 = vunpack.c.l.b16 %v342
    %v1038 = vunpack.c.h.b16 %v342
    %v1039 = vunpack.c.l.b16 %v343
    %v1040 = vunpack.c.h.b16 %v343
    %v1041 = vunpack.c.l.b16 %v344
    %v1042 = vunpack.c.h.b16 %v344
    %v1043 = vunpack.c.l.b16 %v345
    %v1044 = vunpack.c.h.b16 %v345
    %v1045 = vunpack.c.l.b16 %v346
    %v1046 = vunpack.c.h.b16 %v346
    %v1047 = vunpack.c.l.b16 %v347
    %v1048 = vunpack.c.h.b16 %v347
    %v1049 = vunpack.c.l.b16 %v348
    %v1050 = vunpack.c.h.b16 %v348
    %v1051 = vunpack.c.l.b16 %v349
    %v1052 = vunpack.c.h.b16 %v349
    %v1053 = vunpack.c.l.b16 %v350
    %v1054 = vunpack.c.h.b16 %v350
    %v1055 = vunpack.c.l.b16 %v351
    %v1056 = vunpack.c.h.b16 %v351
    %v1057 = vunpack.c.l.b16 %v352
    %v1058 = vunpack.c.h.b16 %v352
    %v1059 = vunpack.c.l.b16 %v353
    %v1060 = vunpack.c.h.b16 %v353
    %v1061 = vunpack.c.l.b16 %v354
    %v1062 = vunpack.c.h.b16 %v354
    %v1063 = vunpack.c.l.b16 %v355
    %v1064 = vunpack.c.h.b16 %v355
    %v1065 = vunpack.c.l.b16 %v356
    %v1066 = vunpack.c.h.b16 %v356
    %v1067 = vunpack.c.l.b16 %v357
    %v1068 = vunpack.c.h.b16 %v357
    %v1069 = vunpack.c.l.b16 %v358
    %v1070 = vunpack.c.h.b16 %v358
    %v1071 = vunpack.c.l.b16 %v359
    %v1072 = vunpack.c.h.b16 %v359
    %v1073 = vunpack.c.l.b16 %v360
    %v1074 = vunpack.c.h.b16 %v360
    %v1075 = vunpack.c.l.b16 %v361
    %v1076 = vunpack.c.h.b16 %v361
    %v1077 = vunpack.c.l.b16 %v362
    %v1078 = vunpack.c.h.b16 %v362
    %v1079 = vunpack.c.l.b16 %v363
    %v1080 = vunpack.c.h.b16 %v363
    %v1081 = vunpack.c.l.b16 %v364
    %v1082 = vunpack.c.h.b16 %v364
    %v1083 = vunpack.c.l.b16 %v365
    %v1084 = vunpack.c.h.b16 %v365
    %v1085 = vunpack.c.l.b16 %v366
    %v1086 = vunpack.c.h.b16 %v366
    %v1087 = vunpack.c.l.b16 %v367
    %v1088 = vunpack.c.h.b16 %v367
    %v1089 = vunpack.c.l.b16 %v368
    %v1090 = vunpack.c.h.b16 %v368
    %v1091 = vunpack.c.l.b16 %v369
    %v1092 = vunpack.c.h.b16 %v369
    %v1093 = vunpack.c.l.b16 %v370
    %v1094 = vunpack.c.h.b16 %v370
    %v1095 = vunpack.c.l.b16 %v371
    %v1096 = vunpack.c.h.b16 %v371
    %v1097 = vunpack.c.l.b16 %v372
    %v1098 = vunpack.c.h.b16 %v372
    %v1099 = vunpack.c.l.b16 %v373
    %v1100 = vunpack.c.h.b16 %v373
    %v1101 = vunpack.c.l.b16 %v374
    %v1102 = vunpack.c.h.b16 %v374
    %v1103 = vunpack.c.l.b16 %v375
    %v1104 = vunpack.c.h.b16 %v375
    %v1105 = vunpack.c.l.b16 %v376
    %v1106 = vunpack.c.h.b16 %v376
    %v1107 = vunpack.c.l.b16 %v377
    %v1108 = vunpack.c.h.b16 %v377
    %v1109 = vunpack.c.l.b16 %v378
    %v1110 = vunpack.c.h.b16 %v378
    %v1111 = vunpack.c.l.b16 %v379
    %v1112 = vunpack.c.h.b16 %v379
    %v1113 = vunpack.c.l.b16 %v380
    %v1114 = vunpack.c.h.b16 %v380
    %v1115 = vunpack.c.l.b16 %v381
    %v1116 = vunpack.c.h.b16 %v381
    %v1117 = vunpack.c.l.b16 %v382
    %v1118 = vunpack.c.h.b16 %v382
    %v1119 = vunpack.c.l.b16 %v383
    %v1120 = vunpack.c.h.b16 %v383
    %v1121 = vunpack.c.l.b16 %v384
    %v1122 = vunpack.c.h.b16 %v384
    %v1123 = vunpack.c.l.b16 %v385
    %v1124 = vunpack.c.h.b16 %v385
    %v1125 = vunpack.c.l.b16 %v386
    %v1126 = vunpack.c.h.b16 %v386
    %v1127 = vunpack.c.l.b16 %v387
    %v1128 = vunpack.c.h.b16 %v387
    %v1129 = vunpack.c.l.b16 %v388
    %v1130 = vunpack.c.h.b16 %v388
    %v1131 = vunpack.c.l.b16 %v389
    %v1132 = vunpack.c.h.b16 %v389
    %v1133 = vunpack.c.l.b16 %v390
    %v1134 = vunpack.c.h.b16 %v390
    %v1135 = vunpack.c.l.b16 %v391
    %v1136 = vunpack.c.h.b16 %v391
    %v1137 = vunpack.c.l.b16 %v392
    %v1138 = vunpack.c.h.b16 %v392
    %v1139 = vunpack.c.l.b16 %v393
    %v1140 = vunpack.c.h.b16 %v393
    %v1141 = vunpack.c.l.b16 %v394
    %v1142 = vunpack.c.h.b16 %v394
    %v1143 = vunpack.c.l.b16 %v395
    %v1144 = vunpack.c.h.b16 %v395
    %v1145 = vunpack.c.l.b16 %v396
    %v1146 = vunpack.c.h.b16 %v396
    %v1147 = vunpack.c.l.b16 %v397
    %v1148 = vunpack.c.h.b16 %v397
    %v1149 = vunpack.c.l.b16 %v398
    %v1150 = vunpack.c.h.b16 %v398
    %v1151 = vunpack.c.l.b16 %v399
    %v1152 = vunpack.c.h.b16 %v399
    %v1153 = vunpack.c.l.b16 %v400
    %v1154 = vunpack.c.h.b16 %v400
    %v1155 = vunpack.c.l.b16 %v401
    %v1156 = vunpack.c.h.b16 %v401
    %v1157 = vunpack.c.l.b16 %v402
    %v1158 = vunpack.c.h.b16 %v402
    %v1159 = vunpack.c.l.b16 %v403
    %v1160 = vunpack.c.h.b16 %v403
    %v1161 = vunpack.c.l.b16 %v404
    %v1162 = vunpack.c.h.b16 %v404
    %v1163 = vunpack.c.l.b16 %v405
    %v1164 = vunpack.c.h.b16 %v405
    %v1165 = vunpack.c.l.b16 %v406
    %v1166 = vunpack.c.h.b16 %v406
    %v1167 = vunpack.c.l.b16 %v407
    %v1168 = vunpack.c.h.b16 %v407
    %v1169 = vunpack.c.l.b16 %v408
    %v1170 = vunpack.c.h.b16 %v408
    %v1171 = vunpack.c.l.b16 %v409
    %v1172 = vunpack.c.h.b16 %v409
    %v1173 = vunpack.c.l.b16 %v410
    %v1174 = vunpack.c.h.b16 %v410
    %v1175 = vunpack.c.l.b16 %v411
    %v1176 = vunpack.c.h.b16 %v411
    %v1177 = vunpack.c.l.b16 %v412
    %v1178 = vunpack.c.h.b16 %v412
    %v1179 = vunpack.c.l.b16 %v413
    %v1180 = vunpack.c.h.b16 %v413
    %v1181 = vunpack.c.l.b16 %v414
    %v1182 = vunpack.c.h.b16 %v414
    %v1183 = vunpack.c.l.b16 %v415
    %v1184 = vunpack.c.h.b16 %v415
    %v1185 = vunpack.c.l.b16 %v416
    %v1186 = vunpack.c.h.b16 %v416
    %v1187 = vunpack.c.l.b16 %v417
    %v1188 = vunpack.c.h.b16 %v417
    %v1189 = vunpack.c.l.b16 %v418
    %v1190 = vunpack.c.h.b16 %v418
    %v1191 = vunpack.c.l.b16 %v419
    %v1192 = vunpack.c.h.b16 %v419
    %v1193 = vunpack.c.l.b16 %v420
    %v1194 = vunpack.c.h.b16 %v420
    %v1195 = vunpack.c.l.b16 %v421
    %v1196 = vunpack.c.h.b16 %v421
    %v1197 = vunpack.c.l.b16 %v422
    %v1198 = vunpack.c.h.b16 %v422
    %v1199 = vunpack.c.l.b16 %v423
    %v1200 = vunpack.c.h.b16 %v423
    %v1201 = vunpack.c.l.b16 %v424
    %v1202 = vunpack.c.h.b16 %v424
    %v1203 = vunpack.c.l.b16 %v425
    %v1204 = vunpack.c.h.b16 %v425
    %v1205 = vunpack.c.l.b16 %v426
    %v1206 = vunpack.c.h.b16 %v426
    %v1207 = vunpack.c.l.b16 %v427
    %v1208 = vunpack.c.h.b16 %v427
    %v1209 = vunpack.c.l.b16 %v428
    %v1210 = vunpack.c.h.b16 %v428
    %v1211 = vunpack.c.l.b16 %v429
    %v1212 = vunpack.c.h.b16 %v429
    %v1213 = vunpack.c.l.b16 %v430
    %v1214 = vunpack.c.h.b16 %v430
    %v1215 = vunpack.c.l.b16 %v431
    %v1216 = vunpack.c.h.b16 %v431
    %v1217 = vunpack.c.l.b16 %v432
    %v1218 = vunpack.c.h.b16 %v432
    %v1219 = vunpack.c.l.b16 %v433
    %v1220 = vunpack.c.h.b16 %v433
    %v1221 = vunpack.c.l.b16 %v434
    %v1222 = vunpack.c.h.b16 %v434
    %v1223 = vunpack.c.l.b16 %v435
    %v1224 = vunpack.c.h.b16 %v435
    %v1225 = vunpack.c.l.b16 %v436
    %v1226 = vunpack.c.h.b16 %v436
    %v1227 = vunpack.c.l.b16 %v437
    %v1228 = vunpack.c.h.b16 %v437
    %v1229 = vunpack.c.l.b16 %v438
    %v1230 = vunpack.c.h.b16 %v438
    %v1231 = vunpack.c.l.b16 %v439
    %v1232 = vunpack.c.h.b16 %v439
    %v1233 = vunpack.c.l.b16 %v440
    %v1234 = vunpack.c.h.b16 %v440
    %v1235 = vunpack.c.l.b16 %v441
    %v1236 = vunpack.c.h.b16 %v441
    %v1237 = vunpack.c.l.b16 %v442
    %v1238 = vunpack.c.h.b16 %v442
    %v1239 = vunpack.c.l.b16 %v443
    %v1240 = vunpack.c.h.b16 %v443
    %v1241 = vunpack.c.l.b16 %v444
    %v1242 = vunpack.c.h.b16 %v444
    %v1243 = vunpack.c.l.b16 %v445
    %v1244 = vunpack.c.h.b16 %v445
    %v1245 = vunpack.c.l.b16 %v446
    %v1246 = vunpack.c.h.b16 %v446
    %v1247 = vunpack.c.l.b16 %v447
    %v1248 = vunpack.c.h.b16 %v447
    %v1249 = vunpack.c.l.b16 %v448
    %v1250 = vunpack.c.h.b16 %v448
    %v1251 = vunpack.c.l.b16 %v449
    %v1252 = vunpack.c.h.b16 %v449
    %v1253 = vunpack.c.l.b16 %v450
    %v1254 = vunpack.c.h.b16 %v450
    %v1255 = vunpack.c.l.b16 %v451
    %v1256 = vunpack.c.h.b16 %v451
    %v1257 = vunpack.c.l.b16 %v452
    %v1258 = vunpack.c.h.b16 %v452
    %v1259 = vunpack.c.l.b16 %v453
    %v1260 = vunpack.c.h.b16 %v453
    %v1261 = vunpack.c.l.b16 %v454
    %v1262 = vunpack.c.h.b16 %v454
    %v1263 = vunpack.c.l.b16 %v455
    %v1264 = vunpack.c.h.b16 %v455
    %v1265 = vunpack.c.l.b16 %v456
    %v1266 = vunpack.c.h.b16 %v456
    %v1267 = vunpack.c.l.b16 %v457
    %v1268 = vunpack.c.h.b16 %v457
    %v1269 = vunpack.c.l.b16 %v458
    %v1270 = vunpack.c.h.b16 %v458
    %v1271 = vunpack.c.l.b16 %v459
    %v1272 = vunpack.c.h.b16 %v459
    %v1273 = vunpack.c.l.b16 %v460
    %v1274 = vunpack.c.h.b16 %v460
    %v1275 = vunpack.c.l.b16 %v461
    %v1276 = vunpack.c.h.b16 %v461
    %v1277 = vunpack.c.l.b16 %v462
    %v1278 = vunpack.c.h.b16 %v462
    %v1279 = vunpack.c.l.b16 %v463
    %v1280 = vunpack.c.h.b16 %v463
    %v1281 = vunpack.c.l.b16 %v464
    %v1282 = vunpack.c.h.b16 %v464
    %v1283 = vunpack.c.l.b16 %v465
    %v1284 = vunpack.c.h.b16 %v465
    %v1285 = vunpack.c.l.b16 %v466
    %v1286 = vunpack.c.h.b16 %v466
    %v1287 = vunpack.c.l.b16 %v467
    %v1288 = vunpack.c.h.b16 %v467
    %v1289 = vunpack.c.l.b16 %v468
    %v1290 = vunpack.c.h.b16 %v468
    %v1291 = vunpack.c.l.b16 %v469
    %v1292 = vunpack.c.h.b16 %v469
    %v1293 = vunpack.c.l.b16 %v470
    %v1294 = vunpack.c.h.b16 %v470
    %v1295 = vunpack.c.l.b16 %v471
    %v1296 = vunpack.c.h.b16 %v471
    %v1297 = vunpack.c.l.b16 %v472
    %v1298 = vunpack.c.h.b16 %v472
    %v1299 = vunpack.c.l.b16 %v473
    %v1300 = vunpack.c.h.b16 %v473
    %v1301 = vunpack.c.l.b16 %v474
    %v1302 = vunpack.c.h.b16 %v474
    %v1303 = vunpack.c.l.b16 %v475
    %v1304 = vunpack.c.h.b16 %v475
    %v1305 = vunpack.c.l.b16 %v476
    %v1306 = vunpack.c.h.b16 %v476
    %v1307 = vunpack.c.l.b16 %v477
    %v1308 = vunpack.c.h.b16 %v477
    %v1309 = vunpack.c.l.b16 %v478
    %v1310 = vunpack.c.h.b16 %v478
    %v1311 = vunpack.c.l.b16 %v479
    %v1312 = vunpack.c.h.b16 %v479
    %v1313 = vunpack.c.l.b16 %v480
    %v1314 = vunpack.c.h.b16 %v480
    %v1315 = vunpack.c.l.b16 %v481
    %v1316 = vunpack.c.h.b16 %v481
    %v1317 = vunpack.c.l.b16 %v482
    %v1318 = vunpack.c.h.b16 %v482
    %v1319 = vunpack.c.l.b16 %v483
    %v1320 = vunpack.c.h.b16 %v483
    %v1321 = vunpack.c.l.b16 %v484
    %v1322 = vunpack.c.h.b16 %v484
    %v1323 = vunpack.c.l.b16 %v485
    %v1324 = vunpack.c.h.b16 %v485
    %v1325 = vunpack.c.l.b16 %v486
    %v1326 = vunpack.c.h.b16 %v486
    %v1327 = vunpack.c.l.b16 %v487
    %v1328 = vunpack.c.h.b16 %v487
    %v1329 = vunpack.c.l.b16 %v488
    %v1330 = vunpack.c.h.b16 %v488
    %v1331 = vunpack.c.l.b16 %v489
    %v1332 = vunpack.c.h.b16 %v489
    %v1333 = vunpack.c.l.b16 %v490
    %v1334 = vunpack.c.h.b16 %v490
    %v1335 = vunpack.c.l.b16 %v491
    %v1336 = vunpack.c.h.b16 %v491
    %v1337 = vunpack.c.l.b16 %v492
    %v1338 = vunpack.c.h.b16 %v492
    %v1339 = vunpack.c.l.b16 %v493
    %v1340 = vunpack.c.h.b16 %v493
    %v1341 = vunpack.c.l.b16 %v494
    %v1342 = vunpack.c.h.b16 %v494
    %v1343 = vunpack.c.l.b16 %v495
    %v1344 = vunpack.c.h.b16 %v495
    %v1345 = vunpack.c.l.b16 %v496
    %v1346 = vunpack.c.h.b16 %v496
    %v1347 = vunpack.c.l.b16 %v497
    %v1348 = vunpack.c.h.b16 %v497
    %v1349 = vunpack.c.l.b16 %v498
    %v1350 = vunpack.c.h.b16 %v498
    %v1351 = vunpack.c.l.b16 %v499
    %v1352 = vunpack.c.h.b16 %v499
    %v1353 = vunpack.c.l.b16 %v500
    %v1354 = vunpack.c.h.b16 %v500
    %v1355 = vunpack.c.l.b16 %v501
    %v1356 = vunpack.c.h.b16 %v501
    %v1357 = vpack.c.b16 %v849, %v845
    %v1358 = vpack.c.b16 %v850, %v846
    %v1359 = vpack.c.b16 %v851, %v847
    %v1360 = vpack.c.b16 %v852, %v848
    %v1361 = vpack.c.b16 %v857, %v853
    %v1362 = vpack.c.b16 %v858, %v854
    %v1363 = vpack.c.b16 %v859, %v855
    %v1364 = vpack.c.b16 %v860, %v856
    %v1365 = vpack.c.b16 %v865, %v861
    %v1366 = vpack.c.b16 %v866, %v862
    %v1367 = vpack.c.b16 %v867, %v863
    %v1368 = vpack.c.b16 %v868, %v864
    %v1369 = vpack.c.b16 %v873, %v869
    %v1370 = vpack.c.b16 %v874, %v870
    %v1371 = vpack.c.b16 %v875, %v871
    %v1372 = vpack.c.b16 %v876, %v872
    %v1373 = vpack.c.b16 %v881, %v877
    %v1374 = vpack.c.b16 %v882, %v878
    %v1375 = vpack.c.b16 %v883, %v879
    %v1376 = vpack.c.b16 %v884, %v880
    %v1377 = vpack.c.b16 %v889, %v885
    %v1378 = vpack.c.b16 %v890, %v886
    %v1379 = vpack.c.b16 %v891, %v887
    %v1380 = vpack.c.b16 %v892, %v888
    %v1381 = vpack.c.b16 %v897, %v893
    %v1382 = vpack.c.b16 %v898, %v894
    %v1383 = vpack.c.b16 %v899, %v895
    %v1384 = vpack.c.b16 %v900, %v896
    %v1385 = vpack.c.b16 %v905, %v901
    %v1386 = vpack.c.b16 %v906, %v902
    %v1387 = vpack.c.b16 %v907, %v903
    %v1388 = vpack.c.b16 %v908, %v904
    %v1389 = vpack.c.b16 %v913, %v909
    %v1390 = vpack.c.b16 %v914, %v910
    %v1391 = vpack.c.b16 %v915, %v911
    %v1392 = vpack.c.b16 %v916, %v912
    %v1393 = vpack.c.b16 %v921, %v917
    %v1394 = vpack.c.b16 %v922, %v918
    %v1395 = vpack.c.b16 %v923, %v919
    %v1396 = vpack.c.b16 %v924, %v920
    %v1397 = vpack.c.b16 %v929, %v925
    %v1398 = vpack.c.b16 %v930, %v926
    %v1399 = vpack.c.b16 %v931, %v927
    %v1400 = vpack.c.b16 %v932, %v928
    %v1401 = vpack.c.b16 %v937, %v933
    %v1402 = vpack.c.b16 %v938, %v934
    %v1403 = vpack.c.b16 %v939, %v935
    %v1404 = vpack.c.b16 %v940, %v936
    %v1405 = vpack.c.b16 %v945, %v941
    %v1406 = vpack.c.b16 %v946, %v942
    %v1407 = vpack.c.b16 %v947, %v943
    %v1408 = vpack.c.b16 %v948, %v944
    %v1409 = vpack.c.b16 %v953, %v949
    %v1410 = vpack.c.b16 %v954, %v950
    %v1411 = vpack.c.b16 %v955, %v951
    %v1412 = vpack.c.b16 %v956, %v952
    %v1413 = vpack.c.b16 %v961, %v957
    %v1414 = vpack.c.b16 %v962, %v958
    %v1415 = vpack.c.b16 %v963, %v959
    %v1416 = vpack.c.b16 %v964, %v960
    %v1417 = vpack.c.b16 %v969, %v965
    %v1418 = vpack.c.b16 %v970, %v966
    %v1419 = vpack.c.b16 %v971, %v967
    %v1420 = vpack.c.b16 %v972, %v968
    %v1421 = vpack.c.b16 %v977, %v973
    %v1422 = vpack.c.b16 %v978, %v974
    %v1423 = vpack.c.b16 %v979, %v975
    %v1424 = vpack.c.b16 %v980, %v976
    %v1425 = vpack.c.b16 %v985, %v981
    %v1426 = vpack.c.b16 %v986, %v982
    %v1427 = vpack.c.b16 %v987, %v983
    %v1428 = vpack.c.b16 %v988, %v984
    %v1429 = vpack.c.b16 %v993, %v989
    %v1430 = vpack.c.b16 %v994, %v990
    %v1431 = vpack.c.b16 %v995, %v991
    %v1432 = vpack.c.b16 %v996, %v992
    %v1433 = vpack.c.b16 %v1001, %v997
    %v1434 = vpack.c.b16 %v1002, %v998
    %v1435 = vpack.c.b16 %v1003, %v999
    %v1436 = vpack.c.b16 %v1004, %v1000
    %v1437 = vpack.c.b16 %v1009, %v1005
    %v1438 = vpack.c.b16 %v1010, %v1006
    %v1439 = vpack.c.b16 %v1011, %v1007
    %v1440 = vpack.c.b16 %v1012, %v1008
    %v1441 = vpack.c.b16 %v1017, %v1013
    %v1442 = vpack.c.b16 %v1018, %v1014
    %v1443 = vpack.c.b16 %v1019, %v1015
    %v1444 = vpack.c.b16 %v1020, %v1016
    %v1445 = vpack.c.b16 %v1025, %v1021
    %v1446 = vpack.c.b16 %v1026, %v1022
    %v1447 = vpack.c.b16 %v1027, %v1023
    %v1448 = vpack.c.b16 %v1028, %v1024
    %v1449 = vpack.c.b16 %v1033, %v1029
    %v1450 = vpack.c.b16 %v1034, %v1030
    %v1451 = vpack.c.b16 %v1035, %v1031
    %v1452 = vpack.c.b16 %v1036, %v1032
    %v1453 = vpack.c.b16 %v1041, %v1037
    %v1454 = vpack.c.b16 %v1042, %v1038
    %v1455 = vpack.c.b16 %v1043, %v1039
    %v1456 = vpack.c.b16 %v1044, %v1040
    %v1457 = vpack.c.b16 %v1049, %v1045
    %v1458 = vpack.c.b16 %v1050, %v1046
    %v1459 = vpack.c.b16 %v1051, %v1047
    %v1460 = vpack.c.b16 %v1052, %v1048
    %v1461 = vpack.c.b16 %v1057, %v1053
    %v1462 = vpack.c.b16 %v1058, %v1054
    %v1463 = vpack.c.b16 %v1059, %v1055
    %v1464 = vpack.c.b16 %v1060, %v1056
    %v1465 = vpack.c.b16 %v1065, %v1061
    %v1466 = vpack.c.b16 %v1066, %v1062
    %v1467 = vpack.c.b16 %v1067, %v1063
    %v1468 = vpack.c.b16 %v1068, %v1064
    %v1469 = vpack.c.b16 %v1073, %v1069
    %v1470 = vpack.c.b16 %v1074, %v1070
    %v1471 = vpack.c.b16 %v1075, %v1071
    %v1472 = vpack.c.b16 %v1076, %v1072
    %v1473 = vpack.c.b16 %v1081, %v1077
    %v1474 = vpack.c.b16 %v1082, %v1078
    %v1475 = vpack.c.b16 %v1083, %v1079
    %v1476 = vpack.c.b16 %v1084, %v1080
    %v1477 = vpack.c.b16 %v1089, %v1085
    %v1478 = vpack.c.b16 %v1090, %v1086
    %v1479 = vpack.c.b16 %v1091, %v1087
    %v1480 = vpack.c.b16 %v1092, %v1088
    %v1481 = vpack.c.b16 %v1097, %v1093
    %v1482 = vpack.c.b16 %v1098, %v1094
    %v1483 = vpack.c.b16 %v1099, %v1095
    %v1484 = vpack.c.b16 %v1100, %v1096
    %v1485 = vpack.c.b16 %v1105, %v1101
    %v1486 = vpack.c.b16 %v1106, %v1102
    %v1487 = vpack.c.b16 %v1107, %v1103
    %v1488 = vpack.c.b16 %v1108, %v1104
    %v1489 = vpack.c.b16 %v1113, %v1109
    %v1490 = vpack.c.b16 %v1114, %v1110
    %v1491 = vpack.c.b16 %v1115, %v1111
    %v1492 = vpack.c.b16 %v1116, %v1112
    %v1493 = vpack.c.b16 %v1121, %v1117
    %v1494 = vpack.c.b16 %v1122, %v1118
    %v1495 = vpack.c.b16 %v1123, %v1119
    %v1496 = vpack.c.b16 %v1124, %v1120
    %v1497 = vpack.c.b16 %v1129, %v1125
    %v1498 = vpack.c.b16 %v1130, %v1126
    %v1499 = vpack.c.b16 %v1131, %v1127
    %v1500 = vpack.c.b16 %v1132, %v1128
    %v1501 = vpack.c.b16 %v1137, %v1133
    %v1502 = vpack.c.b16 %v1138, %v1134
    %v1503 = vpack.c.b16 %v1139, %v1135
    %v1504 = vpack.c.b16 %v1140, %v1136
    %v1505 = vpack.c.b16 %v1145, %v1141
    %v1506 = vpack.c.b16 %v1146, %v1142
    %v1507 = vpack.c.b16 %v1147, %v1143
    %v1508 = vpack.c.b16 %v1148, %v1144
    %v1509 = vpack.c.b16 %v1153, %v1149
    %v1510 = vpack.c.b16 %v1154, %v1150
    %v1511 = vpack.c.b16 %v1155, %v1151
    %v1512 = vpack.c.b16 %v1156, %v1152
    %v1513 = vpack.c.b16 %v1161, %v1157
    %v1514 = vpack.c.b16 %v1162, %v1158
    %v1515 = vpack.c.b16 %v1163, %v1159
    %v1516 = vpack.c.b16 %v1164, %v1160
    %v1517 = vpack.c.b16 %v1169, %v1165
    %v1518 = vpack.c.b16 %v1170, %v1166
    %v1519 = vpack.c.b16 %v1171, %v1167
    %v1520 = vpack.c.b16 %v1172, %v1168
    %v1521 = vpack.c.b16 %v1177, %v1173
    %v1522 = vpack.c.b16 %v1178, %v1174
    %v1523 = vpack.c.b16 %v1179, %v1175
    %v1524 = vpack.c.b16 %v1180, %v1176
    %v1525 = vpack.c.b16 %v1185, %v1181
    %v1526 = vpack.c.b16 %v1186, %v1182
    %v1527 = vpack.c.b16 %v1187, %v1183
    %v1528 = vpack.c.b16 %v1188, %v1184
    %v1529 = vpack.c.b16 %v1193, %v1189
    %v1530 = vpack.c.b16 %v1194, %v1190
    %v1531 = vpack.c.b16 %v1195, %v1191
    %v1532 = vpack.c.b16 %v1196, %v1192
    %v1533 = vpack.c.b16 %v1201, %v1197
    %v1534 = vpack.c.b16 %v1202, %v1198
    %v1535 = vpack.c.b16 %v1203, %v1199
    %v1536 = vpack.c.b16 %v1204, %v1200
    %v1537 = vpack.c.b16 %v1209, %v1205
    %v1538 = vpack.c.b16 %v1210, %v1206
    %v1539 = vpack.c.b16 %v1211, %v1207
    %v1540 = vpack.c.b16 %v1212, %v1208
    %v1541 = vpack.c.b16 %v1217, %v1213
    %v1542 = vpack.c.b16 %v1218, %v1214
    %v1543 = vpack.c.b16 %v1219, %v1215
    %v1544 = vpack.c.b16 %v1220, %v1216
    %v1545 = vpack.c.b16 %v1225, %v1221
    %v1546 = vpack.c.b16 %v1226, %v1222
    %v1547 = vpack.c.b16 %v1227, %v1223
    %v1548 = vpack.c.b16 %v1228, %v1224
    %v1549 = vpack.c.b16 %v1233, %v1229
    %v1550 = vpack.c.b16 %v1234, %v1230
    %v1551 = vpack.c.b16 %v1235, %v1231
    %v1552 = vpack.c.b16 %v1236, %v1232
    %v1553 = vpack.c.b16 %v1241, %v1237
    %v1554 = vpack.c.b16 %v1242, %v1238
    %v1555 = vpack.c.b16 %v1243, %v1239
    %v1556 = vpack.c.b16 %v1244, %v1240
    %v1557 = vpack.c.b16 %v1249, %v1245
    %v1558 = vpack.c.b16 %v1250, %v1246
    %v1559 = vpack.c.b16 %v1251, %v1247
    %v1560 = vpack.c.b16 %v1252, %v1248
    %v1561 = vpack.c.b16 %v1257, %v1253
    %v1562 = vpack.c.b16 %v1258, %v1254
    %v1563 = vpack.c.b16 %v1259, %v1255
    %v1564 = vpack.c.b16 %v1260, %v1256
    %v1565 = vpack.c.b16 %v1265, %v1261
    %v1566 = vpack.c.b16 %v1266, %v1262
    %v1567 = vpack.c.b16 %v1267, %v1263
    %v1568 = vpack.c.b16 %v1268, %v1264
    %v1569 = vpack.c.b16 %v1273, %v1269
    %v1570 = vpack.c.b16 %v1274, %v1270
    %v1571 = vpack.c.b16 %v1275, %v1271
    %v1572 = vpack.c.b16 %v1276, %v1272
    %v1573 = vpack.c.b16 %v1281, %v1277
    %v1574 = vpack.c.b16 %v1282, %v1278
    %v1575 = vpack.c.b16 %v1283, %v1279
    %v1576 = vpack.c.b16 %v1284, %v1280
    %v1577 = vpack.c.b16 %v1289, %v1285
    %v1578 = vpack.c.b16 %v1290, %v1286
    %v1579 = vpack.c.b16 %v1291, %v1287
    %v1580 = vpack.c.b16 %v1292, %v1288
    %v1581 = vpack.c.b16 %v1297, %v1293
    %v1582 = vpack.c.b16 %v1298, %v1294
    %v1583 = vpack.c.b16 %v1299, %v1295
    %v1584 = vpack.c.b16 %v1300, %v1296
    %v1585 = vpack.c.b16 %v1305, %v1301
    %v1586 = vpack.c.b16 %v1306, %v1302
    %v1587 = vpack.c.b16 %v1307, %v1303
    %v1588 = vpack.c.b16 %v1308, %v1304
    %v1589 = vpack.c.b16 %v1313, %v1309
    %v1590 = vpack.c.b16 %v1314, %v1310
    %v1591 = vpack.c.b16 %v1315, %v1311
    %v1592 = vpack.c.b16 %v1316, %v1312
    %v1593 = vpack.c.b16 %v1321, %v1317
    %v1594 = vpack.c.b16 %v1322, %v1318
    %v1595 = vpack.c.b16 %v1323, %v1319
    %v1596 = vpack.c.b16 %v1324, %v1320
    %v1597 = vpack.c.b16 %v1329, %v1325
    %v1598 = vpack.c.b16 %v1330, %v1326
    %v1599 = vpack.c.b16 %v1331, %v1327
    %v1600 = vpack.c.b16 %v1332, %v1328
    %v1601 = vpack.c.b16 %v1337, %v1333
    %v1602 = vpack.c.b16 %v1338, %v1334
    %v1603 = vpack.c.b16 %v1339, %v1335
    %v1604 = vpack.c.b16 %v1340, %v1336
    %v1605 = vpack.c.b16 %v1345, %v1341
    %v1606 = vpack.c.b16 %v1346, %v1342
    %v1607 = vpack.c.b16 %v1347, %v1343
    %v1608 = vpack.c.b16 %v1348, %v1344
    %v1609 = vpack.c.b16 %v1353, %v1349
    %v1610 = vpack.c.b16 %v1354, %v1350
    %v1611 = vpack.c.b16 %v1355, %v1351
    %v1612 = vpack.c.b16 %v1356, %v1352
    %1869 = vmatprep.subr.bf16.mxu0 %v1358
    %1870 = vmatpush1.bf16.msra.mxu0 %v1357
    %1871 = vmatprep.subr.bf16.mxu0 %v1362
    %1872 = vmatpush1.bf16.msra.mxu0 %v1361
    %1873 = vmatprep.subr.bf16.mxu0 %v1366
    %1874 = vmatpush1.bf16.msra.mxu0 %v1365
    %1875 = vmatprep.subr.bf16.mxu0 %v1370
    %1876 = vmatpush1.bf16.msra.mxu0 %v1369
    %1877 = vmatprep.subr.bf16.mxu0 %v1374
    %1878 = vmatpush1.bf16.msra.mxu0 %v1373
    %1879 = vmatprep.subr.bf16.mxu0 %v1378
    %1880 = vmatpush1.bf16.msra.mxu0 %v1377
    %1881 = vmatprep.subr.bf16.mxu0 %v1382
    %1882 = vmatpush1.bf16.msra.mxu0 %v1381
    %1883 = vmatprep.subr.bf16.mxu0 %v1386
    %1884 = vmatpush1.bf16.msra.mxu0 %v1385
    %1885 = vmatprep.subr.bf16.mxu0 %v1390
    %1886 = vmatpush1.bf16.msra.mxu0 %v1389
    %1887 = vmatprep.subr.bf16.mxu0 %v1394
    %1888 = vmatpush1.bf16.msra.mxu0 %v1393
    %1889 = vmatprep.subr.bf16.mxu0 %v1398
    %1890 = vmatpush1.bf16.msra.mxu0 %v1397
    %1891 = vmatprep.subr.bf16.mxu0 %v1402
    %1892 = vmatpush1.bf16.msra.mxu0 %v1401
    %1893 = vmatprep.subr.bf16.mxu0 %v1406
    %1894 = vmatpush1.bf16.msra.mxu0 %v1405
    %1895 = vmatprep.subr.bf16.mxu0 %v1410
    %1896 = vmatpush1.bf16.msra.mxu0 %v1409
    %1897 = vmatprep.subr.bf16.mxu0 %v1414
    %1898 = vmatpush1.bf16.msra.mxu0 %v1413
    %1899 = vmatprep.subr.bf16.mxu0 %v1418
    %1900 = vmatpush1.bf16.msra.mxu0 %v1417
    %1901 = vmatprep.mubr.bf16.mxu0 %v574
    %1902 = vmatmul.mubr.bf16.gmra.mrb[0].mxu0 %v573
    %v1903 = vpop.f32.mrb[0].mxu0
    %v1904 = vadd.f32 %v507, %v1903
    %v1905 = vpop.f32.mrb[0].mxu0
    %v1906 = vadd.f32 %v511, %v1905
    %v1907 = vpop.f32.mrb[0].mxu0
    %v1908 = vpop.f32.mrb[0].mxu0
    %1909 = vdwg.mxu0
    %1910 = vmatprep.subr.bf16.mxu0 %v1422
    %1911 = vmatpush1.bf16.msra.mxu0 %v1421
    %1912 = vmatprep.subr.bf16.mxu0 %v1426
    %1913 = vmatpush1.bf16.msra.mxu0 %v1425
    %1914 = vmatprep.subr.bf16.mxu0 %v1430
    %1915 = vmatpush1.bf16.msra.mxu0 %v1429
    %1916 = vmatprep.subr.bf16.mxu0 %v1434
    %1917 = vmatpush1.bf16.msra.mxu0 %v1433
    %1918 = vmatprep.subr.bf16.mxu0 %v1438
    %1919 = vmatpush1.bf16.msra.mxu0 %v1437
    %1920 = vmatprep.subr.bf16.mxu0 %v1442
    %1921 = vmatpush1.bf16.msra.mxu0 %v1441
    %1922 = vmatprep.subr.bf16.mxu0 %v1446
    %1923 = vmatpush1.bf16.msra.mxu0 %v1445
    %1924 = vmatprep.subr.bf16.mxu0 %v1450
    %1925 = vmatpush1.bf16.msra.mxu0 %v1449
    %1926 = vmatprep.subr.bf16.mxu0 %v1454
    %1927 = vmatpush1.bf16.msra.mxu0 %v1453
    %1928 = vmatprep.subr.bf16.mxu0 %v1458
    %1929 = vmatpush1.bf16.msra.mxu0 %v1457
    %1930 = vmatprep.subr.bf16.mxu0 %v1462
    %1931 = vmatpush1.bf16.msra.mxu0 %v1461
    %1932 = vmatprep.subr.bf16.mxu0 %v1466
    %1933 = vmatpush1.bf16.msra.mxu0 %v1465
    %1934 = vmatprep.subr.bf16.mxu0 %v1470
    %1935 = vmatpush1.bf16.msra.mxu0 %v1469
    %1936 = vmatprep.subr.bf16.mxu0 %v1474
    %1937 = vmatpush1.bf16.msra.mxu0 %v1473
    %1938 = vmatprep.subr.bf16.mxu0 %v1478
    %1939 = vmatpush1.bf16.msra.mxu0 %v1477
    %1940 = vmatprep.subr.bf16.mxu0 %v1482
    %1941 = vmatpush1.bf16.msra.mxu0 %v1481
    %1942 = vmatprep.mubr.bf16.mxu0 %v576
    %1943 = vmatmul.mubr.bf16.gmra.mrb[0].mxu0 %v575
    %v1944 = vpop.f32.mrb[0].mxu0
    %v1945 = vadd.f32 %v1904, %v1944
    %v1946 = vpop.f32.mrb[0].mxu0
    %v1947 = vadd.f32 %v1906, %v1946
    %v1948 = vpop.f32.mrb[0].mxu0
    %v1949 = vpop.f32.mrb[0].mxu0
    %1950 = vdwg.mxu0
    %1951 = vmatprep.subr.bf16.mxu0 %v1486
    %1952 = vmatpush1.bf16.msra.mxu0 %v1485
    %1953 = vmatprep.subr.bf16.mxu0 %v1490
    %1954 = vmatpush1.bf16.msra.mxu0 %v1489
    %1955 = vmatprep.subr.bf16.mxu0 %v1494
    %1956 = vmatpush1.bf16.msra.mxu0 %v1493
    %1957 = vmatprep.subr.bf16.mxu0 %v1498
    %1958 = vmatpush1.bf16.msra.mxu0 %v1497
    %1959 = vmatprep.subr.bf16.mxu0 %v1502
    %1960 = vmatpush1.bf16.msra.mxu0 %v1501
    %1961 = vmatprep.subr.bf16.mxu0 %v1506
    %1962 = vmatpush1.bf16.msra.mxu0 %v1505
    %1963 = vmatprep.subr.bf16.mxu0 %v1510
    %1964 = vmatpush1.bf16.msra.mxu0 %v1509
    %1965 = vmatprep.subr.bf16.mxu0 %v1514
    %1966 = vmatpush1.bf16.msra.mxu0 %v1513
    %1967 = vmatprep.subr.bf16.mxu0 %v1518
    %1968 = vmatpush1.bf16.msra.mxu0 %v1517
    %1969 = vmatprep.subr.bf16.mxu0 %v1522
    %1970 = vmatpush1.bf16.msra.mxu0 %v1521
    %1971 = vmatprep.subr.bf16.mxu0 %v1526
    %1972 = vmatpush1.bf16.msra.mxu0 %v1525
    %1973 = vmatprep.subr.bf16.mxu0 %v1530
    %1974 = vmatpush1.bf16.msra.mxu0 %v1529
    %1975 = vmatprep.subr.bf16.mxu0 %v1534
    %1976 = vmatpush1.bf16.msra.mxu0 %v1533
    %1977 = vmatprep.subr.bf16.mxu0 %v1538
    %1978 = vmatpush1.bf16.msra.mxu0 %v1537
    %1979 = vmatprep.subr.bf16.mxu0 %v1542
    %1980 = vmatpush1.bf16.msra.mxu0 %v1541
    %1981 = vmatprep.subr.bf16.mxu0 %v1546
    %1982 = vmatpush1.bf16.msra.mxu0 %v1545
    %1983 = vmatprep.mubr.bf16.mxu0 %v578
    %1984 = vmatmul.mubr.bf16.gmra.mrb[0].mxu0 %v577
    %v1985 = vpop.f32.mrb[0].mxu0
    %v1986 = vadd.f32 %v1945, %v1985
    %v1987 = vpop.f32.mrb[0].mxu0
    %v1988 = vadd.f32 %v1947, %v1987
    %v1989 = vpop.f32.mrb[0].mxu0
    %v1990 = vpop.f32.mrb[0].mxu0
    %1991 = vdwg.mxu0
    %1992 = vmatprep.subr.bf16.mxu0 %v1550
    %1993 = vmatpush1.bf16.msra.mxu0 %v1549
    %1994 = vmatprep.subr.bf16.mxu0 %v1554
    %1995 = vmatpush1.bf16.msra.mxu0 %v1553
    %1996 = vmatprep.subr.bf16.mxu0 %v1558
    %1997 = vmatpush1.bf16.msra.mxu0 %v1557
    %1998 = vmatprep.subr.bf16.mxu0 %v1562
    %1999 = vmatpush1.bf16.msra.mxu0 %v1561
    %2000 = vmatprep.subr.bf16.mxu0 %v1566
    %2001 = vmatpush1.bf16.msra.mxu0 %v1565
    %2002 = vmatprep.subr.bf16.mxu0 %v1570
    %2003 = vmatpush1.bf16.msra.mxu0 %v1569
    %2004 = vmatprep.subr.bf16.mxu0 %v1574
    %2005 = vmatpush1.bf16.msra.mxu0 %v1573
    %2006 = vmatprep.subr.bf16.mxu0 %v1578
    %2007 = vmatpush1.bf16.msra.mxu0 %v1577
    %2008 = vmatprep.subr.bf16.mxu0 %v1582
    %2009 = vmatpush1.bf16.msra.mxu0 %v1581
    %2010 = vmatprep.subr.bf16.mxu0 %v1586
    %2011 = vmatpush1.bf16.msra.mxu0 %v1585
    %2012 = vmatprep.subr.bf16.mxu0 %v1590
    %2013 = vmatpush1.bf16.msra.mxu0 %v1589
    %2014 = vmatprep.subr.bf16.mxu0 %v1594
    %2015 = vmatpush1.bf16.msra.mxu0 %v1593
    %2016 = vmatprep.subr.bf16.mxu0 %v1598
    %2017 = vmatpush1.bf16.msra.mxu0 %v1597
    %2018 = vmatprep.subr.bf16.mxu0 %v1602
    %2019 = vmatpush1.bf16.msra.mxu0 %v1601
    %2020 = vmatprep.subr.bf16.mxu0 %v1606
    %2021 = vmatpush1.bf16.msra.mxu0 %v1605
    %2022 = vmatprep.subr.bf16.mxu0 %v1610
    %2023 = vmatpush1.bf16.msra.mxu0 %v1609
    %2024 = vmatprep.mubr.bf16.mxu0 %v580
    %2025 = vmatmul.mubr.bf16.gmra.mrb[0].mxu0 %v579
    %v2026 = vpop.f32.mrb[0].mxu0
    %v2027 = vadd.f32 %v1986, %v2026
    %v2028 = vpop.f32.mrb[0].mxu0
    %v2029 = vadd.f32 %v1988, %v2028
    %v2030 = vpop.f32.mrb[0].mxu0
    %v2031 = vpop.f32.mrb[0].mxu0
    %2032 = vdwg.mxu0
    %2033 = vmatprep.subr.bf16.mxu0 %v1360
    %2034 = vmatpush1.bf16.msra.mxu0 %v1359
    %2035 = vmatprep.subr.bf16.mxu0 %v1364
    %2036 = vmatpush1.bf16.msra.mxu0 %v1363
    %2037 = vmatprep.subr.bf16.mxu0 %v1368
    %2038 = vmatpush1.bf16.msra.mxu0 %v1367
    %2039 = vmatprep.subr.bf16.mxu0 %v1372
    %2040 = vmatpush1.bf16.msra.mxu0 %v1371
    %2041 = vmatprep.subr.bf16.mxu0 %v1376
    %2042 = vmatpush1.bf16.msra.mxu0 %v1375
    %2043 = vmatprep.subr.bf16.mxu0 %v1380
    %2044 = vmatpush1.bf16.msra.mxu0 %v1379
    %2045 = vmatprep.subr.bf16.mxu0 %v1384
    %2046 = vmatpush1.bf16.msra.mxu0 %v1383
    %2047 = vmatprep.subr.bf16.mxu0 %v1388
    %2048 = vmatpush1.bf16.msra.mxu0 %v1387
    %2049 = vmatprep.subr.bf16.mxu0 %v1392
    %2050 = vmatpush1.bf16.msra.mxu0 %v1391
    %2051 = vmatprep.subr.bf16.mxu0 %v1396
    %2052 = vmatpush1.bf16.msra.mxu0 %v1395
    %2053 = vmatprep.subr.bf16.mxu0 %v1400
    %2054 = vmatpush1.bf16.msra.mxu0 %v1399
    %2055 = vmatprep.subr.bf16.mxu0 %v1404
    %2056 = vmatpush1.bf16.msra.mxu0 %v1403
    %2057 = vmatprep.subr.bf16.mxu0 %v1408
    %2058 = vmatpush1.bf16.msra.mxu0 %v1407
    %2059 = vmatprep.subr.bf16.mxu0 %v1412
    %2060 = vmatpush1.bf16.msra.mxu0 %v1411
    %2061 = vmatprep.subr.bf16.mxu0 %v1416
    %2062 = vmatpush1.bf16.msra.mxu0 %v1415
    %2063 = vmatprep.subr.bf16.mxu0 %v1420
    %2064 = vmatpush1.bf16.msra.mxu0 %v1419
    %2065 = vmatprep.mubr.bf16.mxu0 %v574
    %2066 = vmatmul.mubr.bf16.gmra.mrb[0].mxu0 %v573
    %v2067 = vpop.f32.mrb[0].mxu0
    %v2068 = vadd.f32 %v515, %v2067
    %v2069 = vpop.f32.mrb[0].mxu0
    %v2070 = vadd.f32 %v519, %v2069
    %v2071 = vpop.f32.mrb[0].mxu0
    %v2072 = vpop.f32.mrb[0].mxu0
    %2073 = vdwg.mxu0
    %2074 = vmatprep.subr.bf16.mxu0 %v1424
    %2075 = vmatpush1.bf16.msra.mxu0 %v1423
    %2076 = vmatprep.subr.bf16.mxu0 %v1428
    %2077 = vmatpush1.bf16.msra.mxu0 %v1427
    %2078 = vmatprep.subr.bf16.mxu0 %v1432
    %2079 = vmatpush1.bf16.msra.mxu0 %v1431
    %2080 = vmatprep.subr.bf16.mxu0 %v1436
    %2081 = vmatpush1.bf16.msra.mxu0 %v1435
    %2082 = vmatprep.subr.bf16.mxu0 %v1440
    %2083 = vmatpush1.bf16.msra.mxu0 %v1439
    %2084 = vmatprep.subr.bf16.mxu0 %v1444
    %2085 = vmatpush1.bf16.msra.mxu0 %v1443
    %2086 = vmatprep.subr.bf16.mxu0 %v1448
    %2087 = vmatpush1.bf16.msra.mxu0 %v1447
    %2088 = vmatprep.subr.bf16.mxu0 %v1452
    %2089 = vmatpush1.bf16.msra.mxu0 %v1451
    %2090 = vmatprep.subr.bf16.mxu0 %v1456
    %2091 = vmatpush1.bf16.msra.mxu0 %v1455
    %2092 = vmatprep.subr.bf16.mxu0 %v1460
    %2093 = vmatpush1.bf16.msra.mxu0 %v1459
    %2094 = vmatprep.subr.bf16.mxu0 %v1464
    %2095 = vmatpush1.bf16.msra.mxu0 %v1463
    %2096 = vmatprep.subr.bf16.mxu0 %v1468
    %2097 = vmatpush1.bf16.msra.mxu0 %v1467
    %2098 = vmatprep.subr.bf16.mxu0 %v1472
    %2099 = vmatpush1.bf16.msra.mxu0 %v1471
    %2100 = vmatprep.subr.bf16.mxu0 %v1476
    %2101 = vmatpush1.bf16.msra.mxu0 %v1475
    %2102 = vmatprep.subr.bf16.mxu0 %v1480
    %2103 = vmatpush1.bf16.msra.mxu0 %v1479
    %2104 = vmatprep.subr.bf16.mxu0 %v1484
    %2105 = vmatpush1.bf16.msra.mxu0 %v1483
    %2106 = vmatprep.mubr.bf16.mxu0 %v576
    %2107 = vmatmul.mubr.bf16.gmra.mrb[0].mxu0 %v575
    %v2108 = vpop.f32.mrb[0].mxu0
    %v2109 = vadd.f32 %v2068, %v2108
    %v2110 = vpop.f32.mrb[0].mxu0
    %v2111 = vadd.f32 %v2070, %v2110
    %v2112 = vpop.f32.mrb[0].mxu0
    %v2113 = vpop.f32.mrb[0].mxu0
    %2114 = vdwg.mxu0
    %2115 = vmatprep.subr.bf16.mxu0 %v1488
    %2116 = vmatpush1.bf16.msra.mxu0 %v1487
    %2117 = vmatprep.subr.bf16.mxu0 %v1492
    %2118 = vmatpush1.bf16.msra.mxu0 %v1491
    %2119 = vmatprep.subr.bf16.mxu0 %v1496
    %2120 = vmatpush1.bf16.msra.mxu0 %v1495
    %2121 = vmatprep.subr.bf16.mxu0 %v1500
    %2122 = vmatpush1.bf16.msra.mxu0 %v1499
    %2123 = vmatprep.subr.bf16.mxu0 %v1504
    %2124 = vmatpush1.bf16.msra.mxu0 %v1503
    %2125 = vmatprep.subr.bf16.mxu0 %v1508
    %2126 = vmatpush1.bf16.msra.mxu0 %v1507
    %2127 = vmatprep.subr.bf16.mxu0 %v1512
    %2128 = vmatpush1.bf16.msra.mxu0 %v1511
    %2129 = vmatprep.subr.bf16.mxu0 %v1516
    %2130 = vmatpush1.bf16.msra.mxu0 %v1515
    %2131 = vmatprep.subr.bf16.mxu0 %v1520
    %2132 = vmatpush1.bf16.msra.mxu0 %v1519
    %2133 = vmatprep.subr.bf16.mxu0 %v1524
    %2134 = vmatpush1.bf16.msra.mxu0 %v1523
    %2135 = vmatprep.subr.bf16.mxu0 %v1528
    %2136 = vmatpush1.bf16.msra.mxu0 %v1527
    %2137 = vmatprep.subr.bf16.mxu0 %v1532
    %2138 = vmatpush1.bf16.msra.mxu0 %v1531
    %2139 = vmatprep.subr.bf16.mxu0 %v1536
    %2140 = vmatpush1.bf16.msra.mxu0 %v1535
    %2141 = vmatprep.subr.bf16.mxu0 %v1540
    %2142 = vmatpush1.bf16.msra.mxu0 %v1539
    %2143 = vmatprep.subr.bf16.mxu0 %v1544
    %2144 = vmatpush1.bf16.msra.mxu0 %v1543
    %2145 = vmatprep.subr.bf16.mxu0 %v1548
    %2146 = vmatpush1.bf16.msra.mxu0 %v1547
    %2147 = vmatprep.mubr.bf16.mxu0 %v578
    %2148 = vmatmul.mubr.bf16.gmra.mrb[0].mxu0 %v577
    %v2149 = vpop.f32.mrb[0].mxu0
    %v2150 = vadd.f32 %v2109, %v2149
    %v2151 = vpop.f32.mrb[0].mxu0
    %v2152 = vadd.f32 %v2111, %v2151
    %v2153 = vpop.f32.mrb[0].mxu0
    %v2154 = vpop.f32.mrb[0].mxu0
    %2155 = vdwg.mxu0
    %2156 = vmatprep.subr.bf16.mxu0 %v1552
    %2157 = vmatpush1.bf16.msra.mxu0 %v1551
    %2158 = vmatprep.subr.bf16.mxu0 %v1556
    %2159 = vmatpush1.bf16.msra.mxu0 %v1555
    %2160 = vmatprep.subr.bf16.mxu0 %v1560
    %2161 = vmatpush1.bf16.msra.mxu0 %v1559
    %2162 = vmatprep.subr.bf16.mxu0 %v1564
    %2163 = vmatpush1.bf16.msra.mxu0 %v1563
    %2164 = vmatprep.subr.bf16.mxu0 %v1568
    %2165 = vmatpush1.bf16.msra.mxu0 %v1567
    %2166 = vmatprep.subr.bf16.mxu0 %v1572
    %2167 = vmatpush1.bf16.msra.mxu0 %v1571
    %2168 = vmatprep.subr.bf16.mxu0 %v1576
    %2169 = vmatpush1.bf16.msra.mxu0 %v1575
    %2170 = vmatprep.subr.bf16.mxu0 %v1580
    %2171 = vmatpush1.bf16.msra.mxu0 %v1579
    %2172 = vmatprep.subr.bf16.mxu0 %v1584
    %2173 = vmatpush1.bf16.msra.mxu0 %v1583
    %2174 = vmatprep.subr.bf16.mxu0 %v1588
    %2175 = vmatpush1.bf16.msra.mxu0 %v1587
    %2176 = vmatprep.subr.bf16.mxu0 %v1592
    %2177 = vmatpush1.bf16.msra.mxu0 %v1591
    %2178 = vmatprep.subr.bf16.mxu0 %v1596
    %2179 = vmatpush1.bf16.msra.mxu0 %v1595
    %2180 = vmatprep.subr.bf16.mxu0 %v1600
    %2181 = vmatpush1.bf16.msra.mxu0 %v1599
    %2182 = vmatprep.subr.bf16.mxu0 %v1604
    %2183 = vmatpush1.bf16.msra.mxu0 %v1603
    %2184 = vmatprep.subr.bf16.mxu0 %v1608
    %2185 = vmatpush1.bf16.msra.mxu0 %v1607
    %2186 = vmatprep.subr.bf16.mxu0 %v1612
    %2187 = vmatpush1.bf16.msra.mxu0 %v1611
    %2188 = vmatprep.mubr.bf16.mxu0 %v580
    %2189 = vmatmul.mubr.bf16.gmra.mrb[0].mxu0 %v579
    %v2190 = vpop.f32.mrb[0].mxu0
    %v2191 = vadd.f32 %v2150, %v2190
    %v2192 = vpop.f32.mrb[0].mxu0
    %v2193 = vadd.f32 %v2152, %v2192
    %v2194 = vpop.f32.mrb[0].mxu0
    %v2195 = vpop.f32.mrb[0].mxu0
    %2196 = vdwg.mxu0
    %v2197 = vmax.f32 %v2027, 0.0
    %v2198 = vmax.f32 %v2029, 0.0
    %v2199 = vmax.f32 %v2191, 0.0
    %v2200 = vmax.f32 %v2193, 0.0
    %v2201 = vpack.c.bf16 %v2197, %v2197
    %v2202 = vpack.c.bf16 %v2198, %v2198
    %v2203 = vpack.c.bf16 %v2199, %v2199
    %v2204 = vpack.c.bf16 %v2200, %v2200
    %v2205 = vld [vmem:[%s4] sm:$0xff]
    %v2206 = vld [vmem:[%s4 + $0x8] sm:$0xff]
    %v2207 = vld [vmem:[%s4 + $0x10] sm:$0xff]
    %v2208 = vld [vmem:[%s4 + $0x18] sm:$0xff]
    %v2209 = vld [vmem:[%s4 + $0x20] sm:$0xff]
    %v2210 = vld [vmem:[%s4 + $0x28] sm:$0xff]
    %v2211 = vld [vmem:[%s4 + $0x30] sm:$0xff]
    %v2212 = vld [vmem:[%s4 + $0x38] sm:$0xff]
    %v2213 = vld [vmem:[%s4 + $0x40] sm:$0xff]
    %v2214 = vld [vmem:[%s4 + $0x48] sm:$0xff]
    %v2215 = vld [vmem:[%s4 + $0x50] sm:$0xff]
    %v2216 = vld [vmem:[%s4 + $0x58] sm:$0xff]
    %v2217 = vld [vmem:[%s4 + $0x60] sm:$0xff]
    %v2218 = vld [vmem:[%s4 + $0x68] sm:$0xff]
    %v2219 = vld [vmem:[%s4 + $0x70] sm:$0xff]
    %v2220 = vld [vmem:[%s4 + $0x78] sm:$0xff]
    %v2221 = vld [vmem:[%s4 + $0x80] sm:$0xff]
    %v2222 = vld [vmem:[%s4 + $0x88] sm:$0xff]
    %v2223 = vld [vmem:[%s4 + $0x90] sm:$0xff]
    %v2224 = vld [vmem:[%s4 + $0x98] sm:$0xff]
    %v2225 = vld [vmem:[%s4 + $0xa0] sm:$0xff]
    %v2226 = vld [vmem:[%s4 + $0xa8] sm:$0xff]
    %v2227 = vld [vmem:[%s4 + $0xb0] sm:$0xff]
    %v2228 = vld [vmem:[%s4 + $0xb8] sm:$0xff]
    %v2229 = vld [vmem:[%s4 + $0xc0] sm:$0xff]
    %v2230 = vld [vmem:[%s4 + $0xc8] sm:$0xff]
    %v2231 = vld [vmem:[%s4 + $0xd0] sm:$0xff]
    %v2232 = vld [vmem:[%s4 + $0xd8] sm:$0xff]
    %v2233 = vld [vmem:[%s4 + $0xe0] sm:$0xff]
    %v2234 = vld [vmem:[%s4 + $0xe8] sm:$0xff]
    %v2235 = vld [vmem:[%s4 + $0xf0] sm:$0xff]
    %v2236 = vld [vmem:[%s4 + $0xf8] sm:$0xff]
    %v2237 = vld [vmem:[%s4 + $0x100] sm:$0xff]
    %v2238 = vld [vmem:[%s4 + $0x108] sm:$0xff]
    %v2239 = vld [vmem:[%s4 + $0x110] sm:$0xff]
    %v2240 = vld [vmem:[%s4 + $0x118] sm:$0xff]
    %v2241 = vld [vmem:[%s4 + $0x120] sm:$0xff]
    %v2242 = vld [vmem:[%s4 + $0x128] sm:$0xff]
    %v2243 = vld [vmem:[%s4 + $0x130] sm:$0xff]
    %v2244 = vld [vmem:[%s4 + $0x138] sm:$0xff]
    %v2245 = vld [vmem:[%s4 + $0x140] sm:$0xff]
    %v2246 = vld [vmem:[%s4 + $0x148] sm:$0xff]
    %v2247 = vld [vmem:[%s4 + $0x150] sm:$0xff]
    %v2248 = vld [vmem:[%s4 + $0x158] sm:$0xff]
    %v2249 = vld [vmem:[%s4 + $0x160] sm:$0xff]
    %v2250 = vld [vmem:[%s4 + $0x168] sm:$0xff]
    %v2251 = vld [vmem:[%s4 + $0x170] sm:$0xff]
    %v2252 = vld [vmem:[%s4 + $0x178] sm:$0xff]
    %v2253 = vld [vmem:[%s4 + $0x180] sm:$0xff]
    %v2254 = vld [vmem:[%s4 + $0x188] sm:$0xff]
    %v2255 = vld [vmem:[%s4 + $0x190] sm:$0xff]
    %v2256 = vld [vmem:[%s4 + $0x198] sm:$0xff]
    %v2257 = vld [vmem:[%s4 + $0x1a0] sm:$0xff]
    %v2258 = vld [vmem:[%s4 + $0x1a8] sm:$0xff]
    %v2259 = vld [vmem:[%s4 + $0x1b0] sm:$0xff]
    %v2260 = vld [vmem:[%s4 + $0x1b8] sm:$0xff]
    %v2261 = vld [vmem:[%s4 + $0x1c0] sm:$0xff]
    %v2262 = vld [vmem:[%s4 + $0x1c8] sm:$0xff]
    %v2263 = vld [vmem:[%s4 + $0x1d0] sm:$0xff]
    %v2264 = vld [vmem:[%s4 + $0x1d8] sm:$0xff]
    %v2265 = vld [vmem:[%s4 + $0x1e0] sm:$0xff]
    %v2266 = vld [vmem:[%s4 + $0x1e8] sm:$0xff]
    %v2267 = vld [vmem:[%s4 + $0x1f0] sm:$0xff]
    %v2268 = vld [vmem:[%s4 + $0x1f8] sm:$0xff]
    %v2269 = vld [vmem:[%s5] sm:$0x3]
    %v2271 = vlaneseq
    %v2272 = vshrl.u32 %v2271, 7
    %v2273 = vsub.s32 0, %v2272
    %v2274 = vrot.slane %v2269, %v2273
    %v2275 = vlaneseq
    %v2276 = vshrl.u32 %v2275, 7
    %v2277 = vsub.s32 1, %v2276
    %v2278 = vrot.slane %v2269, %v2277
    %v2345 = vunpack.c.l.b16 %v2205
    %v2346 = vunpack.c.h.b16 %v2205
    %v2347 = vunpack.c.l.b16 %v2206
    %v2348 = vunpack.c.h.b16 %v2206
    %v2349 = vunpack.c.l.b16 %v2207
    %v2350 = vunpack.c.h.b16 %v2207
    %v2351 = vunpack.c.l.b16 %v2208
    %v2352 = vunpack.c.h.b16 %v2208
    %v2353 = vunpack.c.l.b16 %v2209
    %v2354 = vunpack.c.h.b16 %v2209
    %v2355 = vunpack.c.l.b16 %v2210
    %v2356 = vunpack.c.h.b16 %v2210
    %v2357 = vunpack.c.l.b16 %v2211
    %v2358 = vunpack.c.h.b16 %v2211
    %v2359 = vunpack.c.l.b16 %v2212
    %v2360 = vunpack.c.h.b16 %v2212
    %v2361 = vunpack.c.l.b16 %v2213
    %v2362 = vunpack.c.h.b16 %v2213
    %v2363 = vunpack.c.l.b16 %v2214
    %v2364 = vunpack.c.h.b16 %v2214
    %v2365 = vunpack.c.l.b16 %v2215
    %v2366 = vunpack.c.h.b16 %v2215
    %v2367 = vunpack.c.l.b16 %v2216
    %v2368 = vunpack.c.h.b16 %v2216
    %v2369 = vunpack.c.l.b16 %v2217
    %v2370 = vunpack.c.h.b16 %v2217
    %v2371 = vunpack.c.l.b16 %v2218
    %v2372 = vunpack.c.h.b16 %v2218
    %v2373 = vunpack.c.l.b16 %v2219
    %v2374 = vunpack.c.h.b16 %v2219
    %v2375 = vunpack.c.l.b16 %v2220
    %v2376 = vunpack.c.h.b16 %v2220
    %v2377 = vunpack.c.l.b16 %v2221
    %v2378 = vunpack.c.h.b16 %v2221
    %v2379 = vunpack.c.l.b16 %v2222
    %v2380 = vunpack.c.h.b16 %v2222
    %v2381 = vunpack.c.l.b16 %v2223
    %v2382 = vunpack.c.h.b16 %v2223
    %v2383 = vunpack.c.l.b16 %v2224
    %v2384 = vunpack.c.h.b16 %v2224
    %v2385 = vunpack.c.l.b16 %v2225
    %v2386 = vunpack.c.h.b16 %v2225
    %v2387 = vunpack.c.l.b16 %v2226
    %v2388 = vunpack.c.h.b16 %v2226
    %v2389 = vunpack.c.l.b16 %v2227
    %v2390 = vunpack.c.h.b16 %v2227
    %v2391 = vunpack.c.l.b16 %v2228
    %v2392 = vunpack.c.h.b16 %v2228
    %v2393 = vunpack.c.l.b16 %v2229
    %v2394 = vunpack.c.h.b16 %v2229
    %v2395 = vunpack.c.l.b16 %v2230
    %v2396 = vunpack.c.h.b16 %v2230
    %v2397 = vunpack.c.l.b16 %v2231
    %v2398 = vunpack.c.h.b16 %v2231
    %v2399 = vunpack.c.l.b16 %v2232
    %v2400 = vunpack.c.h.b16 %v2232
    %v2401 = vunpack.c.l.b16 %v2233
    %v2402 = vunpack.c.h.b16 %v2233
    %v2403 = vunpack.c.l.b16 %v2234
    %v2404 = vunpack.c.h.b16 %v2234
    %v2405 = vunpack.c.l.b16 %v2235
    %v2406 = vunpack.c.h.b16 %v2235
    %v2407 = vunpack.c.l.b16 %v2236
    %v2408 = vunpack.c.h.b16 %v2236
    %v2409 = vunpack.c.l.b16 %v2237
    %v2410 = vunpack.c.h.b16 %v2237
    %v2411 = vunpack.c.l.b16 %v2238
    %v2412 = vunpack.c.h.b16 %v2238
    %v2413 = vunpack.c.l.b16 %v2239
    %v2414 = vunpack.c.h.b16 %v2239
    %v2415 = vunpack.c.l.b16 %v2240
    %v2416 = vunpack.c.h.b16 %v2240
    %v2417 = vunpack.c.l.b16 %v2241
    %v2418 = vunpack.c.h.b16 %v2241
    %v2419 = vunpack.c.l.b16 %v2242
    %v2420 = vunpack.c.h.b16 %v2242
    %v2421 = vunpack.c.l.b16 %v2243
    %v2422 = vunpack.c.h.b16 %v2243
    %v2423 = vunpack.c.l.b16 %v2244
    %v2424 = vunpack.c.h.b16 %v2244
    %v2425 = vunpack.c.l.b16 %v2245
    %v2426 = vunpack.c.h.b16 %v2245
    %v2427 = vunpack.c.l.b16 %v2246
    %v2428 = vunpack.c.h.b16 %v2246
    %v2429 = vunpack.c.l.b16 %v2247
    %v2430 = vunpack.c.h.b16 %v2247
    %v2431 = vunpack.c.l.b16 %v2248
    %v2432 = vunpack.c.h.b16 %v2248
    %v2433 = vunpack.c.l.b16 %v2249
    %v2434 = vunpack.c.h.b16 %v2249
    %v2435 = vunpack.c.l.b16 %v2250
    %v2436 = vunpack.c.h.b16 %v2250
    %v2437 = vunpack.c.l.b16 %v2251
    %v2438 = vunpack.c.h.b16 %v2251
    %v2439 = vunpack.c.l.b16 %v2252
    %v2440 = vunpack.c.h.b16 %v2252
    %v2441 = vunpack.c.l.b16 %v2253
    %v2442 = vunpack.c.h.b16 %v2253
    %v2443 = vunpack.c.l.b16 %v2254
    %v2444 = vunpack.c.h.b16 %v2254
    %v2445 = vunpack.c.l.b16 %v2255
    %v2446 = vunpack.c.h.b16 %v2255
    %v2447 = vunpack.c.l.b16 %v2256
    %v2448 = vunpack.c.h.b16 %v2256
    %v2449 = vunpack.c.l.b16 %v2257
    %v2450 = vunpack.c.h.b16 %v2257
    %v2451 = vunpack.c.l.b16 %v2258
    %v2452 = vunpack.c.h.b16 %v2258
    %v2453 = vunpack.c.l.b16 %v2259
    %v2454 = vunpack.c.h.b16 %v2259
    %v2455 = vunpack.c.l.b16 %v2260
    %v2456 = vunpack.c.h.b16 %v2260
    %v2457 = vunpack.c.l.b16 %v2261
    %v2458 = vunpack.c.h.b16 %v2261
    %v2459 = vunpack.c.l.b16 %v2262
    %v2460 = vunpack.c.h.b16 %v2262
    %v2461 = vunpack.c.l.b16 %v2263
    %v2462 = vunpack.c.h.b16 %v2263
    %v2463 = vunpack.c.l.b16 %v2264
    %v2464 = vunpack.c.h.b16 %v2264
    %v2465 = vunpack.c.l.b16 %v2265
    %v2466 = vunpack.c.h.b16 %v2265
    %v2467 = vunpack.c.l.b16 %v2266
    %v2468 = vunpack.c.h.b16 %v2266
    %v2469 = vunpack.c.l.b16 %v2267
    %v2470 = vunpack.c.h.b16 %v2267
    %v2471 = vunpack.c.l.b16 %v2268
    %v2472 = vunpack.c.h.b16 %v2268
    %v2473 = vpack.c.b16 %v2347, %v2345
    %v2474 = vpack.c.b16 %v2348, %v2346
    %v2475 = vpack.c.b16 %v2351, %v2349
    %v2476 = vpack.c.b16 %v2352, %v2350
    %v2477 = vpack.c.b16 %v2355, %v2353
    %v2478 = vpack.c.b16 %v2356, %v2354
    %v2479 = vpack.c.b16 %v2359, %v2357
    %v2480 = vpack.c.b16 %v2360, %v2358
    %v2481 = vpack.c.b16 %v2363, %v2361
    %v2482 = vpack.c.b16 %v2364, %v2362
    %v2483 = vpack.c.b16 %v2367, %v2365
    %v2484 = vpack.c.b16 %v2368, %v2366
    %v2485 = vpack.c.b16 %v2371, %v2369
    %v2486 = vpack.c.b16 %v2372, %v2370
    %v2487 = vpack.c.b16 %v2375, %v2373
    %v2488 = vpack.c.b16 %v2376, %v2374
    %v2489 = vpack.c.b16 %v2379, %v2377
    %v2490 = vpack.c.b16 %v2380, %v2378
    %v2491 = vpack.c.b16 %v2383, %v2381
    %v2492 = vpack.c.b16 %v2384, %v2382
    %v2493 = vpack.c.b16 %v2387, %v2385
    %v2494 = vpack.c.b16 %v2388, %v2386
    %v2495 = vpack.c.b16 %v2391, %v2389
    %v2496 = vpack.c.b16 %v2392, %v2390
    %v2497 = vpack.c.b16 %v2395, %v2393
    %v2498 = vpack.c.b16 %v2396, %v2394
    %v2499 = vpack.c.b16 %v2399, %v2397
    %v2500 = vpack.c.b16 %v2400, %v2398
    %v2501 = vpack.c.b16 %v2403, %v2401
    %v2502 = vpack.c.b16 %v2404, %v2402
    %v2503 = vpack.c.b16 %v2407, %v2405
    %v2504 = vpack.c.b16 %v2408, %v2406
    %v2505 = vpack.c.b16 %v2411, %v2409
    %v2506 = vpack.c.b16 %v2412, %v2410
    %v2507 = vpack.c.b16 %v2415, %v2413
    %v2508 = vpack.c.b16 %v2416, %v2414
    %v2509 = vpack.c.b16 %v2419, %v2417
    %v2510 = vpack.c.b16 %v2420, %v2418
    %v2511 = vpack.c.b16 %v2423, %v2421
    %v2512 = vpack.c.b16 %v2424, %v2422
    %v2513 = vpack.c.b16 %v2427, %v2425
    %v2514 = vpack.c.b16 %v2428, %v2426
    %v2515 = vpack.c.b16 %v2431, %v2429
    %v2516 = vpack.c.b16 %v2432, %v2430
    %v2517 = vpack.c.b16 %v2435, %v2433
    %v2518 = vpack.c.b16 %v2436, %v2434
    %v2519 = vpack.c.b16 %v2439, %v2437
    %v2520 = vpack.c.b16 %v2440, %v2438
    %v2521 = vpack.c.b16 %v2443, %v2441
    %v2522 = vpack.c.b16 %v2444, %v2442
    %v2523 = vpack.c.b16 %v2447, %v2445
    %v2524 = vpack.c.b16 %v2448, %v2446
    %v2525 = vpack.c.b16 %v2451, %v2449
    %v2526 = vpack.c.b16 %v2452, %v2450
    %v2527 = vpack.c.b16 %v2455, %v2453
    %v2528 = vpack.c.b16 %v2456, %v2454
    %v2529 = vpack.c.b16 %v2459, %v2457
    %v2530 = vpack.c.b16 %v2460, %v2458
    %v2531 = vpack.c.b16 %v2463, %v2461
    %v2532 = vpack.c.b16 %v2464, %v2462
    %v2533 = vpack.c.b16 %v2467, %v2465
    %v2534 = vpack.c.b16 %v2468, %v2466
    %v2535 = vpack.c.b16 %v2471, %v2469
    %v2536 = vpack.c.b16 %v2472, %v2470
    %2601 = vmatprep.subr.bf16.mxu0 %v2474
    %2602 = vmatpush1.bf16.msra.mxu0 %v2473
    %2603 = vmatprep.subr.bf16.mxu0 %v2476
    %2604 = vmatpush1.bf16.msra.mxu0 %v2475
    %2605 = vmatprep.subr.bf16.mxu0 %v2478
    %2606 = vmatpush1.bf16.msra.mxu0 %v2477
    %2607 = vmatprep.subr.bf16.mxu0 %v2480
    %2608 = vmatpush1.bf16.msra.mxu0 %v2479
    %2609 = vmatprep.subr.bf16.mxu0 %v2482
    %2610 = vmatpush1.bf16.msra.mxu0 %v2481
    %2611 = vmatprep.subr.bf16.mxu0 %v2484
    %2612 = vmatpush1.bf16.msra.mxu0 %v2483
    %2613 = vmatprep.subr.bf16.mxu0 %v2486
    %2614 = vmatpush1.bf16.msra.mxu0 %v2485
    %2615 = vmatprep.subr.bf16.mxu0 %v2488
    %2616 = vmatpush1.bf16.msra.mxu0 %v2487
    %2617 = vmatprep.subr.bf16.mxu0 %v2490
    %2618 = vmatpush1.bf16.msra.mxu0 %v2489
    %2619 = vmatprep.subr.bf16.mxu0 %v2492
    %2620 = vmatpush1.bf16.msra.mxu0 %v2491
    %2621 = vmatprep.subr.bf16.mxu0 %v2494
    %2622 = vmatpush1.bf16.msra.mxu0 %v2493
    %2623 = vmatprep.subr.bf16.mxu0 %v2496
    %2624 = vmatpush1.bf16.msra.mxu0 %v2495
    %2625 = vmatprep.subr.bf16.mxu0 %v2498
    %2626 = vmatpush1.bf16.msra.mxu0 %v2497
    %2627 = vmatprep.subr.bf16.mxu0 %v2500
    %2628 = vmatpush1.bf16.msra.mxu0 %v2499
    %2629 = vmatprep.subr.bf16.mxu0 %v2502
    %2630 = vmatpush1.bf16.msra.mxu0 %v2501
    %2631 = vmatprep.subr.bf16.mxu0 %v2504
    %2632 = vmatpush1.bf16.msra.mxu0 %v2503
    %2633 = vmatprep.mubr.bf16.mxu0 %v2202
    %2634 = vmatmul.mubr.bf16.gmra.mrb[0].mxu0 %v2201
    %v2635 = vpop.f32.mrb[0].mxu0
    %v2636 = vadd.f32 %v2274, %v2635
    %v2637 = vpop.f32.mrb[0].mxu0
    %v2638 = vadd.f32 %v2278, %v2637
    %v2639 = vpop.f32.mrb[0].mxu0
    %v2640 = vpop.f32.mrb[0].mxu0
    %2641 = vdwg.mxu0
    %2642 = vmatprep.subr.bf16.mxu0 %v2506
    %2643 = vmatpush1.bf16.msra.mxu0 %v2505
    %2644 = vmatprep.subr.bf16.mxu0 %v2508
    %2645 = vmatpush1.bf16.msra.mxu0 %v2507
    %2646 = vmatprep.subr.bf16.mxu0 %v2510
    %2647 = vmatpush1.bf16.msra.mxu0 %v2509
    %2648 = vmatprep.subr.bf16.mxu0 %v2512
    %2649 = vmatpush1.bf16.msra.mxu0 %v2511
    %2650 = vmatprep.subr.bf16.mxu0 %v2514
    %2651 = vmatpush1.bf16.msra.mxu0 %v2513
    %2652 = vmatprep.subr.bf16.mxu0 %v2516
    %2653 = vmatpush1.bf16.msra.mxu0 %v2515
    %2654 = vmatprep.subr.bf16.mxu0 %v2518
    %2655 = vmatpush1.bf16.msra.mxu0 %v2517
    %2656 = vmatprep.subr.bf16.mxu0 %v2520
    %2657 = vmatpush1.bf16.msra.mxu0 %v2519
    %2658 = vmatprep.subr.bf16.mxu0 %v2522
    %2659 = vmatpush1.bf16.msra.mxu0 %v2521
    %2660 = vmatprep.subr.bf16.mxu0 %v2524
    %2661 = vmatpush1.bf16.msra.mxu0 %v2523
    %2662 = vmatprep.subr.bf16.mxu0 %v2526
    %2663 = vmatpush1.bf16.msra.mxu0 %v2525
    %2664 = vmatprep.subr.bf16.mxu0 %v2528
    %2665 = vmatpush1.bf16.msra.mxu0 %v2527
    %2666 = vmatprep.subr.bf16.mxu0 %v2530
    %2667 = vmatpush1.bf16.msra.mxu0 %v2529
    %2668 = vmatprep.subr.bf16.mxu0 %v2532
    %2669 = vmatpush1.bf16.msra.mxu0 %v2531
    %2670 = vmatprep.subr.bf16.mxu0 %v2534
    %2671 = vmatpush1.bf16.msra.mxu0 %v2533
    %2672 = vmatprep.subr.bf16.mxu0 %v2536
    %2673 = vmatpush1.bf16.msra.mxu0 %v2535
    %2674 = vmatprep.mubr.bf16.mxu0 %v2204
    %2675 = vmatmul.mubr.bf16.gmra.mrb[0].mxu0 %v2203
    %v2676 = vpop.f32.mrb[0].mxu0
    %v2677 = vadd.f32 %v2636, %v2676
    %v2678 = vpop.f32.mrb[0].mxu0
    %v2679 = vadd.f32 %v2638, %v2678
    %v2680 = vpop.f32.mrb[0].mxu0
    %v2681 = vpop.f32.mrb[0].mxu0
    %2682 = vdwg.mxu0
    %v2683 = vmax.f32 %v2677, 0.0
    %v2684 = vmax.f32 %v2679, 0.0
    %v2685 = vpack.c.bf16 %v2683, %v2683
    %v2686 = vpack.c.bf16 %v2684, %v2684
    %v2687 = vld [vmem:[%s6] sm:$0xf]
    %v2688 = vld [vmem:[%s6 + $0x4] sm:$0xf]
    %v2689 = vld [vmem:[%s6 + $0x8] sm:$0xf]
    %v2690 = vld [vmem:[%s6 + $0xc] sm:$0xf]
    %v2691 = vld [vmem:[%s6 + $0x10] sm:$0xf]
    %v2692 = vld [vmem:[%s6 + $0x14] sm:$0xf]
    %v2693 = vld [vmem:[%s6 + $0x18] sm:$0xf]
    %v2694 = vld [vmem:[%s6 + $0x1c] sm:$0xf]
    %v2695 = vld [vmem:[%s6 + $0x20] sm:$0xf]
    %v2696 = vld [vmem:[%s6 + $0x24] sm:$0xf]
    %v2697 = vld [vmem:[%s6 + $0x28] sm:$0xf]
    %v2698 = vld [vmem:[%s6 + $0x2c] sm:$0xf]
    %v2699 = vld [vmem:[%s6 + $0x30] sm:$0xf]
    %v2700 = vld [vmem:[%s6 + $0x34] sm:$0xf]
    %v2701 = vld [vmem:[%s6 + $0x38] sm:$0xf]
    %v2702 = vld [vmem:[%s6 + $0x3c] sm:$0xf]
    %v2703 = vld [vmem:[%s6 + $0x40] sm:$0xf]
    %v2704 = vld [vmem:[%s6 + $0x44] sm:$0xf]
    %v2705 = vld [vmem:[%s6 + $0x48] sm:$0xf]
    %v2706 = vld [vmem:[%s6 + $0x4c] sm:$0xf]
    %v2707 = vld [vmem:[%s6 + $0x50] sm:$0xf]
    %v2708 = vld [vmem:[%s6 + $0x54] sm:$0xf]
    %v2709 = vld [vmem:[%s6 + $0x58] sm:$0xf]
    %v2710 = vld [vmem:[%s6 + $0x5c] sm:$0xf]
    %v2711 = vld [vmem:[%s6 + $0x60] sm:$0xf]
    %v2712 = vld [vmem:[%s6 + $0x64] sm:$0xf]
    %v2713 = vld [vmem:[%s6 + $0x68] sm:$0xf]
    %v2714 = vld [vmem:[%s6 + $0x6c] sm:$0xf]
    %v2715 = vld [vmem:[%s6 + $0x70] sm:$0xf]
    %v2716 = vld [vmem:[%s6 + $0x74] sm:$0xf]
    %v2717 = vld [vmem:[%s6 + $0x78] sm:$0xf]
    %v2718 = vld [vmem:[%s6 + $0x7c] sm:$0xf]
    %v2719 = vld [vmem:[%s7] sm:$0x1]
    %v2721 = vlaneseq
    %v2722 = vshrl.u32 %v2721, 7
    %v2723 = vsub.s32 0, %v2722
    %v2724 = vrot.slane %v2719, %v2723
    %v2758 = vunpack.c.l.b16 %v2687
    %v2759 = vunpack.c.l.b16 %v2688
    %v2760 = vunpack.c.l.b16 %v2689
    %v2761 = vunpack.c.l.b16 %v2690
    %v2762 = vunpack.c.l.b16 %v2691
    %v2763 = vunpack.c.l.b16 %v2692
    %v2764 = vunpack.c.l.b16 %v2693
    %v2765 = vunpack.c.l.b16 %v2694
    %v2766 = vunpack.c.l.b16 %v2695
    %v2767 = vunpack.c.l.b16 %v2696
    %v2768 = vunpack.c.l.b16 %v2697
    %v2769 = vunpack.c.l.b16 %v2698
    %v2770 = vunpack.c.l.b16 %v2699
    %v2771 = vunpack.c.l.b16 %v2700
    %v2772 = vunpack.c.l.b16 %v2701
    %v2773 = vunpack.c.l.b16 %v2702
    %v2774 = vunpack.c.l.b16 %v2703
    %v2775 = vunpack.c.l.b16 %v2704
    %v2776 = vunpack.c.l.b16 %v2705
    %v2777 = vunpack.c.l.b16 %v2706
    %v2778 = vunpack.c.l.b16 %v2707
    %v2779 = vunpack.c.l.b16 %v2708
    %v2780 = vunpack.c.l.b16 %v2709
    %v2781 = vunpack.c.l.b16 %v2710
    %v2782 = vunpack.c.l.b16 %v2711
    %v2783 = vunpack.c.l.b16 %v2712
    %v2784 = vunpack.c.l.b16 %v2713
    %v2785 = vunpack.c.l.b16 %v2714
    %v2786 = vunpack.c.l.b16 %v2715
    %v2787 = vunpack.c.l.b16 %v2716
    %v2788 = vunpack.c.l.b16 %v2717
    %v2789 = vunpack.c.l.b16 %v2718
    %v2790 = vpack.c.b16 %v2759, %v2758
    %v2791 = vpack.c.b16 %v2761, %v2760
    %v2792 = vpack.c.b16 %v2763, %v2762
    %v2793 = vpack.c.b16 %v2765, %v2764
    %v2794 = vpack.c.b16 %v2767, %v2766
    %v2795 = vpack.c.b16 %v2769, %v2768
    %v2796 = vpack.c.b16 %v2771, %v2770
    %v2797 = vpack.c.b16 %v2773, %v2772
    %v2798 = vpack.c.b16 %v2775, %v2774
    %v2799 = vpack.c.b16 %v2777, %v2776
    %v2800 = vpack.c.b16 %v2779, %v2778
    %v2801 = vpack.c.b16 %v2781, %v2780
    %v2802 = vpack.c.b16 %v2783, %v2782
    %v2803 = vpack.c.b16 %v2785, %v2784
    %v2804 = vpack.c.b16 %v2787, %v2786
    %v2805 = vpack.c.b16 %v2789, %v2788
    %2822 = vmatprep.subr.bf16.mxu0 0
    %2823 = vmatpush1.bf16.msra.mxu0 %v2790
    %2824 = vmatprep.subr.bf16.mxu0 0
    %2825 = vmatpush1.bf16.msra.mxu0 %v2791
    %2826 = vmatprep.subr.bf16.mxu0 0
    %2827 = vmatpush1.bf16.msra.mxu0 %v2792
    %2828 = vmatprep.subr.bf16.mxu0 0
    %2829 = vmatpush1.bf16.msra.mxu0 %v2793
    %2830 = vmatprep.subr.bf16.mxu0 0
    %2831 = vmatpush1.bf16.msra.mxu0 %v2794
    %2832 = vmatprep.subr.bf16.mxu0 0
    %2833 = vmatpush1.bf16.msra.mxu0 %v2795
    %2834 = vmatprep.subr.bf16.mxu0 0
    %2835 = vmatpush1.bf16.msra.mxu0 %v2796
    %2836 = vmatprep.subr.bf16.mxu0 0
    %2837 = vmatpush1.bf16.msra.mxu0 %v2797
    %2838 = vmatprep.subr.bf16.mxu0 0
    %2839 = vmatpush1.bf16.msra.mxu0 %v2798
    %2840 = vmatprep.subr.bf16.mxu0 0
    %2841 = vmatpush1.bf16.msra.mxu0 %v2799
    %2842 = vmatprep.subr.bf16.mxu0 0
    %2843 = vmatpush1.bf16.msra.mxu0 %v2800
    %2844 = vmatprep.subr.bf16.mxu0 0
    %2845 = vmatpush1.bf16.msra.mxu0 %v2801
    %2846 = vmatprep.subr.bf16.mxu0 0
    %2847 = vmatpush1.bf16.msra.mxu0 %v2802
    %2848 = vmatprep.subr.bf16.mxu0 0
    %2849 = vmatpush1.bf16.msra.mxu0 %v2803
    %2850 = vmatprep.subr.bf16.mxu0 0
    %2851 = vmatpush1.bf16.msra.mxu0 %v2804
    %2852 = vmatprep.subr.bf16.mxu0 0
    %2853 = vmatpush1.bf16.msra.mxu0 %v2805
    %2854 = vmatprep.mubr.bf16.mxu0 %v2686
    %2855 = vmatmul.mubr.bf16.gmra.mrb[0].mxu0 %v2685
    %v2856 = vpop.f32.mrb[0].mxu0
    %v2857 = vadd.f32 %v2724, %v2856
    %v2858 = vpop.f32.mrb[0].mxu0
    %v2859 = vpop.f32.mrb[0].mxu0
    %v2860 = vpop.f32.mrb[0].mxu0
    %2861 = vdwg.mxu0
    %vm2862 = vcmask 66560
    %2863 = vst.msk [vmem:[%s8] sm:$0x3] %vm2862, %v2857
    // Predicated region
    $region38: #{pointnet_cls_forward.5} parent=1 // pred_check
      _
    $region39: #{pointnet_cls_forward.5} parent=1 // pred_check_branch
      %2865 = sbr.rel (0) target = $region41
    $region40: #{pointnet_cls_forward.5} parent=1 // pred_region
      _
    $region41: #{pointnet_cls_forward.5} parent=1 // pred_fallthru
      _
    // Predicated region
    $region42: #{pointnet_cls_forward.5} parent=1 // pred_check
      _
    $region43: #{pointnet_cls_forward.5} parent=1 // pred_check_branch
      %2867 = sbr.rel (0) target = $region45
    $region44: #{pointnet_cls_forward.5} parent=1 // pred_region
      _
    $region45: #{pointnet_cls_forward.5} parent=1 // pred_fallthru
      _
    %2868 = vsyncpa [#allocation3], 1

// kernel: pointnet_cls_forward.7
$region0: #{pointnet_cls_forward.7}
  #allocation0 [shape = 'u32[]', space=smem, size = 0x4, offset = 0x4, fixed_abs, tag = 'smem constant byte address 0x4 - core index']
  #allocation1 [shape = 'u32[144,128]{1,0:T(1,128)}', space=vmem, size = 0x12000, scoped, tag = 'internal scratch']
  %s0 = inlined_call_operand.vmem [shape: f32[2,8,1024], index: 0, kind: input, shape index: {}]
  %s1 = inlined_call_operand.vmem [shape: f32[1,1024], index: 1, kind: input, shape index: {}]
  %s2 = inlined_call_operand.vmem [shape: bf16[1024,512], index: 2, kind: input, shape index: {}]
  %s3 = inlined_call_operand.vmem [shape: f32[1,512], index: 3, kind: input, shape index: {}]
  %s4 = inlined_call_operand.vmem [shape: bf16[512,256], index: 4, kind: input, shape index: {}]
  %s5 = inlined_call_operand.vmem [shape: f32[1,256], index: 5, kind: input, shape index: {}]
  %s6 = inlined_call_operand.vmem [shape: bf16[256,2], index: 6, kind: input, shape index: {}]
  %s7 = inlined_call_operand.vmem [shape: f32[1,2], index: 7, kind: input, shape index: {}]
  %s8 = inlined_call_operand.hbm [shape: f32[2,2], index: 8, kind: output, shape index: {}]
  %s9 = sld [smem:[#allocation0]]
  $region42: #{pointnet_cls_forward.7} parent=0
    _
  %s11 = ssub.s32 1, %s9
  %s12 = scalar_select 0, %s11, %s9
  $region1: #{pointnet_cls_forward.7} parent=0
    #allocation2 [shape = 'u8[1024]{0}', space=vmem, size = 0x400, scoped, tag = 'output window, operand 0, single buffered']
    #allocation3 [shape = 's32[1]{0}', space=sflag, size = 0x4, scoped, tag = 'scoped memory for pointnet_cls_forward.7']
    %13 = vsyncpa [#allocation3], 0
    // Predicated region
    $region2: #{pointnet_cls_forward.7} parent=1 // pred_check
      _
    $region3: #{pointnet_cls_forward.7} parent=1 // pred_check_branch
      %15 = sbr.rel (0) target = $region5
    $region4: #{pointnet_cls_forward.7} parent=1 // pred_region
      _
    $region5: #{pointnet_cls_forward.7} parent=1 // pred_fallthru
      _
    // Predicated region
    $region6: #{pointnet_cls_forward.7} parent=1 // pred_check
      _
    $region7: #{pointnet_cls_forward.7} parent=1 // pred_check_branch
      %17 = sbr.rel (0) target = $region9
    $region8: #{pointnet_cls_forward.7} parent=1 // pred_region
      _
    $region9: #{pointnet_cls_forward.7} parent=1 // pred_fallthru
      _
    // Predicated region
    $region10: #{pointnet_cls_forward.7} parent=1 // pred_check
      _
    $region11: #{pointnet_cls_forward.7} parent=1 // pred_check_branch
      %19 = sbr.rel (0) target = $region13
    $region12: #{pointnet_cls_forward.7} parent=1 // pred_region
      _
    $region13: #{pointnet_cls_forward.7} parent=1 // pred_fallthru
      _
    // Predicated region
    $region14: #{pointnet_cls_forward.7} parent=1 // pred_check
      _
    $region15: #{pointnet_cls_forward.7} parent=1 // pred_check_branch
      %21 = sbr.rel (0) target = $region17
    $region16: #{pointnet_cls_forward.7} parent=1 // pred_region
      _
    $region17: #{pointnet_cls_forward.7} parent=1 // pred_fallthru
      _
    // Predicated region
    $region18: #{pointnet_cls_forward.7} parent=1 // pred_check
      _
    $region19: #{pointnet_cls_forward.7} parent=1 // pred_check_branch
      %23 = sbr.rel (0) target = $region21
    $region20: #{pointnet_cls_forward.7} parent=1 // pred_region
      _
    $region21: #{pointnet_cls_forward.7} parent=1 // pred_fallthru
      _
    // Predicated region
    $region22: #{pointnet_cls_forward.7} parent=1 // pred_check
      _
    $region23: #{pointnet_cls_forward.7} parent=1 // pred_check_branch
      %25 = sbr.rel (0) target = $region25
    $region24: #{pointnet_cls_forward.7} parent=1 // pred_region
      _
    $region25: #{pointnet_cls_forward.7} parent=1 // pred_fallthru
      _
    // Predicated region
    $region26: #{pointnet_cls_forward.7} parent=1 // pred_check
      _
    $region27: #{pointnet_cls_forward.7} parent=1 // pred_check_branch
      %27 = sbr.rel (0) target = $region29
    $region28: #{pointnet_cls_forward.7} parent=1 // pred_region
      _
    $region29: #{pointnet_cls_forward.7} parent=1 // pred_fallthru
      _
    // Predicated region
    $region30: #{pointnet_cls_forward.7} parent=1 // pred_check
      _
    $region31: #{pointnet_cls_forward.7} parent=1 // pred_check_branch
      %29 = sbr.rel (0) target = $region33
    $region32: #{pointnet_cls_forward.7} parent=1 // pred_region
      _
    $region33: #{pointnet_cls_forward.7} parent=1 // pred_fallthru
      _
    %v31 = vld [vmem:[%s0] sm:$0xff]
    %v32 = vld [vmem:[%s0 + $0x8] sm:$0xff]
    %v33 = vld [vmem:[%s0 + $0x10] sm:$0xff]
    %v34 = vld [vmem:[%s0 + $0x18] sm:$0xff]
    %v35 = vld [vmem:[%s0 + $0x20] sm:$0xff]
    %v36 = vld [vmem:[%s0 + $0x28] sm:$0xff]
    %v37 = vld [vmem:[%s0 + $0x30] sm:$0xff]
    %v38 = vld [vmem:[%s0 + $0x38] sm:$0xff]
    %v39 = vld [vmem:[%s0 + $0x40] sm:$0xff]
    %v40 = vld [vmem:[%s0 + $0x48] sm:$0xff]
    %v41 = vld [vmem:[%s0 + $0x50] sm:$0xff]
    %v42 = vld [vmem:[%s0 + $0x58] sm:$0xff]
    %v43 = vld [vmem:[%s0 + $0x60] sm:$0xff]
    %v44 = vld [vmem:[%s0 + $0x68] sm:$0xff]
    %v45 = vld [vmem:[%s0 + $0x70] sm:$0xff]
    %v46 = vld [vmem:[%s0 + $0x78] sm:$0xff]
    %v47 = vrot.slane %v31, 4
    %v48 = vmax.f32 %v31, %v47
    %v49 = vrot.slane %v48, 2
    %v50 = vmax.f32 %v48, %v49
    %v51 = vrot.slane %v50, 1
    %v52 = vmax.f32 %v50, %v51
    %v53 = vrot.slane %v32, 4
    %v54 = vmax.f32 %v32, %v53
    %v55 = vrot.slane %v54, 2
    %v56 = vmax.f32 %v54, %v55
    %v57 = vrot.slane %v56, 1
    %v58 = vmax.f32 %v56, %v57
    %v59 = vrot.slane %v33, 4
    %v60 = vmax.f32 %v33, %v59
    %v61 = vrot.slane %v60, 2
    %v62 = vmax.f32 %v60, %v61
    %v63 = vrot.slane %v62, 1
    %v64 = vmax.f32 %v62, %v63
    %v65 = vrot.slane %v34, 4
    %v66 = vmax.f32 %v34, %v65
    %v67 = vrot.slane %v66, 2
    %v68 = vmax.f32 %v66, %v67
    %v69 = vrot.slane %v68, 1
    %v70 = vmax.f32 %v68, %v69
    %v71 = vrot.slane %v35, 4
    %v72 = vmax.f32 %v35, %v71
    %v73 = vrot.slane %v72, 2
    %v74 = vmax.f32 %v72, %v73
    %v75 = vrot.slane %v74, 1
    %v76 = vmax.f32 %v74, %v75
    %v77 = vrot.slane %v36, 4
    %v78 = vmax.f32 %v36, %v77
    %v79 = vrot.slane %v78, 2
    %v80 = vmax.f32 %v78, %v79
    %v81 = vrot.slane %v80, 1
    %v82 = vmax.f32 %v80, %v81
    %v83 = vrot.slane %v37, 4
    %v84 = vmax.f32 %v37, %v83
    %v85 = vrot.slane %v84, 2
    %v86 = vmax.f32 %v84, %v85
    %v87 = vrot.slane %v86, 1
    %v88 = vmax.f32 %v86, %v87
    %v89 = vrot.slane %v38, 4
    %v90 = vmax.f32 %v38, %v89
    %v91 = vrot.slane %v90, 2
    %v92 = vmax.f32 %v90, %v91
    %v93 = vrot.slane %v92, 1
    %v94 = vmax.f32 %v92, %v93
    %v95 = vrot.slane %v39, 4
    %v96 = vmax.f32 %v39, %v95
    %v97 = vrot.slane %v96, 2
    %v98 = vmax.f32 %v96, %v97
    %v99 = vrot.slane %v98, 1
    %v100 = vmax.f32 %v98, %v99
    %v101 = vrot.slane %v40, 4
    %v102 = vmax.f32 %v40, %v101
    %v103 = vrot.slane %v102, 2
    %v104 = vmax.f32 %v102, %v103
    %v105 = vrot.slane %v104, 1
    %v106 = vmax.f32 %v104, %v105
    %v107 = vrot.slane %v41, 4
    %v108 = vmax.f32 %v41, %v107
    %v109 = vrot.slane %v108, 2
    %v110 = vmax.f32 %v108, %v109
    %v111 = vrot.slane %v110, 1
    %v112 = vmax.f32 %v110, %v111
    %v113 = vrot.slane %v42, 4
    %v114 = vmax.f32 %v42, %v113
    %v115 = vrot.slane %v114, 2
    %v116 = vmax.f32 %v114, %v115
    %v117 = vrot.slane %v116, 1
    %v118 = vmax.f32 %v116, %v117
    %v119 = vrot.slane %v43, 4
    %v120 = vmax.f32 %v43, %v119
    %v121 = vrot.slane %v120, 2
    %v122 = vmax.f32 %v120, %v121
    %v123 = vrot.slane %v122, 1
    %v124 = vmax.f32 %v122, %v123
    %v125 = vrot.slane %v44, 4
    %v126 = vmax.f32 %v44, %v125
    %v127 = vrot.slane %v126, 2
    %v128 = vmax.f32 %v126, %v127
    %v129 = vrot.slane %v128, 1
    %v130 = vmax.f32 %v128, %v129
    %v131 = vrot.slane %v45, 4
    %v132 = vmax.f32 %v45, %v131
    %v133 = vrot.slane %v132, 2
    %v134 = vmax.f32 %v132, %v133
    %v135 = vrot.slane %v134, 1
    %v136 = vmax.f32 %v134, %v135
    %v137 = vrot.slane %v46, 4
    %v138 = vmax.f32 %v46, %v137
    %v139 = vrot.slane %v138, 2
    %v140 = vmax.f32 %v138, %v139
    %v141 = vrot.slane %v140, 1
    %v142 = vmax.f32 %v140, %v141
    %v143 = vld [vmem:[%s1] sm:$0xff]
    %v145 = vlaneseq
    %v146 = vshrl.u32 %v145, 7
    %v147 = vsub.s32 0, %v146
    %v148 = vrot.slane %v143, %v147
    %v149 = vlaneseq
    %v150 = vshrl.u32 %v149, 7
    %v151 = vsub.s32 1, %v150
    %v152 = vrot.slane %v143, %v151
    %v153 = vlaneseq
    %v154 = vshrl.u32 %v153, 7
    %v155 = vsub.s32 2, %v154
    %v156 = vrot.slane %v143, %v155
    %v157 = vlaneseq
    %v158 = vshrl.u32 %v157, 7
    %v159 = vsub.s32 3, %v158
    %v160 = vrot.slane %v143, %v159
    %v161 = vlaneseq
    %v162 = vshrl.u32 %v161, 7
    %v163 = vsub.s32 4, %v162
    %v164 = vrot.slane %v143, %v163
    %v165 = vlaneseq
    %v166 = vshrl.u32 %v165, 7
    %v167 = vsub.s32 5, %v166
    %v168 = vrot.slane %v143, %v167
    %v169 = vlaneseq
    %v170 = vshrl.u32 %v169, 7
    %v171 = vsub.s32 6, %v170
    %v172 = vrot.slane %v143, %v171
    %v173 = vlaneseq
    %v174 = vshrl.u32 %v173, 7
    %v175 = vsub.s32 7, %v174
    %v176 = vrot.slane %v143, %v175
    %v185 = vadd.f32 %v52, %v148
    %v186 = vadd.f32 %v58, %v152
    %v187 = vadd.f32 %v64, %v156
    %v188 = vadd.f32 %v70, %v160
    %v189 = vadd.f32 %v76, %v164
    %v190 = vadd.f32 %v82, %v168
    %v191 = vadd.f32 %v88, %v172
    %v192 = vadd.f32 %v94, %v176
    %v193 = vadd.f32 %v100, %v148
    %v194 = vadd.f32 %v106, %v152
    %v195 = vadd.f32 %v112, %v156
    %v196 = vadd.f32 %v118, %v160
    %v197 = vadd.f32 %v124, %v164
    %v198 = vadd.f32 %v130, %v168
    %v199 = vadd.f32 %v136, %v172
    %v200 = vadd.f32 %v142, %v176
    %v201 = vpack.c.bf16 %v185, %v185
    %v202 = vpack.c.bf16 %v186, %v186
    %v203 = vpack.c.bf16 %v187, %v187
    %v204 = vpack.c.bf16 %v188, %v188
    %v205 = vpack.c.bf16 %v189, %v189
    %v206 = vpack.c.bf16 %v190, %v190
    %v207 = vpack.c.bf16 %v191, %v191
    %v208 = vpack.c.bf16 %v192, %v192
    %v209 = vpack.c.bf16 %v193, %v193
    %v210 = vpack.c.bf16 %v194, %v194
    %v211 = vpack.c.bf16 %v195, %v195
    %v212 = vpack.c.bf16 %v196, %v196
    %v213 = vpack.c.bf16 %v197, %v197
    %v214 = vpack.c.bf16 %v198, %v198
    %v215 = vpack.c.bf16 %v199, %v199
    %v216 = vpack.c.bf16 %v200, %v200
    %v217 = vld [vmem:[%s2] sm:$0xff]
    %v218 = vld [vmem:[%s2 + $0x8] sm:$0xff]
    %v219 = vld [vmem:[%s2 + $0x10] sm:$0xff]
    %v220 = vld [vmem:[%s2 + $0x18] sm:$0xff]
    %v221 = vld [vmem:[%s2 + $0x20] sm:$0xff]
    %v222 = vld [vmem:[%s2 + $0x28] sm:$0xff]
    %v223 = vld [vmem:[%s2 + $0x30] sm:$0xff]
    %v224 = vld [vmem:[%s2 + $0x38] sm:$0xff]
    %v225 = vld [vmem:[%s2 + $0x40] sm:$0xff]
    %v226 = vld [vmem:[%s2 + $0x48] sm:$0xff]
    %v227 = vld [vmem:[%s2 + $0x50] sm:$0xff]
    %v228 = vld [vmem:[%s2 + $0x58] sm:$0xff]
    %v229 = vld [vmem:[%s2 + $0x60] sm:$0xff]
    %v230 = vld [vmem:[%s2 + $0x68] sm:$0xff]
    %v231 = vld [vmem:[%s2 + $0x70] sm:$0xff]
    %v232 = vld [vmem:[%s2 + $0x78] sm:$0xff]
    %v233 = vld [vmem:[%s2 + $0x80] sm:$0xff]
    %v234 = vld [vmem:[%s2 + $0x88] sm:$0xff]
    %v235 = vld [vmem:[%s2 + $0x90] sm:$0xff]
    %v236 = vld [vmem:[%s2 + $0x98] sm:$0xff]
    %v237 = vld [vmem:[%s2 + $0xa0] sm:$0xff]
    %v238 = vld [vmem:[%s2 + $0xa8] sm:$0xff]
    %v239 = vld [vmem:[%s2 + $0xb0] sm:$0xff]
    %v240 = vld [vmem:[%s2 + $0xb8] sm:$0xff]
    %v241 = vld [vmem:[%s2 + $0xc0] sm:$0xff]
    %v242 = vld [vmem:[%s2 + $0xc8] sm:$0xff]
    %v243 = vld [vmem:[%s2 + $0xd0] sm:$0xff]
    %v244 = vld [vmem:[%s2 + $0xd8] sm:$0xff]
    %v245 = vld [vmem:[%s2 + $0xe0] sm:$0xff]
    %v246 = vld [vmem:[%s2 + $0xe8] sm:$0xff]
    %v247 = vld [vmem:[%s2 + $0xf0] sm:$0xff]
    %v248 = vld [vmem:[%s2 + $0xf8] sm:$0xff]
    %v249 = vld [vmem:[%s2 + $0x100] sm:$0xff]
    %v250 = vld [vmem:[%s2 + $0x108] sm:$0xff]
    %v251 = vld [vmem:[%s2 + $0x110] sm:$0xff]
    %v252 = vld [vmem:[%s2 + $0x118] sm:$0xff]
    %v253 = vld [vmem:[%s2 + $0x120] sm:$0xff]
    %v254 = vld [vmem:[%s2 + $0x128] sm:$0xff]
    %v255 = vld [vmem:[%s2 + $0x130] sm:$0xff]
    %v256 = vld [vmem:[%s2 + $0x138] sm:$0xff]
    %v257 = vld [vmem:[%s2 + $0x140] sm:$0xff]
    %v258 = vld [vmem:[%s2 + $0x148] sm:$0xff]
    %v259 = vld [vmem:[%s2 + $0x150] sm:$0xff]
    %v260 = vld [vmem:[%s2 + $0x158] sm:$0xff]
    %v261 = vld [vmem:[%s2 + $0x160] sm:$0xff]
    %v262 = vld [vmem:[%s2 + $0x168] sm:$0xff]
    %v263 = vld [vmem:[%s2 + $0x170] sm:$0xff]
    %v264 = vld [vmem:[%s2 + $0x178] sm:$0xff]
    %v265 = vld [vmem:[%s2 + $0x180] sm:$0xff]
    %v266 = vld [vmem:[%s2 + $0x188] sm:$0xff]
    %v267 = vld [vmem:[%s2 + $0x190] sm:$0xff]
    %v268 = vld [vmem:[%s2 + $0x198] sm:$0xff]
    %v269 = vld [vmem:[%s2 + $0x1a0] sm:$0xff]
    %v270 = vld [vmem:[%s2 + $0x1a8] sm:$0xff]
    %v271 = vld [vmem:[%s2 + $0x1b0] sm:$0xff]
    %v272 = vld [vmem:[%s2 + $0x1b8] sm:$0xff]
    %v273 = vld [vmem:[%s2 + $0x1c0] sm:$0xff]
    %v274 = vld [vmem:[%s2 + $0x1c8] sm:$0xff]
    %v275 = vld [vmem:[%s2 + $0x1d0] sm:$0xff]
    %v276 = vld [vmem:[%s2 + $0x1d8] sm:$0xff]
    %v277 = vld [vmem:[%s2 + $0x1e0] sm:$0xff]
    %v278 = vld [vmem:[%s2 + $0x1e8] sm:$0xff]
    %v279 = vld [vmem:[%s2 + $0x1f0] sm:$0xff]
    %v280 = vld [vmem:[%s2 + $0x1f8] sm:$0xff]
    %v281 = vld [vmem:[%s2 + $0x200] sm:$0xff]
    %v282 = vld [vmem:[%s2 + $0x208] sm:$0xff]
    %v283 = vld [vmem:[%s2 + $0x210] sm:$0xff]
    %v284 = vld [vmem:[%s2 + $0x218] sm:$0xff]
    %v285 = vld [vmem:[%s2 + $0x220] sm:$0xff]
    %v286 = vld [vmem:[%s2 + $0x228] sm:$0xff]
    %v287 = vld [vmem:[%s2 + $0x230] sm:$0xff]
    %v288 = vld [vmem:[%s2 + $0x238] sm:$0xff]
    %v289 = vld [vmem:[%s2 + $0x240] sm:$0xff]
    %v290 = vld [vmem:[%s2 + $0x248] sm:$0xff]
    %v291 = vld [vmem:[%s2 + $0x250] sm:$0xff]
    %v292 = vld [vmem:[%s2 + $0x258] sm:$0xff]
    %v293 = vld [vmem:[%s2 + $0x260] sm:$0xff]
    %v294 = vld [vmem:[%s2 + $0x268] sm:$0xff]
    %v295 = vld [vmem:[%s2 + $0x270] sm:$0xff]
    %v296 = vld [vmem:[%s2 + $0x278] sm:$0xff]
    %v297 = vld [vmem:[%s2 + $0x280] sm:$0xff]
    %v298 = vld [vmem:[%s2 + $0x288] sm:$0xff]
    %v299 = vld [vmem:[%s2 + $0x290] sm:$0xff]
    %v300 = vld [vmem:[%s2 + $0x298] sm:$0xff]
    %v301 = vld [vmem:[%s2 + $0x2a0] sm:$0xff]
    %v302 = vld [vmem:[%s2 + $0x2a8] sm:$0xff]
    %v303 = vld [vmem:[%s2 + $0x2b0] sm:$0xff]
    %v304 = vld [vmem:[%s2 + $0x2b8] sm:$0xff]
    %v305 = vld [vmem:[%s2 + $0x2c0] sm:$0xff]
    %v306 = vld [vmem:[%s2 + $0x2c8] sm:$0xff]
    %v307 = vld [vmem:[%s2 + $0x2d0] sm:$0xff]
    %v308 = vld [vmem:[%s2 + $0x2d8] sm:$0xff]
    %v309 = vld [vmem:[%s2 + $0x2e0] sm:$0xff]
    %v310 = vld [vmem:[%s2 + $0x2e8] sm:$0xff]
    %v311 = vld [vmem:[%s2 + $0x2f0] sm:$0xff]
    %v312 = vld [vmem:[%s2 + $0x2f8] sm:$0xff]
    %v313 = vld [vmem:[%s2 + $0x300] sm:$0xff]
    %v314 = vld [vmem:[%s2 + $0x308] sm:$0xff]
    %v315 = vld [vmem:[%s2 + $0x310] sm:$0xff]
    %v316 = vld [vmem:[%s2 + $0x318] sm:$0xff]
    %v317 = vld [vmem:[%s2 + $0x320] sm:$0xff]
    %v318 = vld [vmem:[%s2 + $0x328] sm:$0xff]
    %v319 = vld [vmem:[%s2 + $0x330] sm:$0xff]
    %v320 = vld [vmem:[%s2 + $0x338] sm:$0xff]
    %v321 = vld [vmem:[%s2 + $0x340] sm:$0xff]
    %v322 = vld [vmem:[%s2 + $0x348] sm:$0xff]
    %v323 = vld [vmem:[%s2 + $0x350] sm:$0xff]
    %v324 = vld [vmem:[%s2 + $0x358] sm:$0xff]
    %v325 = vld [vmem:[%s2 + $0x360] sm:$0xff]
    %v326 = vld [vmem:[%s2 + $0x368] sm:$0xff]
    %v327 = vld [vmem:[%s2 + $0x370] sm:$0xff]
    %v328 = vld [vmem:[%s2 + $0x378] sm:$0xff]
    %v329 = vld [vmem:[%s2 + $0x380] sm:$0xff]
    %v330 = vld [vmem:[%s2 + $0x388] sm:$0xff]
    %v331 = vld [vmem:[%s2 + $0x390] sm:$0xff]
    %v332 = vld [vmem:[%s2 + $0x398] sm:$0xff]
    %v333 = vld [vmem:[%s2 + $0x3a0] sm:$0xff]
    %v334 = vld [vmem:[%s2 + $0x3a8] sm:$0xff]
    %v335 = vld [vmem:[%s2 + $0x3b0] sm:$0xff]
    %v336 = vld [vmem:[%s2 + $0x3b8] sm:$0xff]
    %v337 = vld [vmem:[%s2 + $0x3c0] sm:$0xff]
    %v338 = vld [vmem:[%s2 + $0x3c8] sm:$0xff]
    %v339 = vld [vmem:[%s2 + $0x3d0] sm:$0xff]
    %v340 = vld [vmem:[%s2 + $0x3d8] sm:$0xff]
    %v341 = vld [vmem:[%s2 + $0x3e0] sm:$0xff]
    %v342 = vld [vmem:[%s2 + $0x3e8] sm:$0xff]
    %v343 = vld [vmem:[%s2 + $0x3f0] sm:$0xff]
    %v344 = vld [vmem:[%s2 + $0x3f8] sm:$0xff]
    %v345 = vld [vmem:[%s2 + $0x400] sm:$0xff]
    %v346 = vld [vmem:[%s2 + $0x408] sm:$0xff]
    %v347 = vld [vmem:[%s2 + $0x410] sm:$0xff]
    %v348 = vld [vmem:[%s2 + $0x418] sm:$0xff]
    %v349 = vld [vmem:[%s2 + $0x420] sm:$0xff]
    %v350 = vld [vmem:[%s2 + $0x428] sm:$0xff]
    %v351 = vld [vmem:[%s2 + $0x430] sm:$0xff]
    %v352 = vld [vmem:[%s2 + $0x438] sm:$0xff]
    %v353 = vld [vmem:[%s2 + $0x440] sm:$0xff]
    %v354 = vld [vmem:[%s2 + $0x448] sm:$0xff]
    %v355 = vld [vmem:[%s2 + $0x450] sm:$0xff]
    %v356 = vld [vmem:[%s2 + $0x458] sm:$0xff]
    %v357 = vld [vmem:[%s2 + $0x460] sm:$0xff]
    %v358 = vld [vmem:[%s2 + $0x468] sm:$0xff]
    %v359 = vld [vmem:[%s2 + $0x470] sm:$0xff]
    %v360 = vld [vmem:[%s2 + $0x478] sm:$0xff]
    %v361 = vld [vmem:[%s2 + $0x480] sm:$0xff]
    %v362 = vld [vmem:[%s2 + $0x488] sm:$0xff]
    %v363 = vld [vmem:[%s2 + $0x490] sm:$0xff]
    %v364 = vld [vmem:[%s2 + $0x498] sm:$0xff]
    %v365 = vld [vmem:[%s2 + $0x4a0] sm:$0xff]
    %v366 = vld [vmem:[%s2 + $0x4a8] sm:$0xff]
    %v367 = vld [vmem:[%s2 + $0x4b0] sm:$0xff]
    %v368 = vld [vmem:[%s2 + $0x4b8] sm:$0xff]
    %v369 = vld [vmem:[%s2 + $0x4c0] sm:$0xff]
    %v370 = vld [vmem:[%s2 + $0x4c8] sm:$0xff]
    %v371 = vld [vmem:[%s2 + $0x4d0] sm:$0xff]
    %v372 = vld [vmem:[%s2 + $0x4d8] sm:$0xff]
    %v373 = vld [vmem:[%s2 + $0x4e0] sm:$0xff]
    %v374 = vld [vmem:[%s2 + $0x4e8] sm:$0xff]
    %v375 = vld [vmem:[%s2 + $0x4f0] sm:$0xff]
    %v376 = vld [vmem:[%s2 + $0x4f8] sm:$0xff]
    %v377 = vld [vmem:[%s2 + $0x500] sm:$0xff]
    %v378 = vld [vmem:[%s2 + $0x508] sm:$0xff]
    %v379 = vld [vmem:[%s2 + $0x510] sm:$0xff]
    %v380 = vld [vmem:[%s2 + $0x518] sm:$0xff]
    %v381 = vld [vmem:[%s2 + $0x520] sm:$0xff]
    %v382 = vld [vmem:[%s2 + $0x528] sm:$0xff]
    %v383 = vld [vmem:[%s2 + $0x530] sm:$0xff]
    %v384 = vld [vmem:[%s2 + $0x538] sm:$0xff]
    %v385 = vld [vmem:[%s2 + $0x540] sm:$0xff]
    %v386 = vld [vmem:[%s2 + $0x548] sm:$0xff]
    %v387 = vld [vmem:[%s2 + $0x550] sm:$0xff]
    %v388 = vld [vmem:[%s2 + $0x558] sm:$0xff]
    %v389 = vld [vmem:[%s2 + $0x560] sm:$0xff]
    %v390 = vld [vmem:[%s2 + $0x568] sm:$0xff]
    %v391 = vld [vmem:[%s2 + $0x570] sm:$0xff]
    %v392 = vld [vmem:[%s2 + $0x578] sm:$0xff]
    %v393 = vld [vmem:[%s2 + $0x580] sm:$0xff]
    %v394 = vld [vmem:[%s2 + $0x588] sm:$0xff]
    %v395 = vld [vmem:[%s2 + $0x590] sm:$0xff]
    %v396 = vld [vmem:[%s2 + $0x598] sm:$0xff]
    %v397 = vld [vmem:[%s2 + $0x5a0] sm:$0xff]
    %v398 = vld [vmem:[%s2 + $0x5a8] sm:$0xff]
    %v399 = vld [vmem:[%s2 + $0x5b0] sm:$0xff]
    %v400 = vld [vmem:[%s2 + $0x5b8] sm:$0xff]
    %v401 = vld [vmem:[%s2 + $0x5c0] sm:$0xff]
    %v402 = vld [vmem:[%s2 + $0x5c8] sm:$0xff]
    %v403 = vld [vmem:[%s2 + $0x5d0] sm:$0xff]
    %v404 = vld [vmem:[%s2 + $0x5d8] sm:$0xff]
    %v405 = vld [vmem:[%s2 + $0x5e0] sm:$0xff]
    %v406 = vld [vmem:[%s2 + $0x5e8] sm:$0xff]
    %v407 = vld [vmem:[%s2 + $0x5f0] sm:$0xff]
    %v408 = vld [vmem:[%s2 + $0x5f8] sm:$0xff]
    %v409 = vld [vmem:[%s2 + $0x600] sm:$0xff]
    %v410 = vld [vmem:[%s2 + $0x608] sm:$0xff]
    %v411 = vld [vmem:[%s2 + $0x610] sm:$0xff]
    %v412 = vld [vmem:[%s2 + $0x618] sm:$0xff]
    %v413 = vld [vmem:[%s2 + $0x620] sm:$0xff]
    %v414 = vld [vmem:[%s2 + $0x628] sm:$0xff]
    %v415 = vld [vmem:[%s2 + $0x630] sm:$0xff]
    %v416 = vld [vmem:[%s2 + $0x638] sm:$0xff]
    %v417 = vld [vmem:[%s2 + $0x640] sm:$0xff]
    %v418 = vld [vmem:[%s2 + $0x648] sm:$0xff]
    %v419 = vld [vmem:[%s2 + $0x650] sm:$0xff]
    %v420 = vld [vmem:[%s2 + $0x658] sm:$0xff]
    %v421 = vld [vmem:[%s2 + $0x660] sm:$0xff]
    %v422 = vld [vmem:[%s2 + $0x668] sm:$0xff]
    %v423 = vld [vmem:[%s2 + $0x670] sm:$0xff]
    %v424 = vld [vmem:[%s2 + $0x678] sm:$0xff]
    %v425 = vld [vmem:[%s2 + $0x680] sm:$0xff]
    %v426 = vld [vmem:[%s2 + $0x688] sm:$0xff]
    %v427 = vld [vmem:[%s2 + $0x690] sm:$0xff]
    %v428 = vld [vmem:[%s2 + $0x698] sm:$0xff]
    %v429 = vld [vmem:[%s2 + $0x6a0] sm:$0xff]
    %v430 = vld [vmem:[%s2 + $0x6a8] sm:$0xff]
    %v431 = vld [vmem:[%s2 + $0x6b0] sm:$0xff]
    %v432 = vld [vmem:[%s2 + $0x6b8] sm:$0xff]
    %v433 = vld [vmem:[%s2 + $0x6c0] sm:$0xff]
    %v434 = vld [vmem:[%s2 + $0x6c8] sm:$0xff]
    %v435 = vld [vmem:[%s2 + $0x6d0] sm:$0xff]
    %v436 = vld [vmem:[%s2 + $0x6d8] sm:$0xff]
    %v437 = vld [vmem:[%s2 + $0x6e0] sm:$0xff]
    %v438 = vld [vmem:[%s2 + $0x6e8] sm:$0xff]
    %v439 = vld [vmem:[%s2 + $0x6f0] sm:$0xff]
    %v440 = vld [vmem:[%s2 + $0x6f8] sm:$0xff]
    %v441 = vld [vmem:[%s2 + $0x700] sm:$0xff]
    %v442 = vld [vmem:[%s2 + $0x708] sm:$0xff]
    %v443 = vld [vmem:[%s2 + $0x710] sm:$0xff]
    %v444 = vld [vmem:[%s2 + $0x718] sm:$0xff]
    %v445 = vld [vmem:[%s2 + $0x720] sm:$0xff]
    %v446 = vld [vmem:[%s2 + $0x728] sm:$0xff]
    %v447 = vld [vmem:[%s2 + $0x730] sm:$0xff]
    %v448 = vld [vmem:[%s2 + $0x738] sm:$0xff]
    %v449 = vld [vmem:[%s2 + $0x740] sm:$0xff]
    %v450 = vld [vmem:[%s2 + $0x748] sm:$0xff]
    %v451 = vld [vmem:[%s2 + $0x750] sm:$0xff]
    %v452 = vld [vmem:[%s2 + $0x758] sm:$0xff]
    %v453 = vld [vmem:[%s2 + $0x760] sm:$0xff]
    %v454 = vld [vmem:[%s2 + $0x768] sm:$0xff]
    %v455 = vld [vmem:[%s2 + $0x770] sm:$0xff]
    %v456 = vld [vmem:[%s2 + $0x778] sm:$0xff]
    %v457 = vld [vmem:[%s2 + $0x780] sm:$0xff]
    %v458 = vld [vmem:[%s2 + $0x788] sm:$0xff]
    %v459 = vld [vmem:[%s2 + $0x790] sm:$0xff]
    %v460 = vld [vmem:[%s2 + $0x798] sm:$0xff]
    %v461 = vld [vmem:[%s2 + $0x7a0] sm:$0xff]
    %v462 = vld [vmem:[%s2 + $0x7a8] sm:$0xff]
    %v463 = vld [vmem:[%s2 + $0x7b0] sm:$0xff]
    %v464 = vld [vmem:[%s2 + $0x7b8] sm:$0xff]
    %v465 = vld [vmem:[%s2 + $0x7c0] sm:$0xff]
    %v466 = vld [vmem:[%s2 + $0x7c8] sm:$0xff]
    %v467 = vld [vmem:[%s2 + $0x7d0] sm:$0xff]
    %v468 = vld [vmem:[%s2 + $0x7d8] sm:$0xff]
    %v469 = vld [vmem:[%s2 + $0x7e0] sm:$0xff]
    %v470 = vld [vmem:[%s2 + $0x7e8] sm:$0xff]
    %v471 = vld [vmem:[%s2 + $0x7f0] sm:$0xff]
    %v472 = vld [vmem:[%s2 + $0x7f8] sm:$0xff]
    %v473 = vld [vmem:[%s3] sm:$0xf]
    %v475 = vlaneseq
    %v476 = vshrl.u32 %v475, 7
    %v477 = vsub.s32 0, %v476
    %v478 = vrot.slane %v473, %v477
    %v479 = vlaneseq
    %v480 = vshrl.u32 %v479, 7
    %v481 = vsub.s32 1, %v480
    %v482 = vrot.slane %v473, %v481
    %v483 = vlaneseq
    %v484 = vshrl.u32 %v483, 7
    %v485 = vsub.s32 2, %v484
    %v486 = vrot.slane %v473, %v485
    %v487 = vlaneseq
    %v488 = vshrl.u32 %v487, 7
    %v489 = vsub.s32 3, %v488
    %v490 = vrot.slane %v473, %v489
    %v511 = vunpack.c.l.b16 %v201
    %v512 = vunpack.c.l.b16 %v202
    %v513 = vunpack.c.l.b16 %v203
    %v514 = vunpack.c.l.b16 %v204
    %v515 = vunpack.c.l.b16 %v205
    %v516 = vunpack.c.l.b16 %v206
    %v517 = vunpack.c.l.b16 %v207
    %v518 = vunpack.c.l.b16 %v208
    %v519 = vunpack.c.l.b16 %v209
    %v520 = vunpack.c.l.b16 %v210
    %v521 = vunpack.c.l.b16 %v211
    %v522 = vunpack.c.l.b16 %v212
    %v523 = vunpack.c.l.b16 %v213
    %v524 = vunpack.c.l.b16 %v214
    %v525 = vunpack.c.l.b16 %v215
    %v526 = vunpack.c.l.b16 %v216
    %v527 = vrot.slane %v519, 7
    %vm528 = vcmask 1041409
    %v529 = vsel %vm528, %v527, %v511
    %v530 = vrot.slane %v520, 7
    %v531 = vsel %vm528, %v530, %v512
    %v532 = vrot.slane %v521, 7
    %v533 = vsel %vm528, %v532, %v513
    %v534 = vrot.slane %v522, 7
    %v535 = vsel %vm528, %v534, %v514
    %v536 = vrot.slane %v523, 7
    %v537 = vsel %vm528, %v536, %v515
    %v538 = vrot.slane %v524, 7
    %v539 = vsel %vm528, %v538, %v516
    %v540 = vrot.slane %v525, 7
    %v541 = vsel %vm528, %v540, %v517
    %v542 = vrot.slane %v526, 7
    %v543 = vsel %vm528, %v542, %v518
    %v544 = vpack.c.b16 %v529, %v529
    %v545 = vpack.c.b16 %v531, %v531
    %v546 = vpack.c.b16 %v533, %v533
    %v547 = vpack.c.b16 %v535, %v535
    %v548 = vpack.c.b16 %v537, %v537
    %v549 = vpack.c.b16 %v539, %v539
    %v550 = vpack.c.b16 %v541, %v541
    %v551 = vpack.c.b16 %v543, %v543
    %v816 = vunpack.c.l.b16 %v217
    %v817 = vunpack.c.h.b16 %v217
    %v818 = vunpack.c.l.b16 %v218
    %v819 = vunpack.c.h.b16 %v218
    %v820 = vunpack.c.l.b16 %v219
    %v821 = vunpack.c.h.b16 %v219
    %v822 = vunpack.c.l.b16 %v220
    %v823 = vunpack.c.h.b16 %v220
    %v824 = vunpack.c.l.b16 %v221
    %v825 = vunpack.c.h.b16 %v221
    %v826 = vunpack.c.l.b16 %v222
    %v827 = vunpack.c.h.b16 %v222
    %v828 = vunpack.c.l.b16 %v223
    %v829 = vunpack.c.h.b16 %v223
    %v830 = vunpack.c.l.b16 %v224
    %v831 = vunpack.c.h.b16 %v224
    %v832 = vunpack.c.l.b16 %v225
    %v833 = vunpack.c.h.b16 %v225
    %v834 = vunpack.c.l.b16 %v226
    %v835 = vunpack.c.h.b16 %v226
    %v836 = vunpack.c.l.b16 %v227
    %v837 = vunpack.c.h.b16 %v227
    %v838 = vunpack.c.l.b16 %v228
    %v839 = vunpack.c.h.b16 %v228
    %v840 = vunpack.c.l.b16 %v229
    %v841 = vunpack.c.h.b16 %v229
    %v842 = vunpack.c.l.b16 %v230
    %v843 = vunpack.c.h.b16 %v230
    %v844 = vunpack.c.l.b16 %v231
    %v845 = vunpack.c.h.b16 %v231
    %v846 = vunpack.c.l.b16 %v232
    %v847 = vunpack.c.h.b16 %v232
    %v848 = vunpack.c.l.b16 %v233
    %v849 = vunpack.c.h.b16 %v233
    %v850 = vunpack.c.l.b16 %v234
    %v851 = vunpack.c.h.b16 %v234
    %v852 = vunpack.c.l.b16 %v235
    %v853 = vunpack.c.h.b16 %v235
    %v854 = vunpack.c.l.b16 %v236
    %v855 = vunpack.c.h.b16 %v236
    %v856 = vunpack.c.l.b16 %v237
    %v857 = vunpack.c.h.b16 %v237
    %v858 = vunpack.c.l.b16 %v238
    %v859 = vunpack.c.h.b16 %v238
    %v860 = vunpack.c.l.b16 %v239
    %v861 = vunpack.c.h.b16 %v239
    %v862 = vunpack.c.l.b16 %v240
    %v863 = vunpack.c.h.b16 %v240
    %v864 = vunpack.c.l.b16 %v241
    %v865 = vunpack.c.h.b16 %v241
    %v866 = vunpack.c.l.b16 %v242
    %v867 = vunpack.c.h.b16 %v242
    %v868 = vunpack.c.l.b16 %v243
    %v869 = vunpack.c.h.b16 %v243
    %v870 = vunpack.c.l.b16 %v244
    %v871 = vunpack.c.h.b16 %v244
    %v872 = vunpack.c.l.b16 %v245
    %v873 = vunpack.c.h.b16 %v245
    %v874 = vunpack.c.l.b16 %v246
    %v875 = vunpack.c.h.b16 %v246
    %v876 = vunpack.c.l.b16 %v247
    %v877 = vunpack.c.h.b16 %v247
    %v878 = vunpack.c.l.b16 %v248
    %v879 = vunpack.c.h.b16 %v248
    %v880 = vunpack.c.l.b16 %v249
    %v881 = vunpack.c.h.b16 %v249
    %v882 = vunpack.c.l.b16 %v250
    %v883 = vunpack.c.h.b16 %v250
    %v884 = vunpack.c.l.b16 %v251
    %v885 = vunpack.c.h.b16 %v251
    %v886 = vunpack.c.l.b16 %v252
    %v887 = vunpack.c.h.b16 %v252
    %v888 = vunpack.c.l.b16 %v253
    %v889 = vunpack.c.h.b16 %v253
    %v890 = vunpack.c.l.b16 %v254
    %v891 = vunpack.c.h.b16 %v254
    %v892 = vunpack.c.l.b16 %v255
    %v893 = vunpack.c.h.b16 %v255
    %v894 = vunpack.c.l.b16 %v256
    %v895 = vunpack.c.h.b16 %v256
    %v896 = vunpack.c.l.b16 %v257
    %v897 = vunpack.c.h.b16 %v257
    %v898 = vunpack.c.l.b16 %v258
    %v899 = vunpack.c.h.b16 %v258
    %v900 = vunpack.c.l.b16 %v259
    %v901 = vunpack.c.h.b16 %v259
    %v902 = vunpack.c.l.b16 %v260
    %v903 = vunpack.c.h.b16 %v260
    %v904 = vunpack.c.l.b16 %v261
    %v905 = vunpack.c.h.b16 %v261
    %v906 = vunpack.c.l.b16 %v262
    %v907 = vunpack.c.h.b16 %v262
    %v908 = vunpack.c.l.b16 %v263
    %v909 = vunpack.c.h.b16 %v263
    %v910 = vunpack.c.l.b16 %v264
    %v911 = vunpack.c.h.b16 %v264
    %v912 = vunpack.c.l.b16 %v265
    %v913 = vunpack.c.h.b16 %v265
    %v914 = vunpack.c.l.b16 %v266
    %v915 = vunpack.c.h.b16 %v266
    %v916 = vunpack.c.l.b16 %v267
    %v917 = vunpack.c.h.b16 %v267
    %v918 = vunpack.c.l.b16 %v268
    %v919 = vunpack.c.h.b16 %v268
    %v920 = vunpack.c.l.b16 %v269
    %v921 = vunpack.c.h.b16 %v269
    %v922 = vunpack.c.l.b16 %v270
    %v923 = vunpack.c.h.b16 %v270
    %v924 = vunpack.c.l.b16 %v271
    %v925 = vunpack.c.h.b16 %v271
    %v926 = vunpack.c.l.b16 %v272
    %v927 = vunpack.c.h.b16 %v272
    %v928 = vunpack.c.l.b16 %v273
    %v929 = vunpack.c.h.b16 %v273
    %v930 = vunpack.c.l.b16 %v274
    %v931 = vunpack.c.h.b16 %v274
    %v932 = vunpack.c.l.b16 %v275
    %v933 = vunpack.c.h.b16 %v275
    %v934 = vunpack.c.l.b16 %v276
    %v935 = vunpack.c.h.b16 %v276
    %v936 = vunpack.c.l.b16 %v277
    %v937 = vunpack.c.h.b16 %v277
    %v938 = vunpack.c.l.b16 %v278
    %v939 = vunpack.c.h.b16 %v278
    %v940 = vunpack.c.l.b16 %v279
    %v941 = vunpack.c.h.b16 %v279
    %v942 = vunpack.c.l.b16 %v280
    %v943 = vunpack.c.h.b16 %v280
    %v944 = vunpack.c.l.b16 %v281
    %v945 = vunpack.c.h.b16 %v281
    %v946 = vunpack.c.l.b16 %v282
    %v947 = vunpack.c.h.b16 %v282
    %v948 = vunpack.c.l.b16 %v283
    %v949 = vunpack.c.h.b16 %v283
    %v950 = vunpack.c.l.b16 %v284
    %v951 = vunpack.c.h.b16 %v284
    %v952 = vunpack.c.l.b16 %v285
    %v953 = vunpack.c.h.b16 %v285
    %v954 = vunpack.c.l.b16 %v286
    %v955 = vunpack.c.h.b16 %v286
    %v956 = vunpack.c.l.b16 %v287
    %v957 = vunpack.c.h.b16 %v287
    %v958 = vunpack.c.l.b16 %v288
    %v959 = vunpack.c.h.b16 %v288
    %v960 = vunpack.c.l.b16 %v289
    %v961 = vunpack.c.h.b16 %v289
    %v962 = vunpack.c.l.b16 %v290
    %v963 = vunpack.c.h.b16 %v290
    %v964 = vunpack.c.l.b16 %v291
    %v965 = vunpack.c.h.b16 %v291
    %v966 = vunpack.c.l.b16 %v292
    %v967 = vunpack.c.h.b16 %v292
    %v968 = vunpack.c.l.b16 %v293
    %v969 = vunpack.c.h.b16 %v293
    %v970 = vunpack.c.l.b16 %v294
    %v971 = vunpack.c.h.b16 %v294
    %v972 = vunpack.c.l.b16 %v295
    %v973 = vunpack.c.h.b16 %v295
    %v974 = vunpack.c.l.b16 %v296
    %v975 = vunpack.c.h.b16 %v296
    %v976 = vunpack.c.l.b16 %v297
    %v977 = vunpack.c.h.b16 %v297
    %v978 = vunpack.c.l.b16 %v298
    %v979 = vunpack.c.h.b16 %v298
    %v980 = vunpack.c.l.b16 %v299
    %v981 = vunpack.c.h.b16 %v299
    %v982 = vunpack.c.l.b16 %v300
    %v983 = vunpack.c.h.b16 %v300
    %v984 = vunpack.c.l.b16 %v301
    %v985 = vunpack.c.h.b16 %v301
    %v986 = vunpack.c.l.b16 %v302
    %v987 = vunpack.c.h.b16 %v302
    %v988 = vunpack.c.l.b16 %v303
    %v989 = vunpack.c.h.b16 %v303
    %v990 = vunpack.c.l.b16 %v304
    %v991 = vunpack.c.h.b16 %v304
    %v992 = vunpack.c.l.b16 %v305
    %v993 = vunpack.c.h.b16 %v305
    %v994 = vunpack.c.l.b16 %v306
    %v995 = vunpack.c.h.b16 %v306
    %v996 = vunpack.c.l.b16 %v307
    %v997 = vunpack.c.h.b16 %v307
    %v998 = vunpack.c.l.b16 %v308
    %v999 = vunpack.c.h.b16 %v308
    %v1000 = vunpack.c.l.b16 %v309
    %v1001 = vunpack.c.h.b16 %v309
    %v1002 = vunpack.c.l.b16 %v310
    %v1003 = vunpack.c.h.b16 %v310
    %v1004 = vunpack.c.l.b16 %v311
    %v1005 = vunpack.c.h.b16 %v311
    %v1006 = vunpack.c.l.b16 %v312
    %v1007 = vunpack.c.h.b16 %v312
    %v1008 = vunpack.c.l.b16 %v313
    %v1009 = vunpack.c.h.b16 %v313
    %v1010 = vunpack.c.l.b16 %v314
    %v1011 = vunpack.c.h.b16 %v314
    %v1012 = vunpack.c.l.b16 %v315
    %v1013 = vunpack.c.h.b16 %v315
    %v1014 = vunpack.c.l.b16 %v316
    %v1015 = vunpack.c.h.b16 %v316
    %v1016 = vunpack.c.l.b16 %v317
    %v1017 = vunpack.c.h.b16 %v317
    %v1018 = vunpack.c.l.b16 %v318
    %v1019 = vunpack.c.h.b16 %v318
    %v1020 = vunpack.c.l.b16 %v319
    %v1021 = vunpack.c.h.b16 %v319
    %v1022 = vunpack.c.l.b16 %v320
    %v1023 = vunpack.c.h.b16 %v320
    %v1024 = vunpack.c.l.b16 %v321
    %v1025 = vunpack.c.h.b16 %v321
    %v1026 = vunpack.c.l.b16 %v322
    %v1027 = vunpack.c.h.b16 %v322
    %v1028 = vunpack.c.l.b16 %v323
    %v1029 = vunpack.c.h.b16 %v323
    %v1030 = vunpack.c.l.b16 %v324
    %v1031 = vunpack.c.h.b16 %v324
    %v1032 = vunpack.c.l.b16 %v325
    %v1033 = vunpack.c.h.b16 %v325
    %v1034 = vunpack.c.l.b16 %v326
    %v1035 = vunpack.c.h.b16 %v326
    %v1036 = vunpack.c.l.b16 %v327
    %v1037 = vunpack.c.h.b16 %v327
    %v1038 = vunpack.c.l.b16 %v328
    %v1039 = vunpack.c.h.b16 %v328
    %v1040 = vunpack.c.l.b16 %v329
    %v1041 = vunpack.c.h.b16 %v329
    %v1042 = vunpack.c.l.b16 %v330
    %v1043 = vunpack.c.h.b16 %v330
    %v1044 = vunpack.c.l.b16 %v331
    %v1045 = vunpack.c.h.b16 %v331
    %v1046 = vunpack.c.l.b16 %v332
    %v1047 = vunpack.c.h.b16 %v332
    %v1048 = vunpack.c.l.b16 %v333
    %v1049 = vunpack.c.h.b16 %v333
    %v1050 = vunpack.c.l.b16 %v334
    %v1051 = vunpack.c.h.b16 %v334
    %v1052 = vunpack.c.l.b16 %v335
    %v1053 = vunpack.c.h.b16 %v335
    %v1054 = vunpack.c.l.b16 %v336
    %v1055 = vunpack.c.h.b16 %v336
    %v1056 = vunpack.c.l.b16 %v337
    %v1057 = vunpack.c.h.b16 %v337
    %v1058 = vunpack.c.l.b16 %v338
    %v1059 = vunpack.c.h.b16 %v338
    %v1060 = vunpack.c.l.b16 %v339
    %v1061 = vunpack.c.h.b16 %v339
    %v1062 = vunpack.c.l.b16 %v340
    %v1063 = vunpack.c.h.b16 %v340
    %v1064 = vunpack.c.l.b16 %v341
    %v1065 = vunpack.c.h.b16 %v341
    %v1066 = vunpack.c.l.b16 %v342
    %v1067 = vunpack.c.h.b16 %v342
    %v1068 = vunpack.c.l.b16 %v343
    %v1069 = vunpack.c.h.b16 %v343
    %v1070 = vunpack.c.l.b16 %v344
    %v1071 = vunpack.c.h.b16 %v344
    %v1072 = vunpack.c.l.b16 %v345
    %v1073 = vunpack.c.h.b16 %v345
    %v1074 = vunpack.c.l.b16 %v346
    %v1075 = vunpack.c.h.b16 %v346
    %v1076 = vunpack.c.l.b16 %v347
    %v1077 = vunpack.c.h.b16 %v347
    %v1078 = vunpack.c.l.b16 %v348
    %v1079 = vunpack.c.h.b16 %v348
    %v1080 = vunpack.c.l.b16 %v349
    %v1081 = vunpack.c.h.b16 %v349
    %v1082 = vunpack.c.l.b16 %v350
    %v1083 = vunpack.c.h.b16 %v350
    %v1084 = vunpack.c.l.b16 %v351
    %v1085 = vunpack.c.h.b16 %v351
    %v1086 = vunpack.c.l.b16 %v352
    %v1087 = vunpack.c.h.b16 %v352
    %v1088 = vunpack.c.l.b16 %v353
    %v1089 = vunpack.c.h.b16 %v353
    %v1090 = vunpack.c.l.b16 %v354
    %v1091 = vunpack.c.h.b16 %v354
    %v1092 = vunpack.c.l.b16 %v355
    %v1093 = vunpack.c.h.b16 %v355
    %v1094 = vunpack.c.l.b16 %v356
    %v1095 = vunpack.c.h.b16 %v356
    %v1096 = vunpack.c.l.b16 %v357
    %v1097 = vunpack.c.h.b16 %v357
    %v1098 = vunpack.c.l.b16 %v358
    %v1099 = vunpack.c.h.b16 %v358
    %v1100 = vunpack.c.l.b16 %v359
    %v1101 = vunpack.c.h.b16 %v359
    %v1102 = vunpack.c.l.b16 %v360
    %v1103 = vunpack.c.h.b16 %v360
    %v1104 = vunpack.c.l.b16 %v361
    %v1105 = vunpack.c.h.b16 %v361
    %v1106 = vunpack.c.l.b16 %v362
    %v1107 = vunpack.c.h.b16 %v362
    %v1108 = vunpack.c.l.b16 %v363
    %v1109 = vunpack.c.h.b16 %v363
    %v1110 = vunpack.c.l.b16 %v364
    %v1111 = vunpack.c.h.b16 %v364
    %v1112 = vunpack.c.l.b16 %v365
    %v1113 = vunpack.c.h.b16 %v365
    %v1114 = vunpack.c.l.b16 %v366
    %v1115 = vunpack.c.h.b16 %v366
    %v1116 = vunpack.c.l.b16 %v367
    %v1117 = vunpack.c.h.b16 %v367
    %v1118 = vunpack.c.l.b16 %v368
    %v1119 = vunpack.c.h.b16 %v368
    %v1120 = vunpack.c.l.b16 %v369
    %v1121 = vunpack.c.h.b16 %v369
    %v1122 = vunpack.c.l.b16 %v370
    %v1123 = vunpack.c.h.b16 %v370
    %v1124 = vunpack.c.l.b16 %v371
    %v1125 = vunpack.c.h.b16 %v371
    %v1126 = vunpack.c.l.b16 %v372
    %v1127 = vunpack.c.h.b16 %v372
    %v1128 = vunpack.c.l.b16 %v373
    %v1129 = vunpack.c.h.b16 %v373
    %v1130 = vunpack.c.l.b16 %v374
    %v1131 = vunpack.c.h.b16 %v374
    %v1132 = vunpack.c.l.b16 %v375
    %v1133 = vunpack.c.h.b16 %v375
    %v1134 = vunpack.c.l.b16 %v376
    %v1135 = vunpack.c.h.b16 %v376
    %v1136 = vunpack.c.l.b16 %v377
    %v1137 = vunpack.c.h.b16 %v377
    %v1138 = vunpack.c.l.b16 %v378
    %v1139 = vunpack.c.h.b16 %v378
    %v1140 = vunpack.c.l.b16 %v379
    %v1141 = vunpack.c.h.b16 %v379
    %v1142 = vunpack.c.l.b16 %v380
    %v1143 = vunpack.c.h.b16 %v380
    %v1144 = vunpack.c.l.b16 %v381
    %v1145 = vunpack.c.h.b16 %v381
    %v1146 = vunpack.c.l.b16 %v382
    %v1147 = vunpack.c.h.b16 %v382
    %v1148 = vunpack.c.l.b16 %v383
    %v1149 = vunpack.c.h.b16 %v383
    %v1150 = vunpack.c.l.b16 %v384
    %v1151 = vunpack.c.h.b16 %v384
    %v1152 = vunpack.c.l.b16 %v385
    %v1153 = vunpack.c.h.b16 %v385
    %v1154 = vunpack.c.l.b16 %v386
    %v1155 = vunpack.c.h.b16 %v386
    %v1156 = vunpack.c.l.b16 %v387
    %v1157 = vunpack.c.h.b16 %v387
    %v1158 = vunpack.c.l.b16 %v388
    %v1159 = vunpack.c.h.b16 %v388
    %v1160 = vunpack.c.l.b16 %v389
    %v1161 = vunpack.c.h.b16 %v389
    %v1162 = vunpack.c.l.b16 %v390
    %v1163 = vunpack.c.h.b16 %v390
    %v1164 = vunpack.c.l.b16 %v391
    %v1165 = vunpack.c.h.b16 %v391
    %v1166 = vunpack.c.l.b16 %v392
    %v1167 = vunpack.c.h.b16 %v392
    %v1168 = vunpack.c.l.b16 %v393
    %v1169 = vunpack.c.h.b16 %v393
    %v1170 = vunpack.c.l.b16 %v394
    %v1171 = vunpack.c.h.b16 %v394
    %v1172 = vunpack.c.l.b16 %v395
    %v1173 = vunpack.c.h.b16 %v395
    %v1174 = vunpack.c.l.b16 %v396
    %v1175 = vunpack.c.h.b16 %v396
    %v1176 = vunpack.c.l.b16 %v397
    %v1177 = vunpack.c.h.b16 %v397
    %v1178 = vunpack.c.l.b16 %v398
    %v1179 = vunpack.c.h.b16 %v398
    %v1180 = vunpack.c.l.b16 %v399
    %v1181 = vunpack.c.h.b16 %v399
    %v1182 = vunpack.c.l.b16 %v400
    %v1183 = vunpack.c.h.b16 %v400
    %v1184 = vunpack.c.l.b16 %v401
    %v1185 = vunpack.c.h.b16 %v401
    %v1186 = vunpack.c.l.b16 %v402
    %v1187 = vunpack.c.h.b16 %v402
    %v1188 = vunpack.c.l.b16 %v403
    %v1189 = vunpack.c.h.b16 %v403
    %v1190 = vunpack.c.l.b16 %v404
    %v1191 = vunpack.c.h.b16 %v404
    %v1192 = vunpack.c.l.b16 %v405
    %v1193 = vunpack.c.h.b16 %v405
    %v1194 = vunpack.c.l.b16 %v406
    %v1195 = vunpack.c.h.b16 %v406
    %v1196 = vunpack.c.l.b16 %v407
    %v1197 = vunpack.c.h.b16 %v407
    %v1198 = vunpack.c.l.b16 %v408
    %v1199 = vunpack.c.h.b16 %v408
    %v1200 = vunpack.c.l.b16 %v409
    %v1201 = vunpack.c.h.b16 %v409
    %v1202 = vunpack.c.l.b16 %v410
    %v1203 = vunpack.c.h.b16 %v410
    %v1204 = vunpack.c.l.b16 %v411
    %v1205 = vunpack.c.h.b16 %v411
    %v1206 = vunpack.c.l.b16 %v412
    %v1207 = vunpack.c.h.b16 %v412
    %v1208 = vunpack.c.l.b16 %v413
    %v1209 = vunpack.c.h.b16 %v413
    %v1210 = vunpack.c.l.b16 %v414
    %v1211 = vunpack.c.h.b16 %v414
    %v1212 = vunpack.c.l.b16 %v415
    %v1213 = vunpack.c.h.b16 %v415
    %v1214 = vunpack.c.l.b16 %v416
    %v1215 = vunpack.c.h.b16 %v416
    %v1216 = vunpack.c.l.b16 %v417
    %v1217 = vunpack.c.h.b16 %v417
    %v1218 = vunpack.c.l.b16 %v418
    %v1219 = vunpack.c.h.b16 %v418
    %v1220 = vunpack.c.l.b16 %v419
    %v1221 = vunpack.c.h.b16 %v419
    %v1222 = vunpack.c.l.b16 %v420
    %v1223 = vunpack.c.h.b16 %v420
    %v1224 = vunpack.c.l.b16 %v421
    %v1225 = vunpack.c.h.b16 %v421
    %v1226 = vunpack.c.l.b16 %v422
    %v1227 = vunpack.c.h.b16 %v422
    %v1228 = vunpack.c.l.b16 %v423
    %v1229 = vunpack.c.h.b16 %v423
    %v1230 = vunpack.c.l.b16 %v424
    %v1231 = vunpack.c.h.b16 %v424
    %v1232 = vunpack.c.l.b16 %v425
    %v1233 = vunpack.c.h.b16 %v425
    %v1234 = vunpack.c.l.b16 %v426
    %v1235 = vunpack.c.h.b16 %v426
    %v1236 = vunpack.c.l.b16 %v427
    %v1237 = vunpack.c.h.b16 %v427
    %v1238 = vunpack.c.l.b16 %v428
    %v1239 = vunpack.c.h.b16 %v428
    %v1240 = vunpack.c.l.b16 %v429
    %v1241 = vunpack.c.h.b16 %v429
    %v1242 = vunpack.c.l.b16 %v430
    %v1243 = vunpack.c.h.b16 %v430
    %v1244 = vunpack.c.l.b16 %v431
    %v1245 = vunpack.c.h.b16 %v431
    %v1246 = vunpack.c.l.b16 %v432
    %v1247 = vunpack.c.h.b16 %v432
    %v1248 = vunpack.c.l.b16 %v433
    %v1249 = vunpack.c.h.b16 %v433
    %v1250 = vunpack.c.l.b16 %v434
    %v1251 = vunpack.c.h.b16 %v434
    %v1252 = vunpack.c.l.b16 %v435
    %v1253 = vunpack.c.h.b16 %v435
    %v1254 = vunpack.c.l.b16 %v436
    %v1255 = vunpack.c.h.b16 %v436
    %v1256 = vunpack.c.l.b16 %v437
    %v1257 = vunpack.c.h.b16 %v437
    %v1258 = vunpack.c.l.b16 %v438
    %v1259 = vunpack.c.h.b16 %v438
    %v1260 = vunpack.c.l.b16 %v439
    %v1261 = vunpack.c.h.b16 %v439
    %v1262 = vunpack.c.l.b16 %v440
    %v1263 = vunpack.c.h.b16 %v440
    %v1264 = vunpack.c.l.b16 %v441
    %v1265 = vunpack.c.h.b16 %v441
    %v1266 = vunpack.c.l.b16 %v442
    %v1267 = vunpack.c.h.b16 %v442
    %v1268 = vunpack.c.l.b16 %v443
    %v1269 = vunpack.c.h.b16 %v443
    %v1270 = vunpack.c.l.b16 %v444
    %v1271 = vunpack.c.h.b16 %v444
    %v1272 = vunpack.c.l.b16 %v445
    %v1273 = vunpack.c.h.b16 %v445
    %v1274 = vunpack.c.l.b16 %v446
    %v1275 = vunpack.c.h.b16 %v446
    %v1276 = vunpack.c.l.b16 %v447
    %v1277 = vunpack.c.h.b16 %v447
    %v1278 = vunpack.c.l.b16 %v448
    %v1279 = vunpack.c.h.b16 %v448
    %v1280 = vunpack.c.l.b16 %v449
    %v1281 = vunpack.c.h.b16 %v449
    %v1282 = vunpack.c.l.b16 %v450
    %v1283 = vunpack.c.h.b16 %v450
    %v1284 = vunpack.c.l.b16 %v451
    %v1285 = vunpack.c.h.b16 %v451
    %v1286 = vunpack.c.l.b16 %v452
    %v1287 = vunpack.c.h.b16 %v452
    %v1288 = vunpack.c.l.b16 %v453
    %v1289 = vunpack.c.h.b16 %v453
    %v1290 = vunpack.c.l.b16 %v454
    %v1291 = vunpack.c.h.b16 %v454
    %v1292 = vunpack.c.l.b16 %v455
    %v1293 = vunpack.c.h.b16 %v455
    %v1294 = vunpack.c.l.b16 %v456
    %v1295 = vunpack.c.h.b16 %v456
    %v1296 = vunpack.c.l.b16 %v457
    %v1297 = vunpack.c.h.b16 %v457
    %v1298 = vunpack.c.l.b16 %v458
    %v1299 = vunpack.c.h.b16 %v458
    %v1300 = vunpack.c.l.b16 %v459
    %v1301 = vunpack.c.h.b16 %v459
    %v1302 = vunpack.c.l.b16 %v460
    %v1303 = vunpack.c.h.b16 %v460
    %v1304 = vunpack.c.l.b16 %v461
    %v1305 = vunpack.c.h.b16 %v461
    %v1306 = vunpack.c.l.b16 %v462
    %v1307 = vunpack.c.h.b16 %v462
    %v1308 = vunpack.c.l.b16 %v463
    %v1309 = vunpack.c.h.b16 %v463
    %v1310 = vunpack.c.l.b16 %v464
    %v1311 = vunpack.c.h.b16 %v464
    %v1312 = vunpack.c.l.b16 %v465
    %v1313 = vunpack.c.h.b16 %v465
    %v1314 = vunpack.c.l.b16 %v466
    %v1315 = vunpack.c.h.b16 %v466
    %v1316 = vunpack.c.l.b16 %v467
    %v1317 = vunpack.c.h.b16 %v467
    %v1318 = vunpack.c.l.b16 %v468
    %v1319 = vunpack.c.h.b16 %v468
    %v1320 = vunpack.c.l.b16 %v469
    %v1321 = vunpack.c.h.b16 %v469
    %v1322 = vunpack.c.l.b16 %v470
    %v1323 = vunpack.c.h.b16 %v470
    %v1324 = vunpack.c.l.b16 %v471
    %v1325 = vunpack.c.h.b16 %v471
    %v1326 = vunpack.c.l.b16 %v472
    %v1327 = vunpack.c.h.b16 %v472
    %v1328 = vpack.c.b16 %v820, %v816
    %v1329 = vpack.c.b16 %v821, %v817
    %v1330 = vpack.c.b16 %v822, %v818
    %v1331 = vpack.c.b16 %v823, %v819
    %v1332 = vpack.c.b16 %v828, %v824
    %v1333 = vpack.c.b16 %v829, %v825
    %v1334 = vpack.c.b16 %v830, %v826
    %v1335 = vpack.c.b16 %v831, %v827
    %v1336 = vpack.c.b16 %v836, %v832
    %v1337 = vpack.c.b16 %v837, %v833
    %v1338 = vpack.c.b16 %v838, %v834
    %v1339 = vpack.c.b16 %v839, %v835
    %v1340 = vpack.c.b16 %v844, %v840
    %v1341 = vpack.c.b16 %v845, %v841
    %v1342 = vpack.c.b16 %v846, %v842
    %v1343 = vpack.c.b16 %v847, %v843
    %v1344 = vpack.c.b16 %v852, %v848
    %v1345 = vpack.c.b16 %v853, %v849
    %v1346 = vpack.c.b16 %v854, %v850
    %v1347 = vpack.c.b16 %v855, %v851
    %v1348 = vpack.c.b16 %v860, %v856
    %v1349 = vpack.c.b16 %v861, %v857
    %v1350 = vpack.c.b16 %v862, %v858
    %v1351 = vpack.c.b16 %v863, %v859
    %v1352 = vpack.c.b16 %v868, %v864
    %v1353 = vpack.c.b16 %v869, %v865
    %v1354 = vpack.c.b16 %v870, %v866
    %v1355 = vpack.c.b16 %v871, %v867
    %v1356 = vpack.c.b16 %v876, %v872
    %v1357 = vpack.c.b16 %v877, %v873
    %v1358 = vpack.c.b16 %v878, %v874
    %v1359 = vpack.c.b16 %v879, %v875
    %v1360 = vpack.c.b16 %v884, %v880
    %v1361 = vpack.c.b16 %v885, %v881
    %v1362 = vpack.c.b16 %v886, %v882
    %v1363 = vpack.c.b16 %v887, %v883
    %v1364 = vpack.c.b16 %v892, %v888
    %v1365 = vpack.c.b16 %v893, %v889
    %v1366 = vpack.c.b16 %v894, %v890
    %v1367 = vpack.c.b16 %v895, %v891
    %v1368 = vpack.c.b16 %v900, %v896
    %v1369 = vpack.c.b16 %v901, %v897
    %v1370 = vpack.c.b16 %v902, %v898
    %v1371 = vpack.c.b16 %v903, %v899
    %v1372 = vpack.c.b16 %v908, %v904
    %v1373 = vpack.c.b16 %v909, %v905
    %v1374 = vpack.c.b16 %v910, %v906
    %v1375 = vpack.c.b16 %v911, %v907
    %v1376 = vpack.c.b16 %v916, %v912
    %v1377 = vpack.c.b16 %v917, %v913
    %v1378 = vpack.c.b16 %v918, %v914
    %v1379 = vpack.c.b16 %v919, %v915
    %v1380 = vpack.c.b16 %v924, %v920
    %v1381 = vpack.c.b16 %v925, %v921
    %v1382 = vpack.c.b16 %v926, %v922
    %v1383 = vpack.c.b16 %v927, %v923
    %v1384 = vpack.c.b16 %v932, %v928
    %v1385 = vpack.c.b16 %v933, %v929
    %v1386 = vpack.c.b16 %v934, %v930
    %v1387 = vpack.c.b16 %v935, %v931
    %v1388 = vpack.c.b16 %v940, %v936
    %v1389 = vpack.c.b16 %v941, %v937
    %v1390 = vpack.c.b16 %v942, %v938
    %v1391 = vpack.c.b16 %v943, %v939
    %v1392 = vpack.c.b16 %v948, %v944
    %v1393 = vpack.c.b16 %v949, %v945
    %v1394 = vpack.c.b16 %v950, %v946
    %v1395 = vpack.c.b16 %v951, %v947
    %v1396 = vpack.c.b16 %v956, %v952
    %v1397 = vpack.c.b16 %v957, %v953
    %v1398 = vpack.c.b16 %v958, %v954
    %v1399 = vpack.c.b16 %v959, %v955
    %v1400 = vpack.c.b16 %v964, %v960
    %v1401 = vpack.c.b16 %v965, %v961
    %v1402 = vpack.c.b16 %v966, %v962
    %v1403 = vpack.c.b16 %v967, %v963
    %v1404 = vpack.c.b16 %v972, %v968
    %v1405 = vpack.c.b16 %v973, %v969
    %v1406 = vpack.c.b16 %v974, %v970
    %v1407 = vpack.c.b16 %v975, %v971
    %v1408 = vpack.c.b16 %v980, %v976
    %v1409 = vpack.c.b16 %v981, %v977
    %v1410 = vpack.c.b16 %v982, %v978
    %v1411 = vpack.c.b16 %v983, %v979
    %v1412 = vpack.c.b16 %v988, %v984
    %v1413 = vpack.c.b16 %v989, %v985
    %v1414 = vpack.c.b16 %v990, %v986
    %v1415 = vpack.c.b16 %v991, %v987
    %v1416 = vpack.c.b16 %v996, %v992
    %v1417 = vpack.c.b16 %v997, %v993
    %v1418 = vpack.c.b16 %v998, %v994
    %v1419 = vpack.c.b16 %v999, %v995
    %v1420 = vpack.c.b16 %v1004, %v1000
    %v1421 = vpack.c.b16 %v1005, %v1001
    %v1422 = vpack.c.b16 %v1006, %v1002
    %v1423 = vpack.c.b16 %v1007, %v1003
    %v1424 = vpack.c.b16 %v1012, %v1008
    %v1425 = vpack.c.b16 %v1013, %v1009
    %v1426 = vpack.c.b16 %v1014, %v1010
    %v1427 = vpack.c.b16 %v1015, %v1011
    %v1428 = vpack.c.b16 %v1020, %v1016
    %v1429 = vpack.c.b16 %v1021, %v1017
    %v1430 = vpack.c.b16 %v1022, %v1018
    %v1431 = vpack.c.b16 %v1023, %v1019
    %v1432 = vpack.c.b16 %v1028, %v1024
    %v1433 = vpack.c.b16 %v1029, %v1025
    %v1434 = vpack.c.b16 %v1030, %v1026
    %v1435 = vpack.c.b16 %v1031, %v1027
    %v1436 = vpack.c.b16 %v1036, %v1032
    %v1437 = vpack.c.b16 %v1037, %v1033
    %v1438 = vpack.c.b16 %v1038, %v1034
    %v1439 = vpack.c.b16 %v1039, %v1035
    %v1440 = vpack.c.b16 %v1044, %v1040
    %v1441 = vpack.c.b16 %v1045, %v1041
    %v1442 = vpack.c.b16 %v1046, %v1042
    %v1443 = vpack.c.b16 %v1047, %v1043
    %v1444 = vpack.c.b16 %v1052, %v1048
    %v1445 = vpack.c.b16 %v1053, %v1049
    %v1446 = vpack.c.b16 %v1054, %v1050
    %v1447 = vpack.c.b16 %v1055, %v1051
    %v1448 = vpack.c.b16 %v1060, %v1056
    %v1449 = vpack.c.b16 %v1061, %v1057
    %v1450 = vpack.c.b16 %v1062, %v1058
    %v1451 = vpack.c.b16 %v1063, %v1059
    %v1452 = vpack.c.b16 %v1068, %v1064
    %v1453 = vpack.c.b16 %v1069, %v1065
    %v1454 = vpack.c.b16 %v1070, %v1066
    %v1455 = vpack.c.b16 %v1071, %v1067
    %v1456 = vpack.c.b16 %v1076, %v1072
    %v1457 = vpack.c.b16 %v1077, %v1073
    %v1458 = vpack.c.b16 %v1078, %v1074
    %v1459 = vpack.c.b16 %v1079, %v1075
    %v1460 = vpack.c.b16 %v1084, %v1080
    %v1461 = vpack.c.b16 %v1085, %v1081
    %v1462 = vpack.c.b16 %v1086, %v1082
    %v1463 = vpack.c.b16 %v1087, %v1083
    %v1464 = vpack.c.b16 %v1092, %v1088
    %v1465 = vpack.c.b16 %v1093, %v1089
    %v1466 = vpack.c.b16 %v1094, %v1090
    %v1467 = vpack.c.b16 %v1095, %v1091
    %v1468 = vpack.c.b16 %v1100, %v1096
    %v1469 = vpack.c.b16 %v1101, %v1097
    %v1470 = vpack.c.b16 %v1102, %v1098
    %v1471 = vpack.c.b16 %v1103, %v1099
    %v1472 = vpack.c.b16 %v1108, %v1104
    %v1473 = vpack.c.b16 %v1109, %v1105
    %v1474 = vpack.c.b16 %v1110, %v1106
    %v1475 = vpack.c.b16 %v1111, %v1107
    %v1476 = vpack.c.b16 %v1116, %v1112
    %v1477 = vpack.c.b16 %v1117, %v1113
    %v1478 = vpack.c.b16 %v1118, %v1114
    %v1479 = vpack.c.b16 %v1119, %v1115
    %v1480 = vpack.c.b16 %v1124, %v1120
    %v1481 = vpack.c.b16 %v1125, %v1121
    %v1482 = vpack.c.b16 %v1126, %v1122
    %v1483 = vpack.c.b16 %v1127, %v1123
    %v1484 = vpack.c.b16 %v1132, %v1128
    %v1485 = vpack.c.b16 %v1133, %v1129
    %v1486 = vpack.c.b16 %v1134, %v1130
    %v1487 = vpack.c.b16 %v1135, %v1131
    %v1488 = vpack.c.b16 %v1140, %v1136
    %v1489 = vpack.c.b16 %v1141, %v1137
    %v1490 = vpack.c.b16 %v1142, %v1138
    %v1491 = vpack.c.b16 %v1143, %v1139
    %v1492 = vpack.c.b16 %v1148, %v1144
    %v1493 = vpack.c.b16 %v1149, %v1145
    %v1494 = vpack.c.b16 %v1150, %v1146
    %v1495 = vpack.c.b16 %v1151, %v1147
    %v1496 = vpack.c.b16 %v1156, %v1152
    %v1497 = vpack.c.b16 %v1157, %v1153
    %v1498 = vpack.c.b16 %v1158, %v1154
    %v1499 = vpack.c.b16 %v1159, %v1155
    %v1500 = vpack.c.b16 %v1164, %v1160
    %v1501 = vpack.c.b16 %v1165, %v1161
    %v1502 = vpack.c.b16 %v1166, %v1162
    %v1503 = vpack.c.b16 %v1167, %v1163
    %v1504 = vpack.c.b16 %v1172, %v1168
    %v1505 = vpack.c.b16 %v1173, %v1169
    %v1506 = vpack.c.b16 %v1174, %v1170
    %v1507 = vpack.c.b16 %v1175, %v1171
    %v1508 = vpack.c.b16 %v1180, %v1176
    %v1509 = vpack.c.b16 %v1181, %v1177
    %v1510 = vpack.c.b16 %v1182, %v1178
    %v1511 = vpack.c.b16 %v1183, %v1179
    %v1512 = vpack.c.b16 %v1188, %v1184
    %v1513 = vpack.c.b16 %v1189, %v1185
    %v1514 = vpack.c.b16 %v1190, %v1186
    %v1515 = vpack.c.b16 %v1191, %v1187
    %v1516 = vpack.c.b16 %v1196, %v1192
    %v1517 = vpack.c.b16 %v1197, %v1193
    %v1518 = vpack.c.b16 %v1198, %v1194
    %v1519 = vpack.c.b16 %v1199, %v1195
    %v1520 = vpack.c.b16 %v1204, %v1200
    %v1521 = vpack.c.b16 %v1205, %v1201
    %v1522 = vpack.c.b16 %v1206, %v1202
    %v1523 = vpack.c.b16 %v1207, %v1203
    %v1524 = vpack.c.b16 %v1212, %v1208
    %v1525 = vpack.c.b16 %v1213, %v1209
    %v1526 = vpack.c.b16 %v1214, %v1210
    %v1527 = vpack.c.b16 %v1215, %v1211
    %v1528 = vpack.c.b16 %v1220, %v1216
    %v1529 = vpack.c.b16 %v1221, %v1217
    %v1530 = vpack.c.b16 %v1222, %v1218
    %v1531 = vpack.c.b16 %v1223, %v1219
    %v1532 = vpack.c.b16 %v1228, %v1224
    %v1533 = vpack.c.b16 %v1229, %v1225
    %v1534 = vpack.c.b16 %v1230, %v1226
    %v1535 = vpack.c.b16 %v1231, %v1227
    %v1536 = vpack.c.b16 %v1236, %v1232
    %v1537 = vpack.c.b16 %v1237, %v1233
    %v1538 = vpack.c.b16 %v1238, %v1234
    %v1539 = vpack.c.b16 %v1239, %v1235
    %v1540 = vpack.c.b16 %v1244, %v1240
    %v1541 = vpack.c.b16 %v1245, %v1241
    %v1542 = vpack.c.b16 %v1246, %v1242
    %v1543 = vpack.c.b16 %v1247, %v1243
    %v1544 = vpack.c.b16 %v1252, %v1248
    %v1545 = vpack.c.b16 %v1253, %v1249
    %v1546 = vpack.c.b16 %v1254, %v1250
    %v1547 = vpack.c.b16 %v1255, %v1251
    %v1548 = vpack.c.b16 %v1260, %v1256
    %v1549 = vpack.c.b16 %v1261, %v1257
    %v1550 = vpack.c.b16 %v1262, %v1258
    %v1551 = vpack.c.b16 %v1263, %v1259
    %v1552 = vpack.c.b16 %v1268, %v1264
    %v1553 = vpack.c.b16 %v1269, %v1265
    %v1554 = vpack.c.b16 %v1270, %v1266
    %v1555 = vpack.c.b16 %v1271, %v1267
    %v1556 = vpack.c.b16 %v1276, %v1272
    %v1557 = vpack.c.b16 %v1277, %v1273
    %v1558 = vpack.c.b16 %v1278, %v1274
    %v1559 = vpack.c.b16 %v1279, %v1275
    %v1560 = vpack.c.b16 %v1284, %v1280
    %v1561 = vpack.c.b16 %v1285, %v1281
    %v1562 = vpack.c.b16 %v1286, %v1282
    %v1563 = vpack.c.b16 %v1287, %v1283
    %v1564 = vpack.c.b16 %v1292, %v1288
    %v1565 = vpack.c.b16 %v1293, %v1289
    %v1566 = vpack.c.b16 %v1294, %v1290
    %v1567 = vpack.c.b16 %v1295, %v1291
    %v1568 = vpack.c.b16 %v1300, %v1296
    %v1569 = vpack.c.b16 %v1301, %v1297
    %v1570 = vpack.c.b16 %v1302, %v1298
    %v1571 = vpack.c.b16 %v1303, %v1299
    %v1572 = vpack.c.b16 %v1308, %v1304
    %v1573 = vpack.c.b16 %v1309, %v1305
    %v1574 = vpack.c.b16 %v1310, %v1306
    %v1575 = vpack.c.b16 %v1311, %v1307
    %v1576 = vpack.c.b16 %v1316, %v1312
    %v1577 = vpack.c.b16 %v1317, %v1313
    %v1578 = vpack.c.b16 %v1318, %v1314
    %v1579 = vpack.c.b16 %v1319, %v1315
    %v1580 = vpack.c.b16 %v1324, %v1320
    %v1581 = vpack.c.b16 %v1325, %v1321
    %v1582 = vpack.c.b16 %v1326, %v1322
    %v1583 = vpack.c.b16 %v1327, %v1323
    %1840 = vmatprep.subr.bf16.mxu0 %v1329
    %1841 = vmatpush1.bf16.msra.mxu0 %v1328
    %1842 = vmatprep.subr.bf16.mxu0 %v1333
    %1843 = vmatpush1.bf16.msra.mxu0 %v1332
    %1844 = vmatprep.subr.bf16.mxu0 %v1337
    %1845 = vmatpush1.bf16.msra.mxu0 %v1336
    %1846 = vmatprep.subr.bf16.mxu0 %v1341
    %1847 = vmatpush1.bf16.msra.mxu0 %v1340
    %1848 = vmatprep.subr.bf16.mxu0 %v1345
    %1849 = vmatpush1.bf16.msra.mxu0 %v1344
    %1850 = vmatprep.subr.bf16.mxu0 %v1349
    %1851 = vmatpush1.bf16.msra.mxu0 %v1348
    %1852 = vmatprep.subr.bf16.mxu0 %v1353
    %1853 = vmatpush1.bf16.msra.mxu0 %v1352
    %1854 = vmatprep.subr.bf16.mxu0 %v1357
    %1855 = vmatpush1.bf16.msra.mxu0 %v1356
    %1856 = vmatprep.subr.bf16.mxu0 %v1361
    %1857 = vmatpush1.bf16.msra.mxu0 %v1360
    %1858 = vmatprep.subr.bf16.mxu0 %v1365
    %1859 = vmatpush1.bf16.msra.mxu0 %v1364
    %1860 = vmatprep.subr.bf16.mxu0 %v1369
    %1861 = vmatpush1.bf16.msra.mxu0 %v1368
    %1862 = vmatprep.subr.bf16.mxu0 %v1373
    %1863 = vmatpush1.bf16.msra.mxu0 %v1372
    %1864 = vmatprep.subr.bf16.mxu0 %v1377
    %1865 = vmatpush1.bf16.msra.mxu0 %v1376
    %1866 = vmatprep.subr.bf16.mxu0 %v1381
    %1867 = vmatpush1.bf16.msra.mxu0 %v1380
    %1868 = vmatprep.subr.bf16.mxu0 %v1385
    %1869 = vmatpush1.bf16.msra.mxu0 %v1384
    %1870 = vmatprep.subr.bf16.mxu0 %v1389
    %1871 = vmatpush1.bf16.msra.mxu0 %v1388
    %1872 = vmatprep.mubr.bf16.mxu0 %v545
    %1873 = vmatmul.mubr.bf16.gmra.mrb[0].mxu0 %v544
    %v1874 = vpop.f32.mrb[0].mxu0
    %v1875 = vadd.f32 %v478, %v1874
    %v1876 = vpop.f32.mrb[0].mxu0
    %v1877 = vadd.f32 %v482, %v1876
    %v1878 = vpop.f32.mrb[0].mxu0
    %v1879 = vpop.f32.mrb[0].mxu0
    %1880 = vdwg.mxu0
    %1881 = vmatprep.subr.bf16.mxu0 %v1393
    %1882 = vmatpush1.bf16.msra.mxu0 %v1392
    %1883 = vmatprep.subr.bf16.mxu0 %v1397
    %1884 = vmatpush1.bf16.msra.mxu0 %v1396
    %1885 = vmatprep.subr.bf16.mxu0 %v1401
    %1886 = vmatpush1.bf16.msra.mxu0 %v1400
    %1887 = vmatprep.subr.bf16.mxu0 %v1405
    %1888 = vmatpush1.bf16.msra.mxu0 %v1404
    %1889 = vmatprep.subr.bf16.mxu0 %v1409
    %1890 = vmatpush1.bf16.msra.mxu0 %v1408
    %1891 = vmatprep.subr.bf16.mxu0 %v1413
    %1892 = vmatpush1.bf16.msra.mxu0 %v1412
    %1893 = vmatprep.subr.bf16.mxu0 %v1417
    %1894 = vmatpush1.bf16.msra.mxu0 %v1416
    %1895 = vmatprep.subr.bf16.mxu0 %v1421
    %1896 = vmatpush1.bf16.msra.mxu0 %v1420
    %1897 = vmatprep.subr.bf16.mxu0 %v1425
    %1898 = vmatpush1.bf16.msra.mxu0 %v1424
    %1899 = vmatprep.subr.bf16.mxu0 %v1429
    %1900 = vmatpush1.bf16.msra.mxu0 %v1428
    %1901 = vmatprep.subr.bf16.mxu0 %v1433
    %1902 = vmatpush1.bf16.msra.mxu0 %v1432
    %1903 = vmatprep.subr.bf16.mxu0 %v1437
    %1904 = vmatpush1.bf16.msra.mxu0 %v1436
    %1905 = vmatprep.subr.bf16.mxu0 %v1441
    %1906 = vmatpush1.bf16.msra.mxu0 %v1440
    %1907 = vmatprep.subr.bf16.mxu0 %v1445
    %1908 = vmatpush1.bf16.msra.mxu0 %v1444
    %1909 = vmatprep.subr.bf16.mxu0 %v1449
    %1910 = vmatpush1.bf16.msra.mxu0 %v1448
    %1911 = vmatprep.subr.bf16.mxu0 %v1453
    %1912 = vmatpush1.bf16.msra.mxu0 %v1452
    %1913 = vmatprep.mubr.bf16.mxu0 %v547
    %1914 = vmatmul.mubr.bf16.gmra.mrb[0].mxu0 %v546
    %v1915 = vpop.f32.mrb[0].mxu0
    %v1916 = vadd.f32 %v1875, %v1915
    %v1917 = vpop.f32.mrb[0].mxu0
    %v1918 = vadd.f32 %v1877, %v1917
    %v1919 = vpop.f32.mrb[0].mxu0
    %v1920 = vpop.f32.mrb[0].mxu0
    %1921 = vdwg.mxu0
    %1922 = vmatprep.subr.bf16.mxu0 %v1457
    %1923 = vmatpush1.bf16.msra.mxu0 %v1456
    %1924 = vmatprep.subr.bf16.mxu0 %v1461
    %1925 = vmatpush1.bf16.msra.mxu0 %v1460
    %1926 = vmatprep.subr.bf16.mxu0 %v1465
    %1927 = vmatpush1.bf16.msra.mxu0 %v1464
    %1928 = vmatprep.subr.bf16.mxu0 %v1469
    %1929 = vmatpush1.bf16.msra.mxu0 %v1468
    %1930 = vmatprep.subr.bf16.mxu0 %v1473
    %1931 = vmatpush1.bf16.msra.mxu0 %v1472
    %1932 = vmatprep.subr.bf16.mxu0 %v1477
    %1933 = vmatpush1.bf16.msra.mxu0 %v1476
    %1934 = vmatprep.subr.bf16.mxu0 %v1481
    %1935 = vmatpush1.bf16.msra.mxu0 %v1480
    %1936 = vmatprep.subr.bf16.mxu0 %v1485
    %1937 = vmatpush1.bf16.msra.mxu0 %v1484
    %1938 = vmatprep.subr.bf16.mxu0 %v1489
    %1939 = vmatpush1.bf16.msra.mxu0 %v1488
    %1940 = vmatprep.subr.bf16.mxu0 %v1493
    %1941 = vmatpush1.bf16.msra.mxu0 %v1492
    %1942 = vmatprep.subr.bf16.mxu0 %v1497
    %1943 = vmatpush1.bf16.msra.mxu0 %v1496
    %1944 = vmatprep.subr.bf16.mxu0 %v1501
    %1945 = vmatpush1.bf16.msra.mxu0 %v1500
    %1946 = vmatprep.subr.bf16.mxu0 %v1505
    %1947 = vmatpush1.bf16.msra.mxu0 %v1504
    %1948 = vmatprep.subr.bf16.mxu0 %v1509
    %1949 = vmatpush1.bf16.msra.mxu0 %v1508
    %1950 = vmatprep.subr.bf16.mxu0 %v1513
    %1951 = vmatpush1.bf16.msra.mxu0 %v1512
    %1952 = vmatprep.subr.bf16.mxu0 %v1517
    %1953 = vmatpush1.bf16.msra.mxu0 %v1516
    %1954 = vmatprep.mubr.bf16.mxu0 %v549
    %1955 = vmatmul.mubr.bf16.gmra.mrb[0].mxu0 %v548
    %v1956 = vpop.f32.mrb[0].mxu0
    %v1957 = vadd.f32 %v1916, %v1956
    %v1958 = vpop.f32.mrb[0].mxu0
    %v1959 = vadd.f32 %v1918, %v1958
    %v1960 = vpop.f32.mrb[0].mxu0
    %v1961 = vpop.f32.mrb[0].mxu0
    %1962 = vdwg.mxu0
    %1963 = vmatprep.subr.bf16.mxu0 %v1521
    %1964 = vmatpush1.bf16.msra.mxu0 %v1520
    %1965 = vmatprep.subr.bf16.mxu0 %v1525
    %1966 = vmatpush1.bf16.msra.mxu0 %v1524
    %1967 = vmatprep.subr.bf16.mxu0 %v1529
    %1968 = vmatpush1.bf16.msra.mxu0 %v1528
    %1969 = vmatprep.subr.bf16.mxu0 %v1533
    %1970 = vmatpush1.bf16.msra.mxu0 %v1532
    %1971 = vmatprep.subr.bf16.mxu0 %v1537
    %1972 = vmatpush1.bf16.msra.mxu0 %v1536
    %1973 = vmatprep.subr.bf16.mxu0 %v1541
    %1974 = vmatpush1.bf16.msra.mxu0 %v1540
    %1975 = vmatprep.subr.bf16.mxu0 %v1545
    %1976 = vmatpush1.bf16.msra.mxu0 %v1544
    %1977 = vmatprep.subr.bf16.mxu0 %v1549
    %1978 = vmatpush1.bf16.msra.mxu0 %v1548
    %1979 = vmatprep.subr.bf16.mxu0 %v1553
    %1980 = vmatpush1.bf16.msra.mxu0 %v1552
    %1981 = vmatprep.subr.bf16.mxu0 %v1557
    %1982 = vmatpush1.bf16.msra.mxu0 %v1556
    %1983 = vmatprep.subr.bf16.mxu0 %v1561
    %1984 = vmatpush1.bf16.msra.mxu0 %v1560
    %1985 = vmatprep.subr.bf16.mxu0 %v1565
    %1986 = vmatpush1.bf16.msra.mxu0 %v1564
    %1987 = vmatprep.subr.bf16.mxu0 %v1569
    %1988 = vmatpush1.bf16.msra.mxu0 %v1568
    %1989 = vmatprep.subr.bf16.mxu0 %v1573
    %1990 = vmatpush1.bf16.msra.mxu0 %v1572
    %1991 = vmatprep.subr.bf16.mxu0 %v1577
    %1992 = vmatpush1.bf16.msra.mxu0 %v1576
    %1993 = vmatprep.subr.bf16.mxu0 %v1581
    %1994 = vmatpush1.bf16.msra.mxu0 %v1580
    %1995 = vmatprep.mubr.bf16.mxu0 %v551
    %1996 = vmatmul.mubr.bf16.gmra.mrb[0].mxu0 %v550
    %v1997 = vpop.f32.mrb[0].mxu0
    %v1998 = vadd.f32 %v1957, %v1997
    %v1999 = vpop.f32.mrb[0].mxu0
    %v2000 = vadd.f32 %v1959, %v1999
    %v2001 = vpop.f32.mrb[0].mxu0
    %v2002 = vpop.f32.mrb[0].mxu0
    %2003 = vdwg.mxu0
    %2004 = vmatprep.subr.bf16.mxu0 %v1331
    %2005 = vmatpush1.bf16.msra.mxu0 %v1330
    %2006 = vmatprep.subr.bf16.mxu0 %v1335
    %2007 = vmatpush1.bf16.msra.mxu0 %v1334
    %2008 = vmatprep.subr.bf16.mxu0 %v1339
    %2009 = vmatpush1.bf16.msra.mxu0 %v1338
    %2010 = vmatprep.subr.bf16.mxu0 %v1343
    %2011 = vmatpush1.bf16.msra.mxu0 %v1342
    %2012 = vmatprep.subr.bf16.mxu0 %v1347
    %2013 = vmatpush1.bf16.msra.mxu0 %v1346
    %2014 = vmatprep.subr.bf16.mxu0 %v1351
    %2015 = vmatpush1.bf16.msra.mxu0 %v1350
    %2016 = vmatprep.subr.bf16.mxu0 %v1355
    %2017 = vmatpush1.bf16.msra.mxu0 %v1354
    %2018 = vmatprep.subr.bf16.mxu0 %v1359
    %2019 = vmatpush1.bf16.msra.mxu0 %v1358
    %2020 = vmatprep.subr.bf16.mxu0 %v1363
    %2021 = vmatpush1.bf16.msra.mxu0 %v1362
    %2022 = vmatprep.subr.bf16.mxu0 %v1367
    %2023 = vmatpush1.bf16.msra.mxu0 %v1366
    %2024 = vmatprep.subr.bf16.mxu0 %v1371
    %2025 = vmatpush1.bf16.msra.mxu0 %v1370
    %2026 = vmatprep.subr.bf16.mxu0 %v1375
    %2027 = vmatpush1.bf16.msra.mxu0 %v1374
    %2028 = vmatprep.subr.bf16.mxu0 %v1379
    %2029 = vmatpush1.bf16.msra.mxu0 %v1378
    %2030 = vmatprep.subr.bf16.mxu0 %v1383
    %2031 = vmatpush1.bf16.msra.mxu0 %v1382
    %2032 = vmatprep.subr.bf16.mxu0 %v1387
    %2033 = vmatpush1.bf16.msra.mxu0 %v1386
    %2034 = vmatprep.subr.bf16.mxu0 %v1391
    %2035 = vmatpush1.bf16.msra.mxu0 %v1390
    %2036 = vmatprep.mubr.bf16.mxu0 %v545
    %2037 = vmatmul.mubr.bf16.gmra.mrb[0].mxu0 %v544
    %v2038 = vpop.f32.mrb[0].mxu0
    %v2039 = vadd.f32 %v486, %v2038
    %v2040 = vpop.f32.mrb[0].mxu0
    %v2041 = vadd.f32 %v490, %v2040
    %v2042 = vpop.f32.mrb[0].mxu0
    %v2043 = vpop.f32.mrb[0].mxu0
    %2044 = vdwg.mxu0
    %2045 = vmatprep.subr.bf16.mxu0 %v1395
    %2046 = vmatpush1.bf16.msra.mxu0 %v1394
    %2047 = vmatprep.subr.bf16.mxu0 %v1399
    %2048 = vmatpush1.bf16.msra.mxu0 %v1398
    %2049 = vmatprep.subr.bf16.mxu0 %v1403
    %2050 = vmatpush1.bf16.msra.mxu0 %v1402
    %2051 = vmatprep.subr.bf16.mxu0 %v1407
    %2052 = vmatpush1.bf16.msra.mxu0 %v1406
    %2053 = vmatprep.subr.bf16.mxu0 %v1411
    %2054 = vmatpush1.bf16.msra.mxu0 %v1410
    %2055 = vmatprep.subr.bf16.mxu0 %v1415
    %2056 = vmatpush1.bf16.msra.mxu0 %v1414
    %2057 = vmatprep.subr.bf16.mxu0 %v1419
    %2058 = vmatpush1.bf16.msra.mxu0 %v1418
    %2059 = vmatprep.subr.bf16.mxu0 %v1423
    %2060 = vmatpush1.bf16.msra.mxu0 %v1422
    %2061 = vmatprep.subr.bf16.mxu0 %v1427
    %2062 = vmatpush1.bf16.msra.mxu0 %v1426
    %2063 = vmatprep.subr.bf16.mxu0 %v1431
    %2064 = vmatpush1.bf16.msra.mxu0 %v1430
    %2065 = vmatprep.subr.bf16.mxu0 %v1435
    %2066 = vmatpush1.bf16.msra.mxu0 %v1434
    %2067 = vmatprep.subr.bf16.mxu0 %v1439
    %2068 = vmatpush1.bf16.msra.mxu0 %v1438
    %2069 = vmatprep.subr.bf16.mxu0 %v1443
    %2070 = vmatpush1.bf16.msra.mxu0 %v1442
    %2071 = vmatprep.subr.bf16.mxu0 %v1447
    %2072 = vmatpush1.bf16.msra.mxu0 %v1446
    %2073 = vmatprep.subr.bf16.mxu0 %v1451
    %2074 = vmatpush1.bf16.msra.mxu0 %v1450
    %2075 = vmatprep.subr.bf16.mxu0 %v1455
    %2076 = vmatpush1.bf16.msra.mxu0 %v1454
    %2077 = vmatprep.mubr.bf16.mxu0 %v547
    %2078 = vmatmul.mubr.bf16.gmra.mrb[0].mxu0 %v546
    %v2079 = vpop.f32.mrb[0].mxu0
    %v2080 = vadd.f32 %v2039, %v2079
    %v2081 = vpop.f32.mrb[0].mxu0
    %v2082 = vadd.f32 %v2041, %v2081
    %v2083 = vpop.f32.mrb[0].mxu0
    %v2084 = vpop.f32.mrb[0].mxu0
    %2085 = vdwg.mxu0
    %2086 = vmatprep.subr.bf16.mxu0 %v1459
    %2087 = vmatpush1.bf16.msra.mxu0 %v1458
    %2088 = vmatprep.subr.bf16.mxu0 %v1463
    %2089 = vmatpush1.bf16.msra.mxu0 %v1462
    %2090 = vmatprep.subr.bf16.mxu0 %v1467
    %2091 = vmatpush1.bf16.msra.mxu0 %v1466
    %2092 = vmatprep.subr.bf16.mxu0 %v1471
    %2093 = vmatpush1.bf16.msra.mxu0 %v1470
    %2094 = vmatprep.subr.bf16.mxu0 %v1475
    %2095 = vmatpush1.bf16.msra.mxu0 %v1474
    %2096 = vmatprep.subr.bf16.mxu0 %v1479
    %2097 = vmatpush1.bf16.msra.mxu0 %v1478
    %2098 = vmatprep.subr.bf16.mxu0 %v1483
    %2099 = vmatpush1.bf16.msra.mxu0 %v1482
    %2100 = vmatprep.subr.bf16.mxu0 %v1487
    %2101 = vmatpush1.bf16.msra.mxu0 %v1486
    %2102 = vmatprep.subr.bf16.mxu0 %v1491
    %2103 = vmatpush1.bf16.msra.mxu0 %v1490
    %2104 = vmatprep.subr.bf16.mxu0 %v1495
    %2105 = vmatpush1.bf16.msra.mxu0 %v1494
    %2106 = vmatprep.subr.bf16.mxu0 %v1499
    %2107 = vmatpush1.bf16.msra.mxu0 %v1498
    %2108 = vmatprep.subr.bf16.mxu0 %v1503
    %2109 = vmatpush1.bf16.msra.mxu0 %v1502
    %2110 = vmatprep.subr.bf16.mxu0 %v1507
    %2111 = vmatpush1.bf16.msra.mxu0 %v1506
    %2112 = vmatprep.subr.bf16.mxu0 %v1511
    %2113 = vmatpush1.bf16.msra.mxu0 %v1510
    %2114 = vmatprep.subr.bf16.mxu0 %v1515
    %2115 = vmatpush1.bf16.msra.mxu0 %v1514
    %2116 = vmatprep.subr.bf16.mxu0 %v1519
    %2117 = vmatpush1.bf16.msra.mxu0 %v1518
    %2118 = vmatprep.mubr.bf16.mxu0 %v549
    %2119 = vmatmul.mubr.bf16.gmra.mrb[0].mxu0 %v548
    %v2120 = vpop.f32.mrb[0].mxu0
    %v2121 = vadd.f32 %v2080, %v2120
    %v2122 = vpop.f32.mrb[0].mxu0
    %v2123 = vadd.f32 %v2082, %v2122
    %v2124 = vpop.f32.mrb[0].mxu0
    %v2125 = vpop.f32.mrb[0].mxu0
    %2126 = vdwg.mxu0
    %2127 = vmatprep.subr.bf16.mxu0 %v1523
    %2128 = vmatpush1.bf16.msra.mxu0 %v1522
    %2129 = vmatprep.subr.bf16.mxu0 %v1527
    %2130 = vmatpush1.bf16.msra.mxu0 %v1526
    %2131 = vmatprep.subr.bf16.mxu0 %v1531
    %2132 = vmatpush1.bf16.msra.mxu0 %v1530
    %2133 = vmatprep.subr.bf16.mxu0 %v1535
    %2134 = vmatpush1.bf16.msra.mxu0 %v1534
    %2135 = vmatprep.subr.bf16.mxu0 %v1539
    %2136 = vmatpush1.bf16.msra.mxu0 %v1538
    %2137 = vmatprep.subr.bf16.mxu0 %v1543
    %2138 = vmatpush1.bf16.msra.mxu0 %v1542
    %2139 = vmatprep.subr.bf16.mxu0 %v1547
    %2140 = vmatpush1.bf16.msra.mxu0 %v1546
    %2141 = vmatprep.subr.bf16.mxu0 %v1551
    %2142 = vmatpush1.bf16.msra.mxu0 %v1550
    %2143 = vmatprep.subr.bf16.mxu0 %v1555
    %2144 = vmatpush1.bf16.msra.mxu0 %v1554
    %2145 = vmatprep.subr.bf16.mxu0 %v1559
    %2146 = vmatpush1.bf16.msra.mxu0 %v1558
    %2147 = vmatprep.subr.bf16.mxu0 %v1563
    %2148 = vmatpush1.bf16.msra.mxu0 %v1562
    %2149 = vmatprep.subr.bf16.mxu0 %v1567
    %2150 = vmatpush1.bf16.msra.mxu0 %v1566
    %2151 = vmatprep.subr.bf16.mxu0 %v1571
    %2152 = vmatpush1.bf16.msra.mxu0 %v1570
    %2153 = vmatprep.subr.bf16.mxu0 %v1575
    %2154 = vmatpush1.bf16.msra.mxu0 %v1574
    %2155 = vmatprep.subr.bf16.mxu0 %v1579
    %2156 = vmatpush1.bf16.msra.mxu0 %v1578
    %2157 = vmatprep.subr.bf16.mxu0 %v1583
    %2158 = vmatpush1.bf16.msra.mxu0 %v1582
    %2159 = vmatprep.mubr.bf16.mxu0 %v551
    %2160 = vmatmul.mubr.bf16.gmra.mrb[0].mxu0 %v550
    %v2161 = vpop.f32.mrb[0].mxu0
    %v2162 = vadd.f32 %v2121, %v2161
    %v2163 = vpop.f32.mrb[0].mxu0
    %v2164 = vadd.f32 %v2123, %v2163
    %v2165 = vpop.f32.mrb[0].mxu0
    %v2166 = vpop.f32.mrb[0].mxu0
    %2167 = vdwg.mxu0
    %v2168 = vmax.f32 %v1998, 0.0
    %v2169 = vmax.f32 %v2000, 0.0
    %v2170 = vmax.f32 %v2162, 0.0
    %v2171 = vmax.f32 %v2164, 0.0
    %v2172 = vpack.c.bf16 %v2168, %v2168
    %v2173 = vpack.c.bf16 %v2169, %v2169
    %v2174 = vpack.c.bf16 %v2170, %v2170
    %v2175 = vpack.c.bf16 %v2171, %v2171
    %v2176 = vld [vmem:[%s4] sm:$0xff]
    %v2177 = vld [vmem:[%s4 + $0x8] sm:$0xff]
    %v2178 = vld [vmem:[%s4 + $0x10] sm:$0xff]
    %v2179 = vld [vmem:[%s4 + $0x18] sm:$0xff]
    %v2180 = vld [vmem:[%s4 + $0x20] sm:$0xff]
    %v2181 = vld [vmem:[%s4 + $0x28] sm:$0xff]
    %v2182 = vld [vmem:[%s4 + $0x30] sm:$0xff]
    %v2183 = vld [vmem:[%s4 + $0x38] sm:$0xff]
    %v2184 = vld [vmem:[%s4 + $0x40] sm:$0xff]
    %v2185 = vld [vmem:[%s4 + $0x48] sm:$0xff]
    %v2186 = vld [vmem:[%s4 + $0x50] sm:$0xff]
    %v2187 = vld [vmem:[%s4 + $0x58] sm:$0xff]
    %v2188 = vld [vmem:[%s4 + $0x60] sm:$0xff]
    %v2189 = vld [vmem:[%s4 + $0x68] sm:$0xff]
    %v2190 = vld [vmem:[%s4 + $0x70] sm:$0xff]
    %v2191 = vld [vmem:[%s4 + $0x78] sm:$0xff]
    %v2192 = vld [vmem:[%s4 + $0x80] sm:$0xff]
    %v2193 = vld [vmem:[%s4 + $0x88] sm:$0xff]
    %v2194 = vld [vmem:[%s4 + $0x90] sm:$0xff]
    %v2195 = vld [vmem:[%s4 + $0x98] sm:$0xff]
    %v2196 = vld [vmem:[%s4 + $0xa0] sm:$0xff]
    %v2197 = vld [vmem:[%s4 + $0xa8] sm:$0xff]
    %v2198 = vld [vmem:[%s4 + $0xb0] sm:$0xff]
    %v2199 = vld [vmem:[%s4 + $0xb8] sm:$0xff]
    %v2200 = vld [vmem:[%s4 + $0xc0] sm:$0xff]
    %v2201 = vld [vmem:[%s4 + $0xc8] sm:$0xff]
    %v2202 = vld [vmem:[%s4 + $0xd0] sm:$0xff]
    %v2203 = vld [vmem:[%s4 + $0xd8] sm:$0xff]
    %v2204 = vld [vmem:[%s4 + $0xe0] sm:$0xff]
    %v2205 = vld [vmem:[%s4 + $0xe8] sm:$0xff]
    %v2206 = vld [vmem:[%s4 + $0xf0] sm:$0xff]
    %v2207 = vld [vmem:[%s4 + $0xf8] sm:$0xff]
    %v2208 = vld [vmem:[%s4 + $0x100] sm:$0xff]
    %v2209 = vld [vmem:[%s4 + $0x108] sm:$0xff]
    %v2210 = vld [vmem:[%s4 + $0x110] sm:$0xff]
    %v2211 = vld [vmem:[%s4 + $0x118] sm:$0xff]
    %v2212 = vld [vmem:[%s4 + $0x120] sm:$0xff]
    %v2213 = vld [vmem:[%s4 + $0x128] sm:$0xff]
    %v2214 = vld [vmem:[%s4 + $0x130] sm:$0xff]
    %v2215 = vld [vmem:[%s4 + $0x138] sm:$0xff]
    %v2216 = vld [vmem:[%s4 + $0x140] sm:$0xff]
    %v2217 = vld [vmem:[%s4 + $0x148] sm:$0xff]
    %v2218 = vld [vmem:[%s4 + $0x150] sm:$0xff]
    %v2219 = vld [vmem:[%s4 + $0x158] sm:$0xff]
    %v2220 = vld [vmem:[%s4 + $0x160] sm:$0xff]
    %v2221 = vld [vmem:[%s4 + $0x168] sm:$0xff]
    %v2222 = vld [vmem:[%s4 + $0x170] sm:$0xff]
    %v2223 = vld [vmem:[%s4 + $0x178] sm:$0xff]
    %v2224 = vld [vmem:[%s4 + $0x180] sm:$0xff]
    %v2225 = vld [vmem:[%s4 + $0x188] sm:$0xff]
    %v2226 = vld [vmem:[%s4 + $0x190] sm:$0xff]
    %v2227 = vld [vmem:[%s4 + $0x198] sm:$0xff]
    %v2228 = vld [vmem:[%s4 + $0x1a0] sm:$0xff]
    %v2229 = vld [vmem:[%s4 + $0x1a8] sm:$0xff]
    %v2230 = vld [vmem:[%s4 + $0x1b0] sm:$0xff]
    %v2231 = vld [vmem:[%s4 + $0x1b8] sm:$0xff]
    %v2232 = vld [vmem:[%s4 + $0x1c0] sm:$0xff]
    %v2233 = vld [vmem:[%s4 + $0x1c8] sm:$0xff]
    %v2234 = vld [vmem:[%s4 + $0x1d0] sm:$0xff]
    %v2235 = vld [vmem:[%s4 + $0x1d8] sm:$0xff]
    %v2236 = vld [vmem:[%s4 + $0x1e0] sm:$0xff]
    %v2237 = vld [vmem:[%s4 + $0x1e8] sm:$0xff]
    %v2238 = vld [vmem:[%s4 + $0x1f0] sm:$0xff]
    %v2239 = vld [vmem:[%s4 + $0x1f8] sm:$0xff]
    %v2240 = vld [vmem:[%s5] sm:$0x3]
    %v2242 = vlaneseq
    %v2243 = vshrl.u32 %v2242, 7
    %v2244 = vsub.s32 0, %v2243
    %v2245 = vrot.slane %v2240, %v2244
    %v2246 = vlaneseq
    %v2247 = vshrl.u32 %v2246, 7
    %v2248 = vsub.s32 1, %v2247
    %v2249 = vrot.slane %v2240, %v2248
    %v2316 = vunpack.c.l.b16 %v2176
    %v2317 = vunpack.c.h.b16 %v2176
    %v2318 = vunpack.c.l.b16 %v2177
    %v2319 = vunpack.c.h.b16 %v2177
    %v2320 = vunpack.c.l.b16 %v2178
    %v2321 = vunpack.c.h.b16 %v2178
    %v2322 = vunpack.c.l.b16 %v2179
    %v2323 = vunpack.c.h.b16 %v2179
    %v2324 = vunpack.c.l.b16 %v2180
    %v2325 = vunpack.c.h.b16 %v2180
    %v2326 = vunpack.c.l.b16 %v2181
    %v2327 = vunpack.c.h.b16 %v2181
    %v2328 = vunpack.c.l.b16 %v2182
    %v2329 = vunpack.c.h.b16 %v2182
    %v2330 = vunpack.c.l.b16 %v2183
    %v2331 = vunpack.c.h.b16 %v2183
    %v2332 = vunpack.c.l.b16 %v2184
    %v2333 = vunpack.c.h.b16 %v2184
    %v2334 = vunpack.c.l.b16 %v2185
    %v2335 = vunpack.c.h.b16 %v2185
    %v2336 = vunpack.c.l.b16 %v2186
    %v2337 = vunpack.c.h.b16 %v2186
    %v2338 = vunpack.c.l.b16 %v2187
    %v2339 = vunpack.c.h.b16 %v2187
    %v2340 = vunpack.c.l.b16 %v2188
    %v2341 = vunpack.c.h.b16 %v2188
    %v2342 = vunpack.c.l.b16 %v2189
    %v2343 = vunpack.c.h.b16 %v2189
    %v2344 = vunpack.c.l.b16 %v2190
    %v2345 = vunpack.c.h.b16 %v2190
    %v2346 = vunpack.c.l.b16 %v2191
    %v2347 = vunpack.c.h.b16 %v2191
    %v2348 = vunpack.c.l.b16 %v2192
    %v2349 = vunpack.c.h.b16 %v2192
    %v2350 = vunpack.c.l.b16 %v2193
    %v2351 = vunpack.c.h.b16 %v2193
    %v2352 = vunpack.c.l.b16 %v2194
    %v2353 = vunpack.c.h.b16 %v2194
    %v2354 = vunpack.c.l.b16 %v2195
    %v2355 = vunpack.c.h.b16 %v2195
    %v2356 = vunpack.c.l.b16 %v2196
    %v2357 = vunpack.c.h.b16 %v2196
    %v2358 = vunpack.c.l.b16 %v2197
    %v2359 = vunpack.c.h.b16 %v2197
    %v2360 = vunpack.c.l.b16 %v2198
    %v2361 = vunpack.c.h.b16 %v2198
    %v2362 = vunpack.c.l.b16 %v2199
    %v2363 = vunpack.c.h.b16 %v2199
    %v2364 = vunpack.c.l.b16 %v2200
    %v2365 = vunpack.c.h.b16 %v2200
    %v2366 = vunpack.c.l.b16 %v2201
    %v2367 = vunpack.c.h.b16 %v2201
    %v2368 = vunpack.c.l.b16 %v2202
    %v2369 = vunpack.c.h.b16 %v2202
    %v2370 = vunpack.c.l.b16 %v2203
    %v2371 = vunpack.c.h.b16 %v2203
    %v2372 = vunpack.c.l.b16 %v2204
    %v2373 = vunpack.c.h.b16 %v2204
    %v2374 = vunpack.c.l.b16 %v2205
    %v2375 = vunpack.c.h.b16 %v2205
    %v2376 = vunpack.c.l.b16 %v2206
    %v2377 = vunpack.c.h.b16 %v2206
    %v2378 = vunpack.c.l.b16 %v2207
    %v2379 = vunpack.c.h.b16 %v2207
    %v2380 = vunpack.c.l.b16 %v2208
    %v2381 = vunpack.c.h.b16 %v2208
    %v2382 = vunpack.c.l.b16 %v2209
    %v2383 = vunpack.c.h.b16 %v2209
    %v2384 = vunpack.c.l.b16 %v2210
    %v2385 = vunpack.c.h.b16 %v2210
    %v2386 = vunpack.c.l.b16 %v2211
    %v2387 = vunpack.c.h.b16 %v2211
    %v2388 = vunpack.c.l.b16 %v2212
    %v2389 = vunpack.c.h.b16 %v2212
    %v2390 = vunpack.c.l.b16 %v2213
    %v2391 = vunpack.c.h.b16 %v2213
    %v2392 = vunpack.c.l.b16 %v2214
    %v2393 = vunpack.c.h.b16 %v2214
    %v2394 = vunpack.c.l.b16 %v2215
    %v2395 = vunpack.c.h.b16 %v2215
    %v2396 = vunpack.c.l.b16 %v2216
    %v2397 = vunpack.c.h.b16 %v2216
    %v2398 = vunpack.c.l.b16 %v2217
    %v2399 = vunpack.c.h.b16 %v2217
    %v2400 = vunpack.c.l.b16 %v2218
    %v2401 = vunpack.c.h.b16 %v2218
    %v2402 = vunpack.c.l.b16 %v2219
    %v2403 = vunpack.c.h.b16 %v2219
    %v2404 = vunpack.c.l.b16 %v2220
    %v2405 = vunpack.c.h.b16 %v2220
    %v2406 = vunpack.c.l.b16 %v2221
    %v2407 = vunpack.c.h.b16 %v2221
    %v2408 = vunpack.c.l.b16 %v2222
    %v2409 = vunpack.c.h.b16 %v2222
    %v2410 = vunpack.c.l.b16 %v2223
    %v2411 = vunpack.c.h.b16 %v2223
    %v2412 = vunpack.c.l.b16 %v2224
    %v2413 = vunpack.c.h.b16 %v2224
    %v2414 = vunpack.c.l.b16 %v2225
    %v2415 = vunpack.c.h.b16 %v2225
    %v2416 = vunpack.c.l.b16 %v2226
    %v2417 = vunpack.c.h.b16 %v2226
    %v2418 = vunpack.c.l.b16 %v2227
    %v2419 = vunpack.c.h.b16 %v2227
    %v2420 = vunpack.c.l.b16 %v2228
    %v2421 = vunpack.c.h.b16 %v2228
    %v2422 = vunpack.c.l.b16 %v2229
    %v2423 = vunpack.c.h.b16 %v2229
    %v2424 = vunpack.c.l.b16 %v2230
    %v2425 = vunpack.c.h.b16 %v2230
    %v2426 = vunpack.c.l.b16 %v2231
    %v2427 = vunpack.c.h.b16 %v2231
    %v2428 = vunpack.c.l.b16 %v2232
    %v2429 = vunpack.c.h.b16 %v2232
    %v2430 = vunpack.c.l.b16 %v2233
    %v2431 = vunpack.c.h.b16 %v2233
    %v2432 = vunpack.c.l.b16 %v2234
    %v2433 = vunpack.c.h.b16 %v2234
    %v2434 = vunpack.c.l.b16 %v2235
    %v2435 = vunpack.c.h.b16 %v2235
    %v2436 = vunpack.c.l.b16 %v2236
    %v2437 = vunpack.c.h.b16 %v2236
    %v2438 = vunpack.c.l.b16 %v2237
    %v2439 = vunpack.c.h.b16 %v2237
    %v2440 = vunpack.c.l.b16 %v2238
    %v2441 = vunpack.c.h.b16 %v2238
    %v2442 = vunpack.c.l.b16 %v2239
    %v2443 = vunpack.c.h.b16 %v2239
    %v2444 = vpack.c.b16 %v2318, %v2316
    %v2445 = vpack.c.b16 %v2319, %v2317
    %v2446 = vpack.c.b16 %v2322, %v2320
    %v2447 = vpack.c.b16 %v2323, %v2321
    %v2448 = vpack.c.b16 %v2326, %v2324
    %v2449 = vpack.c.b16 %v2327, %v2325
    %v2450 = vpack.c.b16 %v2330, %v2328
    %v2451 = vpack.c.b16 %v2331, %v2329
    %v2452 = vpack.c.b16 %v2334, %v2332
    %v2453 = vpack.c.b16 %v2335, %v2333
    %v2454 = vpack.c.b16 %v2338, %v2336
    %v2455 = vpack.c.b16 %v2339, %v2337
    %v2456 = vpack.c.b16 %v2342, %v2340
    %v2457 = vpack.c.b16 %v2343, %v2341
    %v2458 = vpack.c.b16 %v2346, %v2344
    %v2459 = vpack.c.b16 %v2347, %v2345
    %v2460 = vpack.c.b16 %v2350, %v2348
    %v2461 = vpack.c.b16 %v2351, %v2349
    %v2462 = vpack.c.b16 %v2354, %v2352
    %v2463 = vpack.c.b16 %v2355, %v2353
    %v2464 = vpack.c.b16 %v2358, %v2356
    %v2465 = vpack.c.b16 %v2359, %v2357
    %v2466 = vpack.c.b16 %v2362, %v2360
    %v2467 = vpack.c.b16 %v2363, %v2361
    %v2468 = vpack.c.b16 %v2366, %v2364
    %v2469 = vpack.c.b16 %v2367, %v2365
    %v2470 = vpack.c.b16 %v2370, %v2368
    %v2471 = vpack.c.b16 %v2371, %v2369
    %v2472 = vpack.c.b16 %v2374, %v2372
    %v2473 = vpack.c.b16 %v2375, %v2373
    %v2474 = vpack.c.b16 %v2378, %v2376
    %v2475 = vpack.c.b16 %v2379, %v2377
    %v2476 = vpack.c.b16 %v2382, %v2380
    %v2477 = vpack.c.b16 %v2383, %v2381
    %v2478 = vpack.c.b16 %v2386, %v2384
    %v2479 = vpack.c.b16 %v2387, %v2385
    %v2480 = vpack.c.b16 %v2390, %v2388
    %v2481 = vpack.c.b16 %v2391, %v2389
    %v2482 = vpack.c.b16 %v2394, %v2392
    %v2483 = vpack.c.b16 %v2395, %v2393
    %v2484 = vpack.c.b16 %v2398, %v2396
    %v2485 = vpack.c.b16 %v2399, %v2397
    %v2486 = vpack.c.b16 %v2402, %v2400
    %v2487 = vpack.c.b16 %v2403, %v2401
    %v2488 = vpack.c.b16 %v2406, %v2404
    %v2489 = vpack.c.b16 %v2407, %v2405
    %v2490 = vpack.c.b16 %v2410, %v2408
    %v2491 = vpack.c.b16 %v2411, %v2409
    %v2492 = vpack.c.b16 %v2414, %v2412
    %v2493 = vpack.c.b16 %v2415, %v2413
    %v2494 = vpack.c.b16 %v2418, %v2416
    %v2495 = vpack.c.b16 %v2419, %v2417
    %v2496 = vpack.c.b16 %v2422, %v2420
    %v2497 = vpack.c.b16 %v2423, %v2421
    %v2498 = vpack.c.b16 %v2426, %v2424
    %v2499 = vpack.c.b16 %v2427, %v2425
    %v2500 = vpack.c.b16 %v2430, %v2428
    %v2501 = vpack.c.b16 %v2431, %v2429
    %v2502 = vpack.c.b16 %v2434, %v2432
    %v2503 = vpack.c.b16 %v2435, %v2433
    %v2504 = vpack.c.b16 %v2438, %v2436
    %v2505 = vpack.c.b16 %v2439, %v2437
    %v2506 = vpack.c.b16 %v2442, %v2440
    %v2507 = vpack.c.b16 %v2443, %v2441
    %2572 = vmatprep.subr.bf16.mxu0 %v2445
    %2573 = vmatpush1.bf16.msra.mxu0 %v2444
    %2574 = vmatprep.subr.bf16.mxu0 %v2447
    %2575 = vmatpush1.bf16.msra.mxu0 %v2446
    %2576 = vmatprep.subr.bf16.mxu0 %v2449
    %2577 = vmatpush1.bf16.msra.mxu0 %v2448
    %2578 = vmatprep.subr.bf16.mxu0 %v2451
    %2579 = vmatpush1.bf16.msra.mxu0 %v2450
    %2580 = vmatprep.subr.bf16.mxu0 %v2453
    %2581 = vmatpush1.bf16.msra.mxu0 %v2452
    %2582 = vmatprep.subr.bf16.mxu0 %v2455
    %2583 = vmatpush1.bf16.msra.mxu0 %v2454
    %2584 = vmatprep.subr.bf16.mxu0 %v2457
    %2585 = vmatpush1.bf16.msra.mxu0 %v2456
    %2586 = vmatprep.subr.bf16.mxu0 %v2459
    %2587 = vmatpush1.bf16.msra.mxu0 %v2458
    %2588 = vmatprep.subr.bf16.mxu0 %v2461
    %2589 = vmatpush1.bf16.msra.mxu0 %v2460
    %2590 = vmatprep.subr.bf16.mxu0 %v2463
    %2591 = vmatpush1.bf16.msra.mxu0 %v2462
    %2592 = vmatprep.subr.bf16.mxu0 %v2465
    %2593 = vmatpush1.bf16.msra.mxu0 %v2464
    %2594 = vmatprep.subr.bf16.mxu0 %v2467
    %2595 = vmatpush1.bf16.msra.mxu0 %v2466
    %2596 = vmatprep.subr.bf16.mxu0 %v2469
    %2597 = vmatpush1.bf16.msra.mxu0 %v2468
    %2598 = vmatprep.subr.bf16.mxu0 %v2471
    %2599 = vmatpush1.bf16.msra.mxu0 %v2470
    %2600 = vmatprep.subr.bf16.mxu0 %v2473
    %2601 = vmatpush1.bf16.msra.mxu0 %v2472
    %2602 = vmatprep.subr.bf16.mxu0 %v2475
    %2603 = vmatpush1.bf16.msra.mxu0 %v2474
    %2604 = vmatprep.mubr.bf16.mxu0 %v2173
    %2605 = vmatmul.mubr.bf16.gmra.mrb[0].mxu0 %v2172
    %v2606 = vpop.f32.mrb[0].mxu0
    %v2607 = vadd.f32 %v2245, %v2606
    %v2608 = vpop.f32.mrb[0].mxu0
    %v2609 = vadd.f32 %v2249, %v2608
    %v2610 = vpop.f32.mrb[0].mxu0
    %v2611 = vpop.f32.mrb[0].mxu0
    %2612 = vdwg.mxu0
    %2613 = vmatprep.subr.bf16.mxu0 %v2477
    %2614 = vmatpush1.bf16.msra.mxu0 %v2476
    %2615 = vmatprep.subr.bf16.mxu0 %v2479
    %2616 = vmatpush1.bf16.msra.mxu0 %v2478
    %2617 = vmatprep.subr.bf16.mxu0 %v2481
    %2618 = vmatpush1.bf16.msra.mxu0 %v2480
    %2619 = vmatprep.subr.bf16.mxu0 %v2483
    %2620 = vmatpush1.bf16.msra.mxu0 %v2482
    %2621 = vmatprep.subr.bf16.mxu0 %v2485
    %2622 = vmatpush1.bf16.msra.mxu0 %v2484
    %2623 = vmatprep.subr.bf16.mxu0 %v2487
    %2624 = vmatpush1.bf16.msra.mxu0 %v2486
    %2625 = vmatprep.subr.bf16.mxu0 %v2489
    %2626 = vmatpush1.bf16.msra.mxu0 %v2488
    %2627 = vmatprep.subr.bf16.mxu0 %v2491
    %2628 = vmatpush1.bf16.msra.mxu0 %v2490
    %2629 = vmatprep.subr.bf16.mxu0 %v2493
    %2630 = vmatpush1.bf16.msra.mxu0 %v2492
    %2631 = vmatprep.subr.bf16.mxu0 %v2495
    %2632 = vmatpush1.bf16.msra.mxu0 %v2494
    %2633 = vmatprep.subr.bf16.mxu0 %v2497
    %2634 = vmatpush1.bf16.msra.mxu0 %v2496
    %2635 = vmatprep.subr.bf16.mxu0 %v2499
    %2636 = vmatpush1.bf16.msra.mxu0 %v2498
    %2637 = vmatprep.subr.bf16.mxu0 %v2501
    %2638 = vmatpush1.bf16.msra.mxu0 %v2500
    %2639 = vmatprep.subr.bf16.mxu0 %v2503
    %2640 = vmatpush1.bf16.msra.mxu0 %v2502
    %2641 = vmatprep.subr.bf16.mxu0 %v2505
    %2642 = vmatpush1.bf16.msra.mxu0 %v2504
    %2643 = vmatprep.subr.bf16.mxu0 %v2507
    %2644 = vmatpush1.bf16.msra.mxu0 %v2506
    %2645 = vmatprep.mubr.bf16.mxu0 %v2175
    %2646 = vmatmul.mubr.bf16.gmra.mrb[0].mxu0 %v2174
    %v2647 = vpop.f32.mrb[0].mxu0
    %v2648 = vadd.f32 %v2607, %v2647
    %v2649 = vpop.f32.mrb[0].mxu0
    %v2650 = vadd.f32 %v2609, %v2649
    %v2651 = vpop.f32.mrb[0].mxu0
    %v2652 = vpop.f32.mrb[0].mxu0
    %2653 = vdwg.mxu0
    %v2654 = vmax.f32 %v2648, 0.0
    %v2655 = vmax.f32 %v2650, 0.0
    %v2656 = vpack.c.bf16 %v2654, %v2654
    %v2657 = vpack.c.bf16 %v2655, %v2655
    %v2658 = vld [vmem:[%s6] sm:$0xf]
    %v2659 = vld [vmem:[%s6 + $0x4] sm:$0xf]
    %v2660 = vld [vmem:[%s6 + $0x8] sm:$0xf]
    %v2661 = vld [vmem:[%s6 + $0xc] sm:$0xf]
    %v2662 = vld [vmem:[%s6 + $0x10] sm:$0xf]
    %v2663 = vld [vmem:[%s6 + $0x14] sm:$0xf]
    %v2664 = vld [vmem:[%s6 + $0x18] sm:$0xf]
    %v2665 = vld [vmem:[%s6 + $0x1c] sm:$0xf]
    %v2666 = vld [vmem:[%s6 + $0x20] sm:$0xf]
    %v2667 = vld [vmem:[%s6 + $0x24] sm:$0xf]
    %v2668 = vld [vmem:[%s6 + $0x28] sm:$0xf]
    %v2669 = vld [vmem:[%s6 + $0x2c] sm:$0xf]
    %v2670 = vld [vmem:[%s6 + $0x30] sm:$0xf]
    %v2671 = vld [vmem:[%s6 + $0x34] sm:$0xf]
    %v2672 = vld [vmem:[%s6 + $0x38] sm:$0xf]
    %v2673 = vld [vmem:[%s6 + $0x3c] sm:$0xf]
    %v2674 = vld [vmem:[%s6 + $0x40] sm:$0xf]
    %v2675 = vld [vmem:[%s6 + $0x44] sm:$0xf]
    %v2676 = vld [vmem:[%s6 + $0x48] sm:$0xf]
    %v2677 = vld [vmem:[%s6 + $0x4c] sm:$0xf]
    %v2678 = vld [vmem:[%s6 + $0x50] sm:$0xf]
    %v2679 = vld [vmem:[%s6 + $0x54] sm:$0xf]
    %v2680 = vld [vmem:[%s6 + $0x58] sm:$0xf]
    %v2681 = vld [vmem:[%s6 + $0x5c] sm:$0xf]
    %v2682 = vld [vmem:[%s6 + $0x60] sm:$0xf]
    %v2683 = vld [vmem:[%s6 + $0x64] sm:$0xf]
    %v2684 = vld [vmem:[%s6 + $0x68] sm:$0xf]
    %v2685 = vld [vmem:[%s6 + $0x6c] sm:$0xf]
    %v2686 = vld [vmem:[%s6 + $0x70] sm:$0xf]
    %v2687 = vld [vmem:[%s6 + $0x74] sm:$0xf]
    %v2688 = vld [vmem:[%s6 + $0x78] sm:$0xf]
    %v2689 = vld [vmem:[%s6 + $0x7c] sm:$0xf]
    %v2690 = vld [vmem:[%s7] sm:$0x1]
    %v2692 = vlaneseq
    %v2693 = vshrl.u32 %v2692, 7
    %v2694 = vsub.s32 0, %v2693
    %v2695 = vrot.slane %v2690, %v2694
    %v2729 = vunpack.c.l.b16 %v2658
    %v2730 = vunpack.c.l.b16 %v2659
    %v2731 = vunpack.c.l.b16 %v2660
    %v2732 = vunpack.c.l.b16 %v2661
    %v2733 = vunpack.c.l.b16 %v2662
    %v2734 = vunpack.c.l.b16 %v2663
    %v2735 = vunpack.c.l.b16 %v2664
    %v2736 = vunpack.c.l.b16 %v2665
    %v2737 = vunpack.c.l.b16 %v2666
    %v2738 = vunpack.c.l.b16 %v2667
    %v2739 = vunpack.c.l.b16 %v2668
    %v2740 = vunpack.c.l.b16 %v2669
    %v2741 = vunpack.c.l.b16 %v2670
    %v2742 = vunpack.c.l.b16 %v2671
    %v2743 = vunpack.c.l.b16 %v2672
    %v2744 = vunpack.c.l.b16 %v2673
    %v2745 = vunpack.c.l.b16 %v2674
    %v2746 = vunpack.c.l.b16 %v2675
    %v2747 = vunpack.c.l.b16 %v2676
    %v2748 = vunpack.c.l.b16 %v2677
    %v2749 = vunpack.c.l.b16 %v2678
    %v2750 = vunpack.c.l.b16 %v2679
    %v2751 = vunpack.c.l.b16 %v2680
    %v2752 = vunpack.c.l.b16 %v2681
    %v2753 = vunpack.c.l.b16 %v2682
    %v2754 = vunpack.c.l.b16 %v2683
    %v2755 = vunpack.c.l.b16 %v2684
    %v2756 = vunpack.c.l.b16 %v2685
    %v2757 = vunpack.c.l.b16 %v2686
    %v2758 = vunpack.c.l.b16 %v2687
    %v2759 = vunpack.c.l.b16 %v2688
    %v2760 = vunpack.c.l.b16 %v2689
    %v2761 = vpack.c.b16 %v2730, %v2729
    %v2762 = vpack.c.b16 %v2732, %v2731
    %v2763 = vpack.c.b16 %v2734, %v2733
    %v2764 = vpack.c.b16 %v2736, %v2735
    %v2765 = vpack.c.b16 %v2738, %v2737
    %v2766 = vpack.c.b16 %v2740, %v2739
    %v2767 = vpack.c.b16 %v2742, %v2741
    %v2768 = vpack.c.b16 %v2744, %v2743
    %v2769 = vpack.c.b16 %v2746, %v2745
    %v2770 = vpack.c.b16 %v2748, %v2747
    %v2771 = vpack.c.b16 %v2750, %v2749
    %v2772 = vpack.c.b16 %v2752, %v2751
    %v2773 = vpack.c.b16 %v2754, %v2753
    %v2774 = vpack.c.b16 %v2756, %v2755
    %v2775 = vpack.c.b16 %v2758, %v2757
    %v2776 = vpack.c.b16 %v2760, %v2759
    %2793 = vmatprep.subr.bf16.mxu0 0
    %2794 = vmatpush1.bf16.msra.mxu0 %v2761
    %2795 = vmatprep.subr.bf16.mxu0 0
    %2796 = vmatpush1.bf16.msra.mxu0 %v2762
    %2797 = vmatprep.subr.bf16.mxu0 0
    %2798 = vmatpush1.bf16.msra.mxu0 %v2763
    %2799 = vmatprep.subr.bf16.mxu0 0
    %2800 = vmatpush1.bf16.msra.mxu0 %v2764
    %2801 = vmatprep.subr.bf16.mxu0 0
    %2802 = vmatpush1.bf16.msra.mxu0 %v2765
    %2803 = vmatprep.subr.bf16.mxu0 0
    %2804 = vmatpush1.bf16.msra.mxu0 %v2766
    %2805 = vmatprep.subr.bf16.mxu0 0
    %2806 = vmatpush1.bf16.msra.mxu0 %v2767
    %2807 = vmatprep.subr.bf16.mxu0 0
    %2808 = vmatpush1.bf16.msra.mxu0 %v2768
    %2809 = vmatprep.subr.bf16.mxu0 0
    %2810 = vmatpush1.bf16.msra.mxu0 %v2769
    %2811 = vmatprep.subr.bf16.mxu0 0
    %2812 = vmatpush1.bf16.msra.mxu0 %v2770
    %2813 = vmatprep.subr.bf16.mxu0 0
    %2814 = vmatpush1.bf16.msra.mxu0 %v2771
    %2815 = vmatprep.subr.bf16.mxu0 0
    %2816 = vmatpush1.bf16.msra.mxu0 %v2772
    %2817 = vmatprep.subr.bf16.mxu0 0
    %2818 = vmatpush1.bf16.msra.mxu0 %v2773
    %2819 = vmatprep.subr.bf16.mxu0 0
    %2820 = vmatpush1.bf16.msra.mxu0 %v2774
    %2821 = vmatprep.subr.bf16.mxu0 0
    %2822 = vmatpush1.bf16.msra.mxu0 %v2775
    %2823 = vmatprep.subr.bf16.mxu0 0
    %2824 = vmatpush1.bf16.msra.mxu0 %v2776
    %2825 = vmatprep.mubr.bf16.mxu0 %v2657
    %2826 = vmatmul.mubr.bf16.gmra.mrb[0].mxu0 %v2656
    %v2827 = vpop.f32.mrb[0].mxu0
    %v2828 = vadd.f32 %v2695, %v2827
    %v2829 = vpop.f32.mrb[0].mxu0
    %v2830 = vpop.f32.mrb[0].mxu0
    %v2831 = vpop.f32.mrb[0].mxu0
    %2832 = vdwg.mxu0
    %vm2833 = vcmask 9216
    %v2834 = vsel %vm2833, %v2828, -inf
    %2835 = vmax.xlane.f32.xlu0 %v2834
    %v2836 = vpop.xlane.xlu0 %2835
    %v2837 = vsub.f32 %v2828, %v2836
    %v2838 = vmul.f32 %v2837, 1.442695
    %v2839 = vpow.pop %v2838
    %v2840 = vsel %vm2833, %v2839, 0.0
    %2841 = vadd.xlane.f32.xlu0 %v2840
    %v2842 = vpop.xlane.xlu0 %2841
    %v2843 = vlog2.pop %v2842
    %v2844 = vmul.f32 %v2843, 0.6931472
    %v2845 = vadd.f32 %v2836, %v2844
    %v2846 = vsub.f32 %v2828, %v2845
    %2847 = vst.msk [vmem:[#allocation2] sm:$0x3] %vm2833, %v2846
    // Predicated region
    $region34: #{pointnet_cls_forward.7} parent=1 // pred_check
      _
    $region35: #{pointnet_cls_forward.7} parent=1 // pred_check_branch
      %2849 = sbr.rel (0) target = $region37
    $region36: #{pointnet_cls_forward.7} parent=1 // pred_region
      %s2851 = ssub.s32 32, 32
      %2852 = vsyncadd [#allocation3], %s2851
      %s2854 = sshll.u32 [#allocation2], 4
      %s2855 = int_to_ptr.vmem [resolvable:$true] %s2854
      %2857 = dma.vmem_to_hbm [thread:$0]  %s2855, 32, %s8, [#allocation3]
    $region37: #{pointnet_cls_forward.7} parent=1 // pred_fallthru
      _
    // Predicated region
    $region38: #{pointnet_cls_forward.7} parent=1 // pred_check
      _
    $region39: #{pointnet_cls_forward.7} parent=1 // pred_check_branch
      %2859 = sbr.rel (0) target = $region41
    $region40: #{pointnet_cls_forward.7} parent=1 // pred_region
      %2860 = dma.done [#allocation3], 32
    $region41: #{pointnet_cls_forward.7} parent=1 // pred_fallthru
      _
    %2861 = vsyncpa [#allocation3], 1

</llo_original>
